<compile_context>
chip_gen: v7x
topology: tpu7x:2x2x1
jax: 0.10.0
libtpu: 0.0.40
codegen_flags: <defaults>
</compile_context>

<pallas_src>
import jax
import jax.numpy as jnp
from jax.experimental import pallas as pl
from jax.experimental.pallas import tpu as pltpu


# ----------------------------------------------------------------------------
# Helpers
# ----------------------------------------------------------------------------

def _round_up(x, m):
    return ((x + m - 1) // m) * m


def _pick_hblk(H, W, target_rows=512):
    """Pick an image-row block hblk | H so that hblk*W rows fit the target.

    Prefers row counts that are multiples of 256 (full MXU pass on v6e/v7x) and
    keeps them multiples of 8 (sublane tiling) unless only the full frame works.
    """
    cands = [hb for hb in range(1, H + 1) if H % hb == 0 and (hb * W) % 8 == 0]
    fit = [hb for hb in cands if hb * W <= target_rows]
    if fit:
        mxu = [hb for hb in fit if (hb * W) % 256 == 0]
        return max(mxu) if mxu else max(fit)
    return min(cands) if cands else H


def _mosaic_params(semantics, est_bytes):
    """Generation-aware VMEM budget (64 MiB on v7x, 128 MiB on v5e/v6e)."""
    try:
        cap = int(getattr(pltpu.get_tpu_info(), "vmem_capacity_bytes", 64 << 20))
    except Exception:
        cap = 64 << 20
    want = int(est_bytes * 1.3) + (4 << 20)
    limit = min(max(want, 32 << 20), cap - (4 << 20))
    return pltpu.CompilerParams(dimension_semantics=semantics,
                                vmem_limit_bytes=int(limit))


def _pack_gru_params(p, C, N3):
    """Merge per-gate 3x3 conv weights/biases into tap-major, gate-contiguous
    blocks: weights (9, C, N3) bf16 with columns [z | r | n | 0-pad]."""
    def pack_w(ws):
        w = jnp.zeros((9, C, N3), jnp.float32)
        for g, wg in enumerate(ws):                       # wg: (9, C, C)
            w = w.at[:, :, g * C:(g + 1) * C].set(wg)
        return w.astype(jnp.bfloat16)

    def pack_b(bs):
        b = jnp.zeros((1, N3), jnp.float32)
        for g, bg in enumerate(bs):
            if bg is not None:
                b = b.at[:, g * C:(g + 1) * C].set(bg)
        return b

    wx = pack_w([p["wxz"], p["wxr"], p["wxn"]])
    wh = pack_w([p["whz"], p["whr"], p["whn"]])
    bx = pack_b([p["bz"], p["br"], p["bxn"]])             # all x-path biases
    bh = pack_b([None, None, p["bhn"]])                   # only bhn on h path
    return wx, wh, bx, bh


# ----------------------------------------------------------------------------
# ConvGRU (NoInit) forward: phase 1 (T-parallel x projections) + phase 2
# (sequential recurrence, h path only)
# ----------------------------------------------------------------------------

def convgru_forward(x, p):
    """x: (T, B, H, W, C) f32 -> (T, B, H, W, C) f32 ConvGRU outputs (NoInit)."""
    T, B, H, W, C = x.shape
    if T == 1:                                            # NoInit degenerate case
        return x
    Hp, Wp = H + 2, W + 2
    HW = H * W
    N3 = _round_up(3 * C, 128)                            # gates packed contiguously
    hblk = _pick_hblk(H, W, 512)
    rblk = hblk * W
    n_h = H // hblk

    wx, wh, bx, bh = _pack_gru_params(p, C, N3)

    # Frames 1..T-1 padded + bf16 for the hoisted x-path projections; frame 0
    # stays f32 (exact NoInit passthrough / initial state).
    xp1 = jnp.pad(x[1:], ((0, 0), (0, 0), (1, 1), (1, 1), (0, 0))).astype(jnp.bfloat16)
    x0r = x[0].reshape(B, HW, C)

    # ---------------- Phase 1: x-path gate projections (parallel over T, B) ---
    def xproj_kernel(xp_ref, wx_ref, bx_ref, gx_ref):
        # xp_ref: (Hp, Wp, C) bf16 padded frame  |  gx_ref: (rblk, N3) bf16
        j = pl.program_id(2)
        y0 = pl.multiple_of(j * hblk, hblk)
        acc = None
        for dy in range(3):
            for dx in range(3):
                win = xp_ref[pl.ds(y0 + dy, hblk), dx:dx + W, :]
                g = jnp.dot(win.reshape(rblk, C), wx_ref[3 * dy + dx],
                            preferred_element_type=jnp.float32)
                acc = g if acc is None else acc + g
        gx_ref[...] = (acc + bx_ref[...]).astype(jnp.bfloat16)

    est1 = (2 * Hp * Wp * C * 2 + 2 * 9 * C * N3 * 2 + 2 * N3 * 4
            + 2 * rblk * N3 * 2 + 4 * rblk * N3 * 4 + 2 * rblk * C * 4)
    gx = pl.pallas_call(
        xproj_kernel,
        out_shape=jax.ShapeDtypeStruct((T - 1, B, HW, N3), jnp.bfloat16),
        grid_spec=pltpu.PrefetchScalarGridSpec(
            num_scalar_prefetch=0,
            grid=(T - 1, B, n_h),
            in_specs=[
                pl.BlockSpec((None, None, Hp, Wp, C),
                             lambda t, b, j: (t, b, 0, 0, 0)),
                # TODO(synk): single-buffer the grid-invariant weight/bias blocks
                # (pipeline_mode=pl.Buffered(1)) once validated on this jax pin.
                pl.BlockSpec((9, C, N3), lambda t, b, j: (0, 0, 0)),
                pl.BlockSpec((1, N3), lambda t, b, j: (0, 0)),
            ],
            out_specs=pl.BlockSpec((None, None, rblk, N3),
                                   lambda t, b, j: (t, b, j, 0)),
        ),
        compiler_params=_mosaic_params(("parallel", "parallel", "arbitrary"), est1),
    )(xp1, wx, bx)

    # ---------------- Phase 2: sequential recurrence (h path only) ------------
    # h_t lives in f32 VMEM scratch, double-buffered on frame parity so the row
    # blocks of one frame never clobber the halo rows another block still reads.
    def step_kernel(x0_ref, gx_ref, wh_ref, bh_ref, out_ref, hpad_ref):
        t = pl.program_id(0)
        b = pl.program_id(1)
        j = pl.program_id(2)
        y0 = pl.multiple_of(j * hblk, hblk)

        @pl.when((t == 0) & (b == 0) & (j == 0))
        def _zero_padding():
            # Zero once: the padded borders of both h buffers stay zero forever.
            hpad_ref[...] = jnp.zeros_like(hpad_ref)

        @pl.when(t == 0)
        def _noinit():
            # NoInit semantics: state := frame 0, output[0] := frame 0.
            x0 = x0_ref[...]
            out_ref[...] = x0
            hpad_ref[0, b, pl.ds(y0 + 1, hblk), pl.ds(1, W), :] = \
                x0.reshape(hblk, W, C)

        @pl.when(t > 0)
        def _recur():
            rbuf = (t - 1) % 2                       # holds h_{t-1}
            wbuf = t % 2                             # receives h_t
            acc = None
            for dy in range(3):
                for dx in range(3):
                    win = hpad_ref[rbuf, b, pl.ds(y0 + dy, hblk), dx:dx + W, :]
                    g = jnp.dot(win.reshape(rblk, C).astype(jnp.bfloat16),
                                wh_ref[3 * dy + dx],
                                preferred_element_type=jnp.float32)
                    acc = g if acc is None else acc + g
            gh = acc + bh_ref[...]
            gxv = gx_ref[...].astype(jnp.float32)    # x-path pre-acts (+ biases)
            z = jax.nn.sigmoid(gxv[:, 0:C] + gh[:, 0:C])
            r = jax.nn.sigmoid(gxv[:, C:2 * C] + gh[:, C:2 * C])
            n = jnp.tanh(gxv[:, 2 * C:3 * C] + r * gh[:, 2 * C:3 * C])
            h_prev = hpad_ref[rbuf, b, pl.ds(y0 + 1, hblk), pl.ds(1, W), :]
            h_prev = h_prev.reshape(rblk, C)
            h_new = (1.0 - z) * n + z * h_prev
            out_ref[...] = h_new
            hpad_ref[wbuf, b, pl.ds(y0 + 1, hblk), pl.ds(1, W), :] = \
                h_new.reshape(hblk, W, C)

    est2 = (2 * B * Hp * Wp * C * 4 + 2 * rblk * C * 4 + 2 * rblk * N3 * 2
            + 2 * 9 * C * N3 * 2 + 2 * N3 * 4 + 2 * rblk * C * 4
            + 6 * rblk * N3 * 4)
    out = pl.pallas_call(
        step_kernel,
        out_shape=jax.ShapeDtypeStruct((T, B, HW, C), jnp.float32),
        grid_spec=pltpu.PrefetchScalarGridSpec(
            num_scalar_prefetch=0,
            grid=(T, B, n_h),
            in_specs=[
                # frame 0 rows are only fetched while t == 0.
                pl.BlockSpec((None, rblk, C),
                             lambda t, b, j: (jnp.where(t == 0, b, 0),
                                              jnp.where(t == 0, j, 0), 0)),
                pl.BlockSpec((None, None, rblk, N3),
                             lambda t, b, j: (jnp.maximum(t - 1, 0), b, j, 0)),
                pl.BlockSpec((9, C, N3), lambda t, b, j: (0, 0, 0)),
                pl.BlockSpec((1, N3), lambda t, b, j: (0, 0)),
            ],
            out_specs=pl.BlockSpec((None, None, rblk, C),
                                   lambda t, b, j: (t, b, j, 0)),
            scratch_shapes=[pltpu.VMEM((2, B, Hp, Wp, C), jnp.float32)],
        ),
        # TODO(synk): on v7x, split the (independent) batch axis across the two
        # TensorCores (core-parallel b axis with per-core h scratch).
        compiler_params=_mosaic_params(("arbitrary", "arbitrary", "arbitrary"),
                                       est2),
    )(x0r, gx, wh, bh)
    return out.reshape(T, B, H, W, C)


# ----------------------------------------------------------------------------
# Extra level: 3x3 conv, stride 2, pad 1, + ReLU  (feats: (N, H, W, Cin))
# ----------------------------------------------------------------------------

def extra_conv_relu(feats, p):
    N, H, W, Cin = feats.shape
    Cout = p["w"].shape[-1]
    Ho = (H - 1) // 2 + 1
    Wo = (W - 1) // 2 + 1
    pad_b = 1 + max(0, 2 * Ho - H)
    pad_r = 1 + max(0, 2 * Wo - W)
    Hp, Wp = H + 1 + pad_b, W + 1 + pad_r                 # both even
    Hh, Wh = Hp // 2, Wp // 2

    # Re-pack the padded input into its 4 stride-2 parity planes (no HBM
    # inflation); the kernel then only needs contiguous window reads.
    xp = jnp.pad(feats, ((0, 0), (1, pad_b), (1, pad_r), (0, 0))).astype(jnp.bfloat16)
    xps = jnp.stack([xp[:, a::2, c::2, :] for a in range(2) for c in range(2)],
                    axis=1)                               # (N, 4, Hh, Wh, Cin)

    w = p["w"].reshape(9, Cin, Cout).astype(jnp.bfloat16)
    b = p["b"].reshape(1, Cout).astype(jnp.float32)

    ohblk = _pick_hblk(Ho, Wo, 512)
    orblk = ohblk * Wo
    n_oh = Ho // ohblk

    def conv_kernel(xps_ref, w_ref, b_ref, o_ref):
        # xps_ref: (4, Hh, Wh, Cin) bf16 parity planes  |  o_ref: (orblk, Cout)
        j = pl.program_id(1)
        oy0 = pl.multiple_of(j * ohblk, ohblk)
        acc = None
        for dy in range(3):
            for dx in range(3):
                plane = (dy % 2) * 2 + (dx % 2)
                win = xps_ref[plane, pl.ds(oy0 + dy // 2, ohblk),
                              dx // 2:dx // 2 + Wo, :]
                g = jnp.dot(win.reshape(orblk, Cin), w_ref[3 * dy + dx],
                            preferred_element_type=jnp.float32)
                acc = g if acc is None else acc + g
        o_ref[...] = jnp.maximum(acc + b_ref[...], 0.0)

    est3 = (2 * 4 * Hh * Wh * Cin * 2 + 2 * 9 * Cin * Cout * 2 + 2 * Cout * 4
            + 2 * orblk * Cout * 4 + 4 * orblk * Cout * 4 + 2 * orblk * Cin * 4)
    out = pl.pallas_call(
        conv_kernel,
        out_shape=jax.ShapeDtypeStruct((N, Ho * Wo, Cout), jnp.float32),
        grid_spec=pltpu.PrefetchScalarGridSpec(
            num_scalar_prefetch=0,
            grid=(N, n_oh),
            in_specs=[
                pl.BlockSpec((None, 4, Hh, Wh, Cin), lambda n, j: (n, 0, 0, 0, 0)),
                pl.BlockSpec((9, Cin, Cout), lambda n, j: (0, 0, 0)),
                pl.BlockSpec((1, Cout), lambda n, j: (0, 0)),
            ],
            out_specs=pl.BlockSpec((None, orblk, Cout), lambda n, j: (n, j, 0)),
        ),
        compiler_params=_mosaic_params(("parallel", "arbitrary"), est3),
    )(xps, w, b)
    return out.reshape(N, Ho, Wo, Cout)


# ----------------------------------------------------------------------------
# Decoder forward (mirrors NoInitRNNDecoder.forward, is_train / in_dict=None)
# ----------------------------------------------------------------------------

def no_init_rnn_decoder_forward(input_list, params, out_layers_type):
    # TODO(synk): warm-start path (in_dict with prior states) not implemented.
    final_outs = []
    states_out = []
    rnn_lvl = 0
    extra_lvl = 0
    feats = None
    for lvl, x in enumerate(input_list):
        tp = out_layers_type[lvl]
        if tp == 0:
            out = x.reshape((-1,) + x.shape[2:])           # (T*B, H, W, C)
        elif tp == 1:
            seq = convgru_forward(x, params["rnn_cells"][rnn_lvl])
            states_out.append(seq[-1])                     # final hidden state
            feats = seq.reshape((-1,) + seq.shape[2:])
            out = feats
            rnn_lvl += 1
        else:  # tp == 2
            feats = extra_conv_relu(feats, params["extra_convs"][extra_lvl])
            out = feats
            extra_lvl += 1
        final_outs.append(out)
    return final_outs, dict(state_dict_lists=states_out)


# ----------------------------------------------------------------------------
# Deterministic parameter init
# ----------------------------------------------------------------------------

def init_params(key, in_channels, out_layers_type):
    params = dict(rnn_cells=[], extra_convs=[])
    for lvl, tp in enumerate(out_layers_type):
        if tp == 1:
            C = in_channels[lvl]
            keys = jax.random.split(key, 11)
            key = keys[0]
            w = lambda k: (0.1 * jax.random.normal(k, (9, C, C))).astype(jnp.float32)
            b = lambda k: (0.1 * jax.random.normal(k, (1, C))).astype(jnp.float32)
            params["rnn_cells"].append(dict(
                wxz=w(keys[1]), wxr=w(keys[2]), wxn=w(keys[3]),
                whz=w(keys[4]), whr=w(keys[5]), whn=w(keys[6]),
                bz=b(keys[7]), br=b(keys[8]), bxn=b(keys[9]), bhn=b(keys[10])))
        elif tp == 2:
            Cin, Cout = in_channels[lvl - 1], in_channels[lvl]
            keys = jax.random.split(key, 3)
            key = keys[0]
            params["extra_convs"].append(dict(
                w=(0.1 * jax.random.normal(keys[1], (3, 3, Cin, Cout))).astype(jnp.float32),
                b=(0.1 * jax.random.normal(keys[2], (1, Cout))).astype(jnp.float32)))
    return params, key


# ----------------------------------------------------------------------------
# Pure-JAX reference (for verification)
# ----------------------------------------------------------------------------

def _conv_ref(x, w_hwio, stride):
    return jax.lax.conv_general_dilated(
        x, w_hwio, window_strides=(stride, stride), padding=((1, 1), (1, 1)),
        dimension_numbers=("NHWC", "HWIO", "NHWC"))


def convgru_ref(x, p):
    T, B, H, W, C = x.shape
    hwio = lambda w: w.reshape(3, 3, C, C)
    h = x[0]
    outs = [h]
    for t in range(1, T):
        xt = x[t]
        z = jax.nn.sigmoid(_conv_ref(xt, hwio(p["wxz"]), 1) +
                           _conv_ref(h, hwio(p["whz"]), 1) + p["bz"].reshape(1, 1, 1, C))
        r = jax.nn.sigmoid(_conv_ref(xt, hwio(p["wxr"]), 1) +
                           _conv_ref(h, hwio(p["whr"]), 1) + p["br"].reshape(1, 1, 1, C))
        n = jnp.tanh(_conv_ref(xt, hwio(p["wxn"]), 1) + p["bxn"].reshape(1, 1, 1, C) +
                     r * (_conv_ref(h, hwio(p["whn"]), 1) + p["bhn"].reshape(1, 1, 1, C)))
        h = (1.0 - z) * n + z * h
        outs.append(h)
    return jnp.stack(outs, axis=0)


def decoder_ref(input_list, params, out_layers_type):
    final_outs = []
    rnn_lvl = extra_lvl = 0
    feats = None
    for lvl, x in enumerate(input_list):
        tp = out_layers_type[lvl]
        if tp == 0:
            out = x.reshape((-1,) + x.shape[2:])
        elif tp == 1:
            seq = convgru_ref(x, params["rnn_cells"][rnn_lvl])
            feats = seq.reshape((-1,) + seq.shape[2:])
            out = feats
            rnn_lvl += 1
        else:
            p = params["extra_convs"][extra_lvl]
            feats = jax.nn.relu(_conv_ref(feats, p["w"], 2) + p["b"].reshape(1, 1, 1, -1))
            out = feats
            extra_lvl += 1
        final_outs.append(out)
    return final_outs


# ----------------------------------------------------------------------------

if __name__ == "__main__":
    # Config: level0 passthrough, level1 ConvGRU, level2 stride-2 conv of level1.
    # Level-1 spatial size 32 makes the row-tiled grid use 2 row blocks per frame.
    out_layers_type = [0, 1, 2]
    in_channels = [4, 4, 8]
    spatial = [32, 32, 16]
    T, B = 4, 2

    key = jax.random.PRNGKey(0)
    params, key = init_params(key, in_channels, out_layers_type)

    input_list = []
    for c, s in zip(in_channels, spatial):
        key, sub = jax.random.split(key)
        input_list.append(jax.random.normal(sub, (T, B, s, s, c), dtype=jnp.float32))

    outs, out_dict = no_init_rnn_decoder_forward(input_list, params, out_layers_type)
    outs = jax.block_until_ready(outs)

    refs = decoder_ref(input_list, params, out_layers_type)
    for o, r in zip(outs, refs):
        assert o.shape == r.shape, (o.shape, r.shape)
        # bf16 MXU operands (f32 accumulation) => slightly relaxed tolerance.
        # TODO(synk): validate bf16 h-path error growth at production T.
        assert jnp.allclose(o, r, atol=2e-2, rtol=2e-2), \
            float(jnp.max(jnp.abs(o - r)))
    print("KERNEL_OK")
</pallas_src>

<mosaic_0001>
module attributes {stable_mosaic.version = 11 : i64} {
  func.func @xproj_kernel(%arg0: i32, %arg1: i32, %arg2: i32, %arg3: memref<1x1x34x34x4xbf16, #tpu.memory_space<vmem>>, %arg4: memref<9x4x128xbf16, #tpu.memory_space<vmem>>, %arg5: memref<1x128xf32, #tpu.memory_space<vmem>>, %arg6: memref<1x1x512x128xbf16, #tpu.memory_space<vmem>>) attributes {dimension_semantics = [#tpu.dimension_semantics<parallel>, #tpu.dimension_semantics<parallel>, #tpu.dimension_semantics<arbitrary>], iteration_bounds = array<i64: 3, 2, 2>, scalar_prefetch = 0 : i64, scratch_operands = 0 : i64, tpu.core_type = #tpu.core_type<tc>, window_params = [{transform_indices = @transform_0, window_bounds = array<i64: 1, 1, 34, 34, 4>}, {pipeline_mode = #tpu.pipeline_mode<synchronous>, transform_indices = @transform_1, window_bounds = array<i64: 9, 4, 128>}, {pipeline_mode = #tpu.pipeline_mode<synchronous>, transform_indices = @transform_2, window_bounds = array<i64: 1, 128>}, {transform_indices = @transform_3, window_bounds = array<i64: 1, 1, 512, 128>}]} {
    %c16_i32 = arith.constant 16 : i32
    %0 = arith.muli %arg2, %c16_i32 : i32
    %1 = tpu.assume_multiple %0, 16 : i32
    %c0_i32 = arith.constant 0 : i32
    %2 = arith.addi %1, %c0_i32 : i32
    %c0 = arith.constant 0 : index
    %c0_0 = arith.constant 0 : index
    %3 = arith.index_cast %2 : i32 to index
    %c0_1 = arith.constant 0 : index
    %c0_2 = arith.constant 0 : index
    %4 = vector.load %arg3[%c0, %c0_0, %3, %c0_1, %c0_2] : memref<1x1x34x34x4xbf16, #tpu.memory_space<vmem>>, vector<1x1x16x32x4xbf16>
    %5 = vector.shape_cast %4 : vector<1x1x16x32x4xbf16> to vector<16x32x4xbf16>
    %6 = vector.shape_cast %5 : vector<16x32x4xbf16> to vector<512x4xbf16>
    %c0_3 = arith.constant 0 : index
    %c0_4 = arith.constant 0 : index
    %c0_5 = arith.constant 0 : index
    %7 = vector.load %arg4[%c0_3, %c0_4, %c0_5] : memref<9x4x128xbf16, #tpu.memory_space<vmem>>, vector<1x4x128xbf16>
    %8 = vector.shape_cast %7 : vector<1x4x128xbf16> to vector<4x128xbf16>
    %cst = arith.constant dense<0.000000e+00> : vector<512x128xf32>
    %9 = tpu.matmul %6, %8, %cst {dimension_numbers = #tpu.dot_dimension_numbers<[1], [0], [0], [1], [0, 0, 1, 1], [], []>} : vector<512x4xbf16>, vector<4x128xbf16>, vector<512x128xf32> -> vector<512x128xf32>
    %c0_i32_6 = arith.constant 0 : i32
    %10 = arith.addi %1, %c0_i32_6 : i32
    %c0_7 = arith.constant 0 : index
    %c0_8 = arith.constant 0 : index
    %11 = arith.index_cast %10 : i32 to index
    %c1 = arith.constant 1 : index
    %c0_9 = arith.constant 0 : index
    %12 = vector.load %arg3[%c0_7, %c0_8, %11, %c1, %c0_9] : memref<1x1x34x34x4xbf16, #tpu.memory_space<vmem>>, vector<1x1x16x32x4xbf16>
    %13 = vector.shape_cast %12 : vector<1x1x16x32x4xbf16> to vector<16x32x4xbf16>
    %14 = vector.shape_cast %13 : vector<16x32x4xbf16> to vector<512x4xbf16>
    %c1_10 = arith.constant 1 : index
    %c0_11 = arith.constant 0 : index
    %c0_12 = arith.constant 0 : index
    %15 = vector.load %arg4[%c1_10, %c0_11, %c0_12] : memref<9x4x128xbf16, #tpu.memory_space<vmem>>, vector<1x4x128xbf16>
    %16 = vector.shape_cast %15 : vector<1x4x128xbf16> to vector<4x128xbf16>
    %cst_13 = arith.constant dense<0.000000e+00> : vector<512x128xf32>
    %17 = tpu.matmul %14, %16, %cst_13 {dimension_numbers = #tpu.dot_dimension_numbers<[1], [0], [0], [1], [0, 0, 1, 1], [], []>} : vector<512x4xbf16>, vector<4x128xbf16>, vector<512x128xf32> -> vector<512x128xf32>
    %18 = arith.addf %9, %17 : vector<512x128xf32>
    %c0_i32_14 = arith.constant 0 : i32
    %19 = arith.addi %1, %c0_i32_14 : i32
    %c0_15 = arith.constant 0 : index
    %c0_16 = arith.constant 0 : index
    %20 = arith.index_cast %19 : i32 to index
    %c2 = arith.constant 2 : index
    %c0_17 = arith.constant 0 : index
    %21 = vector.load %arg3[%c0_15, %c0_16, %20, %c2, %c0_17] : memref<1x1x34x34x4xbf16, #tpu.memory_space<vmem>>, vector<1x1x16x32x4xbf16>
    %22 = vector.shape_cast %21 : vector<1x1x16x32x4xbf16> to vector<16x32x4xbf16>
    %23 = vector.shape_cast %22 : vector<16x32x4xbf16> to vector<512x4xbf16>
    %c2_18 = arith.constant 2 : index
    %c0_19 = arith.constant 0 : index
    %c0_20 = arith.constant 0 : index
    %24 = vector.load %arg4[%c2_18, %c0_19, %c0_20] : memref<9x4x128xbf16, #tpu.memory_space<vmem>>, vector<1x4x128xbf16>
    %25 = vector.shape_cast %24 : vector<1x4x128xbf16> to vector<4x128xbf16>
    %cst_21 = arith.constant dense<0.000000e+00> : vector<512x128xf32>
    %26 = tpu.matmul %23, %25, %cst_21 {dimension_numbers = #tpu.dot_dimension_numbers<[1], [0], [0], [1], [0, 0, 1, 1], [], []>} : vector<512x4xbf16>, vector<4x128xbf16>, vector<512x128xf32> -> vector<512x128xf32>
    %27 = arith.addf %18, %26 : vector<512x128xf32>
    %c1_i32 = arith.constant 1 : i32
    %28 = arith.addi %1, %c1_i32 : i32
    %c0_22 = arith.constant 0 : index
    %c0_23 = arith.constant 0 : index
    %29 = arith.index_cast %28 : i32 to index
    %c0_24 = arith.constant 0 : index
    %c0_25 = arith.constant 0 : index
    %30 = vector.load %arg3[%c0_22, %c0_23, %29, %c0_24, %c0_25] : memref<1x1x34x34x4xbf16, #tpu.memory_space<vmem>>, vector<1x1x16x32x4xbf16>
    %31 = vector.shape_cast %30 : vector<1x1x16x32x4xbf16> to vector<16x32x4xbf16>
    %32 = vector.shape_cast %31 : vector<16x32x4xbf16> to vector<512x4xbf16>
    %c3 = arith.constant 3 : index
    %c0_26 = arith.constant 0 : index
    %c0_27 = arith.constant 0 : index
    %33 = vector.load %arg4[%c3, %c0_26, %c0_27] : memref<9x4x128xbf16, #tpu.memory_space<vmem>>, vector<1x4x128xbf16>
    %34 = vector.shape_cast %33 : vector<1x4x128xbf16> to vector<4x128xbf16>
    %cst_28 = arith.constant dense<0.000000e+00> : vector<512x128xf32>
    %35 = tpu.matmul %32, %34, %cst_28 {dimension_numbers = #tpu.dot_dimension_numbers<[1], [0], [0], [1], [0, 0, 1, 1], [], []>} : vector<512x4xbf16>, vector<4x128xbf16>, vector<512x128xf32> -> vector<512x128xf32>
    %36 = arith.addf %27, %35 : vector<512x128xf32>
    %c1_i32_29 = arith.constant 1 : i32
    %37 = arith.addi %1, %c1_i32_29 : i32
    %c0_30 = arith.constant 0 : index
    %c0_31 = arith.constant 0 : index
    %38 = arith.index_cast %37 : i32 to index
    %c1_32 = arith.constant 1 : index
    %c0_33 = arith.constant 0 : index
    %39 = vector.load %arg3[%c0_30, %c0_31, %38, %c1_32, %c0_33] : memref<1x1x34x34x4xbf16, #tpu.memory_space<vmem>>, vector<1x1x16x32x4xbf16>
    %40 = vector.shape_cast %39 : vector<1x1x16x32x4xbf16> to vector<16x32x4xbf16>
    %41 = vector.shape_cast %40 : vector<16x32x4xbf16> to vector<512x4xbf16>
    %c4 = arith.constant 4 : index
    %c0_34 = arith.constant 0 : index
    %c0_35 = arith.constant 0 : index
    %42 = vector.load %arg4[%c4, %c0_34, %c0_35] : memref<9x4x128xbf16, #tpu.memory_space<vmem>>, vector<1x4x128xbf16>
    %43 = vector.shape_cast %42 : vector<1x4x128xbf16> to vector<4x128xbf16>
    %cst_36 = arith.constant dense<0.000000e+00> : vector<512x128xf32>
    %44 = tpu.matmul %41, %43, %cst_36 {dimension_numbers = #tpu.dot_dimension_numbers<[1], [0], [0], [1], [0, 0, 1, 1], [], []>} : vector<512x4xbf16>, vector<4x128xbf16>, vector<512x128xf32> -> vector<512x128xf32>
    %45 = arith.addf %36, %44 : vector<512x128xf32>
    %c1_i32_37 = arith.constant 1 : i32
    %46 = arith.addi %1, %c1_i32_37 : i32
    %c0_38 = arith.constant 0 : index
    %c0_39 = arith.constant 0 : index
    %47 = arith.index_cast %46 : i32 to index
    %c2_40 = arith.constant 2 : index
    %c0_41 = arith.constant 0 : index
    %48 = vector.load %arg3[%c0_38, %c0_39, %47, %c2_40, %c0_41] : memref<1x1x34x34x4xbf16, #tpu.memory_space<vmem>>, vector<1x1x16x32x4xbf16>
    %49 = vector.shape_cast %48 : vector<1x1x16x32x4xbf16> to vector<16x32x4xbf16>
    %50 = vector.shape_cast %49 : vector<16x32x4xbf16> to vector<512x4xbf16>
    %c5 = arith.constant 5 : index
    %c0_42 = arith.constant 0 : index
    %c0_43 = arith.constant 0 : index
    %51 = vector.load %arg4[%c5, %c0_42, %c0_43] : memref<9x4x128xbf16, #tpu.memory_space<vmem>>, vector<1x4x128xbf16>
    %52 = vector.shape_cast %51 : vector<1x4x128xbf16> to vector<4x128xbf16>
    %cst_44 = arith.constant dense<0.000000e+00> : vector<512x128xf32>
    %53 = tpu.matmul %50, %52, %cst_44 {dimension_numbers = #tpu.dot_dimension_numbers<[1], [0], [0], [1], [0, 0, 1, 1], [], []>} : vector<512x4xbf16>, vector<4x128xbf16>, vector<512x128xf32> -> vector<512x128xf32>
    %54 = arith.addf %45, %53 : vector<512x128xf32>
    %c2_i32 = arith.constant 2 : i32
    %55 = arith.addi %1, %c2_i32 : i32
    %c0_45 = arith.constant 0 : index
    %c0_46 = arith.constant 0 : index
    %56 = arith.index_cast %55 : i32 to index
    %c0_47 = arith.constant 0 : index
    %c0_48 = arith.constant 0 : index
    %57 = vector.load %arg3[%c0_45, %c0_46, %56, %c0_47, %c0_48] : memref<1x1x34x34x4xbf16, #tpu.memory_space<vmem>>, vector<1x1x16x32x4xbf16>
    %58 = vector.shape_cast %57 : vector<1x1x16x32x4xbf16> to vector<16x32x4xbf16>
    %59 = vector.shape_cast %58 : vector<16x32x4xbf16> to vector<512x4xbf16>
    %c6 = arith.constant 6 : index
    %c0_49 = arith.constant 0 : index
    %c0_50 = arith.constant 0 : index
    %60 = vector.load %arg4[%c6, %c0_49, %c0_50] : memref<9x4x128xbf16, #tpu.memory_space<vmem>>, vector<1x4x128xbf16>
    %61 = vector.shape_cast %60 : vector<1x4x128xbf16> to vector<4x128xbf16>
    %cst_51 = arith.constant dense<0.000000e+00> : vector<512x128xf32>
    %62 = tpu.matmul %59, %61, %cst_51 {dimension_numbers = #tpu.dot_dimension_numbers<[1], [0], [0], [1], [0, 0, 1, 1], [], []>} : vector<512x4xbf16>, vector<4x128xbf16>, vector<512x128xf32> -> vector<512x128xf32>
    %63 = arith.addf %54, %62 : vector<512x128xf32>
    %c2_i32_52 = arith.constant 2 : i32
    %64 = arith.addi %1, %c2_i32_52 : i32
    %c0_53 = arith.constant 0 : index
    %c0_54 = arith.constant 0 : index
    %65 = arith.index_cast %64 : i32 to index
    %c1_55 = arith.constant 1 : index
    %c0_56 = arith.constant 0 : index
    %66 = vector.load %arg3[%c0_53, %c0_54, %65, %c1_55, %c0_56] : memref<1x1x34x34x4xbf16, #tpu.memory_space<vmem>>, vector<1x1x16x32x4xbf16>
    %67 = vector.shape_cast %66 : vector<1x1x16x32x4xbf16> to vector<16x32x4xbf16>
    %68 = vector.shape_cast %67 : vector<16x32x4xbf16> to vector<512x4xbf16>
    %c7 = arith.constant 7 : index
    %c0_57 = arith.constant 0 : index
    %c0_58 = arith.constant 0 : index
    %69 = vector.load %arg4[%c7, %c0_57, %c0_58] : memref<9x4x128xbf16, #tpu.memory_space<vmem>>, vector<1x4x128xbf16>
    %70 = vector.shape_cast %69 : vector<1x4x128xbf16> to vector<4x128xbf16>
    %cst_59 = arith.constant dense<0.000000e+00> : vector<512x128xf32>
    %71 = tpu.matmul %68, %70, %cst_59 {dimension_numbers = #tpu.dot_dimension_numbers<[1], [0], [0], [1], [0, 0, 1, 1], [], []>} : vector<512x4xbf16>, vector<4x128xbf16>, vector<512x128xf32> -> vector<512x128xf32>
    %72 = arith.addf %63, %71 : vector<512x128xf32>
    %c2_i32_60 = arith.constant 2 : i32
    %73 = arith.addi %1, %c2_i32_60 : i32
    %c0_61 = arith.constant 0 : index
    %c0_62 = arith.constant 0 : index
    %74 = arith.index_cast %73 : i32 to index
    %c2_63 = arith.constant 2 : index
    %c0_64 = arith.constant 0 : index
    %75 = vector.load %arg3[%c0_61, %c0_62, %74, %c2_63, %c0_64] : memref<1x1x34x34x4xbf16, #tpu.memory_space<vmem>>, vector<1x1x16x32x4xbf16>
    %76 = vector.shape_cast %75 : vector<1x1x16x32x4xbf16> to vector<16x32x4xbf16>
    %77 = vector.shape_cast %76 : vector<16x32x4xbf16> to vector<512x4xbf16>
    %c8 = arith.constant 8 : index
    %c0_65 = arith.constant 0 : index
    %c0_66 = arith.constant 0 : index
    %78 = vector.load %arg4[%c8, %c0_65, %c0_66] : memref<9x4x128xbf16, #tpu.memory_space<vmem>>, vector<1x4x128xbf16>
    %79 = vector.shape_cast %78 : vector<1x4x128xbf16> to vector<4x128xbf16>
    %cst_67 = arith.constant dense<0.000000e+00> : vector<512x128xf32>
    %80 = tpu.matmul %77, %79, %cst_67 {dimension_numbers = #tpu.dot_dimension_numbers<[1], [0], [0], [1], [0, 0, 1, 1], [], []>} : vector<512x4xbf16>, vector<4x128xbf16>, vector<512x128xf32> -> vector<512x128xf32>
    %81 = arith.addf %72, %80 : vector<512x128xf32>
    %c0_68 = arith.constant 0 : index
    %c0_69 = arith.constant 0 : index
    %82 = vector.load %arg5[%c0_68, %c0_69] : memref<1x128xf32, #tpu.memory_space<vmem>>, vector<1x128xf32>
    %83 = vector.broadcast %82 : vector<1x128xf32> to vector<512x128xf32>
    %84 = arith.addf %81, %83 : vector<512x128xf32>
    %85 = arith.truncf %84 : vector<512x128xf32> to vector<512x128xbf16>
    %c0_70 = arith.constant 0 : index
    %c0_71 = arith.constant 0 : index
    %c0_72 = arith.constant 0 : index
    %c0_73 = arith.constant 0 : index
    %86 = vector.load %arg6[%c0_70, %c0_71, %c0_72, %c0_73] : memref<1x1x512x128xbf16, #tpu.memory_space<vmem>>, vector<1x1x512x128xbf16>
    %87 = vector.shape_cast %86 : vector<1x1x512x128xbf16> to vector<512x128xbf16>
    %88 = vector.shape_cast %85 : vector<512x128xbf16> to vector<1x1x512x128xbf16>
    tpu.vector_store %arg6[%c0_70, %c0_71, %c0_72, %c0_73], %88 {strides = array<i32>} : memref<1x1x512x128xbf16, #tpu.memory_space<vmem>>, vector<1x1x512x128xbf16>,
    return
  }
  func.func @transform_0(%arg0: i32, %arg1: i32, %arg2: i32) -> (i32, i32, i32, i32, i32) {
    %c0_i32 = arith.constant 0 : i32
    %c0_i32_0 = arith.constant 0 : i32
    %c0_i32_1 = arith.constant 0 : i32
    %c0_i32_2 = arith.constant 0 : i32
    return %arg0, %arg1, %c0_i32, %c0_i32_0, %c0_i32_1 : i32, i32, i32, i32, i32
  }
  func.func @transform_1(%arg0: i32, %arg1: i32, %arg2: i32) -> (i32, i32, i32) {
    %c0_i32 = arith.constant 0 : i32
    %c0_i32_0 = arith.constant 0 : i32
    %c0_i32_1 = arith.constant 0 : i32
    %c0_i32_2 = arith.constant 0 : i32
    return %c0_i32, %c0_i32_0, %c0_i32_1 : i32, i32, i32
  }
  func.func @transform_2(%arg0: i32, %arg1: i32, %arg2: i32) -> (i32, i32) {
    %c0_i32 = arith.constant 0 : i32
    %c0_i32_0 = arith.constant 0 : i32
    %c0_i32_1 = arith.constant 0 : i32
    return %c0_i32, %c0_i32_0 : i32, i32
  }
  func.func @transform_3(%arg0: i32, %arg1: i32, %arg2: i32) -> (i32, i32, i32, i32) {
    %c0_i32 = arith.constant 0 : i32
    %c0_i32_0 = arith.constant 0 : i32
    return %arg0, %arg1, %arg2, %c0_i32 : i32, i32, i32, i32
  }
}

</mosaic_0001>

<llo_original>
// kernel: tpu_custom_call.1
$region0: #{tpu_custom_call.1}
  #allocation0 [shape = 'u32[]', space=smem, size = 0x4, offset = 0x4, fixed_abs, tag = 'smem constant byte address 0x4 - core index']
  #allocation1 [shape = 'u32[144,128]{1,0:T(1,128)}', space=vmem, size = 0x12000, scoped, tag = 'internal scratch']
  %s0 = inlined_call_operand.vmem [shape: bf16[3,2,34,34,4], index: 0, kind: input, shape index: {}]
  %s1 = inlined_call_operand.vmem [shape: bf16[9,4,128], index: 1, kind: input, shape index: {}]
  %s2 = inlined_call_operand.vmem [shape: f32[1,128], index: 2, kind: input, shape index: {}]
  %s3 = inlined_call_operand.hbm [shape: bf16[3,2,1024,128], index: 3, kind: output, shape index: {}]
  %s4 = sld [smem:[#allocation0]]
  $region45: #{tpu_custom_call.1} parent=0
    _
  %s6 = ssub.s32 1, %s4
  %s7 = scalar_select 0, %s6, %s4
  $region1: #{tpu_custom_call.1} parent=0
    #allocation2 [shape = 'u8[262144]{0}', space=vmem, size = 0x40000, scoped, tag = 'output window, operand 0']
    #allocation3 [shape = 's32[2]{0}', space=sflag, size = 0x8, scoped, tag = 'scoped memory for tpu_custom_call.1']
    %8 = vsyncpa [#allocation3], 0
    %s9 = scalar_lea.sflag [#allocation3], 1
    %10 = vsyncpa %s9, 0
    loop: start=0, step=1, limit=14
    $region2: #{tpu_custom_call.1} parent=1 // loop_pre_header
      _
    $region3: #{tpu_custom_call.1} parent=1 // loop_header
      %s12 = sphi 0, %s16
      %p13 = scmp.ge.s32.totalorder %s12, 14
      %s19 = sphi 0, %s38
      %s20 = sphi 0, %s34
      %s21 = sphi 0, %s30
      %s22 = sphi 0, %s19
      %s23 = sphi 0, %s20
      %s24 = sphi 0, %s21
      %s25 = sphi 0, %s22
      %s26 = sphi 0, %s23
      %s27 = sphi 0, %s24
      %s43 = sphi 0, %s45
      %s46 = sphi 0, %s43
      %s47 = sphi 0, %s46
      %s63 = sphi 0, %s47
      %s67 = sphi 0, %s67
      %s69 = sphi 0, %s67
      %s70 = sphi 0, %s69
      %s84 = sphi 0, %s70
      %s88 = sphi 0, %s88
      %s90 = sphi 0, %s88
      %s91 = sphi 0, %s90
      %s105 = sphi 0, %s91
      %s115 = sphi 0, %s117
      %s118 = sphi 0, %s115
      %s119 = sphi 0, %s118
      %s135 = sphi 0, %s119
    $region4: #{tpu_custom_call.1} parent=1 // loop_header_branch
      %15 = sbr.rel (%p13) target = $region8
    $region5: #{tpu_custom_call.1} parent=1 // loop_body
      %s17 = ssub.s32 %s12, 1
      %s18 = ssub.s32 %s12, 2
      %s28 = sadd.s32 1, %s21
      %p29 = scmp.ge.s32.totalorder %s28, 2
      %s30 = scalar_select %p29, 0, %s28
      %s31 = sadd.s32 1, %s20
      %s32 = scalar_select %p29, %s31, %s20
      %p33 = scmp.ge.s32.totalorder %s32, 2
      %s34 = scalar_select %p33, 0, %s32
      %s35 = sadd.s32 1, %s19
      %s36 = scalar_select %p33, %s35, %s19
      %p37 = scmp.ge.s32.totalorder %s36, 3
      %s38 = scalar_select %p37, 0, %s36
      %s39 = ssub.s32 %s19, %s38
      %s40 = ssub.s32 %s20, %s34
      %s41 = sor.u32 %s39, %s40
      %p42 = scmp.eq.s32.totalorder %s41, 0
      %s44 = sadd.s32 %s43, 1
      %s45 = scalar_select %p42, %s43, %s44
      %p48 = pneg %p42
      %p49 = scmp.eq.s32.totalorder %s12, 11
      %p50 = por %p48, %p49
      %p51 = scmp.ne.s32.totalorder %s43, %s46
      %p52 = scmp.eq.s32.totalorder %s12, 0
      %p53 = por %p51, %p52
      %p54 = scmp.ne.s32.totalorder %s43, %s46
      %p55 = scmp.eq.s32.totalorder %s17, 11
      %p56 = por %p54, %p55
      %p57 = scmp.ne.s32.totalorder %s46, %s47
      %p58 = scmp.eq.s32.totalorder %s17, 0
      %p59 = por %p57, %p58
      %p60 = scmp.ne.s32.totalorder %s46, %s47
      %p61 = scmp.eq.s32.totalorder %s18, 11
      %p62 = por %p60, %p61
      %p64 = scmp.ne.s32.totalorder %s47, %s63
      %p65 = scmp.eq.s32.totalorder %s18, 0
      %p66 = por %p64, %p65
      %s68 = sadd.s32 %s67, 1
      %p71 = scmp.eq.s32.totalorder %s12, 11
      %p72 = scmp.ne.s32.totalorder %s67, %s69
      %p73 = scmp.eq.s32.totalorder %s12, 0
      %p74 = por %p72, %p73
      %p75 = scmp.ne.s32.totalorder %s67, %s69
      %p76 = scmp.eq.s32.totalorder %s17, 11
      %p77 = por %p75, %p76
      %p78 = scmp.ne.s32.totalorder %s69, %s70
      %p79 = scmp.eq.s32.totalorder %s17, 0
      %p80 = por %p78, %p79
      %p81 = scmp.ne.s32.totalorder %s69, %s70
      %p82 = scmp.eq.s32.totalorder %s18, 11
      %p83 = por %p81, %p82
      %p85 = scmp.ne.s32.totalorder %s70, %s84
      %p86 = scmp.eq.s32.totalorder %s18, 0
      %p87 = por %p85, %p86
      %s89 = sadd.s32 %s88, 1
      %p92 = scmp.eq.s32.totalorder %s12, 11
      %p93 = scmp.ne.s32.totalorder %s88, %s90
      %p94 = scmp.eq.s32.totalorder %s12, 0
      %p95 = por %p93, %p94
      %p96 = scmp.ne.s32.totalorder %s88, %s90
      %p97 = scmp.eq.s32.totalorder %s17, 11
      %p98 = por %p96, %p97
      %p99 = scmp.ne.s32.totalorder %s90, %s91
      %p100 = scmp.eq.s32.totalorder %s17, 0
      %p101 = por %p99, %p100
      %p102 = scmp.ne.s32.totalorder %s90, %s91
      %p103 = scmp.eq.s32.totalorder %s18, 11
      %p104 = por %p102, %p103
      %p106 = scmp.ne.s32.totalorder %s91, %s105
      %p107 = scmp.eq.s32.totalorder %s18, 0
      %p108 = por %p106, %p107
      %s109 = ssub.s32 %s19, %s38
      %s110 = ssub.s32 %s20, %s34
      %s111 = sor.u32 %s109, %s110
      %s112 = ssub.s32 %s21, %s30
      %s113 = sor.u32 %s111, %s112
      %p114 = scmp.eq.s32.totalorder %s113, 0
      %s116 = sadd.s32 %s115, 1
      %s117 = scalar_select %p114, %s115, %s116
      %p120 = pneg %p114
      %p121 = scmp.eq.s32.totalorder %s12, 11
      %p122 = por %p120, %p121
      %p123 = scmp.ne.s32.totalorder %s115, %s118
      %p124 = scmp.eq.s32.totalorder %s12, 0
      %p125 = por %p123, %p124
      %p126 = scmp.ne.s32.totalorder %s115, %s118
      %p127 = scmp.eq.s32.totalorder %s17, 11
      %p128 = por %p126, %p127
      %p129 = scmp.ne.s32.totalorder %s118, %s119
      %p130 = scmp.eq.s32.totalorder %s17, 0
      %p131 = por %p129, %p130
      %p132 = scmp.ne.s32.totalorder %s118, %s119
      %p133 = scmp.eq.s32.totalorder %s18, 11
      %p134 = por %p132, %p133
      %p136 = scmp.ne.s32.totalorder %s119, %s135
      %p137 = scmp.eq.s32.totalorder %s18, 0
      %p138 = por %p136, %p137
      %p139 = scmp.le.s32.totalorder 1, %s12
      %p140 = scmp.lt.s32.totalorder %s12, 13
      %p141 = pnand %p139, %p140
      %p142 = pneg %p141
      // Predicated region
      $region9: #{tpu_custom_call.1} parent=5 // pred_check
        _
      $region10: #{tpu_custom_call.1} parent=5 // pred_check_branch
        %144 = sbr.rel (%p141) target = $region12
      $region11: #{tpu_custom_call.1} parent=5 // pred_region
        %s145 = ssub.s32 %s12, 1
        // Predicated region
        $region13: #{tpu_custom_call.1} parent=11 // pred_check
          %p146 = pneg %p80
        $region14: #{tpu_custom_call.1} parent=11 // pred_check_branch
          %148 = sbr.rel (%p146) target = $region16
        $region15: #{tpu_custom_call.1} parent=11 // pred_region
          _
        $region16: #{tpu_custom_call.1} parent=11 // pred_fallthru
          _
        // Predicated region
        $region17: #{tpu_custom_call.1} parent=11 // pred_check
          %p149 = pneg %p101
        $region18: #{tpu_custom_call.1} parent=11 // pred_check_branch
          %151 = sbr.rel (%p149) target = $region20
        $region19: #{tpu_custom_call.1} parent=11 // pred_region
          _
        $region20: #{tpu_custom_call.1} parent=11 // pred_fallthru
          _
      $region12: #{tpu_custom_call.1} parent=5 // pred_fallthru
        _
      %p152 = scmp.lt.s32.totalorder %s12, 12
      // Predicated region
      $region21: #{tpu_custom_call.1} parent=5 // pred_check
        %p153 = pneg %p152
      $region22: #{tpu_custom_call.1} parent=5 // pred_check_branch
        %155 = sbr.rel (%p153) target = $region24
      $region23: #{tpu_custom_call.1} parent=5 // pred_region
        // Predicated region
        $region25: #{tpu_custom_call.1} parent=23 // pred_check
          %p156 = pneg %p53
        $region26: #{tpu_custom_call.1} parent=23 // pred_check_branch
          %158 = sbr.rel (%p156) target = $region28
        $region27: #{tpu_custom_call.1} parent=23 // pred_region
          %p159 = scmp.lt.s32.totalorder %s19, 2
          %s160 = scalar_select %p159, %s19, 2
          %p161 = scmp.lt.s32.totalorder %s20, 1
          %s162 = scalar_select %p161, %s20, 1
          %s163 = smul.addr %s162, 170
          %s164 = smul.addr %s160, 340
          %s165 = sadd.s32 %s163, %s164
          %s166 = smul.addr %s165, 4
          %s167 = scalar_lea.vmem %s0, %s166
        $region28: #{tpu_custom_call.1} parent=23 // pred_fallthru
          _
      $region24: #{tpu_custom_call.1} parent=5 // pred_fallthru
        _
      %p168 = scmp.le.s32.totalorder 1, %s12
      %p169 = scmp.lt.s32.totalorder %s12, 13
      %p170 = pnand %p168, %p169
      %p171 = pneg %p170
      // Predicated region
      $region29: #{tpu_custom_call.1} parent=5 // pred_check
        _
      $region30: #{tpu_custom_call.1} parent=5 // pred_check_branch
        %173 = sbr.rel (%p170) target = $region32
      $region31: #{tpu_custom_call.1} parent=5 // pred_region
        %s174 = ssub.s32 %s12, 1
        %p175 = scmp.lt.s32.totalorder %s22, 2
        %s176 = scalar_select %p175, %s22, 2
        %p177 = scmp.lt.s32.totalorder %s23, 1
        %s178 = scalar_select %p177, %s23, 1
        %s179 = smul.addr %s178, 170
        %s180 = smul.addr %s176, 340
        %s181 = sadd.s32 %s179, %s180
        %s182 = smul.addr %s181, 4
        %s183 = scalar_lea.vmem %s0, %s182
        %p184 = pneg %p59
        %p185 = pneg %p56
        %p186 = pneg %p80
        %p187 = pneg %p77
        %p188 = pneg %p101
        %p189 = pneg %p98
        %p190 = pneg %p131
        %p191 = pneg %p128
        %s192 = sand.u32 %s118, 1
        %s193 = scalar_lea.sflag [#allocation3], %s192
        %s194 = sand.u32 %s118, 1
        %s195 = smul.addr %s194, 256
        %s196 = scalar_lea.vmem [#allocation2], %s195
        %p197 = scmp.lt.s32.totalorder %s22, 2
        %s198 = scalar_select %p197, %s22, 2
        %p199 = scmp.lt.s32.totalorder %s23, 1
        %s200 = scalar_select %p199, %s23, 1
        %s201 = smul.addr %s200, 170
        %s202 = smul.addr %s198, 340
        %s203 = sadd.s32 %s201, %s202
        %s204 = smul.addr %s203, 4
        %s205 = scalar_lea.vmem %s0, %s204
        %s206 = smul.u32 64, %s24
        %s208 = smul.u32 %s24, 16
        %s209 = smul.u32 %s208, 5
        %s210 = smul.addr %s209, 4
        %s211 = scalar_lea.vmem %s205, %s210
        %v212 = vld [vmem:[%s211] sm:$0xf]
        %v213 = vld [vmem:[%s211 + $0x4] sm:$0xf]
        %v214 = vld [vmem:[%s211 + $0x8] sm:$0xf]
        %v215 = vld [vmem:[%s211 + $0xc] sm:$0xf]
        %v216 = vld [vmem:[%s211 + $0x14] sm:$0xf]
        %v217 = vld [vmem:[%s211 + $0x18] sm:$0xf]
        %v218 = vld [vmem:[%s211 + $0x1c] sm:$0xf]
        %v219 = vld [vmem:[%s211 + $0x20] sm:$0xf]
        %v220 = vld [vmem:[%s211 + $0x28] sm:$0xf]
        %v221 = vld [vmem:[%s211 + $0x2c] sm:$0xf]
        %v222 = vld [vmem:[%s211 + $0x30] sm:$0xf]
        %v223 = vld [vmem:[%s211 + $0x34] sm:$0xf]
        %v224 = vld [vmem:[%s211 + $0x3c] sm:$0xf]
        %v225 = vld [vmem:[%s211 + $0x40] sm:$0xf]
        %v226 = vld [vmem:[%s211 + $0x44] sm:$0xf]
        %v227 = vld [vmem:[%s211 + $0x48] sm:$0xf]
        %v228 = vld [vmem:[%s211 + $0x50] sm:$0xf]
        %v229 = vld [vmem:[%s211 + $0x54] sm:$0xf]
        %v230 = vld [vmem:[%s211 + $0x58] sm:$0xf]
        %v231 = vld [vmem:[%s211 + $0x5c] sm:$0xf]
        %v232 = vld [vmem:[%s211 + $0x64] sm:$0xf]
        %v233 = vld [vmem:[%s211 + $0x68] sm:$0xf]
        %v234 = vld [vmem:[%s211 + $0x6c] sm:$0xf]
        %v235 = vld [vmem:[%s211 + $0x70] sm:$0xf]
        %v236 = vld [vmem:[%s211 + $0x78] sm:$0xf]
        %v237 = vld [vmem:[%s211 + $0x7c] sm:$0xf]
        %v238 = vld [vmem:[%s211 + $0x80] sm:$0xf]
        %v239 = vld [vmem:[%s211 + $0x84] sm:$0xf]
        %v240 = vld [vmem:[%s211 + $0x8c] sm:$0xf]
        %v241 = vld [vmem:[%s211 + $0x90] sm:$0xf]
        %v242 = vld [vmem:[%s211 + $0x94] sm:$0xf]
        %v243 = vld [vmem:[%s211 + $0x98] sm:$0xf]
        %v244 = vld [vmem:[%s211 + $0xa0] sm:$0xf]
        %v245 = vld [vmem:[%s211 + $0xa4] sm:$0xf]
        %v246 = vld [vmem:[%s211 + $0xa8] sm:$0xf]
        %v247 = vld [vmem:[%s211 + $0xac] sm:$0xf]
        %v248 = vld [vmem:[%s211 + $0xb4] sm:$0xf]
        %v249 = vld [vmem:[%s211 + $0xb8] sm:$0xf]
        %v250 = vld [vmem:[%s211 + $0xbc] sm:$0xf]
        %v251 = vld [vmem:[%s211 + $0xc0] sm:$0xf]
        %v252 = vld [vmem:[%s211 + $0xc8] sm:$0xf]
        %v253 = vld [vmem:[%s211 + $0xcc] sm:$0xf]
        %v254 = vld [vmem:[%s211 + $0xd0] sm:$0xf]
        %v255 = vld [vmem:[%s211 + $0xd4] sm:$0xf]
        %v256 = vld [vmem:[%s211 + $0xdc] sm:$0xf]
        %v257 = vld [vmem:[%s211 + $0xe0] sm:$0xf]
        %v258 = vld [vmem:[%s211 + $0xe4] sm:$0xf]
        %v259 = vld [vmem:[%s211 + $0xe8] sm:$0xf]
        %v260 = vld [vmem:[%s211 + $0xf0] sm:$0xf]
        %v261 = vld [vmem:[%s211 + $0xf4] sm:$0xf]
        %v262 = vld [vmem:[%s211 + $0xf8] sm:$0xf]
        %v263 = vld [vmem:[%s211 + $0xfc] sm:$0xf]
        %v264 = vld [vmem:[%s211 + $0x104] sm:$0xf]
        %v265 = vld [vmem:[%s211 + $0x108] sm:$0xf]
        %v266 = vld [vmem:[%s211 + $0x10c] sm:$0xf]
        %v267 = vld [vmem:[%s211 + $0x110] sm:$0xf]
        %v268 = vld [vmem:[%s211 + $0x118] sm:$0xf]
        %v269 = vld [vmem:[%s211 + $0x11c] sm:$0xf]
        %v270 = vld [vmem:[%s211 + $0x120] sm:$0xf]
        %v271 = vld [vmem:[%s211 + $0x124] sm:$0xf]
        %v272 = vld [vmem:[%s211 + $0x12c] sm:$0xf]
        %v273 = vld [vmem:[%s211 + $0x130] sm:$0xf]
        %v274 = vld [vmem:[%s211 + $0x134] sm:$0xf]
        %v275 = vld [vmem:[%s211 + $0x138] sm:$0xf]
        %v276 = vld [vmem:[%s1] sm:$0x3]
        %v277 = vld [vmem:[%s211 + $0x10] sm:$0x1]
        %v278 = vld [vmem:[%s211 + $0x24] sm:$0x1]
        %v279 = vld [vmem:[%s211 + $0x38] sm:$0x1]
        %v280 = vld [vmem:[%s211 + $0x4c] sm:$0x1]
        %v281 = vld [vmem:[%s211 + $0x60] sm:$0x1]
        %v282 = vld [vmem:[%s211 + $0x74] sm:$0x1]
        %v283 = vld [vmem:[%s211 + $0x88] sm:$0x1]
        %v284 = vld [vmem:[%s211 + $0x9c] sm:$0x1]
        %v285 = vld [vmem:[%s211 + $0xb0] sm:$0x1]
        %v286 = vld [vmem:[%s211 + $0xc4] sm:$0x1]
        %v287 = vld [vmem:[%s211 + $0xd8] sm:$0x1]
        %v288 = vld [vmem:[%s211 + $0xec] sm:$0x1]
        %v289 = vld [vmem:[%s211 + $0x100] sm:$0x1]
        %v290 = vld [vmem:[%s211 + $0x114] sm:$0x1]
        %v291 = vld [vmem:[%s211 + $0x128] sm:$0x1]
        %v292 = vld [vmem:[%s211 + $0x13c] sm:$0x1]
        %vm293 = vsmask.f32 3328
        %vm294 = vsmask.f32 7440
        %vm295 = vmor %vm293, %vm294
        %v297 = vshrl.u32 %v212, 16
        %v299 = vrot.slane %v297, 4
        %v300 = vshll.u32 %v212, 16
        %v302 = vrot.slane %v300, 5
        %v303 = vor.u32 %v299, %v302
        %v304 = vrot.slane %v303, 4
        %v306 = vshll.u32 %v213, 16
        %v308 = vrot.slane %v306, 5
        %v309 = vsel %vm295, %v304, %v308
        %v310 = vshrl.u32 %v213, 16
        %v312 = vrot.slane %v310, 4
        %v313 = vor.u32 %v312, %v308
        %v314 = vrot.slane %v313, 4
        %v316 = vshll.u32 %v214, 16
        %v318 = vrot.slane %v316, 5
        %v319 = vsel %vm295, %v314, %v318
        %v320 = vshrl.u32 %v214, 16
        %v322 = vrot.slane %v320, 4
        %v323 = vor.u32 %v322, %v318
        %v324 = vrot.slane %v323, 4
        %v326 = vshll.u32 %v215, 16
        %v328 = vrot.slane %v326, 5
        %v329 = vsel %vm295, %v324, %v328
        %v330 = vshrl.u32 %v215, 16
        %v332 = vrot.slane %v330, 4
        %v333 = vor.u32 %v332, %v328
        %v334 = vrot.slane %v333, 4
        %v336 = vshll.u32 %v277, 16
        %v338 = vrot.slane %v336, 5
        %v339 = vsel %vm295, %v334, %v338
        %v341 = vshrl.u32 %v216, 16
        %v343 = vrot.slane %v341, 4
        %v344 = vshll.u32 %v216, 16
        %v346 = vrot.slane %v344, 5
        %v347 = vor.u32 %v343, %v346
        %v348 = vrot.slane %v347, 4
        %v350 = vshll.u32 %v217, 16
        %v352 = vrot.slane %v350, 5
        %v353 = vsel %vm295, %v348, %v352
        %v354 = vshrl.u32 %v217, 16
        %v356 = vrot.slane %v354, 4
        %v357 = vor.u32 %v356, %v352
        %v358 = vrot.slane %v357, 4
        %v360 = vshll.u32 %v218, 16
        %v362 = vrot.slane %v360, 5
        %v363 = vsel %vm295, %v358, %v362
        %v364 = vshrl.u32 %v218, 16
        %v366 = vrot.slane %v364, 4
        %v367 = vor.u32 %v366, %v362
        %v368 = vrot.slane %v367, 4
        %v370 = vshll.u32 %v219, 16
        %v372 = vrot.slane %v370, 5
        %v373 = vsel %vm295, %v368, %v372
        %v374 = vshrl.u32 %v219, 16
        %v376 = vrot.slane %v374, 4
        %v377 = vor.u32 %v376, %v372
        %v378 = vrot.slane %v377, 4
        %v380 = vshll.u32 %v278, 16
        %v382 = vrot.slane %v380, 5
        %v383 = vsel %vm295, %v378, %v382
        %v385 = vshrl.u32 %v220, 16
        %v387 = vrot.slane %v385, 4
        %v388 = vshll.u32 %v220, 16
        %v390 = vrot.slane %v388, 5
        %v391 = vor.u32 %v387, %v390
        %v392 = vrot.slane %v391, 4
        %v394 = vshll.u32 %v221, 16
        %v396 = vrot.slane %v394, 5
        %v397 = vsel %vm295, %v392, %v396
        %v398 = vshrl.u32 %v221, 16
        %v400 = vrot.slane %v398, 4
        %v401 = vor.u32 %v400, %v396
        %v402 = vrot.slane %v401, 4
        %v404 = vshll.u32 %v222, 16
        %v406 = vrot.slane %v404, 5
        %v407 = vsel %vm295, %v402, %v406
        %v408 = vshrl.u32 %v222, 16
        %v410 = vrot.slane %v408, 4
        %v411 = vor.u32 %v410, %v406
        %v412 = vrot.slane %v411, 4
        %v414 = vshll.u32 %v223, 16
        %v416 = vrot.slane %v414, 5
        %v417 = vsel %vm295, %v412, %v416
        %v418 = vshrl.u32 %v223, 16
        %v420 = vrot.slane %v418, 4
        %v421 = vor.u32 %v420, %v416
        %v422 = vrot.slane %v421, 4
        %v424 = vshll.u32 %v279, 16
        %v426 = vrot.slane %v424, 5
        %v427 = vsel %vm295, %v422, %v426
        %v429 = vshrl.u32 %v224, 16
        %v431 = vrot.slane %v429, 4
        %v432 = vshll.u32 %v224, 16
        %v434 = vrot.slane %v432, 5
        %v435 = vor.u32 %v431, %v434
        %v436 = vrot.slane %v435, 4
        %v438 = vshll.u32 %v225, 16
        %v440 = vrot.slane %v438, 5
        %v441 = vsel %vm295, %v436, %v440
        %v442 = vshrl.u32 %v225, 16
        %v444 = vrot.slane %v442, 4
        %v445 = vor.u32 %v444, %v440
        %v446 = vrot.slane %v445, 4
        %v448 = vshll.u32 %v226, 16
        %v450 = vrot.slane %v448, 5
        %v451 = vsel %vm295, %v446, %v450
        %v452 = vshrl.u32 %v226, 16
        %v454 = vrot.slane %v452, 4
        %v455 = vor.u32 %v454, %v450
        %v456 = vrot.slane %v455, 4
        %v458 = vshll.u32 %v227, 16
        %v460 = vrot.slane %v458, 5
        %v461 = vsel %vm295, %v456, %v460
        %v462 = vshrl.u32 %v227, 16
        %v464 = vrot.slane %v462, 4
        %v465 = vor.u32 %v464, %v460
        %v466 = vrot.slane %v465, 4
        %v468 = vshll.u32 %v280, 16
        %v470 = vrot.slane %v468, 5
        %v471 = vsel %vm295, %v466, %v470
        %v473 = vshrl.u32 %v228, 16
        %v475 = vrot.slane %v473, 4
        %v476 = vshll.u32 %v228, 16
        %v478 = vrot.slane %v476, 5
        %v479 = vor.u32 %v475, %v478
        %v480 = vrot.slane %v479, 4
        %v482 = vshll.u32 %v229, 16
        %v484 = vrot.slane %v482, 5
        %v485 = vsel %vm295, %v480, %v484
        %v486 = vshrl.u32 %v229, 16
        %v488 = vrot.slane %v486, 4
        %v489 = vor.u32 %v488, %v484
        %v490 = vrot.slane %v489, 4
        %v492 = vshll.u32 %v230, 16
        %v494 = vrot.slane %v492, 5
        %v495 = vsel %vm295, %v490, %v494
        %v496 = vshrl.u32 %v230, 16
        %v498 = vrot.slane %v496, 4
        %v499 = vor.u32 %v498, %v494
        %v500 = vrot.slane %v499, 4
        %v502 = vshll.u32 %v231, 16
        %v504 = vrot.slane %v502, 5
        %v505 = vsel %vm295, %v500, %v504
        %v506 = vshrl.u32 %v231, 16
        %v508 = vrot.slane %v506, 4
        %v509 = vor.u32 %v508, %v504
        %v510 = vrot.slane %v509, 4
        %v512 = vshll.u32 %v281, 16
        %v514 = vrot.slane %v512, 5
        %v515 = vsel %vm295, %v510, %v514
        %v517 = vshrl.u32 %v232, 16
        %v519 = vrot.slane %v517, 4
        %v520 = vshll.u32 %v232, 16
        %v522 = vrot.slane %v520, 5
        %v523 = vor.u32 %v519, %v522
        %v524 = vrot.slane %v523, 4
        %v526 = vshll.u32 %v233, 16
        %v528 = vrot.slane %v526, 5
        %v529 = vsel %vm295, %v524, %v528
        %v530 = vshrl.u32 %v233, 16
        %v532 = vrot.slane %v530, 4
        %v533 = vor.u32 %v532, %v528
        %v534 = vrot.slane %v533, 4
        %v536 = vshll.u32 %v234, 16
        %v538 = vrot.slane %v536, 5
        %v539 = vsel %vm295, %v534, %v538
        %v540 = vshrl.u32 %v234, 16
        %v542 = vrot.slane %v540, 4
        %v543 = vor.u32 %v542, %v538
        %v544 = vrot.slane %v543, 4
        %v546 = vshll.u32 %v235, 16
        %v548 = vrot.slane %v546, 5
        %v549 = vsel %vm295, %v544, %v548
        %v550 = vshrl.u32 %v235, 16
        %v552 = vrot.slane %v550, 4
        %v553 = vor.u32 %v552, %v548
        %v554 = vrot.slane %v553, 4
        %v556 = vshll.u32 %v282, 16
        %v558 = vrot.slane %v556, 5
        %v559 = vsel %vm295, %v554, %v558
        %v561 = vshrl.u32 %v236, 16
        %v563 = vrot.slane %v561, 4
        %v564 = vshll.u32 %v236, 16
        %v566 = vrot.slane %v564, 5
        %v567 = vor.u32 %v563, %v566
        %v568 = vrot.slane %v567, 4
        %v570 = vshll.u32 %v237, 16
        %v572 = vrot.slane %v570, 5
        %v573 = vsel %vm295, %v568, %v572
        %v574 = vshrl.u32 %v237, 16
        %v576 = vrot.slane %v574, 4
        %v577 = vor.u32 %v576, %v572
        %v578 = vrot.slane %v577, 4
        %v580 = vshll.u32 %v238, 16
        %v582 = vrot.slane %v580, 5
        %v583 = vsel %vm295, %v578, %v582
        %v584 = vshrl.u32 %v238, 16
        %v586 = vrot.slane %v584, 4
        %v587 = vor.u32 %v586, %v582
        %v588 = vrot.slane %v587, 4
        %v590 = vshll.u32 %v239, 16
        %v592 = vrot.slane %v590, 5
        %v593 = vsel %vm295, %v588, %v592
        %v594 = vshrl.u32 %v239, 16
        %v596 = vrot.slane %v594, 4
        %v597 = vor.u32 %v596, %v592
        %v598 = vrot.slane %v597, 4
        %v600 = vshll.u32 %v283, 16
        %v602 = vrot.slane %v600, 5
        %v603 = vsel %vm295, %v598, %v602
        %v605 = vshrl.u32 %v240, 16
        %v607 = vrot.slane %v605, 4
        %v608 = vshll.u32 %v240, 16
        %v610 = vrot.slane %v608, 5
        %v611 = vor.u32 %v607, %v610
        %v612 = vrot.slane %v611, 4
        %v614 = vshll.u32 %v241, 16
        %v616 = vrot.slane %v614, 5
        %v617 = vsel %vm295, %v612, %v616
        %v618 = vshrl.u32 %v241, 16
        %v620 = vrot.slane %v618, 4
        %v621 = vor.u32 %v620, %v616
        %v622 = vrot.slane %v621, 4
        %v624 = vshll.u32 %v242, 16
        %v626 = vrot.slane %v624, 5
        %v627 = vsel %vm295, %v622, %v626
        %v628 = vshrl.u32 %v242, 16
        %v630 = vrot.slane %v628, 4
        %v631 = vor.u32 %v630, %v626
        %v632 = vrot.slane %v631, 4
        %v634 = vshll.u32 %v243, 16
        %v636 = vrot.slane %v634, 5
        %v637 = vsel %vm295, %v632, %v636
        %v638 = vshrl.u32 %v243, 16
        %v640 = vrot.slane %v638, 4
        %v641 = vor.u32 %v640, %v636
        %v642 = vrot.slane %v641, 4
        %v644 = vshll.u32 %v284, 16
        %v646 = vrot.slane %v644, 5
        %v647 = vsel %vm295, %v642, %v646
        %v649 = vshrl.u32 %v244, 16
        %v651 = vrot.slane %v649, 4
        %v652 = vshll.u32 %v244, 16
        %v654 = vrot.slane %v652, 5
        %v655 = vor.u32 %v651, %v654
        %v656 = vrot.slane %v655, 4
        %v658 = vshll.u32 %v245, 16
        %v660 = vrot.slane %v658, 5
        %v661 = vsel %vm295, %v656, %v660
        %v662 = vshrl.u32 %v245, 16
        %v664 = vrot.slane %v662, 4
        %v665 = vor.u32 %v664, %v660
        %v666 = vrot.slane %v665, 4
        %v668 = vshll.u32 %v246, 16
        %v670 = vrot.slane %v668, 5
        %v671 = vsel %vm295, %v666, %v670
        %v672 = vshrl.u32 %v246, 16
        %v674 = vrot.slane %v672, 4
        %v675 = vor.u32 %v674, %v670
        %v676 = vrot.slane %v675, 4
        %v678 = vshll.u32 %v247, 16
        %v680 = vrot.slane %v678, 5
        %v681 = vsel %vm295, %v676, %v680
        %v682 = vshrl.u32 %v247, 16
        %v684 = vrot.slane %v682, 4
        %v685 = vor.u32 %v684, %v680
        %v686 = vrot.slane %v685, 4
        %v688 = vshll.u32 %v285, 16
        %v690 = vrot.slane %v688, 5
        %v691 = vsel %vm295, %v686, %v690
        %v693 = vshrl.u32 %v248, 16
        %v695 = vrot.slane %v693, 4
        %v696 = vshll.u32 %v248, 16
        %v698 = vrot.slane %v696, 5
        %v699 = vor.u32 %v695, %v698
        %v700 = vrot.slane %v699, 4
        %v702 = vshll.u32 %v249, 16
        %v704 = vrot.slane %v702, 5
        %v705 = vsel %vm295, %v700, %v704
        %v706 = vshrl.u32 %v249, 16
        %v708 = vrot.slane %v706, 4
        %v709 = vor.u32 %v708, %v704
        %v710 = vrot.slane %v709, 4
        %v712 = vshll.u32 %v250, 16
        %v714 = vrot.slane %v712, 5
        %v715 = vsel %vm295, %v710, %v714
        %v716 = vshrl.u32 %v250, 16
        %v718 = vrot.slane %v716, 4
        %v719 = vor.u32 %v718, %v714
        %v720 = vrot.slane %v719, 4
        %v722 = vshll.u32 %v251, 16
        %v724 = vrot.slane %v722, 5
        %v725 = vsel %vm295, %v720, %v724
        %v726 = vshrl.u32 %v251, 16
        %v728 = vrot.slane %v726, 4
        %v729 = vor.u32 %v728, %v724
        %v730 = vrot.slane %v729, 4
        %v732 = vshll.u32 %v286, 16
        %v734 = vrot.slane %v732, 5
        %v735 = vsel %vm295, %v730, %v734
        %v737 = vshrl.u32 %v252, 16
        %v739 = vrot.slane %v737, 4
        %v740 = vshll.u32 %v252, 16
        %v742 = vrot.slane %v740, 5
        %v743 = vor.u32 %v739, %v742
        %v744 = vrot.slane %v743, 4
        %v746 = vshll.u32 %v253, 16
        %v748 = vrot.slane %v746, 5
        %v749 = vsel %vm295, %v744, %v748
        %v750 = vshrl.u32 %v253, 16
        %v752 = vrot.slane %v750, 4
        %v753 = vor.u32 %v752, %v748
        %v754 = vrot.slane %v753, 4
        %v756 = vshll.u32 %v254, 16
        %v758 = vrot.slane %v756, 5
        %v759 = vsel %vm295, %v754, %v758
        %v760 = vshrl.u32 %v254, 16
        %v762 = vrot.slane %v760, 4
        %v763 = vor.u32 %v762, %v758
        %v764 = vrot.slane %v763, 4
        %v766 = vshll.u32 %v255, 16
        %v768 = vrot.slane %v766, 5
        %v769 = vsel %vm295, %v764, %v768
        %v770 = vshrl.u32 %v255, 16
        %v772 = vrot.slane %v770, 4
        %v773 = vor.u32 %v772, %v768
        %v774 = vrot.slane %v773, 4
        %v776 = vshll.u32 %v287, 16
        %v778 = vrot.slane %v776, 5
        %v779 = vsel %vm295, %v774, %v778
        %v781 = vshrl.u32 %v256, 16
        %v783 = vrot.slane %v781, 4
        %v784 = vshll.u32 %v256, 16
        %v786 = vrot.slane %v784, 5
        %v787 = vor.u32 %v783, %v786
        %v788 = vrot.slane %v787, 4
        %v790 = vshll.u32 %v257, 16
        %v792 = vrot.slane %v790, 5
        %v793 = vsel %vm295, %v788, %v792
        %v794 = vshrl.u32 %v257, 16
        %v796 = vrot.slane %v794, 4
        %v797 = vor.u32 %v796, %v792
        %v798 = vrot.slane %v797, 4
        %v800 = vshll.u32 %v258, 16
        %v802 = vrot.slane %v800, 5
        %v803 = vsel %vm295, %v798, %v802
        %v804 = vshrl.u32 %v258, 16
        %v806 = vrot.slane %v804, 4
        %v807 = vor.u32 %v806, %v802
        %v808 = vrot.slane %v807, 4
        %v810 = vshll.u32 %v259, 16
        %v812 = vrot.slane %v810, 5
        %v813 = vsel %vm295, %v808, %v812
        %v814 = vshrl.u32 %v259, 16
        %v816 = vrot.slane %v814, 4
        %v817 = vor.u32 %v816, %v812
        %v818 = vrot.slane %v817, 4
        %v820 = vshll.u32 %v288, 16
        %v822 = vrot.slane %v820, 5
        %v823 = vsel %vm295, %v818, %v822
        %v825 = vshrl.u32 %v260, 16
        %v827 = vrot.slane %v825, 4
        %v828 = vshll.u32 %v260, 16
        %v830 = vrot.slane %v828, 5
        %v831 = vor.u32 %v827, %v830
        %v832 = vrot.slane %v831, 4
        %v834 = vshll.u32 %v261, 16
        %v836 = vrot.slane %v834, 5
        %v837 = vsel %vm295, %v832, %v836
        %v838 = vshrl.u32 %v261, 16
        %v840 = vrot.slane %v838, 4
        %v841 = vor.u32 %v840, %v836
        %v842 = vrot.slane %v841, 4
        %v844 = vshll.u32 %v262, 16
        %v846 = vrot.slane %v844, 5
        %v847 = vsel %vm295, %v842, %v846
        %v848 = vshrl.u32 %v262, 16
        %v850 = vrot.slane %v848, 4
        %v851 = vor.u32 %v850, %v846
        %v852 = vrot.slane %v851, 4
        %v854 = vshll.u32 %v263, 16
        %v856 = vrot.slane %v854, 5
        %v857 = vsel %vm295, %v852, %v856
        %v858 = vshrl.u32 %v263, 16
        %v860 = vrot.slane %v858, 4
        %v861 = vor.u32 %v860, %v856
        %v862 = vrot.slane %v861, 4
        %v864 = vshll.u32 %v289, 16
        %v866 = vrot.slane %v864, 5
        %v867 = vsel %vm295, %v862, %v866
        %v869 = vshrl.u32 %v264, 16
        %v871 = vrot.slane %v869, 4
        %v872 = vshll.u32 %v264, 16
        %v874 = vrot.slane %v872, 5
        %v875 = vor.u32 %v871, %v874
        %v876 = vrot.slane %v875, 4
        %v878 = vshll.u32 %v265, 16
        %v880 = vrot.slane %v878, 5
        %v881 = vsel %vm295, %v876, %v880
        %v882 = vshrl.u32 %v265, 16
        %v884 = vrot.slane %v882, 4
        %v885 = vor.u32 %v884, %v880
        %v886 = vrot.slane %v885, 4
        %v888 = vshll.u32 %v266, 16
        %v890 = vrot.slane %v888, 5
        %v891 = vsel %vm295, %v886, %v890
        %v892 = vshrl.u32 %v266, 16
        %v894 = vrot.slane %v892, 4
        %v895 = vor.u32 %v894, %v890
        %v896 = vrot.slane %v895, 4
        %v898 = vshll.u32 %v267, 16
        %v900 = vrot.slane %v898, 5
        %v901 = vsel %vm295, %v896, %v900
        %v902 = vshrl.u32 %v267, 16
        %v904 = vrot.slane %v902, 4
        %v905 = vor.u32 %v904, %v900
        %v906 = vrot.slane %v905, 4
        %v908 = vshll.u32 %v290, 16
        %v910 = vrot.slane %v908, 5
        %v911 = vsel %vm295, %v906, %v910
        %v913 = vshrl.u32 %v268, 16
        %v915 = vrot.slane %v913, 4
        %v916 = vshll.u32 %v268, 16
        %v918 = vrot.slane %v916, 5
        %v919 = vor.u32 %v915, %v918
        %v920 = vrot.slane %v919, 4
        %v922 = vshll.u32 %v269, 16
        %v924 = vrot.slane %v922, 5
        %v925 = vsel %vm295, %v920, %v924
        %v926 = vshrl.u32 %v269, 16
        %v928 = vrot.slane %v926, 4
        %v929 = vor.u32 %v928, %v924
        %v930 = vrot.slane %v929, 4
        %v932 = vshll.u32 %v270, 16
        %v934 = vrot.slane %v932, 5
        %v935 = vsel %vm295, %v930, %v934
        %v936 = vshrl.u32 %v270, 16
        %v938 = vrot.slane %v936, 4
        %v939 = vor.u32 %v938, %v934
        %v940 = vrot.slane %v939, 4
        %v942 = vshll.u32 %v271, 16
        %v944 = vrot.slane %v942, 5
        %v945 = vsel %vm295, %v940, %v944
        %v946 = vshrl.u32 %v271, 16
        %v948 = vrot.slane %v946, 4
        %v949 = vor.u32 %v948, %v944
        %v950 = vrot.slane %v949, 4
        %v952 = vshll.u32 %v291, 16
        %v954 = vrot.slane %v952, 5
        %v955 = vsel %vm295, %v950, %v954
        %v957 = vshrl.u32 %v272, 16
        %v959 = vrot.slane %v957, 4
        %v960 = vshll.u32 %v272, 16
        %v962 = vrot.slane %v960, 5
        %v963 = vor.u32 %v959, %v962
        %v964 = vrot.slane %v963, 4
        %v966 = vshll.u32 %v273, 16
        %v968 = vrot.slane %v966, 5
        %v969 = vsel %vm295, %v964, %v968
        %v970 = vshrl.u32 %v273, 16
        %v972 = vrot.slane %v970, 4
        %v973 = vor.u32 %v972, %v968
        %v974 = vrot.slane %v973, 4
        %v976 = vshll.u32 %v274, 16
        %v978 = vrot.slane %v976, 5
        %v979 = vsel %vm295, %v974, %v978
        %v980 = vshrl.u32 %v274, 16
        %v982 = vrot.slane %v980, 4
        %v983 = vor.u32 %v982, %v978
        %v984 = vrot.slane %v983, 4
        %v986 = vshll.u32 %v275, 16
        %v988 = vrot.slane %v986, 5
        %v989 = vsel %vm295, %v984, %v988
        %v990 = vshrl.u32 %v275, 16
        %v992 = vrot.slane %v990, 4
        %v993 = vor.u32 %v992, %v988
        %v994 = vrot.slane %v993, 4
        %v996 = vshll.u32 %v292, 16
        %v998 = vrot.slane %v996, 5
        %v999 = vsel %vm295, %v994, %v998
        %s1000 = scalar_lea.vmem %s1, 2
        %v1001 = vld [vmem:[%s1000] sm:$0x3]
        %v1002 = vunpack.c.l.b16 %v309
        %v1003 = vunpack.c.l.b16 %v319
        %v1004 = vunpack.c.l.b16 %v329
        %v1005 = vunpack.c.l.b16 %v339
        %v1006 = vunpack.c.l.b16 %v353
        %v1007 = vunpack.c.l.b16 %v363
        %v1008 = vunpack.c.l.b16 %v373
        %v1009 = vunpack.c.l.b16 %v383
        %v1010 = vunpack.c.l.b16 %v397
        %v1011 = vunpack.c.l.b16 %v407
        %v1012 = vunpack.c.l.b16 %v417
        %v1013 = vunpack.c.l.b16 %v427
        %v1014 = vunpack.c.l.b16 %v441
        %v1015 = vunpack.c.l.b16 %v451
        %v1016 = vunpack.c.l.b16 %v461
        %v1017 = vunpack.c.l.b16 %v471
        %v1018 = vunpack.c.l.b16 %v485
        %v1019 = vunpack.c.l.b16 %v495
        %v1020 = vunpack.c.l.b16 %v505
        %v1021 = vunpack.c.l.b16 %v515
        %v1022 = vunpack.c.l.b16 %v529
        %v1023 = vunpack.c.l.b16 %v539
        %v1024 = vunpack.c.l.b16 %v549
        %v1025 = vunpack.c.l.b16 %v559
        %v1026 = vunpack.c.l.b16 %v573
        %v1027 = vunpack.c.l.b16 %v583
        %v1028 = vunpack.c.l.b16 %v593
        %v1029 = vunpack.c.l.b16 %v603
        %v1030 = vunpack.c.l.b16 %v617
        %v1031 = vunpack.c.l.b16 %v627
        %v1032 = vunpack.c.l.b16 %v637
        %v1033 = vunpack.c.l.b16 %v647
        %v1034 = vunpack.c.l.b16 %v661
        %v1035 = vunpack.c.l.b16 %v671
        %v1036 = vunpack.c.l.b16 %v681
        %v1037 = vunpack.c.l.b16 %v691
        %v1038 = vunpack.c.l.b16 %v705
        %v1039 = vunpack.c.l.b16 %v715
        %v1040 = vunpack.c.l.b16 %v725
        %v1041 = vunpack.c.l.b16 %v735
        %v1042 = vunpack.c.l.b16 %v749
        %v1043 = vunpack.c.l.b16 %v759
        %v1044 = vunpack.c.l.b16 %v769
        %v1045 = vunpack.c.l.b16 %v779
        %v1046 = vunpack.c.l.b16 %v793
        %v1047 = vunpack.c.l.b16 %v803
        %v1048 = vunpack.c.l.b16 %v813
        %v1049 = vunpack.c.l.b16 %v823
        %v1050 = vunpack.c.l.b16 %v837
        %v1051 = vunpack.c.l.b16 %v847
        %v1052 = vunpack.c.l.b16 %v857
        %v1053 = vunpack.c.l.b16 %v867
        %v1054 = vunpack.c.l.b16 %v881
        %v1055 = vunpack.c.l.b16 %v891
        %v1056 = vunpack.c.l.b16 %v901
        %v1057 = vunpack.c.l.b16 %v911
        %v1058 = vunpack.c.l.b16 %v925
        %v1059 = vunpack.c.l.b16 %v935
        %v1060 = vunpack.c.l.b16 %v945
        %v1061 = vunpack.c.l.b16 %v955
        %v1062 = vunpack.c.l.b16 %v969
        %v1063 = vunpack.c.l.b16 %v979
        %v1064 = vunpack.c.l.b16 %v989
        %v1065 = vunpack.c.l.b16 %v999
        %v1066 = vpack.c.b16 %v1003, %v1002
        %v1067 = vpack.c.b16 %v1005, %v1004
        %v1068 = vpack.c.b16 %v1007, %v1006
        %v1069 = vpack.c.b16 %v1009, %v1008
        %v1070 = vpack.c.b16 %v1011, %v1010
        %v1071 = vpack.c.b16 %v1013, %v1012
        %v1072 = vpack.c.b16 %v1015, %v1014
        %v1073 = vpack.c.b16 %v1017, %v1016
        %v1074 = vpack.c.b16 %v1019, %v1018
        %v1075 = vpack.c.b16 %v1021, %v1020
        %v1076 = vpack.c.b16 %v1023, %v1022
        %v1077 = vpack.c.b16 %v1025, %v1024
        %v1078 = vpack.c.b16 %v1027, %v1026
        %v1079 = vpack.c.b16 %v1029, %v1028
        %v1080 = vpack.c.b16 %v1031, %v1030
        %v1081 = vpack.c.b16 %v1033, %v1032
        %v1082 = vpack.c.b16 %v1035, %v1034
        %v1083 = vpack.c.b16 %v1037, %v1036
        %v1084 = vpack.c.b16 %v1039, %v1038
        %v1085 = vpack.c.b16 %v1041, %v1040
        %v1086 = vpack.c.b16 %v1043, %v1042
        %v1087 = vpack.c.b16 %v1045, %v1044
        %v1088 = vpack.c.b16 %v1047, %v1046
        %v1089 = vpack.c.b16 %v1049, %v1048
        %v1090 = vpack.c.b16 %v1051, %v1050
        %v1091 = vpack.c.b16 %v1053, %v1052
        %v1092 = vpack.c.b16 %v1055, %v1054
        %v1093 = vpack.c.b16 %v1057, %v1056
        %v1094 = vpack.c.b16 %v1059, %v1058
        %v1095 = vpack.c.b16 %v1061, %v1060
        %v1096 = vpack.c.b16 %v1063, %v1062
        %v1097 = vpack.c.b16 %v1065, %v1064
        %vm1098 = vcmask 31744
        %v1100 = vsel %vm1098, %v1066, 0
        %v1103 = vsel %vm1098, %v1067, 0
        %v1106 = vsel %vm1098, %v1068, 0
        %v1109 = vsel %vm1098, %v1069, 0
        %v1112 = vsel %vm1098, %v1070, 0
        %v1115 = vsel %vm1098, %v1071, 0
        %v1118 = vsel %vm1098, %v1072, 0
        %v1121 = vsel %vm1098, %v1073, 0
        %v1124 = vsel %vm1098, %v1074, 0
        %v1127 = vsel %vm1098, %v1075, 0
        %v1130 = vsel %vm1098, %v1076, 0
        %v1133 = vsel %vm1098, %v1077, 0
        %v1136 = vsel %vm1098, %v1078, 0
        %v1139 = vsel %vm1098, %v1079, 0
        %v1142 = vsel %vm1098, %v1080, 0
        %v1145 = vsel %vm1098, %v1081, 0
        %v1148 = vsel %vm1098, %v1082, 0
        %v1151 = vsel %vm1098, %v1083, 0
        %v1154 = vsel %vm1098, %v1084, 0
        %v1157 = vsel %vm1098, %v1085, 0
        %v1160 = vsel %vm1098, %v1086, 0
        %v1163 = vsel %vm1098, %v1087, 0
        %v1166 = vsel %vm1098, %v1088, 0
        %v1169 = vsel %vm1098, %v1089, 0
        %v1172 = vsel %vm1098, %v1090, 0
        %v1175 = vsel %vm1098, %v1091, 0
        %v1178 = vsel %vm1098, %v1092, 0
        %v1181 = vsel %vm1098, %v1093, 0
        %v1184 = vsel %vm1098, %v1094, 0
        %v1187 = vsel %vm1098, %v1095, 0
        %v1190 = vsel %vm1098, %v1096, 0
        %v1193 = vsel %vm1098, %v1097, 0
        %vm1195 = vcmask 1041408
        %v1197 = vsel %vm1195, %v1001, 0
        %1199 = vmatprep.subr.bf16.mxu0 0
        %1200 = vmatpush1.bf16.msra.mxu0 %v1197
        %1201 = vmatprep.subr.bf16.mxu0 0
        %1202 = vmatpush1.bf16.msra.mxu0 0
        %1203 = vmatprep.subr.bf16.mxu0 0
        %1204 = vmatpush1.bf16.msra.mxu0 0
        %1205 = vmatprep.subr.bf16.mxu0 0
        %1206 = vmatpush1.bf16.msra.mxu0 0
        %1207 = vmatprep.subr.bf16.mxu0 0
        %1208 = vmatpush1.bf16.msra.mxu0 0
        %1209 = vmatprep.subr.bf16.mxu0 0
        %1210 = vmatpush1.bf16.msra.mxu0 0
        %1211 = vmatprep.subr.bf16.mxu0 0
        %1212 = vmatpush1.bf16.msra.mxu0 0
        %1213 = vmatprep.subr.bf16.mxu0 0
        %1214 = vmatpush1.bf16.msra.mxu0 0
        %1215 = vmatprep.subr.bf16.mxu0 0
        %1216 = vmatpush1.bf16.msra.mxu0 0
        %1217 = vmatprep.subr.bf16.mxu0 0
        %1218 = vmatpush1.bf16.msra.mxu0 0
        %1219 = vmatprep.subr.bf16.mxu0 0
        %1220 = vmatpush1.bf16.msra.mxu0 0
        %1221 = vmatprep.subr.bf16.mxu0 0
        %1222 = vmatpush1.bf16.msra.mxu0 0
        %1223 = vmatprep.subr.bf16.mxu0 0
        %1224 = vmatpush1.bf16.msra.mxu0 0
        %1225 = vmatprep.subr.bf16.mxu0 0
        %1226 = vmatpush1.bf16.msra.mxu0 0
        %1227 = vmatprep.subr.bf16.mxu0 0
        %1228 = vmatpush1.bf16.msra.mxu0 0
        %1229 = vmatprep.subr.bf16.mxu0 0
        %1230 = vmatpush1.bf16.msra.mxu0 0
        %1231 = vmatprep.mubr.bf16.mxu0 0
        %1232 = vmatmul.mubr.bf16.gmra.mrb[0].mxu0 %v1100
        %v1233 = vpop.f32.mrb[0].mxu0
        %v1234 = vadd.f32 0.0, %v1233
        %v1235 = vpop.f32.mrb[0].mxu0
        %v1236 = vpop.f32.mrb[0].mxu0
        %v1237 = vadd.f32 0.0, %v1236
        %v1238 = vpop.f32.mrb[0].mxu0
        %1239 = vmatprep.mubr.bf16.mxu0 0
        %1240 = vmatmul.mubr.bf16.gmra.mrb[0].mxu0 %v1103
        %v1241 = vpop.f32.mrb[0].mxu0
        %v1242 = vadd.f32 0.0, %v1241
        %v1243 = vpop.f32.mrb[0].mxu0
        %v1244 = vpop.f32.mrb[0].mxu0
        %v1245 = vadd.f32 0.0, %v1244
        %v1246 = vpop.f32.mrb[0].mxu0
        %1247 = vmatprep.mubr.bf16.mxu0 0
        %1248 = vmatmul.mubr.bf16.gmra.mrb[0].mxu0 %v1106
        %v1249 = vpop.f32.mrb[0].mxu0
        %v1250 = vadd.f32 0.0, %v1249
        %v1251 = vpop.f32.mrb[0].mxu0
        %v1252 = vpop.f32.mrb[0].mxu0
        %v1253 = vadd.f32 0.0, %v1252
        %v1254 = vpop.f32.mrb[0].mxu0
        %1255 = vmatprep.mubr.bf16.mxu0 0
        %1256 = vmatmul.mubr.bf16.gmra.mrb[0].mxu0 %v1109
        %v1257 = vpop.f32.mrb[0].mxu0
        %v1258 = vadd.f32 0.0, %v1257
        %v1259 = vpop.f32.mrb[0].mxu0
        %v1260 = vpop.f32.mrb[0].mxu0
        %v1261 = vadd.f32 0.0, %v1260
        %v1262 = vpop.f32.mrb[0].mxu0
        %1263 = vmatprep.mubr.bf16.mxu0 0
        %1264 = vmatmul.mubr.bf16.gmra.mrb[0].mxu0 %v1112
        %v1265 = vpop.f32.mrb[0].mxu0
        %v1266 = vadd.f32 0.0, %v1265
        %v1267 = vpop.f32.mrb[0].mxu0
        %v1268 = vpop.f32.mrb[0].mxu0
        %v1269 = vadd.f32 0.0, %v1268
        %v1270 = vpop.f32.mrb[0].mxu0
        %1271 = vmatprep.mubr.bf16.mxu0 0
        %1272 = vmatmul.mubr.bf16.gmra.mrb[0].mxu0 %v1115
        %v1273 = vpop.f32.mrb[0].mxu0
        %v1274 = vadd.f32 0.0, %v1273
        %v1275 = vpop.f32.mrb[0].mxu0
        %v1276 = vpop.f32.mrb[0].mxu0
        %v1277 = vadd.f32 0.0, %v1276
        %v1278 = vpop.f32.mrb[0].mxu0
        %1279 = vmatprep.mubr.bf16.mxu0 0
        %1280 = vmatmul.mubr.bf16.gmra.mrb[0].mxu0 %v1118
        %v1281 = vpop.f32.mrb[0].mxu0
        %v1282 = vadd.f32 0.0, %v1281
        %v1283 = vpop.f32.mrb[0].mxu0
        %v1284 = vpop.f32.mrb[0].mxu0
        %v1285 = vadd.f32 0.0, %v1284
        %v1286 = vpop.f32.mrb[0].mxu0
        %1287 = vmatprep.mubr.bf16.mxu0 0
        %1288 = vmatmul.mubr.bf16.gmra.mrb[0].mxu0 %v1121
        %v1289 = vpop.f32.mrb[0].mxu0
        %v1290 = vadd.f32 0.0, %v1289
        %v1291 = vpop.f32.mrb[0].mxu0
        %v1292 = vpop.f32.mrb[0].mxu0
        %v1293 = vadd.f32 0.0, %v1292
        %v1294 = vpop.f32.mrb[0].mxu0
        %1295 = vmatprep.mubr.bf16.mxu0 0
        %1296 = vmatmul.mubr.bf16.gmra.mrb[0].mxu0 %v1124
        %v1297 = vpop.f32.mrb[0].mxu0
        %v1298 = vadd.f32 0.0, %v1297
        %v1299 = vpop.f32.mrb[0].mxu0
        %v1300 = vpop.f32.mrb[0].mxu0
        %v1301 = vadd.f32 0.0, %v1300
        %v1302 = vpop.f32.mrb[0].mxu0
        %1303 = vmatprep.mubr.bf16.mxu0 0
        %1304 = vmatmul.mubr.bf16.gmra.mrb[0].mxu0 %v1127
        %v1305 = vpop.f32.mrb[0].mxu0
        %v1306 = vadd.f32 0.0, %v1305
        %v1307 = vpop.f32.mrb[0].mxu0
        %v1308 = vpop.f32.mrb[0].mxu0
        %v1309 = vadd.f32 0.0, %v1308
        %v1310 = vpop.f32.mrb[0].mxu0
        %1311 = vmatprep.mubr.bf16.mxu0 0
        %1312 = vmatmul.mubr.bf16.gmra.mrb[0].mxu0 %v1130
        %v1313 = vpop.f32.mrb[0].mxu0
        %v1314 = vadd.f32 0.0, %v1313
        %v1315 = vpop.f32.mrb[0].mxu0
        %v1316 = vpop.f32.mrb[0].mxu0
        %v1317 = vadd.f32 0.0, %v1316
        %v1318 = vpop.f32.mrb[0].mxu0
        %1319 = vmatprep.mubr.bf16.mxu0 0
        %1320 = vmatmul.mubr.bf16.gmra.mrb[0].mxu0 %v1133
        %v1321 = vpop.f32.mrb[0].mxu0
        %v1322 = vadd.f32 0.0, %v1321
        %v1323 = vpop.f32.mrb[0].mxu0
        %v1324 = vpop.f32.mrb[0].mxu0
        %v1325 = vadd.f32 0.0, %v1324
        %v1326 = vpop.f32.mrb[0].mxu0
        %1327 = vmatprep.mubr.bf16.mxu0 0
        %1328 = vmatmul.mubr.bf16.gmra.mrb[0].mxu0 %v1136
        %v1329 = vpop.f32.mrb[0].mxu0
        %v1330 = vadd.f32 0.0, %v1329
        %v1331 = vpop.f32.mrb[0].mxu0
        %v1332 = vpop.f32.mrb[0].mxu0
        %v1333 = vadd.f32 0.0, %v1332
        %v1334 = vpop.f32.mrb[0].mxu0
        %1335 = vmatprep.mubr.bf16.mxu0 0
        %1336 = vmatmul.mubr.bf16.gmra.mrb[0].mxu0 %v1139
        %v1337 = vpop.f32.mrb[0].mxu0
        %v1338 = vadd.f32 0.0, %v1337
        %v1339 = vpop.f32.mrb[0].mxu0
        %v1340 = vpop.f32.mrb[0].mxu0
        %v1341 = vadd.f32 0.0, %v1340
        %v1342 = vpop.f32.mrb[0].mxu0
        %1343 = vmatprep.mubr.bf16.mxu0 0
        %1344 = vmatmul.mubr.bf16.gmra.mrb[0].mxu0 %v1142
        %v1345 = vpop.f32.mrb[0].mxu0
        %v1346 = vadd.f32 0.0, %v1345
        %v1347 = vpop.f32.mrb[0].mxu0
        %v1348 = vpop.f32.mrb[0].mxu0
        %v1349 = vadd.f32 0.0, %v1348
        %v1350 = vpop.f32.mrb[0].mxu0
        %1351 = vmatprep.mubr.bf16.mxu0 0
        %1352 = vmatmul.mubr.bf16.gmra.mrb[0].mxu0 %v1145
        %v1353 = vpop.f32.mrb[0].mxu0
        %v1354 = vadd.f32 0.0, %v1353
        %v1355 = vpop.f32.mrb[0].mxu0
        %v1356 = vpop.f32.mrb[0].mxu0
        %v1357 = vadd.f32 0.0, %v1356
        %v1358 = vpop.f32.mrb[0].mxu0
        %1359 = vmatprep.mubr.bf16.mxu0 0
        %1360 = vmatmul.mubr.bf16.gmra.mrb[0].mxu0 %v1148
        %v1361 = vpop.f32.mrb[0].mxu0
        %v1362 = vadd.f32 0.0, %v1361
        %v1363 = vpop.f32.mrb[0].mxu0
        %v1364 = vpop.f32.mrb[0].mxu0
        %v1365 = vadd.f32 0.0, %v1364
        %v1366 = vpop.f32.mrb[0].mxu0
        %1367 = vmatprep.mubr.bf16.mxu0 0
        %1368 = vmatmul.mubr.bf16.gmra.mrb[0].mxu0 %v1151
        %v1369 = vpop.f32.mrb[0].mxu0
        %v1370 = vadd.f32 0.0, %v1369
        %v1371 = vpop.f32.mrb[0].mxu0
        %v1372 = vpop.f32.mrb[0].mxu0
        %v1373 = vadd.f32 0.0, %v1372
        %v1374 = vpop.f32.mrb[0].mxu0
        %1375 = vmatprep.mubr.bf16.mxu0 0
        %1376 = vmatmul.mubr.bf16.gmra.mrb[0].mxu0 %v1154
        %v1377 = vpop.f32.mrb[0].mxu0
        %v1378 = vadd.f32 0.0, %v1377
        %v1379 = vpop.f32.mrb[0].mxu0
        %v1380 = vpop.f32.mrb[0].mxu0
        %v1381 = vadd.f32 0.0, %v1380
        %v1382 = vpop.f32.mrb[0].mxu0
        %1383 = vmatprep.mubr.bf16.mxu0 0
        %1384 = vmatmul.mubr.bf16.gmra.mrb[0].mxu0 %v1157
        %v1385 = vpop.f32.mrb[0].mxu0
        %v1386 = vadd.f32 0.0, %v1385
        %v1387 = vpop.f32.mrb[0].mxu0
        %v1388 = vpop.f32.mrb[0].mxu0
        %v1389 = vadd.f32 0.0, %v1388
        %v1390 = vpop.f32.mrb[0].mxu0
        %1391 = vmatprep.mubr.bf16.mxu0 0
        %1392 = vmatmul.mubr.bf16.gmra.mrb[0].mxu0 %v1160
        %v1393 = vpop.f32.mrb[0].mxu0
        %v1394 = vadd.f32 0.0, %v1393
        %v1395 = vpop.f32.mrb[0].mxu0
        %v1396 = vpop.f32.mrb[0].mxu0
        %v1397 = vadd.f32 0.0, %v1396
        %v1398 = vpop.f32.mrb[0].mxu0
        %1399 = vmatprep.mubr.bf16.mxu0 0
        %1400 = vmatmul.mubr.bf16.gmra.mrb[0].mxu0 %v1163
        %v1401 = vpop.f32.mrb[0].mxu0
        %v1402 = vadd.f32 0.0, %v1401
        %v1403 = vpop.f32.mrb[0].mxu0
        %v1404 = vpop.f32.mrb[0].mxu0
        %v1405 = vadd.f32 0.0, %v1404
        %v1406 = vpop.f32.mrb[0].mxu0
        %1407 = vmatprep.mubr.bf16.mxu0 0
        %1408 = vmatmul.mubr.bf16.gmra.mrb[0].mxu0 %v1166
        %v1409 = vpop.f32.mrb[0].mxu0
        %v1410 = vadd.f32 0.0, %v1409
        %v1411 = vpop.f32.mrb[0].mxu0
        %v1412 = vpop.f32.mrb[0].mxu0
        %v1413 = vadd.f32 0.0, %v1412
        %v1414 = vpop.f32.mrb[0].mxu0
        %1415 = vmatprep.mubr.bf16.mxu0 0
        %1416 = vmatmul.mubr.bf16.gmra.mrb[0].mxu0 %v1169
        %v1417 = vpop.f32.mrb[0].mxu0
        %v1418 = vadd.f32 0.0, %v1417
        %v1419 = vpop.f32.mrb[0].mxu0
        %v1420 = vpop.f32.mrb[0].mxu0
        %v1421 = vadd.f32 0.0, %v1420
        %v1422 = vpop.f32.mrb[0].mxu0
        %1423 = vmatprep.mubr.bf16.mxu0 0
        %1424 = vmatmul.mubr.bf16.gmra.mrb[0].mxu0 %v1172
        %v1425 = vpop.f32.mrb[0].mxu0
        %v1426 = vadd.f32 0.0, %v1425
        %v1427 = vpop.f32.mrb[0].mxu0
        %v1428 = vpop.f32.mrb[0].mxu0
        %v1429 = vadd.f32 0.0, %v1428
        %v1430 = vpop.f32.mrb[0].mxu0
        %1431 = vmatprep.mubr.bf16.mxu0 0
        %1432 = vmatmul.mubr.bf16.gmra.mrb[0].mxu0 %v1175
        %v1433 = vpop.f32.mrb[0].mxu0
        %v1434 = vadd.f32 0.0, %v1433
        %v1435 = vpop.f32.mrb[0].mxu0
        %v1436 = vpop.f32.mrb[0].mxu0
        %v1437 = vadd.f32 0.0, %v1436
        %v1438 = vpop.f32.mrb[0].mxu0
        %1439 = vmatprep.mubr.bf16.mxu0 0
        %1440 = vmatmul.mubr.bf16.gmra.mrb[0].mxu0 %v1178
        %v1441 = vpop.f32.mrb[0].mxu0
        %v1442 = vadd.f32 0.0, %v1441
        %v1443 = vpop.f32.mrb[0].mxu0
        %v1444 = vpop.f32.mrb[0].mxu0
        %v1445 = vadd.f32 0.0, %v1444
        %v1446 = vpop.f32.mrb[0].mxu0
        %1447 = vmatprep.mubr.bf16.mxu0 0
        %1448 = vmatmul.mubr.bf16.gmra.mrb[0].mxu0 %v1181
        %v1449 = vpop.f32.mrb[0].mxu0
        %v1450 = vadd.f32 0.0, %v1449
        %v1451 = vpop.f32.mrb[0].mxu0
        %v1452 = vpop.f32.mrb[0].mxu0
        %v1453 = vadd.f32 0.0, %v1452
        %v1454 = vpop.f32.mrb[0].mxu0
        %1455 = vmatprep.mubr.bf16.mxu0 0
        %1456 = vmatmul.mubr.bf16.gmra.mrb[0].mxu0 %v1184
        %v1457 = vpop.f32.mrb[0].mxu0
        %v1458 = vadd.f32 0.0, %v1457
        %v1459 = vpop.f32.mrb[0].mxu0
        %v1460 = vpop.f32.mrb[0].mxu0
        %v1461 = vadd.f32 0.0, %v1460
        %v1462 = vpop.f32.mrb[0].mxu0
        %1463 = vmatprep.mubr.bf16.mxu0 0
        %1464 = vmatmul.mubr.bf16.gmra.mrb[0].mxu0 %v1187
        %v1465 = vpop.f32.mrb[0].mxu0
        %v1466 = vadd.f32 0.0, %v1465
        %v1467 = vpop.f32.mrb[0].mxu0
        %v1468 = vpop.f32.mrb[0].mxu0
        %v1469 = vadd.f32 0.0, %v1468
        %v1470 = vpop.f32.mrb[0].mxu0
        %1471 = vmatprep.mubr.bf16.mxu0 0
        %1472 = vmatmul.mubr.bf16.gmra.mrb[0].mxu0 %v1190
        %v1473 = vpop.f32.mrb[0].mxu0
        %v1474 = vadd.f32 0.0, %v1473
        %v1475 = vpop.f32.mrb[0].mxu0
        %v1476 = vpop.f32.mrb[0].mxu0
        %v1477 = vadd.f32 0.0, %v1476
        %v1478 = vpop.f32.mrb[0].mxu0
        %1479 = vmatprep.mubr.bf16.mxu0 0
        %1480 = vmatmul.mubr.bf16.gmra.mrb[0].mxu0 %v1193
        %v1481 = vpop.f32.mrb[0].mxu0
        %v1482 = vadd.f32 0.0, %v1481
        %v1483 = vpop.f32.mrb[0].mxu0
        %v1484 = vpop.f32.mrb[0].mxu0
        %v1485 = vadd.f32 0.0, %v1484
        %v1486 = vpop.f32.mrb[0].mxu0
        %1487 = vdwg.mxu0
        %v1552 = vunpack.c.l.b16 %v212
        %v1553 = vunpack.c.l.b16 %v213
        %v1554 = vunpack.c.l.b16 %v214
        %v1555 = vunpack.c.l.b16 %v215
        %v1556 = vunpack.c.l.b16 %v216
        %v1557 = vunpack.c.l.b16 %v217
        %v1558 = vunpack.c.l.b16 %v218
        %v1559 = vunpack.c.l.b16 %v219
        %v1560 = vunpack.c.l.b16 %v220
        %v1561 = vunpack.c.l.b16 %v221
        %v1562 = vunpack.c.l.b16 %v222
        %v1563 = vunpack.c.l.b16 %v223
        %v1564 = vunpack.c.l.b16 %v224
        %v1565 = vunpack.c.l.b16 %v225
        %v1566 = vunpack.c.l.b16 %v226
        %v1567 = vunpack.c.l.b16 %v227
        %v1568 = vunpack.c.l.b16 %v228
        %v1569 = vunpack.c.l.b16 %v229
        %v1570 = vunpack.c.l.b16 %v230
        %v1571 = vunpack.c.l.b16 %v231
        %v1572 = vunpack.c.l.b16 %v232
        %v1573 = vunpack.c.l.b16 %v233
        %v1574 = vunpack.c.l.b16 %v234
        %v1575 = vunpack.c.l.b16 %v235
        %v1576 = vunpack.c.l.b16 %v236
        %v1577 = vunpack.c.l.b16 %v237
        %v1578 = vunpack.c.l.b16 %v238
        %v1579 = vunpack.c.l.b16 %v239
        %v1580 = vunpack.c.l.b16 %v240
        %v1581 = vunpack.c.l.b16 %v241
        %v1582 = vunpack.c.l.b16 %v242
        %v1583 = vunpack.c.l.b16 %v243
        %v1584 = vunpack.c.l.b16 %v244
        %v1585 = vunpack.c.l.b16 %v245
        %v1586 = vunpack.c.l.b16 %v246
        %v1587 = vunpack.c.l.b16 %v247
        %v1588 = vunpack.c.l.b16 %v248
        %v1589 = vunpack.c.l.b16 %v249
        %v1590 = vunpack.c.l.b16 %v250
        %v1591 = vunpack.c.l.b16 %v251
        %v1592 = vunpack.c.l.b16 %v252
        %v1593 = vunpack.c.l.b16 %v253
        %v1594 = vunpack.c.l.b16 %v254
        %v1595 = vunpack.c.l.b16 %v255
        %v1596 = vunpack.c.l.b16 %v256
        %v1597 = vunpack.c.l.b16 %v257
        %v1598 = vunpack.c.l.b16 %v258
        %v1599 = vunpack.c.l.b16 %v259
        %v1600 = vunpack.c.l.b16 %v260
        %v1601 = vunpack.c.l.b16 %v261
        %v1602 = vunpack.c.l.b16 %v262
        %v1603 = vunpack.c.l.b16 %v263
        %v1604 = vunpack.c.l.b16 %v264
        %v1605 = vunpack.c.l.b16 %v265
        %v1606 = vunpack.c.l.b16 %v266
        %v1607 = vunpack.c.l.b16 %v267
        %v1608 = vunpack.c.l.b16 %v268
        %v1609 = vunpack.c.l.b16 %v269
        %v1610 = vunpack.c.l.b16 %v270
        %v1611 = vunpack.c.l.b16 %v271
        %v1612 = vunpack.c.l.b16 %v272
        %v1613 = vunpack.c.l.b16 %v273
        %v1614 = vunpack.c.l.b16 %v274
        %v1615 = vunpack.c.l.b16 %v275
        %v1616 = vpack.c.b16 %v1553, %v1552
        %v1617 = vpack.c.b16 %v1555, %v1554
        %v1618 = vpack.c.b16 %v1557, %v1556
        %v1619 = vpack.c.b16 %v1559, %v1558
        %v1620 = vpack.c.b16 %v1561, %v1560
        %v1621 = vpack.c.b16 %v1563, %v1562
        %v1622 = vpack.c.b16 %v1565, %v1564
        %v1623 = vpack.c.b16 %v1567, %v1566
        %v1624 = vpack.c.b16 %v1569, %v1568
        %v1625 = vpack.c.b16 %v1571, %v1570
        %v1626 = vpack.c.b16 %v1573, %v1572
        %v1627 = vpack.c.b16 %v1575, %v1574
        %v1628 = vpack.c.b16 %v1577, %v1576
        %v1629 = vpack.c.b16 %v1579, %v1578
        %v1630 = vpack.c.b16 %v1581, %v1580
        %v1631 = vpack.c.b16 %v1583, %v1582
        %v1632 = vpack.c.b16 %v1585, %v1584
        %v1633 = vpack.c.b16 %v1587, %v1586
        %v1634 = vpack.c.b16 %v1589, %v1588
        %v1635 = vpack.c.b16 %v1591, %v1590
        %v1636 = vpack.c.b16 %v1593, %v1592
        %v1637 = vpack.c.b16 %v1595, %v1594
        %v1638 = vpack.c.b16 %v1597, %v1596
        %v1639 = vpack.c.b16 %v1599, %v1598
        %v1640 = vpack.c.b16 %v1601, %v1600
        %v1641 = vpack.c.b16 %v1603, %v1602
        %v1642 = vpack.c.b16 %v1605, %v1604
        %v1643 = vpack.c.b16 %v1607, %v1606
        %v1644 = vpack.c.b16 %v1609, %v1608
        %v1645 = vpack.c.b16 %v1611, %v1610
        %v1646 = vpack.c.b16 %v1613, %v1612
        %v1647 = vpack.c.b16 %v1615, %v1614
        %v1649 = vsel %vm1098, %v1616, 0
        %v1652 = vsel %vm1098, %v1617, 0
        %v1655 = vsel %vm1098, %v1618, 0
        %v1658 = vsel %vm1098, %v1619, 0
        %v1661 = vsel %vm1098, %v1620, 0
        %v1664 = vsel %vm1098, %v1621, 0
        %v1667 = vsel %vm1098, %v1622, 0
        %v1670 = vsel %vm1098, %v1623, 0
        %v1673 = vsel %vm1098, %v1624, 0
        %v1676 = vsel %vm1098, %v1625, 0
        %v1679 = vsel %vm1098, %v1626, 0
        %v1682 = vsel %vm1098, %v1627, 0
        %v1685 = vsel %vm1098, %v1628, 0
        %v1688 = vsel %vm1098, %v1629, 0
        %v1691 = vsel %vm1098, %v1630, 0
        %v1694 = vsel %vm1098, %v1631, 0
        %v1697 = vsel %vm1098, %v1632, 0
        %v1700 = vsel %vm1098, %v1633, 0
        %v1703 = vsel %vm1098, %v1634, 0
        %v1706 = vsel %vm1098, %v1635, 0
        %v1709 = vsel %vm1098, %v1636, 0
        %v1712 = vsel %vm1098, %v1637, 0
        %v1715 = vsel %vm1098, %v1638, 0
        %v1718 = vsel %vm1098, %v1639, 0
        %v1721 = vsel %vm1098, %v1640, 0
        %v1724 = vsel %vm1098, %v1641, 0
        %v1727 = vsel %vm1098, %v1642, 0
        %v1730 = vsel %vm1098, %v1643, 0
        %v1733 = vsel %vm1098, %v1644, 0
        %v1736 = vsel %vm1098, %v1645, 0
        %v1739 = vsel %vm1098, %v1646, 0
        %v1742 = vsel %vm1098, %v1647, 0
        %v1745 = vsel %vm1195, %v276, 0
        %1747 = vmatprep.subr.bf16.mxu0 0
        %1748 = vmatpush1.bf16.msra.mxu0 %v1745
        %1749 = vmatprep.subr.bf16.mxu0 0
        %1750 = vmatpush1.bf16.msra.mxu0 0
        %1751 = vmatprep.subr.bf16.mxu0 0
        %1752 = vmatpush1.bf16.msra.mxu0 0
        %1753 = vmatprep.subr.bf16.mxu0 0
        %1754 = vmatpush1.bf16.msra.mxu0 0
        %1755 = vmatprep.subr.bf16.mxu0 0
        %1756 = vmatpush1.bf16.msra.mxu0 0
        %1757 = vmatprep.subr.bf16.mxu0 0
        %1758 = vmatpush1.bf16.msra.mxu0 0
        %1759 = vmatprep.subr.bf16.mxu0 0
        %1760 = vmatpush1.bf16.msra.mxu0 0
        %1761 = vmatprep.subr.bf16.mxu0 0
        %1762 = vmatpush1.bf16.msra.mxu0 0
        %1763 = vmatprep.subr.bf16.mxu0 0
        %1764 = vmatpush1.bf16.msra.mxu0 0
        %1765 = vmatprep.subr.bf16.mxu0 0
        %1766 = vmatpush1.bf16.msra.mxu0 0
        %1767 = vmatprep.subr.bf16.mxu0 0
        %1768 = vmatpush1.bf16.msra.mxu0 0
        %1769 = vmatprep.subr.bf16.mxu0 0
        %1770 = vmatpush1.bf16.msra.mxu0 0
        %1771 = vmatprep.subr.bf16.mxu0 0
        %1772 = vmatpush1.bf16.msra.mxu0 0
        %1773 = vmatprep.subr.bf16.mxu0 0
        %1774 = vmatpush1.bf16.msra.mxu0 0
        %1775 = vmatprep.subr.bf16.mxu0 0
        %1776 = vmatpush1.bf16.msra.mxu0 0
        %1777 = vmatprep.subr.bf16.mxu0 0
        %1778 = vmatpush1.bf16.msra.mxu0 0
        %1779 = vmatprep.mubr.bf16.mxu0 0
        %1780 = vmatmul.mubr.bf16.gmra.mrb[0].mxu0 %v1649
        %v1781 = vpop.f32.mrb[0].mxu0
        %v1782 = vadd.f32 %v1234, %v1781
        %v1783 = vpop.f32.mrb[0].mxu0
        %v1784 = vpop.f32.mrb[0].mxu0
        %v1785 = vadd.f32 %v1237, %v1784
        %v1786 = vpop.f32.mrb[0].mxu0
        %1787 = vmatprep.mubr.bf16.mxu0 0
        %1788 = vmatmul.mubr.bf16.gmra.mrb[0].mxu0 %v1652
        %v1789 = vpop.f32.mrb[0].mxu0
        %v1790 = vadd.f32 %v1242, %v1789
        %v1791 = vpop.f32.mrb[0].mxu0
        %v1792 = vpop.f32.mrb[0].mxu0
        %v1793 = vadd.f32 %v1245, %v1792
        %v1794 = vpop.f32.mrb[0].mxu0
        %1795 = vmatprep.mubr.bf16.mxu0 0
        %1796 = vmatmul.mubr.bf16.gmra.mrb[0].mxu0 %v1655
        %v1797 = vpop.f32.mrb[0].mxu0
        %v1798 = vadd.f32 %v1250, %v1797
        %v1799 = vpop.f32.mrb[0].mxu0
        %v1800 = vpop.f32.mrb[0].mxu0
        %v1801 = vadd.f32 %v1253, %v1800
        %v1802 = vpop.f32.mrb[0].mxu0
        %1803 = vmatprep.mubr.bf16.mxu0 0
        %1804 = vmatmul.mubr.bf16.gmra.mrb[0].mxu0 %v1658
        %v1805 = vpop.f32.mrb[0].mxu0
        %v1806 = vadd.f32 %v1258, %v1805
        %v1807 = vpop.f32.mrb[0].mxu0
        %v1808 = vpop.f32.mrb[0].mxu0
        %v1809 = vadd.f32 %v1261, %v1808
        %v1810 = vpop.f32.mrb[0].mxu0
        %1811 = vmatprep.mubr.bf16.mxu0 0
        %1812 = vmatmul.mubr.bf16.gmra.mrb[0].mxu0 %v1661
        %v1813 = vpop.f32.mrb[0].mxu0
        %v1814 = vadd.f32 %v1266, %v1813
        %v1815 = vpop.f32.mrb[0].mxu0
        %v1816 = vpop.f32.mrb[0].mxu0
        %v1817 = vadd.f32 %v1269, %v1816
        %v1818 = vpop.f32.mrb[0].mxu0
        %1819 = vmatprep.mubr.bf16.mxu0 0
        %1820 = vmatmul.mubr.bf16.gmra.mrb[0].mxu0 %v1664
        %v1821 = vpop.f32.mrb[0].mxu0
        %v1822 = vadd.f32 %v1274, %v1821
        %v1823 = vpop.f32.mrb[0].mxu0
        %v1824 = vpop.f32.mrb[0].mxu0
        %v1825 = vadd.f32 %v1277, %v1824
        %v1826 = vpop.f32.mrb[0].mxu0
        %1827 = vmatprep.mubr.bf16.mxu0 0
        %1828 = vmatmul.mubr.bf16.gmra.mrb[0].mxu0 %v1667
        %v1829 = vpop.f32.mrb[0].mxu0
        %v1830 = vadd.f32 %v1282, %v1829
        %v1831 = vpop.f32.mrb[0].mxu0
        %v1832 = vpop.f32.mrb[0].mxu0
        %v1833 = vadd.f32 %v1285, %v1832
        %v1834 = vpop.f32.mrb[0].mxu0
        %1835 = vmatprep.mubr.bf16.mxu0 0
        %1836 = vmatmul.mubr.bf16.gmra.mrb[0].mxu0 %v1670
        %v1837 = vpop.f32.mrb[0].mxu0
        %v1838 = vadd.f32 %v1290, %v1837
        %v1839 = vpop.f32.mrb[0].mxu0
        %v1840 = vpop.f32.mrb[0].mxu0
        %v1841 = vadd.f32 %v1293, %v1840
        %v1842 = vpop.f32.mrb[0].mxu0
        %1843 = vmatprep.mubr.bf16.mxu0 0
        %1844 = vmatmul.mubr.bf16.gmra.mrb[0].mxu0 %v1673
        %v1845 = vpop.f32.mrb[0].mxu0
        %v1846 = vadd.f32 %v1298, %v1845
        %v1847 = vpop.f32.mrb[0].mxu0
        %v1848 = vpop.f32.mrb[0].mxu0
        %v1849 = vadd.f32 %v1301, %v1848
        %v1850 = vpop.f32.mrb[0].mxu0
        %1851 = vmatprep.mubr.bf16.mxu0 0
        %1852 = vmatmul.mubr.bf16.gmra.mrb[0].mxu0 %v1676
        %v1853 = vpop.f32.mrb[0].mxu0
        %v1854 = vadd.f32 %v1306, %v1853
        %v1855 = vpop.f32.mrb[0].mxu0
        %v1856 = vpop.f32.mrb[0].mxu0
        %v1857 = vadd.f32 %v1309, %v1856
        %v1858 = vpop.f32.mrb[0].mxu0
        %1859 = vmatprep.mubr.bf16.mxu0 0
        %1860 = vmatmul.mubr.bf16.gmra.mrb[0].mxu0 %v1679
        %v1861 = vpop.f32.mrb[0].mxu0
        %v1862 = vadd.f32 %v1314, %v1861
        %v1863 = vpop.f32.mrb[0].mxu0
        %v1864 = vpop.f32.mrb[0].mxu0
        %v1865 = vadd.f32 %v1317, %v1864
        %v1866 = vpop.f32.mrb[0].mxu0
        %1867 = vmatprep.mubr.bf16.mxu0 0
        %1868 = vmatmul.mubr.bf16.gmra.mrb[0].mxu0 %v1682
        %v1869 = vpop.f32.mrb[0].mxu0
        %v1870 = vadd.f32 %v1322, %v1869
        %v1871 = vpop.f32.mrb[0].mxu0
        %v1872 = vpop.f32.mrb[0].mxu0
        %v1873 = vadd.f32 %v1325, %v1872
        %v1874 = vpop.f32.mrb[0].mxu0
        %1875 = vmatprep.mubr.bf16.mxu0 0
        %1876 = vmatmul.mubr.bf16.gmra.mrb[0].mxu0 %v1685
        %v1877 = vpop.f32.mrb[0].mxu0
        %v1878 = vadd.f32 %v1330, %v1877
        %v1879 = vpop.f32.mrb[0].mxu0
        %v1880 = vpop.f32.mrb[0].mxu0
        %v1881 = vadd.f32 %v1333, %v1880
        %v1882 = vpop.f32.mrb[0].mxu0
        %1883 = vmatprep.mubr.bf16.mxu0 0
        %1884 = vmatmul.mubr.bf16.gmra.mrb[0].mxu0 %v1688
        %v1885 = vpop.f32.mrb[0].mxu0
        %v1886 = vadd.f32 %v1338, %v1885
        %v1887 = vpop.f32.mrb[0].mxu0
        %v1888 = vpop.f32.mrb[0].mxu0
        %v1889 = vadd.f32 %v1341, %v1888
        %v1890 = vpop.f32.mrb[0].mxu0
        %1891 = vmatprep.mubr.bf16.mxu0 0
        %1892 = vmatmul.mubr.bf16.gmra.mrb[0].mxu0 %v1691
        %v1893 = vpop.f32.mrb[0].mxu0
        %v1894 = vadd.f32 %v1346, %v1893
        %v1895 = vpop.f32.mrb[0].mxu0
        %v1896 = vpop.f32.mrb[0].mxu0
        %v1897 = vadd.f32 %v1349, %v1896
        %v1898 = vpop.f32.mrb[0].mxu0
        %1899 = vmatprep.mubr.bf16.mxu0 0
        %1900 = vmatmul.mubr.bf16.gmra.mrb[0].mxu0 %v1694
        %v1901 = vpop.f32.mrb[0].mxu0
        %v1902 = vadd.f32 %v1354, %v1901
        %v1903 = vpop.f32.mrb[0].mxu0
        %v1904 = vpop.f32.mrb[0].mxu0
        %v1905 = vadd.f32 %v1357, %v1904
        %v1906 = vpop.f32.mrb[0].mxu0
        %1907 = vmatprep.mubr.bf16.mxu0 0
        %1908 = vmatmul.mubr.bf16.gmra.mrb[0].mxu0 %v1697
        %v1909 = vpop.f32.mrb[0].mxu0
        %v1910 = vadd.f32 %v1362, %v1909
        %v1911 = vpop.f32.mrb[0].mxu0
        %v1912 = vpop.f32.mrb[0].mxu0
        %v1913 = vadd.f32 %v1365, %v1912
        %v1914 = vpop.f32.mrb[0].mxu0
        %1915 = vmatprep.mubr.bf16.mxu0 0
        %1916 = vmatmul.mubr.bf16.gmra.mrb[0].mxu0 %v1700
        %v1917 = vpop.f32.mrb[0].mxu0
        %v1918 = vadd.f32 %v1370, %v1917
        %v1919 = vpop.f32.mrb[0].mxu0
        %v1920 = vpop.f32.mrb[0].mxu0
        %v1921 = vadd.f32 %v1373, %v1920
        %v1922 = vpop.f32.mrb[0].mxu0
        %1923 = vmatprep.mubr.bf16.mxu0 0
        %1924 = vmatmul.mubr.bf16.gmra.mrb[0].mxu0 %v1703
        %v1925 = vpop.f32.mrb[0].mxu0
        %v1926 = vadd.f32 %v1378, %v1925
        %v1927 = vpop.f32.mrb[0].mxu0
        %v1928 = vpop.f32.mrb[0].mxu0
        %v1929 = vadd.f32 %v1381, %v1928
        %v1930 = vpop.f32.mrb[0].mxu0
        %1931 = vmatprep.mubr.bf16.mxu0 0
        %1932 = vmatmul.mubr.bf16.gmra.mrb[0].mxu0 %v1706
        %v1933 = vpop.f32.mrb[0].mxu0
        %v1934 = vadd.f32 %v1386, %v1933
        %v1935 = vpop.f32.mrb[0].mxu0
        %v1936 = vpop.f32.mrb[0].mxu0
        %v1937 = vadd.f32 %v1389, %v1936
        %v1938 = vpop.f32.mrb[0].mxu0
        %1939 = vmatprep.mubr.bf16.mxu0 0
        %1940 = vmatmul.mubr.bf16.gmra.mrb[0].mxu0 %v1709
        %v1941 = vpop.f32.mrb[0].mxu0
        %v1942 = vadd.f32 %v1394, %v1941
        %v1943 = vpop.f32.mrb[0].mxu0
        %v1944 = vpop.f32.mrb[0].mxu0
        %v1945 = vadd.f32 %v1397, %v1944
        %v1946 = vpop.f32.mrb[0].mxu0
        %1947 = vmatprep.mubr.bf16.mxu0 0
        %1948 = vmatmul.mubr.bf16.gmra.mrb[0].mxu0 %v1712
        %v1949 = vpop.f32.mrb[0].mxu0
        %v1950 = vadd.f32 %v1402, %v1949
        %v1951 = vpop.f32.mrb[0].mxu0
        %v1952 = vpop.f32.mrb[0].mxu0
        %v1953 = vadd.f32 %v1405, %v1952
        %v1954 = vpop.f32.mrb[0].mxu0
        %1955 = vmatprep.mubr.bf16.mxu0 0
        %1956 = vmatmul.mubr.bf16.gmra.mrb[0].mxu0 %v1715
        %v1957 = vpop.f32.mrb[0].mxu0
        %v1958 = vadd.f32 %v1410, %v1957
        %v1959 = vpop.f32.mrb[0].mxu0
        %v1960 = vpop.f32.mrb[0].mxu0
        %v1961 = vadd.f32 %v1413, %v1960
        %v1962 = vpop.f32.mrb[0].mxu0
        %1963 = vmatprep.mubr.bf16.mxu0 0
        %1964 = vmatmul.mubr.bf16.gmra.mrb[0].mxu0 %v1718
        %v1965 = vpop.f32.mrb[0].mxu0
        %v1966 = vadd.f32 %v1418, %v1965
        %v1967 = vpop.f32.mrb[0].mxu0
        %v1968 = vpop.f32.mrb[0].mxu0
        %v1969 = vadd.f32 %v1421, %v1968
        %v1970 = vpop.f32.mrb[0].mxu0
        %1971 = vmatprep.mubr.bf16.mxu0 0
        %1972 = vmatmul.mubr.bf16.gmra.mrb[0].mxu0 %v1721
        %v1973 = vpop.f32.mrb[0].mxu0
        %v1974 = vadd.f32 %v1426, %v1973
        %v1975 = vpop.f32.mrb[0].mxu0
        %v1976 = vpop.f32.mrb[0].mxu0
        %v1977 = vadd.f32 %v1429, %v1976
        %v1978 = vpop.f32.mrb[0].mxu0
        %1979 = vmatprep.mubr.bf16.mxu0 0
        %1980 = vmatmul.mubr.bf16.gmra.mrb[0].mxu0 %v1724
        %v1981 = vpop.f32.mrb[0].mxu0
        %v1982 = vadd.f32 %v1434, %v1981
        %v1983 = vpop.f32.mrb[0].mxu0
        %v1984 = vpop.f32.mrb[0].mxu0
        %v1985 = vadd.f32 %v1437, %v1984
        %v1986 = vpop.f32.mrb[0].mxu0
        %1987 = vmatprep.mubr.bf16.mxu0 0
        %1988 = vmatmul.mubr.bf16.gmra.mrb[0].mxu0 %v1727
        %v1989 = vpop.f32.mrb[0].mxu0
        %v1990 = vadd.f32 %v1442, %v1989
        %v1991 = vpop.f32.mrb[0].mxu0
        %v1992 = vpop.f32.mrb[0].mxu0
        %v1993 = vadd.f32 %v1445, %v1992
        %v1994 = vpop.f32.mrb[0].mxu0
        %1995 = vmatprep.mubr.bf16.mxu0 0
        %1996 = vmatmul.mubr.bf16.gmra.mrb[0].mxu0 %v1730
        %v1997 = vpop.f32.mrb[0].mxu0
        %v1998 = vadd.f32 %v1450, %v1997
        %v1999 = vpop.f32.mrb[0].mxu0
        %v2000 = vpop.f32.mrb[0].mxu0
        %v2001 = vadd.f32 %v1453, %v2000
        %v2002 = vpop.f32.mrb[0].mxu0
        %2003 = vmatprep.mubr.bf16.mxu0 0
        %2004 = vmatmul.mubr.bf16.gmra.mrb[0].mxu0 %v1733
        %v2005 = vpop.f32.mrb[0].mxu0
        %v2006 = vadd.f32 %v1458, %v2005
        %v2007 = vpop.f32.mrb[0].mxu0
        %v2008 = vpop.f32.mrb[0].mxu0
        %v2009 = vadd.f32 %v1461, %v2008
        %v2010 = vpop.f32.mrb[0].mxu0
        %2011 = vmatprep.mubr.bf16.mxu0 0
        %2012 = vmatmul.mubr.bf16.gmra.mrb[0].mxu0 %v1736
        %v2013 = vpop.f32.mrb[0].mxu0
        %v2014 = vadd.f32 %v1466, %v2013
        %v2015 = vpop.f32.mrb[0].mxu0
        %v2016 = vpop.f32.mrb[0].mxu0
        %v2017 = vadd.f32 %v1469, %v2016
        %v2018 = vpop.f32.mrb[0].mxu0
        %2019 = vmatprep.mubr.bf16.mxu0 0
        %2020 = vmatmul.mubr.bf16.gmra.mrb[0].mxu0 %v1739
        %v2021 = vpop.f32.mrb[0].mxu0
        %v2022 = vadd.f32 %v1474, %v2021
        %v2023 = vpop.f32.mrb[0].mxu0
        %v2024 = vpop.f32.mrb[0].mxu0
        %v2025 = vadd.f32 %v1477, %v2024
        %v2026 = vpop.f32.mrb[0].mxu0
        %2027 = vmatprep.mubr.bf16.mxu0 0
        %2028 = vmatmul.mubr.bf16.gmra.mrb[0].mxu0 %v1742
        %v2029 = vpop.f32.mrb[0].mxu0
        %v2030 = vadd.f32 %v1482, %v2029
        %v2031 = vpop.f32.mrb[0].mxu0
        %v2032 = vpop.f32.mrb[0].mxu0
        %v2033 = vadd.f32 %v1485, %v2032
        %v2034 = vpop.f32.mrb[0].mxu0
        %2035 = vdwg.mxu0
        %v2036 = vld [vmem:[%s211] sm:$0xe]
        %v2037 = vld [vmem:[%s211 + $0x14] sm:$0xe]
        %v2038 = vld [vmem:[%s211 + $0x28] sm:$0xe]
        %v2039 = vld [vmem:[%s211 + $0x3c] sm:$0xe]
        %v2040 = vld [vmem:[%s211 + $0x50] sm:$0xe]
        %v2041 = vld [vmem:[%s211 + $0x64] sm:$0xe]
        %v2042 = vld [vmem:[%s211 + $0x78] sm:$0xe]
        %v2043 = vld [vmem:[%s211 + $0x8c] sm:$0xe]
        %v2044 = vld [vmem:[%s211 + $0xa0] sm:$0xe]
        %v2045 = vld [vmem:[%s211 + $0xb4] sm:$0xe]
        %v2046 = vld [vmem:[%s211 + $0xc8] sm:$0xe]
        %v2047 = vld [vmem:[%s211 + $0xdc] sm:$0xe]
        %v2048 = vld [vmem:[%s211 + $0xf0] sm:$0xe]
        %v2049 = vld [vmem:[%s211 + $0x104] sm:$0xe]
        %v2050 = vld [vmem:[%s211 + $0x118] sm:$0xe]
        %v2051 = vld [vmem:[%s211 + $0x12c] sm:$0xe]
        %vm2084 = vcmask 1042432
        %vm2085 = vcmask 1046532
        %vm2086 = vmor %vm2084, %vm2085
        %v2087 = vrot.slane %v2036, 5
        %v2088 = vrot.slane %v2087, 4
        %v2089 = vrot.slane %v213, 5
        %v2090 = vsel %vm2086, %v2088, %v2089
        %v2091 = vrot.slane %v2089, 4
        %v2092 = vrot.slane %v214, 5
        %v2093 = vsel %vm2086, %v2091, %v2092
        %v2094 = vrot.slane %v2092, 4
        %v2095 = vrot.slane %v215, 5
        %v2096 = vsel %vm2086, %v2094, %v2095
        %v2097 = vrot.slane %v2095, 4
        %v2098 = vrot.slane %v277, 5
        %v2099 = vsel %vm2086, %v2097, %v2098
        %v2100 = vrot.slane %v2037, 5
        %v2101 = vrot.slane %v2100, 4
        %v2102 = vrot.slane %v217, 5
        %v2103 = vsel %vm2086, %v2101, %v2102
        %v2104 = vrot.slane %v2102, 4
        %v2105 = vrot.slane %v218, 5
        %v2106 = vsel %vm2086, %v2104, %v2105
        %v2107 = vrot.slane %v2105, 4
        %v2108 = vrot.slane %v219, 5
        %v2109 = vsel %vm2086, %v2107, %v2108
        %v2110 = vrot.slane %v2108, 4
        %v2111 = vrot.slane %v278, 5
        %v2112 = vsel %vm2086, %v2110, %v2111
        %v2113 = vrot.slane %v2038, 5
        %v2114 = vrot.slane %v2113, 4
        %v2115 = vrot.slane %v221, 5
        %v2116 = vsel %vm2086, %v2114, %v2115
        %v2117 = vrot.slane %v2115, 4
        %v2118 = vrot.slane %v222, 5
        %v2119 = vsel %vm2086, %v2117, %v2118
        %v2120 = vrot.slane %v2118, 4
        %v2121 = vrot.slane %v223, 5
        %v2122 = vsel %vm2086, %v2120, %v2121
        %v2123 = vrot.slane %v2121, 4
        %v2124 = vrot.slane %v279, 5
        %v2125 = vsel %vm2086, %v2123, %v2124
        %v2126 = vrot.slane %v2039, 5
        %v2127 = vrot.slane %v2126, 4
        %v2128 = vrot.slane %v225, 5
        %v2129 = vsel %vm2086, %v2127, %v2128
        %v2130 = vrot.slane %v2128, 4
        %v2131 = vrot.slane %v226, 5
        %v2132 = vsel %vm2086, %v2130, %v2131
        %v2133 = vrot.slane %v2131, 4
        %v2134 = vrot.slane %v227, 5
        %v2135 = vsel %vm2086, %v2133, %v2134
        %v2136 = vrot.slane %v2134, 4
        %v2137 = vrot.slane %v280, 5
        %v2138 = vsel %vm2086, %v2136, %v2137
        %v2139 = vrot.slane %v2040, 5
        %v2140 = vrot.slane %v2139, 4
        %v2141 = vrot.slane %v229, 5
        %v2142 = vsel %vm2086, %v2140, %v2141
        %v2143 = vrot.slane %v2141, 4
        %v2144 = vrot.slane %v230, 5
        %v2145 = vsel %vm2086, %v2143, %v2144
        %v2146 = vrot.slane %v2144, 4
        %v2147 = vrot.slane %v231, 5
        %v2148 = vsel %vm2086, %v2146, %v2147
        %v2149 = vrot.slane %v2147, 4
        %v2150 = vrot.slane %v281, 5
        %v2151 = vsel %vm2086, %v2149, %v2150
        %v2152 = vrot.slane %v2041, 5
        %v2153 = vrot.slane %v2152, 4
        %v2154 = vrot.slane %v233, 5
        %v2155 = vsel %vm2086, %v2153, %v2154
        %v2156 = vrot.slane %v2154, 4
        %v2157 = vrot.slane %v234, 5
        %v2158 = vsel %vm2086, %v2156, %v2157
        %v2159 = vrot.slane %v2157, 4
        %v2160 = vrot.slane %v235, 5
        %v2161 = vsel %vm2086, %v2159, %v2160
        %v2162 = vrot.slane %v2160, 4
        %v2163 = vrot.slane %v282, 5
        %v2164 = vsel %vm2086, %v2162, %v2163
        %v2165 = vrot.slane %v2042, 5
        %v2166 = vrot.slane %v2165, 4
        %v2167 = vrot.slane %v237, 5
        %v2168 = vsel %vm2086, %v2166, %v2167
        %v2169 = vrot.slane %v2167, 4
        %v2170 = vrot.slane %v238, 5
        %v2171 = vsel %vm2086, %v2169, %v2170
        %v2172 = vrot.slane %v2170, 4
        %v2173 = vrot.slane %v239, 5
        %v2174 = vsel %vm2086, %v2172, %v2173
        %v2175 = vrot.slane %v2173, 4
        %v2176 = vrot.slane %v283, 5
        %v2177 = vsel %vm2086, %v2175, %v2176
        %v2178 = vrot.slane %v2043, 5
        %v2179 = vrot.slane %v2178, 4
        %v2180 = vrot.slane %v241, 5
        %v2181 = vsel %vm2086, %v2179, %v2180
        %v2182 = vrot.slane %v2180, 4
        %v2183 = vrot.slane %v242, 5
        %v2184 = vsel %vm2086, %v2182, %v2183
        %v2185 = vrot.slane %v2183, 4
        %v2186 = vrot.slane %v243, 5
        %v2187 = vsel %vm2086, %v2185, %v2186
        %v2188 = vrot.slane %v2186, 4
        %v2189 = vrot.slane %v284, 5
        %v2190 = vsel %vm2086, %v2188, %v2189
        %v2191 = vrot.slane %v2044, 5
        %v2192 = vrot.slane %v2191, 4
        %v2193 = vrot.slane %v245, 5
        %v2194 = vsel %vm2086, %v2192, %v2193
        %v2195 = vrot.slane %v2193, 4
        %v2196 = vrot.slane %v246, 5
        %v2197 = vsel %vm2086, %v2195, %v2196
        %v2198 = vrot.slane %v2196, 4
        %v2199 = vrot.slane %v247, 5
        %v2200 = vsel %vm2086, %v2198, %v2199
        %v2201 = vrot.slane %v2199, 4
        %v2202 = vrot.slane %v285, 5
        %v2203 = vsel %vm2086, %v2201, %v2202
        %v2204 = vrot.slane %v2045, 5
        %v2205 = vrot.slane %v2204, 4
        %v2206 = vrot.slane %v249, 5
        %v2207 = vsel %vm2086, %v2205, %v2206
        %v2208 = vrot.slane %v2206, 4
        %v2209 = vrot.slane %v250, 5
        %v2210 = vsel %vm2086, %v2208, %v2209
        %v2211 = vrot.slane %v2209, 4
        %v2212 = vrot.slane %v251, 5
        %v2213 = vsel %vm2086, %v2211, %v2212
        %v2214 = vrot.slane %v2212, 4
        %v2215 = vrot.slane %v286, 5
        %v2216 = vsel %vm2086, %v2214, %v2215
        %v2217 = vrot.slane %v2046, 5
        %v2218 = vrot.slane %v2217, 4
        %v2219 = vrot.slane %v253, 5
        %v2220 = vsel %vm2086, %v2218, %v2219
        %v2221 = vrot.slane %v2219, 4
        %v2222 = vrot.slane %v254, 5
        %v2223 = vsel %vm2086, %v2221, %v2222
        %v2224 = vrot.slane %v2222, 4
        %v2225 = vrot.slane %v255, 5
        %v2226 = vsel %vm2086, %v2224, %v2225
        %v2227 = vrot.slane %v2225, 4
        %v2228 = vrot.slane %v287, 5
        %v2229 = vsel %vm2086, %v2227, %v2228
        %v2230 = vrot.slane %v2047, 5
        %v2231 = vrot.slane %v2230, 4
        %v2232 = vrot.slane %v257, 5
        %v2233 = vsel %vm2086, %v2231, %v2232
        %v2234 = vrot.slane %v2232, 4
        %v2235 = vrot.slane %v258, 5
        %v2236 = vsel %vm2086, %v2234, %v2235
        %v2237 = vrot.slane %v2235, 4
        %v2238 = vrot.slane %v259, 5
        %v2239 = vsel %vm2086, %v2237, %v2238
        %v2240 = vrot.slane %v2238, 4
        %v2241 = vrot.slane %v288, 5
        %v2242 = vsel %vm2086, %v2240, %v2241
        %v2243 = vrot.slane %v2048, 5
        %v2244 = vrot.slane %v2243, 4
        %v2245 = vrot.slane %v261, 5
        %v2246 = vsel %vm2086, %v2244, %v2245
        %v2247 = vrot.slane %v2245, 4
        %v2248 = vrot.slane %v262, 5
        %v2249 = vsel %vm2086, %v2247, %v2248
        %v2250 = vrot.slane %v2248, 4
        %v2251 = vrot.slane %v263, 5
        %v2252 = vsel %vm2086, %v2250, %v2251
        %v2253 = vrot.slane %v2251, 4
        %v2254 = vrot.slane %v289, 5
        %v2255 = vsel %vm2086, %v2253, %v2254
        %v2256 = vrot.slane %v2049, 5
        %v2257 = vrot.slane %v2256, 4
        %v2258 = vrot.slane %v265, 5
        %v2259 = vsel %vm2086, %v2257, %v2258
        %v2260 = vrot.slane %v2258, 4
        %v2261 = vrot.slane %v266, 5
        %v2262 = vsel %vm2086, %v2260, %v2261
        %v2263 = vrot.slane %v2261, 4
        %v2264 = vrot.slane %v267, 5
        %v2265 = vsel %vm2086, %v2263, %v2264
        %v2266 = vrot.slane %v2264, 4
        %v2267 = vrot.slane %v290, 5
        %v2268 = vsel %vm2086, %v2266, %v2267
        %v2269 = vrot.slane %v2050, 5
        %v2270 = vrot.slane %v2269, 4
        %v2271 = vrot.slane %v269, 5
        %v2272 = vsel %vm2086, %v2270, %v2271
        %v2273 = vrot.slane %v2271, 4
        %v2274 = vrot.slane %v270, 5
        %v2275 = vsel %vm2086, %v2273, %v2274
        %v2276 = vrot.slane %v2274, 4
        %v2277 = vrot.slane %v271, 5
        %v2278 = vsel %vm2086, %v2276, %v2277
        %v2279 = vrot.slane %v2277, 4
        %v2280 = vrot.slane %v291, 5
        %v2281 = vsel %vm2086, %v2279, %v2280
        %v2282 = vrot.slane %v2051, 5
        %v2283 = vrot.slane %v2282, 4
        %v2284 = vrot.slane %v273, 5
        %v2285 = vsel %vm2086, %v2283, %v2284
        %v2286 = vrot.slane %v2284, 4
        %v2287 = vrot.slane %v274, 5
        %v2288 = vsel %vm2086, %v2286, %v2287
        %v2289 = vrot.slane %v2287, 4
        %v2290 = vrot.slane %v275, 5
        %v2291 = vsel %vm2086, %v2289, %v2290
        %v2292 = vrot.slane %v2290, 4
        %v2293 = vrot.slane %v292, 5
        %v2294 = vsel %vm2086, %v2292, %v2293
        %s2295 = scalar_lea.vmem %s1, 4
        %v2296 = vld [vmem:[%s2295] sm:$0x3]
        %v2297 = vunpack.c.l.b16 %v2090
        %v2298 = vunpack.c.l.b16 %v2093
        %v2299 = vunpack.c.l.b16 %v2096
        %v2300 = vunpack.c.l.b16 %v2099
        %v2301 = vunpack.c.l.b16 %v2103
        %v2302 = vunpack.c.l.b16 %v2106
        %v2303 = vunpack.c.l.b16 %v2109
        %v2304 = vunpack.c.l.b16 %v2112
        %v2305 = vunpack.c.l.b16 %v2116
        %v2306 = vunpack.c.l.b16 %v2119
        %v2307 = vunpack.c.l.b16 %v2122
        %v2308 = vunpack.c.l.b16 %v2125
        %v2309 = vunpack.c.l.b16 %v2129
        %v2310 = vunpack.c.l.b16 %v2132
        %v2311 = vunpack.c.l.b16 %v2135
        %v2312 = vunpack.c.l.b16 %v2138
        %v2313 = vunpack.c.l.b16 %v2142
        %v2314 = vunpack.c.l.b16 %v2145
        %v2315 = vunpack.c.l.b16 %v2148
        %v2316 = vunpack.c.l.b16 %v2151
        %v2317 = vunpack.c.l.b16 %v2155
        %v2318 = vunpack.c.l.b16 %v2158
        %v2319 = vunpack.c.l.b16 %v2161
        %v2320 = vunpack.c.l.b16 %v2164
        %v2321 = vunpack.c.l.b16 %v2168
        %v2322 = vunpack.c.l.b16 %v2171
        %v2323 = vunpack.c.l.b16 %v2174
        %v2324 = vunpack.c.l.b16 %v2177
        %v2325 = vunpack.c.l.b16 %v2181
        %v2326 = vunpack.c.l.b16 %v2184
        %v2327 = vunpack.c.l.b16 %v2187
        %v2328 = vunpack.c.l.b16 %v2190
        %v2329 = vunpack.c.l.b16 %v2194
        %v2330 = vunpack.c.l.b16 %v2197
        %v2331 = vunpack.c.l.b16 %v2200
        %v2332 = vunpack.c.l.b16 %v2203
        %v2333 = vunpack.c.l.b16 %v2207
        %v2334 = vunpack.c.l.b16 %v2210
        %v2335 = vunpack.c.l.b16 %v2213
        %v2336 = vunpack.c.l.b16 %v2216
        %v2337 = vunpack.c.l.b16 %v2220
        %v2338 = vunpack.c.l.b16 %v2223
        %v2339 = vunpack.c.l.b16 %v2226
        %v2340 = vunpack.c.l.b16 %v2229
        %v2341 = vunpack.c.l.b16 %v2233
        %v2342 = vunpack.c.l.b16 %v2236
        %v2343 = vunpack.c.l.b16 %v2239
        %v2344 = vunpack.c.l.b16 %v2242
        %v2345 = vunpack.c.l.b16 %v2246
        %v2346 = vunpack.c.l.b16 %v2249
        %v2347 = vunpack.c.l.b16 %v2252
        %v2348 = vunpack.c.l.b16 %v2255
        %v2349 = vunpack.c.l.b16 %v2259
        %v2350 = vunpack.c.l.b16 %v2262
        %v2351 = vunpack.c.l.b16 %v2265
        %v2352 = vunpack.c.l.b16 %v2268
        %v2353 = vunpack.c.l.b16 %v2272
        %v2354 = vunpack.c.l.b16 %v2275
        %v2355 = vunpack.c.l.b16 %v2278
        %v2356 = vunpack.c.l.b16 %v2281
        %v2357 = vunpack.c.l.b16 %v2285
        %v2358 = vunpack.c.l.b16 %v2288
        %v2359 = vunpack.c.l.b16 %v2291
        %v2360 = vunpack.c.l.b16 %v2294
        %v2361 = vpack.c.b16 %v2298, %v2297
        %v2362 = vpack.c.b16 %v2300, %v2299
        %v2363 = vpack.c.b16 %v2302, %v2301
        %v2364 = vpack.c.b16 %v2304, %v2303
        %v2365 = vpack.c.b16 %v2306, %v2305
        %v2366 = vpack.c.b16 %v2308, %v2307
        %v2367 = vpack.c.b16 %v2310, %v2309
        %v2368 = vpack.c.b16 %v2312, %v2311
        %v2369 = vpack.c.b16 %v2314, %v2313
        %v2370 = vpack.c.b16 %v2316, %v2315
        %v2371 = vpack.c.b16 %v2318, %v2317
        %v2372 = vpack.c.b16 %v2320, %v2319
        %v2373 = vpack.c.b16 %v2322, %v2321
        %v2374 = vpack.c.b16 %v2324, %v2323
        %v2375 = vpack.c.b16 %v2326, %v2325
        %v2376 = vpack.c.b16 %v2328, %v2327
        %v2377 = vpack.c.b16 %v2330, %v2329
        %v2378 = vpack.c.b16 %v2332, %v2331
        %v2379 = vpack.c.b16 %v2334, %v2333
        %v2380 = vpack.c.b16 %v2336, %v2335
        %v2381 = vpack.c.b16 %v2338, %v2337
        %v2382 = vpack.c.b16 %v2340, %v2339
        %v2383 = vpack.c.b16 %v2342, %v2341
        %v2384 = vpack.c.b16 %v2344, %v2343
        %v2385 = vpack.c.b16 %v2346, %v2345
        %v2386 = vpack.c.b16 %v2348, %v2347
        %v2387 = vpack.c.b16 %v2350, %v2349
        %v2388 = vpack.c.b16 %v2352, %v2351
        %v2389 = vpack.c.b16 %v2354, %v2353
        %v2390 = vpack.c.b16 %v2356, %v2355
        %v2391 = vpack.c.b16 %v2358, %v2357
        %v2392 = vpack.c.b16 %v2360, %v2359
        %v2394 = vsel %vm1098, %v2361, 0
        %v2397 = vsel %vm1098, %v2362, 0
        %v2400 = vsel %vm1098, %v2363, 0
        %v2403 = vsel %vm1098, %v2364, 0
        %v2406 = vsel %vm1098, %v2365, 0
        %v2409 = vsel %vm1098, %v2366, 0
        %v2412 = vsel %vm1098, %v2367, 0
        %v2415 = vsel %vm1098, %v2368, 0
        %v2418 = vsel %vm1098, %v2369, 0
        %v2421 = vsel %vm1098, %v2370, 0
        %v2424 = vsel %vm1098, %v2371, 0
        %v2427 = vsel %vm1098, %v2372, 0
        %v2430 = vsel %vm1098, %v2373, 0
        %v2433 = vsel %vm1098, %v2374, 0
        %v2436 = vsel %vm1098, %v2375, 0
        %v2439 = vsel %vm1098, %v2376, 0
        %v2442 = vsel %vm1098, %v2377, 0
        %v2445 = vsel %vm1098, %v2378, 0
        %v2448 = vsel %vm1098, %v2379, 0
        %v2451 = vsel %vm1098, %v2380, 0
        %v2454 = vsel %vm1098, %v2381, 0
        %v2457 = vsel %vm1098, %v2382, 0
        %v2460 = vsel %vm1098, %v2383, 0
        %v2463 = vsel %vm1098, %v2384, 0
        %v2466 = vsel %vm1098, %v2385, 0
        %v2469 = vsel %vm1098, %v2386, 0
        %v2472 = vsel %vm1098, %v2387, 0
        %v2475 = vsel %vm1098, %v2388, 0
        %v2478 = vsel %vm1098, %v2389, 0
        %v2481 = vsel %vm1098, %v2390, 0
        %v2484 = vsel %vm1098, %v2391, 0
        %v2487 = vsel %vm1098, %v2392, 0
        %v2490 = vsel %vm1195, %v2296, 0
        %2492 = vmatprep.subr.bf16.mxu0 0
        %2493 = vmatpush1.bf16.msra.mxu0 %v2490
        %2494 = vmatprep.subr.bf16.mxu0 0
        %2495 = vmatpush1.bf16.msra.mxu0 0
        %2496 = vmatprep.subr.bf16.mxu0 0
        %2497 = vmatpush1.bf16.msra.mxu0 0
        %2498 = vmatprep.subr.bf16.mxu0 0
        %2499 = vmatpush1.bf16.msra.mxu0 0
        %2500 = vmatprep.subr.bf16.mxu0 0
        %2501 = vmatpush1.bf16.msra.mxu0 0
        %2502 = vmatprep.subr.bf16.mxu0 0
        %2503 = vmatpush1.bf16.msra.mxu0 0
        %2504 = vmatprep.subr.bf16.mxu0 0
        %2505 = vmatpush1.bf16.msra.mxu0 0
        %2506 = vmatprep.subr.bf16.mxu0 0
        %2507 = vmatpush1.bf16.msra.mxu0 0
        %2508 = vmatprep.subr.bf16.mxu0 0
        %2509 = vmatpush1.bf16.msra.mxu0 0
        %2510 = vmatprep.subr.bf16.mxu0 0
        %2511 = vmatpush1.bf16.msra.mxu0 0
        %2512 = vmatprep.subr.bf16.mxu0 0
        %2513 = vmatpush1.bf16.msra.mxu0 0
        %2514 = vmatprep.subr.bf16.mxu0 0
        %2515 = vmatpush1.bf16.msra.mxu0 0
        %2516 = vmatprep.subr.bf16.mxu0 0
        %2517 = vmatpush1.bf16.msra.mxu0 0
        %2518 = vmatprep.subr.bf16.mxu0 0
        %2519 = vmatpush1.bf16.msra.mxu0 0
        %2520 = vmatprep.subr.bf16.mxu0 0
        %2521 = vmatpush1.bf16.msra.mxu0 0
        %2522 = vmatprep.subr.bf16.mxu0 0
        %2523 = vmatpush1.bf16.msra.mxu0 0
        %2524 = vmatprep.mubr.bf16.mxu0 0
        %2525 = vmatmul.mubr.bf16.gmra.mrb[0].mxu0 %v2394
        %v2526 = vpop.f32.mrb[0].mxu0
        %v2527 = vadd.f32 0.0, %v2526
        %v2528 = vpop.f32.mrb[0].mxu0
        %v2529 = vpop.f32.mrb[0].mxu0
        %v2530 = vadd.f32 0.0, %v2529
        %v2531 = vpop.f32.mrb[0].mxu0
        %2532 = vmatprep.mubr.bf16.mxu0 0
        %2533 = vmatmul.mubr.bf16.gmra.mrb[0].mxu0 %v2397
        %v2534 = vpop.f32.mrb[0].mxu0
        %v2535 = vadd.f32 0.0, %v2534
        %v2536 = vpop.f32.mrb[0].mxu0
        %v2537 = vpop.f32.mrb[0].mxu0
        %v2538 = vadd.f32 0.0, %v2537
        %v2539 = vpop.f32.mrb[0].mxu0
        %2540 = vmatprep.mubr.bf16.mxu0 0
        %2541 = vmatmul.mubr.bf16.gmra.mrb[0].mxu0 %v2400
        %v2542 = vpop.f32.mrb[0].mxu0
        %v2543 = vadd.f32 0.0, %v2542
        %v2544 = vpop.f32.mrb[0].mxu0
        %v2545 = vpop.f32.mrb[0].mxu0
        %v2546 = vadd.f32 0.0, %v2545
        %v2547 = vpop.f32.mrb[0].mxu0
        %2548 = vmatprep.mubr.bf16.mxu0 0
        %2549 = vmatmul.mubr.bf16.gmra.mrb[0].mxu0 %v2403
        %v2550 = vpop.f32.mrb[0].mxu0
        %v2551 = vadd.f32 0.0, %v2550
        %v2552 = vpop.f32.mrb[0].mxu0
        %v2553 = vpop.f32.mrb[0].mxu0
        %v2554 = vadd.f32 0.0, %v2553
        %v2555 = vpop.f32.mrb[0].mxu0
        %2556 = vmatprep.mubr.bf16.mxu0 0
        %2557 = vmatmul.mubr.bf16.gmra.mrb[0].mxu0 %v2406
        %v2558 = vpop.f32.mrb[0].mxu0
        %v2559 = vadd.f32 0.0, %v2558
        %v2560 = vpop.f32.mrb[0].mxu0
        %v2561 = vpop.f32.mrb[0].mxu0
        %v2562 = vadd.f32 0.0, %v2561
        %v2563 = vpop.f32.mrb[0].mxu0
        %2564 = vmatprep.mubr.bf16.mxu0 0
        %2565 = vmatmul.mubr.bf16.gmra.mrb[0].mxu0 %v2409
        %v2566 = vpop.f32.mrb[0].mxu0
        %v2567 = vadd.f32 0.0, %v2566
        %v2568 = vpop.f32.mrb[0].mxu0
        %v2569 = vpop.f32.mrb[0].mxu0
        %v2570 = vadd.f32 0.0, %v2569
        %v2571 = vpop.f32.mrb[0].mxu0
        %2572 = vmatprep.mubr.bf16.mxu0 0
        %2573 = vmatmul.mubr.bf16.gmra.mrb[0].mxu0 %v2412
        %v2574 = vpop.f32.mrb[0].mxu0
        %v2575 = vadd.f32 0.0, %v2574
        %v2576 = vpop.f32.mrb[0].mxu0
        %v2577 = vpop.f32.mrb[0].mxu0
        %v2578 = vadd.f32 0.0, %v2577
        %v2579 = vpop.f32.mrb[0].mxu0
        %2580 = vmatprep.mubr.bf16.mxu0 0
        %2581 = vmatmul.mubr.bf16.gmra.mrb[0].mxu0 %v2415
        %v2582 = vpop.f32.mrb[0].mxu0
        %v2583 = vadd.f32 0.0, %v2582
        %v2584 = vpop.f32.mrb[0].mxu0
        %v2585 = vpop.f32.mrb[0].mxu0
        %v2586 = vadd.f32 0.0, %v2585
        %v2587 = vpop.f32.mrb[0].mxu0
        %2588 = vmatprep.mubr.bf16.mxu0 0
        %2589 = vmatmul.mubr.bf16.gmra.mrb[0].mxu0 %v2418
        %v2590 = vpop.f32.mrb[0].mxu0
        %v2591 = vadd.f32 0.0, %v2590
        %v2592 = vpop.f32.mrb[0].mxu0
        %v2593 = vpop.f32.mrb[0].mxu0
        %v2594 = vadd.f32 0.0, %v2593
        %v2595 = vpop.f32.mrb[0].mxu0
        %2596 = vmatprep.mubr.bf16.mxu0 0
        %2597 = vmatmul.mubr.bf16.gmra.mrb[0].mxu0 %v2421
        %v2598 = vpop.f32.mrb[0].mxu0
        %v2599 = vadd.f32 0.0, %v2598
        %v2600 = vpop.f32.mrb[0].mxu0
        %v2601 = vpop.f32.mrb[0].mxu0
        %v2602 = vadd.f32 0.0, %v2601
        %v2603 = vpop.f32.mrb[0].mxu0
        %2604 = vmatprep.mubr.bf16.mxu0 0
        %2605 = vmatmul.mubr.bf16.gmra.mrb[0].mxu0 %v2424
        %v2606 = vpop.f32.mrb[0].mxu0
        %v2607 = vadd.f32 0.0, %v2606
        %v2608 = vpop.f32.mrb[0].mxu0
        %v2609 = vpop.f32.mrb[0].mxu0
        %v2610 = vadd.f32 0.0, %v2609
        %v2611 = vpop.f32.mrb[0].mxu0
        %2612 = vmatprep.mubr.bf16.mxu0 0
        %2613 = vmatmul.mubr.bf16.gmra.mrb[0].mxu0 %v2427
        %v2614 = vpop.f32.mrb[0].mxu0
        %v2615 = vadd.f32 0.0, %v2614
        %v2616 = vpop.f32.mrb[0].mxu0
        %v2617 = vpop.f32.mrb[0].mxu0
        %v2618 = vadd.f32 0.0, %v2617
        %v2619 = vpop.f32.mrb[0].mxu0
        %2620 = vmatprep.mubr.bf16.mxu0 0
        %2621 = vmatmul.mubr.bf16.gmra.mrb[0].mxu0 %v2430
        %v2622 = vpop.f32.mrb[0].mxu0
        %v2623 = vadd.f32 0.0, %v2622
        %v2624 = vpop.f32.mrb[0].mxu0
        %v2625 = vpop.f32.mrb[0].mxu0
        %v2626 = vadd.f32 0.0, %v2625
        %v2627 = vpop.f32.mrb[0].mxu0
        %2628 = vmatprep.mubr.bf16.mxu0 0
        %2629 = vmatmul.mubr.bf16.gmra.mrb[0].mxu0 %v2433
        %v2630 = vpop.f32.mrb[0].mxu0
        %v2631 = vadd.f32 0.0, %v2630
        %v2632 = vpop.f32.mrb[0].mxu0
        %v2633 = vpop.f32.mrb[0].mxu0
        %v2634 = vadd.f32 0.0, %v2633
        %v2635 = vpop.f32.mrb[0].mxu0
        %2636 = vmatprep.mubr.bf16.mxu0 0
        %2637 = vmatmul.mubr.bf16.gmra.mrb[0].mxu0 %v2436
        %v2638 = vpop.f32.mrb[0].mxu0
        %v2639 = vadd.f32 0.0, %v2638
        %v2640 = vpop.f32.mrb[0].mxu0
        %v2641 = vpop.f32.mrb[0].mxu0
        %v2642 = vadd.f32 0.0, %v2641
        %v2643 = vpop.f32.mrb[0].mxu0
        %2644 = vmatprep.mubr.bf16.mxu0 0
        %2645 = vmatmul.mubr.bf16.gmra.mrb[0].mxu0 %v2439
        %v2646 = vpop.f32.mrb[0].mxu0
        %v2647 = vadd.f32 0.0, %v2646
        %v2648 = vpop.f32.mrb[0].mxu0
        %v2649 = vpop.f32.mrb[0].mxu0
        %v2650 = vadd.f32 0.0, %v2649
        %v2651 = vpop.f32.mrb[0].mxu0
        %2652 = vmatprep.mubr.bf16.mxu0 0
        %2653 = vmatmul.mubr.bf16.gmra.mrb[0].mxu0 %v2442
        %v2654 = vpop.f32.mrb[0].mxu0
        %v2655 = vadd.f32 0.0, %v2654
        %v2656 = vpop.f32.mrb[0].mxu0
        %v2657 = vpop.f32.mrb[0].mxu0
        %v2658 = vadd.f32 0.0, %v2657
        %v2659 = vpop.f32.mrb[0].mxu0
        %2660 = vmatprep.mubr.bf16.mxu0 0
        %2661 = vmatmul.mubr.bf16.gmra.mrb[0].mxu0 %v2445
        %v2662 = vpop.f32.mrb[0].mxu0
        %v2663 = vadd.f32 0.0, %v2662
        %v2664 = vpop.f32.mrb[0].mxu0
        %v2665 = vpop.f32.mrb[0].mxu0
        %v2666 = vadd.f32 0.0, %v2665
        %v2667 = vpop.f32.mrb[0].mxu0
        %2668 = vmatprep.mubr.bf16.mxu0 0
        %2669 = vmatmul.mubr.bf16.gmra.mrb[0].mxu0 %v2448
        %v2670 = vpop.f32.mrb[0].mxu0
        %v2671 = vadd.f32 0.0, %v2670
        %v2672 = vpop.f32.mrb[0].mxu0
        %v2673 = vpop.f32.mrb[0].mxu0
        %v2674 = vadd.f32 0.0, %v2673
        %v2675 = vpop.f32.mrb[0].mxu0
        %2676 = vmatprep.mubr.bf16.mxu0 0
        %2677 = vmatmul.mubr.bf16.gmra.mrb[0].mxu0 %v2451
        %v2678 = vpop.f32.mrb[0].mxu0
        %v2679 = vadd.f32 0.0, %v2678
        %v2680 = vpop.f32.mrb[0].mxu0
        %v2681 = vpop.f32.mrb[0].mxu0
        %v2682 = vadd.f32 0.0, %v2681
        %v2683 = vpop.f32.mrb[0].mxu0
        %2684 = vmatprep.mubr.bf16.mxu0 0
        %2685 = vmatmul.mubr.bf16.gmra.mrb[0].mxu0 %v2454
        %v2686 = vpop.f32.mrb[0].mxu0
        %v2687 = vadd.f32 0.0, %v2686
        %v2688 = vpop.f32.mrb[0].mxu0
        %v2689 = vpop.f32.mrb[0].mxu0
        %v2690 = vadd.f32 0.0, %v2689
        %v2691 = vpop.f32.mrb[0].mxu0
        %2692 = vmatprep.mubr.bf16.mxu0 0
        %2693 = vmatmul.mubr.bf16.gmra.mrb[0].mxu0 %v2457
        %v2694 = vpop.f32.mrb[0].mxu0
        %v2695 = vadd.f32 0.0, %v2694
        %v2696 = vpop.f32.mrb[0].mxu0
        %v2697 = vpop.f32.mrb[0].mxu0
        %v2698 = vadd.f32 0.0, %v2697
        %v2699 = vpop.f32.mrb[0].mxu0
        %2700 = vmatprep.mubr.bf16.mxu0 0
        %2701 = vmatmul.mubr.bf16.gmra.mrb[0].mxu0 %v2460
        %v2702 = vpop.f32.mrb[0].mxu0
        %v2703 = vadd.f32 0.0, %v2702
        %v2704 = vpop.f32.mrb[0].mxu0
        %v2705 = vpop.f32.mrb[0].mxu0
        %v2706 = vadd.f32 0.0, %v2705
        %v2707 = vpop.f32.mrb[0].mxu0
        %2708 = vmatprep.mubr.bf16.mxu0 0
        %2709 = vmatmul.mubr.bf16.gmra.mrb[0].mxu0 %v2463
        %v2710 = vpop.f32.mrb[0].mxu0
        %v2711 = vadd.f32 0.0, %v2710
        %v2712 = vpop.f32.mrb[0].mxu0
        %v2713 = vpop.f32.mrb[0].mxu0
        %v2714 = vadd.f32 0.0, %v2713
        %v2715 = vpop.f32.mrb[0].mxu0
        %2716 = vmatprep.mubr.bf16.mxu0 0
        %2717 = vmatmul.mubr.bf16.gmra.mrb[0].mxu0 %v2466
        %v2718 = vpop.f32.mrb[0].mxu0
        %v2719 = vadd.f32 0.0, %v2718
        %v2720 = vpop.f32.mrb[0].mxu0
        %v2721 = vpop.f32.mrb[0].mxu0
        %v2722 = vadd.f32 0.0, %v2721
        %v2723 = vpop.f32.mrb[0].mxu0
        %2724 = vmatprep.mubr.bf16.mxu0 0
        %2725 = vmatmul.mubr.bf16.gmra.mrb[0].mxu0 %v2469
        %v2726 = vpop.f32.mrb[0].mxu0
        %v2727 = vadd.f32 0.0, %v2726
        %v2728 = vpop.f32.mrb[0].mxu0
        %v2729 = vpop.f32.mrb[0].mxu0
        %v2730 = vadd.f32 0.0, %v2729
        %v2731 = vpop.f32.mrb[0].mxu0
        %2732 = vmatprep.mubr.bf16.mxu0 0
        %2733 = vmatmul.mubr.bf16.gmra.mrb[0].mxu0 %v2472
        %v2734 = vpop.f32.mrb[0].mxu0
        %v2735 = vadd.f32 0.0, %v2734
        %v2736 = vpop.f32.mrb[0].mxu0
        %v2737 = vpop.f32.mrb[0].mxu0
        %v2738 = vadd.f32 0.0, %v2737
        %v2739 = vpop.f32.mrb[0].mxu0
        %2740 = vmatprep.mubr.bf16.mxu0 0
        %2741 = vmatmul.mubr.bf16.gmra.mrb[0].mxu0 %v2475
        %v2742 = vpop.f32.mrb[0].mxu0
        %v2743 = vadd.f32 0.0, %v2742
        %v2744 = vpop.f32.mrb[0].mxu0
        %v2745 = vpop.f32.mrb[0].mxu0
        %v2746 = vadd.f32 0.0, %v2745
        %v2747 = vpop.f32.mrb[0].mxu0
        %2748 = vmatprep.mubr.bf16.mxu0 0
        %2749 = vmatmul.mubr.bf16.gmra.mrb[0].mxu0 %v2478
        %v2750 = vpop.f32.mrb[0].mxu0
        %v2751 = vadd.f32 0.0, %v2750
        %v2752 = vpop.f32.mrb[0].mxu0
        %v2753 = vpop.f32.mrb[0].mxu0
        %v2754 = vadd.f32 0.0, %v2753
        %v2755 = vpop.f32.mrb[0].mxu0
        %2756 = vmatprep.mubr.bf16.mxu0 0
        %2757 = vmatmul.mubr.bf16.gmra.mrb[0].mxu0 %v2481
        %v2758 = vpop.f32.mrb[0].mxu0
        %v2759 = vadd.f32 0.0, %v2758
        %v2760 = vpop.f32.mrb[0].mxu0
        %v2761 = vpop.f32.mrb[0].mxu0
        %v2762 = vadd.f32 0.0, %v2761
        %v2763 = vpop.f32.mrb[0].mxu0
        %2764 = vmatprep.mubr.bf16.mxu0 0
        %2765 = vmatmul.mubr.bf16.gmra.mrb[0].mxu0 %v2484
        %v2766 = vpop.f32.mrb[0].mxu0
        %v2767 = vadd.f32 0.0, %v2766
        %v2768 = vpop.f32.mrb[0].mxu0
        %v2769 = vpop.f32.mrb[0].mxu0
        %v2770 = vadd.f32 0.0, %v2769
        %v2771 = vpop.f32.mrb[0].mxu0
        %2772 = vmatprep.mubr.bf16.mxu0 0
        %2773 = vmatmul.mubr.bf16.gmra.mrb[0].mxu0 %v2487
        %v2774 = vpop.f32.mrb[0].mxu0
        %v2775 = vadd.f32 0.0, %v2774
        %v2776 = vpop.f32.mrb[0].mxu0
        %v2777 = vpop.f32.mrb[0].mxu0
        %v2778 = vadd.f32 0.0, %v2777
        %v2779 = vpop.f32.mrb[0].mxu0
        %2780 = vdwg.mxu0
        %v2781 = vadd.f32 %v1782, %v2527
        %v2782 = vadd.f32 %v1785, %v2530
        %v2783 = vadd.f32 %v1790, %v2535
        %v2784 = vadd.f32 %v1793, %v2538
        %v2785 = vadd.f32 %v1798, %v2543
        %v2786 = vadd.f32 %v1801, %v2546
        %v2787 = vadd.f32 %v1806, %v2551
        %v2788 = vadd.f32 %v1809, %v2554
        %v2789 = vadd.f32 %v1814, %v2559
        %v2790 = vadd.f32 %v1817, %v2562
        %v2791 = vadd.f32 %v1822, %v2567
        %v2792 = vadd.f32 %v1825, %v2570
        %v2793 = vadd.f32 %v1830, %v2575
        %v2794 = vadd.f32 %v1833, %v2578
        %v2795 = vadd.f32 %v1838, %v2583
        %v2796 = vadd.f32 %v1841, %v2586
        %v2797 = vadd.f32 %v1846, %v2591
        %v2798 = vadd.f32 %v1849, %v2594
        %v2799 = vadd.f32 %v1854, %v2599
        %v2800 = vadd.f32 %v1857, %v2602
        %v2801 = vadd.f32 %v1862, %v2607
        %v2802 = vadd.f32 %v1865, %v2610
        %v2803 = vadd.f32 %v1870, %v2615
        %v2804 = vadd.f32 %v1873, %v2618
        %v2805 = vadd.f32 %v1878, %v2623
        %v2806 = vadd.f32 %v1881, %v2626
        %v2807 = vadd.f32 %v1886, %v2631
        %v2808 = vadd.f32 %v1889, %v2634
        %v2809 = vadd.f32 %v1894, %v2639
        %v2810 = vadd.f32 %v1897, %v2642
        %v2811 = vadd.f32 %v1902, %v2647
        %v2812 = vadd.f32 %v1905, %v2650
        %v2813 = vadd.f32 %v1910, %v2655
        %v2814 = vadd.f32 %v1913, %v2658
        %v2815 = vadd.f32 %v1918, %v2663
        %v2816 = vadd.f32 %v1921, %v2666
        %v2817 = vadd.f32 %v1926, %v2671
        %v2818 = vadd.f32 %v1929, %v2674
        %v2819 = vadd.f32 %v1934, %v2679
        %v2820 = vadd.f32 %v1937, %v2682
        %v2821 = vadd.f32 %v1942, %v2687
        %v2822 = vadd.f32 %v1945, %v2690
        %v2823 = vadd.f32 %v1950, %v2695
        %v2824 = vadd.f32 %v1953, %v2698
        %v2825 = vadd.f32 %v1958, %v2703
        %v2826 = vadd.f32 %v1961, %v2706
        %v2827 = vadd.f32 %v1966, %v2711
        %v2828 = vadd.f32 %v1969, %v2714
        %v2829 = vadd.f32 %v1974, %v2719
        %v2830 = vadd.f32 %v1977, %v2722
        %v2831 = vadd.f32 %v1982, %v2727
        %v2832 = vadd.f32 %v1985, %v2730
        %v2833 = vadd.f32 %v1990, %v2735
        %v2834 = vadd.f32 %v1993, %v2738
        %v2835 = vadd.f32 %v1998, %v2743
        %v2836 = vadd.f32 %v2001, %v2746
        %v2837 = vadd.f32 %v2006, %v2751
        %v2838 = vadd.f32 %v2009, %v2754
        %v2839 = vadd.f32 %v2014, %v2759
        %v2840 = vadd.f32 %v2017, %v2762
        %v2841 = vadd.f32 %v2022, %v2767
        %v2842 = vadd.f32 %v2025, %v2770
        %v2843 = vadd.f32 %v2030, %v2775
        %v2844 = vadd.f32 %v2033, %v2778
        %s2845 = sadd.s32 %s208, 1
        %s2846 = smul.u32 %s2845, 5
        %s2847 = smul.addr %s2846, 4
        %s2848 = scalar_lea.vmem %s205, %s2847
        %v2849 = vld [vmem:[%s2848] sm:$0xf]
        %v2850 = vld [vmem:[%s2848 + $0x4] sm:$0xf]
        %v2851 = vld [vmem:[%s2848 + $0x8] sm:$0xf]
        %v2852 = vld [vmem:[%s2848 + $0xc] sm:$0xf]
        %v2853 = vld [vmem:[%s2848 + $0x14] sm:$0xf]
        %v2854 = vld [vmem:[%s2848 + $0x18] sm:$0xf]
        %v2855 = vld [vmem:[%s2848 + $0x1c] sm:$0xf]
        %v2856 = vld [vmem:[%s2848 + $0x20] sm:$0xf]
        %v2857 = vld [vmem:[%s2848 + $0x28] sm:$0xf]
        %v2858 = vld [vmem:[%s2848 + $0x2c] sm:$0xf]
        %v2859 = vld [vmem:[%s2848 + $0x30] sm:$0xf]
        %v2860 = vld [vmem:[%s2848 + $0x34] sm:$0xf]
        %v2861 = vld [vmem:[%s2848 + $0x3c] sm:$0xf]
        %v2862 = vld [vmem:[%s2848 + $0x40] sm:$0xf]
        %v2863 = vld [vmem:[%s2848 + $0x44] sm:$0xf]
        %v2864 = vld [vmem:[%s2848 + $0x48] sm:$0xf]
        %v2865 = vld [vmem:[%s2848 + $0x50] sm:$0xf]
        %v2866 = vld [vmem:[%s2848 + $0x54] sm:$0xf]
        %v2867 = vld [vmem:[%s2848 + $0x58] sm:$0xf]
        %v2868 = vld [vmem:[%s2848 + $0x5c] sm:$0xf]
        %v2869 = vld [vmem:[%s2848 + $0x64] sm:$0xf]
        %v2870 = vld [vmem:[%s2848 + $0x68] sm:$0xf]
        %v2871 = vld [vmem:[%s2848 + $0x6c] sm:$0xf]
        %v2872 = vld [vmem:[%s2848 + $0x70] sm:$0xf]
        %v2873 = vld [vmem:[%s2848 + $0x78] sm:$0xf]
        %v2874 = vld [vmem:[%s2848 + $0x7c] sm:$0xf]
        %v2875 = vld [vmem:[%s2848 + $0x80] sm:$0xf]
        %v2876 = vld [vmem:[%s2848 + $0x84] sm:$0xf]
        %v2877 = vld [vmem:[%s2848 + $0x8c] sm:$0xf]
        %v2878 = vld [vmem:[%s2848 + $0x90] sm:$0xf]
        %v2879 = vld [vmem:[%s2848 + $0x94] sm:$0xf]
        %v2880 = vld [vmem:[%s2848 + $0x98] sm:$0xf]
        %v2881 = vld [vmem:[%s2848 + $0xa0] sm:$0xf]
        %v2882 = vld [vmem:[%s2848 + $0xa4] sm:$0xf]
        %v2883 = vld [vmem:[%s2848 + $0xa8] sm:$0xf]
        %v2884 = vld [vmem:[%s2848 + $0xac] sm:$0xf]
        %v2885 = vld [vmem:[%s2848 + $0xb4] sm:$0xf]
        %v2886 = vld [vmem:[%s2848 + $0xb8] sm:$0xf]
        %v2887 = vld [vmem:[%s2848 + $0xbc] sm:$0xf]
        %v2888 = vld [vmem:[%s2848 + $0xc0] sm:$0xf]
        %v2889 = vld [vmem:[%s2848 + $0xc8] sm:$0xf]
        %v2890 = vld [vmem:[%s2848 + $0xcc] sm:$0xf]
        %v2891 = vld [vmem:[%s2848 + $0xd0] sm:$0xf]
        %v2892 = vld [vmem:[%s2848 + $0xd4] sm:$0xf]
        %v2893 = vld [vmem:[%s2848 + $0xdc] sm:$0xf]
        %v2894 = vld [vmem:[%s2848 + $0xe0] sm:$0xf]
        %v2895 = vld [vmem:[%s2848 + $0xe4] sm:$0xf]
        %v2896 = vld [vmem:[%s2848 + $0xe8] sm:$0xf]
        %v2897 = vld [vmem:[%s2848 + $0xf0] sm:$0xf]
        %v2898 = vld [vmem:[%s2848 + $0xf4] sm:$0xf]
        %v2899 = vld [vmem:[%s2848 + $0xf8] sm:$0xf]
        %v2900 = vld [vmem:[%s2848 + $0xfc] sm:$0xf]
        %v2901 = vld [vmem:[%s2848 + $0x104] sm:$0xf]
        %v2902 = vld [vmem:[%s2848 + $0x108] sm:$0xf]
        %v2903 = vld [vmem:[%s2848 + $0x10c] sm:$0xf]
        %v2904 = vld [vmem:[%s2848 + $0x110] sm:$0xf]
        %v2905 = vld [vmem:[%s2848 + $0x118] sm:$0xf]
        %v2906 = vld [vmem:[%s2848 + $0x11c] sm:$0xf]
        %v2907 = vld [vmem:[%s2848 + $0x120] sm:$0xf]
        %v2908 = vld [vmem:[%s2848 + $0x124] sm:$0xf]
        %v2909 = vld [vmem:[%s2848 + $0x12c] sm:$0xf]
        %v2910 = vld [vmem:[%s2848 + $0x130] sm:$0xf]
        %v2911 = vld [vmem:[%s2848 + $0x134] sm:$0xf]
        %v2912 = vld [vmem:[%s2848 + $0x138] sm:$0xf]
        %s2913 = scalar_lea.vmem %s1, 6
        %v2914 = vld [vmem:[%s2913] sm:$0x3]
        %v2979 = vunpack.c.l.b16 %v2849
        %v2980 = vunpack.c.l.b16 %v2850
        %v2981 = vunpack.c.l.b16 %v2851
        %v2982 = vunpack.c.l.b16 %v2852
        %v2983 = vunpack.c.l.b16 %v2853
        %v2984 = vunpack.c.l.b16 %v2854
        %v2985 = vunpack.c.l.b16 %v2855
        %v2986 = vunpack.c.l.b16 %v2856
        %v2987 = vunpack.c.l.b16 %v2857
        %v2988 = vunpack.c.l.b16 %v2858
        %v2989 = vunpack.c.l.b16 %v2859
        %v2990 = vunpack.c.l.b16 %v2860
        %v2991 = vunpack.c.l.b16 %v2861
        %v2992 = vunpack.c.l.b16 %v2862
        %v2993 = vunpack.c.l.b16 %v2863
        %v2994 = vunpack.c.l.b16 %v2864
        %v2995 = vunpack.c.l.b16 %v2865
        %v2996 = vunpack.c.l.b16 %v2866
        %v2997 = vunpack.c.l.b16 %v2867
        %v2998 = vunpack.c.l.b16 %v2868
        %v2999 = vunpack.c.l.b16 %v2869
        %v3000 = vunpack.c.l.b16 %v2870
        %v3001 = vunpack.c.l.b16 %v2871
        %v3002 = vunpack.c.l.b16 %v2872
        %v3003 = vunpack.c.l.b16 %v2873
        %v3004 = vunpack.c.l.b16 %v2874
        %v3005 = vunpack.c.l.b16 %v2875
        %v3006 = vunpack.c.l.b16 %v2876
        %v3007 = vunpack.c.l.b16 %v2877
        %v3008 = vunpack.c.l.b16 %v2878
        %v3009 = vunpack.c.l.b16 %v2879
        %v3010 = vunpack.c.l.b16 %v2880
        %v3011 = vunpack.c.l.b16 %v2881
        %v3012 = vunpack.c.l.b16 %v2882
        %v3013 = vunpack.c.l.b16 %v2883
        %v3014 = vunpack.c.l.b16 %v2884
        %v3015 = vunpack.c.l.b16 %v2885
        %v3016 = vunpack.c.l.b16 %v2886
        %v3017 = vunpack.c.l.b16 %v2887
        %v3018 = vunpack.c.l.b16 %v2888
        %v3019 = vunpack.c.l.b16 %v2889
        %v3020 = vunpack.c.l.b16 %v2890
        %v3021 = vunpack.c.l.b16 %v2891
        %v3022 = vunpack.c.l.b16 %v2892
        %v3023 = vunpack.c.l.b16 %v2893
        %v3024 = vunpack.c.l.b16 %v2894
        %v3025 = vunpack.c.l.b16 %v2895
        %v3026 = vunpack.c.l.b16 %v2896
        %v3027 = vunpack.c.l.b16 %v2897
        %v3028 = vunpack.c.l.b16 %v2898
        %v3029 = vunpack.c.l.b16 %v2899
        %v3030 = vunpack.c.l.b16 %v2900
        %v3031 = vunpack.c.l.b16 %v2901
        %v3032 = vunpack.c.l.b16 %v2902
        %v3033 = vunpack.c.l.b16 %v2903
        %v3034 = vunpack.c.l.b16 %v2904
        %v3035 = vunpack.c.l.b16 %v2905
        %v3036 = vunpack.c.l.b16 %v2906
        %v3037 = vunpack.c.l.b16 %v2907
        %v3038 = vunpack.c.l.b16 %v2908
        %v3039 = vunpack.c.l.b16 %v2909
        %v3040 = vunpack.c.l.b16 %v2910
        %v3041 = vunpack.c.l.b16 %v2911
        %v3042 = vunpack.c.l.b16 %v2912
        %v3043 = vpack.c.b16 %v2980, %v2979
        %v3044 = vpack.c.b16 %v2982, %v2981
        %v3045 = vpack.c.b16 %v2984, %v2983
        %v3046 = vpack.c.b16 %v2986, %v2985
        %v3047 = vpack.c.b16 %v2988, %v2987
        %v3048 = vpack.c.b16 %v2990, %v2989
        %v3049 = vpack.c.b16 %v2992, %v2991
        %v3050 = vpack.c.b16 %v2994, %v2993
        %v3051 = vpack.c.b16 %v2996, %v2995
        %v3052 = vpack.c.b16 %v2998, %v2997
        %v3053 = vpack.c.b16 %v3000, %v2999
        %v3054 = vpack.c.b16 %v3002, %v3001
        %v3055 = vpack.c.b16 %v3004, %v3003
        %v3056 = vpack.c.b16 %v3006, %v3005
        %v3057 = vpack.c.b16 %v3008, %v3007
        %v3058 = vpack.c.b16 %v3010, %v3009
        %v3059 = vpack.c.b16 %v3012, %v3011
        %v3060 = vpack.c.b16 %v3014, %v3013
        %v3061 = vpack.c.b16 %v3016, %v3015
        %v3062 = vpack.c.b16 %v3018, %v3017
        %v3063 = vpack.c.b16 %v3020, %v3019
        %v3064 = vpack.c.b16 %v3022, %v3021
        %v3065 = vpack.c.b16 %v3024, %v3023
        %v3066 = vpack.c.b16 %v3026, %v3025
        %v3067 = vpack.c.b16 %v3028, %v3027
        %v3068 = vpack.c.b16 %v3030, %v3029
        %v3069 = vpack.c.b16 %v3032, %v3031
        %v3070 = vpack.c.b16 %v3034, %v3033
        %v3071 = vpack.c.b16 %v3036, %v3035
        %v3072 = vpack.c.b16 %v3038, %v3037
        %v3073 = vpack.c.b16 %v3040, %v3039
        %v3074 = vpack.c.b16 %v3042, %v3041
        %v3076 = vsel %vm1098, %v3043, 0
        %v3079 = vsel %vm1098, %v3044, 0
        %v3082 = vsel %vm1098, %v3045, 0
        %v3085 = vsel %vm1098, %v3046, 0
        %v3088 = vsel %vm1098, %v3047, 0
        %v3091 = vsel %vm1098, %v3048, 0
        %v3094 = vsel %vm1098, %v3049, 0
        %v3097 = vsel %vm1098, %v3050, 0
        %v3100 = vsel %vm1098, %v3051, 0
        %v3103 = vsel %vm1098, %v3052, 0
        %v3106 = vsel %vm1098, %v3053, 0
        %v3109 = vsel %vm1098, %v3054, 0
        %v3112 = vsel %vm1098, %v3055, 0
        %v3115 = vsel %vm1098, %v3056, 0
        %v3118 = vsel %vm1098, %v3057, 0
        %v3121 = vsel %vm1098, %v3058, 0
        %v3124 = vsel %vm1098, %v3059, 0
        %v3127 = vsel %vm1098, %v3060, 0
        %v3130 = vsel %vm1098, %v3061, 0
        %v3133 = vsel %vm1098, %v3062, 0
        %v3136 = vsel %vm1098, %v3063, 0
        %v3139 = vsel %vm1098, %v3064, 0
        %v3142 = vsel %vm1098, %v3065, 0
        %v3145 = vsel %vm1098, %v3066, 0
        %v3148 = vsel %vm1098, %v3067, 0
        %v3151 = vsel %vm1098, %v3068, 0
        %v3154 = vsel %vm1098, %v3069, 0
        %v3157 = vsel %vm1098, %v3070, 0
        %v3160 = vsel %vm1098, %v3071, 0
        %v3163 = vsel %vm1098, %v3072, 0
        %v3166 = vsel %vm1098, %v3073, 0
        %v3169 = vsel %vm1098, %v3074, 0
        %v3172 = vsel %vm1195, %v2914, 0
        %3174 = vmatprep.subr.bf16.mxu0 0
        %3175 = vmatpush1.bf16.msra.mxu0 %v3172
        %3176 = vmatprep.subr.bf16.mxu0 0
        %3177 = vmatpush1.bf16.msra.mxu0 0
        %3178 = vmatprep.subr.bf16.mxu0 0
        %3179 = vmatpush1.bf16.msra.mxu0 0
        %3180 = vmatprep.subr.bf16.mxu0 0
        %3181 = vmatpush1.bf16.msra.mxu0 0
        %3182 = vmatprep.subr.bf16.mxu0 0
        %3183 = vmatpush1.bf16.msra.mxu0 0
        %3184 = vmatprep.subr.bf16.mxu0 0
        %3185 = vmatpush1.bf16.msra.mxu0 0
        %3186 = vmatprep.subr.bf16.mxu0 0
        %3187 = vmatpush1.bf16.msra.mxu0 0
        %3188 = vmatprep.subr.bf16.mxu0 0
        %3189 = vmatpush1.bf16.msra.mxu0 0
        %3190 = vmatprep.subr.bf16.mxu0 0
        %3191 = vmatpush1.bf16.msra.mxu0 0
        %3192 = vmatprep.subr.bf16.mxu0 0
        %3193 = vmatpush1.bf16.msra.mxu0 0
        %3194 = vmatprep.subr.bf16.mxu0 0
        %3195 = vmatpush1.bf16.msra.mxu0 0
        %3196 = vmatprep.subr.bf16.mxu0 0
        %3197 = vmatpush1.bf16.msra.mxu0 0
        %3198 = vmatprep.subr.bf16.mxu0 0
        %3199 = vmatpush1.bf16.msra.mxu0 0
        %3200 = vmatprep.subr.bf16.mxu0 0
        %3201 = vmatpush1.bf16.msra.mxu0 0
        %3202 = vmatprep.subr.bf16.mxu0 0
        %3203 = vmatpush1.bf16.msra.mxu0 0
        %3204 = vmatprep.subr.bf16.mxu0 0
        %3205 = vmatpush1.bf16.msra.mxu0 0
        %3206 = vmatprep.mubr.bf16.mxu0 0
        %3207 = vmatmul.mubr.bf16.gmra.mrb[0].mxu0 %v3076
        %v3208 = vpop.f32.mrb[0].mxu0
        %v3209 = vadd.f32 0.0, %v3208
        %v3210 = vpop.f32.mrb[0].mxu0
        %v3211 = vpop.f32.mrb[0].mxu0
        %v3212 = vadd.f32 0.0, %v3211
        %v3213 = vpop.f32.mrb[0].mxu0
        %3214 = vmatprep.mubr.bf16.mxu0 0
        %3215 = vmatmul.mubr.bf16.gmra.mrb[0].mxu0 %v3079
        %v3216 = vpop.f32.mrb[0].mxu0
        %v3217 = vadd.f32 0.0, %v3216
        %v3218 = vpop.f32.mrb[0].mxu0
        %v3219 = vpop.f32.mrb[0].mxu0
        %v3220 = vadd.f32 0.0, %v3219
        %v3221 = vpop.f32.mrb[0].mxu0
        %3222 = vmatprep.mubr.bf16.mxu0 0
        %3223 = vmatmul.mubr.bf16.gmra.mrb[0].mxu0 %v3082
        %v3224 = vpop.f32.mrb[0].mxu0
        %v3225 = vadd.f32 0.0, %v3224
        %v3226 = vpop.f32.mrb[0].mxu0
        %v3227 = vpop.f32.mrb[0].mxu0
        %v3228 = vadd.f32 0.0, %v3227
        %v3229 = vpop.f32.mrb[0].mxu0
        %3230 = vmatprep.mubr.bf16.mxu0 0
        %3231 = vmatmul.mubr.bf16.gmra.mrb[0].mxu0 %v3085
        %v3232 = vpop.f32.mrb[0].mxu0
        %v3233 = vadd.f32 0.0, %v3232
        %v3234 = vpop.f32.mrb[0].mxu0
        %v3235 = vpop.f32.mrb[0].mxu0
        %v3236 = vadd.f32 0.0, %v3235
        %v3237 = vpop.f32.mrb[0].mxu0
        %3238 = vmatprep.mubr.bf16.mxu0 0
        %3239 = vmatmul.mubr.bf16.gmra.mrb[0].mxu0 %v3088
        %v3240 = vpop.f32.mrb[0].mxu0
        %v3241 = vadd.f32 0.0, %v3240
        %v3242 = vpop.f32.mrb[0].mxu0
        %v3243 = vpop.f32.mrb[0].mxu0
        %v3244 = vadd.f32 0.0, %v3243
        %v3245 = vpop.f32.mrb[0].mxu0
        %3246 = vmatprep.mubr.bf16.mxu0 0
        %3247 = vmatmul.mubr.bf16.gmra.mrb[0].mxu0 %v3091
        %v3248 = vpop.f32.mrb[0].mxu0
        %v3249 = vadd.f32 0.0, %v3248
        %v3250 = vpop.f32.mrb[0].mxu0
        %v3251 = vpop.f32.mrb[0].mxu0
        %v3252 = vadd.f32 0.0, %v3251
        %v3253 = vpop.f32.mrb[0].mxu0
        %3254 = vmatprep.mubr.bf16.mxu0 0
        %3255 = vmatmul.mubr.bf16.gmra.mrb[0].mxu0 %v3094
        %v3256 = vpop.f32.mrb[0].mxu0
        %v3257 = vadd.f32 0.0, %v3256
        %v3258 = vpop.f32.mrb[0].mxu0
        %v3259 = vpop.f32.mrb[0].mxu0
        %v3260 = vadd.f32 0.0, %v3259
        %v3261 = vpop.f32.mrb[0].mxu0
        %3262 = vmatprep.mubr.bf16.mxu0 0
        %3263 = vmatmul.mubr.bf16.gmra.mrb[0].mxu0 %v3097
        %v3264 = vpop.f32.mrb[0].mxu0
        %v3265 = vadd.f32 0.0, %v3264
        %v3266 = vpop.f32.mrb[0].mxu0
        %v3267 = vpop.f32.mrb[0].mxu0
        %v3268 = vadd.f32 0.0, %v3267
        %v3269 = vpop.f32.mrb[0].mxu0
        %3270 = vmatprep.mubr.bf16.mxu0 0
        %3271 = vmatmul.mubr.bf16.gmra.mrb[0].mxu0 %v3100
        %v3272 = vpop.f32.mrb[0].mxu0
        %v3273 = vadd.f32 0.0, %v3272
        %v3274 = vpop.f32.mrb[0].mxu0
        %v3275 = vpop.f32.mrb[0].mxu0
        %v3276 = vadd.f32 0.0, %v3275
        %v3277 = vpop.f32.mrb[0].mxu0
        %3278 = vmatprep.mubr.bf16.mxu0 0
        %3279 = vmatmul.mubr.bf16.gmra.mrb[0].mxu0 %v3103
        %v3280 = vpop.f32.mrb[0].mxu0
        %v3281 = vadd.f32 0.0, %v3280
        %v3282 = vpop.f32.mrb[0].mxu0
        %v3283 = vpop.f32.mrb[0].mxu0
        %v3284 = vadd.f32 0.0, %v3283
        %v3285 = vpop.f32.mrb[0].mxu0
        %3286 = vmatprep.mubr.bf16.mxu0 0
        %3287 = vmatmul.mubr.bf16.gmra.mrb[0].mxu0 %v3106
        %v3288 = vpop.f32.mrb[0].mxu0
        %v3289 = vadd.f32 0.0, %v3288
        %v3290 = vpop.f32.mrb[0].mxu0
        %v3291 = vpop.f32.mrb[0].mxu0
        %v3292 = vadd.f32 0.0, %v3291
        %v3293 = vpop.f32.mrb[0].mxu0
        %3294 = vmatprep.mubr.bf16.mxu0 0
        %3295 = vmatmul.mubr.bf16.gmra.mrb[0].mxu0 %v3109
        %v3296 = vpop.f32.mrb[0].mxu0
        %v3297 = vadd.f32 0.0, %v3296
        %v3298 = vpop.f32.mrb[0].mxu0
        %v3299 = vpop.f32.mrb[0].mxu0
        %v3300 = vadd.f32 0.0, %v3299
        %v3301 = vpop.f32.mrb[0].mxu0
        %3302 = vmatprep.mubr.bf16.mxu0 0
        %3303 = vmatmul.mubr.bf16.gmra.mrb[0].mxu0 %v3112
        %v3304 = vpop.f32.mrb[0].mxu0
        %v3305 = vadd.f32 0.0, %v3304
        %v3306 = vpop.f32.mrb[0].mxu0
        %v3307 = vpop.f32.mrb[0].mxu0
        %v3308 = vadd.f32 0.0, %v3307
        %v3309 = vpop.f32.mrb[0].mxu0
        %3310 = vmatprep.mubr.bf16.mxu0 0
        %3311 = vmatmul.mubr.bf16.gmra.mrb[0].mxu0 %v3115
        %v3312 = vpop.f32.mrb[0].mxu0
        %v3313 = vadd.f32 0.0, %v3312
        %v3314 = vpop.f32.mrb[0].mxu0
        %v3315 = vpop.f32.mrb[0].mxu0
        %v3316 = vadd.f32 0.0, %v3315
        %v3317 = vpop.f32.mrb[0].mxu0
        %3318 = vmatprep.mubr.bf16.mxu0 0
        %3319 = vmatmul.mubr.bf16.gmra.mrb[0].mxu0 %v3118
        %v3320 = vpop.f32.mrb[0].mxu0
        %v3321 = vadd.f32 0.0, %v3320
        %v3322 = vpop.f32.mrb[0].mxu0
        %v3323 = vpop.f32.mrb[0].mxu0
        %v3324 = vadd.f32 0.0, %v3323
        %v3325 = vpop.f32.mrb[0].mxu0
        %3326 = vmatprep.mubr.bf16.mxu0 0
        %3327 = vmatmul.mubr.bf16.gmra.mrb[0].mxu0 %v3121
        %v3328 = vpop.f32.mrb[0].mxu0
        %v3329 = vadd.f32 0.0, %v3328
        %v3330 = vpop.f32.mrb[0].mxu0
        %v3331 = vpop.f32.mrb[0].mxu0
        %v3332 = vadd.f32 0.0, %v3331
        %v3333 = vpop.f32.mrb[0].mxu0
        %3334 = vmatprep.mubr.bf16.mxu0 0
        %3335 = vmatmul.mubr.bf16.gmra.mrb[0].mxu0 %v3124
        %v3336 = vpop.f32.mrb[0].mxu0
        %v3337 = vadd.f32 0.0, %v3336
        %v3338 = vpop.f32.mrb[0].mxu0
        %v3339 = vpop.f32.mrb[0].mxu0
        %v3340 = vadd.f32 0.0, %v3339
        %v3341 = vpop.f32.mrb[0].mxu0
        %3342 = vmatprep.mubr.bf16.mxu0 0
        %3343 = vmatmul.mubr.bf16.gmra.mrb[0].mxu0 %v3127
        %v3344 = vpop.f32.mrb[0].mxu0
        %v3345 = vadd.f32 0.0, %v3344
        %v3346 = vpop.f32.mrb[0].mxu0
        %v3347 = vpop.f32.mrb[0].mxu0
        %v3348 = vadd.f32 0.0, %v3347
        %v3349 = vpop.f32.mrb[0].mxu0
        %3350 = vmatprep.mubr.bf16.mxu0 0
        %3351 = vmatmul.mubr.bf16.gmra.mrb[0].mxu0 %v3130
        %v3352 = vpop.f32.mrb[0].mxu0
        %v3353 = vadd.f32 0.0, %v3352
        %v3354 = vpop.f32.mrb[0].mxu0
        %v3355 = vpop.f32.mrb[0].mxu0
        %v3356 = vadd.f32 0.0, %v3355
        %v3357 = vpop.f32.mrb[0].mxu0
        %3358 = vmatprep.mubr.bf16.mxu0 0
        %3359 = vmatmul.mubr.bf16.gmra.mrb[0].mxu0 %v3133
        %v3360 = vpop.f32.mrb[0].mxu0
        %v3361 = vadd.f32 0.0, %v3360
        %v3362 = vpop.f32.mrb[0].mxu0
        %v3363 = vpop.f32.mrb[0].mxu0
        %v3364 = vadd.f32 0.0, %v3363
        %v3365 = vpop.f32.mrb[0].mxu0
        %3366 = vmatprep.mubr.bf16.mxu0 0
        %3367 = vmatmul.mubr.bf16.gmra.mrb[0].mxu0 %v3136
        %v3368 = vpop.f32.mrb[0].mxu0
        %v3369 = vadd.f32 0.0, %v3368
        %v3370 = vpop.f32.mrb[0].mxu0
        %v3371 = vpop.f32.mrb[0].mxu0
        %v3372 = vadd.f32 0.0, %v3371
        %v3373 = vpop.f32.mrb[0].mxu0
        %3374 = vmatprep.mubr.bf16.mxu0 0
        %3375 = vmatmul.mubr.bf16.gmra.mrb[0].mxu0 %v3139
        %v3376 = vpop.f32.mrb[0].mxu0
        %v3377 = vadd.f32 0.0, %v3376
        %v3378 = vpop.f32.mrb[0].mxu0
        %v3379 = vpop.f32.mrb[0].mxu0
        %v3380 = vadd.f32 0.0, %v3379
        %v3381 = vpop.f32.mrb[0].mxu0
        %3382 = vmatprep.mubr.bf16.mxu0 0
        %3383 = vmatmul.mubr.bf16.gmra.mrb[0].mxu0 %v3142
        %v3384 = vpop.f32.mrb[0].mxu0
        %v3385 = vadd.f32 0.0, %v3384
        %v3386 = vpop.f32.mrb[0].mxu0
        %v3387 = vpop.f32.mrb[0].mxu0
        %v3388 = vadd.f32 0.0, %v3387
        %v3389 = vpop.f32.mrb[0].mxu0
        %3390 = vmatprep.mubr.bf16.mxu0 0
        %3391 = vmatmul.mubr.bf16.gmra.mrb[0].mxu0 %v3145
        %v3392 = vpop.f32.mrb[0].mxu0
        %v3393 = vadd.f32 0.0, %v3392
        %v3394 = vpop.f32.mrb[0].mxu0
        %v3395 = vpop.f32.mrb[0].mxu0
        %v3396 = vadd.f32 0.0, %v3395
        %v3397 = vpop.f32.mrb[0].mxu0
        %3398 = vmatprep.mubr.bf16.mxu0 0
        %3399 = vmatmul.mubr.bf16.gmra.mrb[0].mxu0 %v3148
        %v3400 = vpop.f32.mrb[0].mxu0
        %v3401 = vadd.f32 0.0, %v3400
        %v3402 = vpop.f32.mrb[0].mxu0
        %v3403 = vpop.f32.mrb[0].mxu0
        %v3404 = vadd.f32 0.0, %v3403
        %v3405 = vpop.f32.mrb[0].mxu0
        %3406 = vmatprep.mubr.bf16.mxu0 0
        %3407 = vmatmul.mubr.bf16.gmra.mrb[0].mxu0 %v3151
        %v3408 = vpop.f32.mrb[0].mxu0
        %v3409 = vadd.f32 0.0, %v3408
        %v3410 = vpop.f32.mrb[0].mxu0
        %v3411 = vpop.f32.mrb[0].mxu0
        %v3412 = vadd.f32 0.0, %v3411
        %v3413 = vpop.f32.mrb[0].mxu0
        %3414 = vmatprep.mubr.bf16.mxu0 0
        %3415 = vmatmul.mubr.bf16.gmra.mrb[0].mxu0 %v3154
        %v3416 = vpop.f32.mrb[0].mxu0
        %v3417 = vadd.f32 0.0, %v3416
        %v3418 = vpop.f32.mrb[0].mxu0
        %v3419 = vpop.f32.mrb[0].mxu0
        %v3420 = vadd.f32 0.0, %v3419
        %v3421 = vpop.f32.mrb[0].mxu0
        %3422 = vmatprep.mubr.bf16.mxu0 0
        %3423 = vmatmul.mubr.bf16.gmra.mrb[0].mxu0 %v3157
        %v3424 = vpop.f32.mrb[0].mxu0
        %v3425 = vadd.f32 0.0, %v3424
        %v3426 = vpop.f32.mrb[0].mxu0
        %v3427 = vpop.f32.mrb[0].mxu0
        %v3428 = vadd.f32 0.0, %v3427
        %v3429 = vpop.f32.mrb[0].mxu0
        %3430 = vmatprep.mubr.bf16.mxu0 0
        %3431 = vmatmul.mubr.bf16.gmra.mrb[0].mxu0 %v3160
        %v3432 = vpop.f32.mrb[0].mxu0
        %v3433 = vadd.f32 0.0, %v3432
        %v3434 = vpop.f32.mrb[0].mxu0
        %v3435 = vpop.f32.mrb[0].mxu0
        %v3436 = vadd.f32 0.0, %v3435
        %v3437 = vpop.f32.mrb[0].mxu0
        %3438 = vmatprep.mubr.bf16.mxu0 0
        %3439 = vmatmul.mubr.bf16.gmra.mrb[0].mxu0 %v3163
        %v3440 = vpop.f32.mrb[0].mxu0
        %v3441 = vadd.f32 0.0, %v3440
        %v3442 = vpop.f32.mrb[0].mxu0
        %v3443 = vpop.f32.mrb[0].mxu0
        %v3444 = vadd.f32 0.0, %v3443
        %v3445 = vpop.f32.mrb[0].mxu0
        %3446 = vmatprep.mubr.bf16.mxu0 0
        %3447 = vmatmul.mubr.bf16.gmra.mrb[0].mxu0 %v3166
        %v3448 = vpop.f32.mrb[0].mxu0
        %v3449 = vadd.f32 0.0, %v3448
        %v3450 = vpop.f32.mrb[0].mxu0
        %v3451 = vpop.f32.mrb[0].mxu0
        %v3452 = vadd.f32 0.0, %v3451
        %v3453 = vpop.f32.mrb[0].mxu0
        %3454 = vmatprep.mubr.bf16.mxu0 0
        %3455 = vmatmul.mubr.bf16.gmra.mrb[0].mxu0 %v3169
        %v3456 = vpop.f32.mrb[0].mxu0
        %v3457 = vadd.f32 0.0, %v3456
        %v3458 = vpop.f32.mrb[0].mxu0
        %v3459 = vpop.f32.mrb[0].mxu0
        %v3460 = vadd.f32 0.0, %v3459
        %v3461 = vpop.f32.mrb[0].mxu0
        %3462 = vdwg.mxu0
        %v3463 = vadd.f32 %v2781, %v3209
        %v3464 = vadd.f32 %v2782, %v3212
        %v3465 = vadd.f32 %v2783, %v3217
        %v3466 = vadd.f32 %v2784, %v3220
        %v3467 = vadd.f32 %v2785, %v3225
        %v3468 = vadd.f32 %v2786, %v3228
        %v3469 = vadd.f32 %v2787, %v3233
        %v3470 = vadd.f32 %v2788, %v3236
        %v3471 = vadd.f32 %v2789, %v3241
        %v3472 = vadd.f32 %v2790, %v3244
        %v3473 = vadd.f32 %v2791, %v3249
        %v3474 = vadd.f32 %v2792, %v3252
        %v3475 = vadd.f32 %v2793, %v3257
        %v3476 = vadd.f32 %v2794, %v3260
        %v3477 = vadd.f32 %v2795, %v3265
        %v3478 = vadd.f32 %v2796, %v3268
        %v3479 = vadd.f32 %v2797, %v3273
        %v3480 = vadd.f32 %v2798, %v3276
        %v3481 = vadd.f32 %v2799, %v3281
        %v3482 = vadd.f32 %v2800, %v3284
        %v3483 = vadd.f32 %v2801, %v3289
        %v3484 = vadd.f32 %v2802, %v3292
        %v3485 = vadd.f32 %v2803, %v3297
        %v3486 = vadd.f32 %v2804, %v3300
        %v3487 = vadd.f32 %v2805, %v3305
        %v3488 = vadd.f32 %v2806, %v3308
        %v3489 = vadd.f32 %v2807, %v3313
        %v3490 = vadd.f32 %v2808, %v3316
        %v3491 = vadd.f32 %v2809, %v3321
        %v3492 = vadd.f32 %v2810, %v3324
        %v3493 = vadd.f32 %v2811, %v3329
        %v3494 = vadd.f32 %v2812, %v3332
        %v3495 = vadd.f32 %v2813, %v3337
        %v3496 = vadd.f32 %v2814, %v3340
        %v3497 = vadd.f32 %v2815, %v3345
        %v3498 = vadd.f32 %v2816, %v3348
        %v3499 = vadd.f32 %v2817, %v3353
        %v3500 = vadd.f32 %v2818, %v3356
        %v3501 = vadd.f32 %v2819, %v3361
        %v3502 = vadd.f32 %v2820, %v3364
        %v3503 = vadd.f32 %v2821, %v3369
        %v3504 = vadd.f32 %v2822, %v3372
        %v3505 = vadd.f32 %v2823, %v3377
        %v3506 = vadd.f32 %v2824, %v3380
        %v3507 = vadd.f32 %v2825, %v3385
        %v3508 = vadd.f32 %v2826, %v3388
        %v3509 = vadd.f32 %v2827, %v3393
        %v3510 = vadd.f32 %v2828, %v3396
        %v3511 = vadd.f32 %v2829, %v3401
        %v3512 = vadd.f32 %v2830, %v3404
        %v3513 = vadd.f32 %v2831, %v3409
        %v3514 = vadd.f32 %v2832, %v3412
        %v3515 = vadd.f32 %v2833, %v3417
        %v3516 = vadd.f32 %v2834, %v3420
        %v3517 = vadd.f32 %v2835, %v3425
        %v3518 = vadd.f32 %v2836, %v3428
        %v3519 = vadd.f32 %v2837, %v3433
        %v3520 = vadd.f32 %v2838, %v3436
        %v3521 = vadd.f32 %v2839, %v3441
        %v3522 = vadd.f32 %v2840, %v3444
        %v3523 = vadd.f32 %v2841, %v3449
        %v3524 = vadd.f32 %v2842, %v3452
        %v3525 = vadd.f32 %v2843, %v3457
        %v3526 = vadd.f32 %v2844, %v3460
        %v3527 = vld [vmem:[%s2848] sm:$0xf]
        %v3528 = vld [vmem:[%s2848 + $0x4] sm:$0xf]
        %v3529 = vld [vmem:[%s2848 + $0x8] sm:$0xf]
        %v3530 = vld [vmem:[%s2848 + $0xc] sm:$0xf]
        %v3531 = vld [vmem:[%s2848 + $0x10] sm:$0x1]
        %v3532 = vld [vmem:[%s2848 + $0x14] sm:$0xf]
        %v3533 = vld [vmem:[%s2848 + $0x18] sm:$0xf]
        %v3534 = vld [vmem:[%s2848 + $0x1c] sm:$0xf]
        %v3535 = vld [vmem:[%s2848 + $0x20] sm:$0xf]
        %v3536 = vld [vmem:[%s2848 + $0x24] sm:$0x1]
        %v3537 = vld [vmem:[%s2848 + $0x28] sm:$0xf]
        %v3538 = vld [vmem:[%s2848 + $0x2c] sm:$0xf]
        %v3539 = vld [vmem:[%s2848 + $0x30] sm:$0xf]
        %v3540 = vld [vmem:[%s2848 + $0x34] sm:$0xf]
        %v3541 = vld [vmem:[%s2848 + $0x38] sm:$0x1]
        %v3542 = vld [vmem:[%s2848 + $0x3c] sm:$0xf]
        %v3543 = vld [vmem:[%s2848 + $0x40] sm:$0xf]
        %v3544 = vld [vmem:[%s2848 + $0x44] sm:$0xf]
        %v3545 = vld [vmem:[%s2848 + $0x48] sm:$0xf]
        %v3546 = vld [vmem:[%s2848 + $0x4c] sm:$0x1]
        %v3547 = vld [vmem:[%s2848 + $0x50] sm:$0xf]
        %v3548 = vld [vmem:[%s2848 + $0x54] sm:$0xf]
        %v3549 = vld [vmem:[%s2848 + $0x58] sm:$0xf]
        %v3550 = vld [vmem:[%s2848 + $0x5c] sm:$0xf]
        %v3551 = vld [vmem:[%s2848 + $0x60] sm:$0x1]
        %v3552 = vld [vmem:[%s2848 + $0x64] sm:$0xf]
        %v3553 = vld [vmem:[%s2848 + $0x68] sm:$0xf]
        %v3554 = vld [vmem:[%s2848 + $0x6c] sm:$0xf]
        %v3555 = vld [vmem:[%s2848 + $0x70] sm:$0xf]
        %v3556 = vld [vmem:[%s2848 + $0x74] sm:$0x1]
        %v3557 = vld [vmem:[%s2848 + $0x78] sm:$0xf]
        %v3558 = vld [vmem:[%s2848 + $0x7c] sm:$0xf]
        %v3559 = vld [vmem:[%s2848 + $0x80] sm:$0xf]
        %v3560 = vld [vmem:[%s2848 + $0x84] sm:$0xf]
        %v3561 = vld [vmem:[%s2848 + $0x88] sm:$0x1]
        %v3562 = vld [vmem:[%s2848 + $0x8c] sm:$0xf]
        %v3563 = vld [vmem:[%s2848 + $0x90] sm:$0xf]
        %v3564 = vld [vmem:[%s2848 + $0x94] sm:$0xf]
        %v3565 = vld [vmem:[%s2848 + $0x98] sm:$0xf]
        %v3566 = vld [vmem:[%s2848 + $0x9c] sm:$0x1]
        %v3567 = vld [vmem:[%s2848 + $0xa0] sm:$0xf]
        %v3568 = vld [vmem:[%s2848 + $0xa4] sm:$0xf]
        %v3569 = vld [vmem:[%s2848 + $0xa8] sm:$0xf]
        %v3570 = vld [vmem:[%s2848 + $0xac] sm:$0xf]
        %v3571 = vld [vmem:[%s2848 + $0xb0] sm:$0x1]
        %v3572 = vld [vmem:[%s2848 + $0xb4] sm:$0xf]
        %v3573 = vld [vmem:[%s2848 + $0xb8] sm:$0xf]
        %v3574 = vld [vmem:[%s2848 + $0xbc] sm:$0xf]
        %v3575 = vld [vmem:[%s2848 + $0xc0] sm:$0xf]
        %v3576 = vld [vmem:[%s2848 + $0xc4] sm:$0x1]
        %v3577 = vld [vmem:[%s2848 + $0xc8] sm:$0xf]
        %v3578 = vld [vmem:[%s2848 + $0xcc] sm:$0xf]
        %v3579 = vld [vmem:[%s2848 + $0xd0] sm:$0xf]
        %v3580 = vld [vmem:[%s2848 + $0xd4] sm:$0xf]
        %v3581 = vld [vmem:[%s2848 + $0xd8] sm:$0x1]
        %v3582 = vld [vmem:[%s2848 + $0xdc] sm:$0xf]
        %v3583 = vld [vmem:[%s2848 + $0xe0] sm:$0xf]
        %v3584 = vld [vmem:[%s2848 + $0xe4] sm:$0xf]
        %v3585 = vld [vmem:[%s2848 + $0xe8] sm:$0xf]
        %v3586 = vld [vmem:[%s2848 + $0xec] sm:$0x1]
        %v3587 = vld [vmem:[%s2848 + $0xf0] sm:$0xf]
        %v3588 = vld [vmem:[%s2848 + $0xf4] sm:$0xf]
        %v3589 = vld [vmem:[%s2848 + $0xf8] sm:$0xf]
        %v3590 = vld [vmem:[%s2848 + $0xfc] sm:$0xf]
        %v3591 = vld [vmem:[%s2848 + $0x100] sm:$0x1]
        %v3592 = vld [vmem:[%s2848 + $0x104] sm:$0xf]
        %v3593 = vld [vmem:[%s2848 + $0x108] sm:$0xf]
        %v3594 = vld [vmem:[%s2848 + $0x10c] sm:$0xf]
        %v3595 = vld [vmem:[%s2848 + $0x110] sm:$0xf]
        %v3596 = vld [vmem:[%s2848 + $0x114] sm:$0x1]
        %v3597 = vld [vmem:[%s2848 + $0x118] sm:$0xf]
        %v3598 = vld [vmem:[%s2848 + $0x11c] sm:$0xf]
        %v3599 = vld [vmem:[%s2848 + $0x120] sm:$0xf]
        %v3600 = vld [vmem:[%s2848 + $0x124] sm:$0xf]
        %v3601 = vld [vmem:[%s2848 + $0x128] sm:$0x1]
        %v3602 = vld [vmem:[%s2848 + $0x12c] sm:$0xf]
        %v3603 = vld [vmem:[%s2848 + $0x130] sm:$0xf]
        %v3604 = vld [vmem:[%s2848 + $0x134] sm:$0xf]
        %v3605 = vld [vmem:[%s2848 + $0x138] sm:$0xf]
        %v3606 = vld [vmem:[%s2848 + $0x13c] sm:$0x1]
        %v3608 = vshrl.u32 %v3527, 16
        %v3610 = vrot.slane %v3608, 4
        %v3611 = vshll.u32 %v3527, 16
        %v3613 = vrot.slane %v3611, 5
        %v3614 = vor.u32 %v3610, %v3613
        %v3615 = vrot.slane %v3614, 4
        %v3617 = vshll.u32 %v3528, 16
        %v3619 = vrot.slane %v3617, 5
        %v3620 = vsel %vm295, %v3615, %v3619
        %v3621 = vshrl.u32 %v3528, 16
        %v3623 = vrot.slane %v3621, 4
        %v3624 = vor.u32 %v3623, %v3619
        %v3625 = vrot.slane %v3624, 4
        %v3627 = vshll.u32 %v3529, 16
        %v3629 = vrot.slane %v3627, 5
        %v3630 = vsel %vm295, %v3625, %v3629
        %v3631 = vshrl.u32 %v3529, 16
        %v3633 = vrot.slane %v3631, 4
        %v3634 = vor.u32 %v3633, %v3629
        %v3635 = vrot.slane %v3634, 4
        %v3637 = vshll.u32 %v3530, 16
        %v3639 = vrot.slane %v3637, 5
        %v3640 = vsel %vm295, %v3635, %v3639
        %v3641 = vshrl.u32 %v3530, 16
        %v3643 = vrot.slane %v3641, 4
        %v3644 = vor.u32 %v3643, %v3639
        %v3645 = vrot.slane %v3644, 4
        %v3647 = vshll.u32 %v3531, 16
        %v3649 = vrot.slane %v3647, 5
        %v3650 = vsel %vm295, %v3645, %v3649
        %v3652 = vshrl.u32 %v3532, 16
        %v3654 = vrot.slane %v3652, 4
        %v3655 = vshll.u32 %v3532, 16
        %v3657 = vrot.slane %v3655, 5
        %v3658 = vor.u32 %v3654, %v3657
        %v3659 = vrot.slane %v3658, 4
        %v3661 = vshll.u32 %v3533, 16
        %v3663 = vrot.slane %v3661, 5
        %v3664 = vsel %vm295, %v3659, %v3663
        %v3665 = vshrl.u32 %v3533, 16
        %v3667 = vrot.slane %v3665, 4
        %v3668 = vor.u32 %v3667, %v3663
        %v3669 = vrot.slane %v3668, 4
        %v3671 = vshll.u32 %v3534, 16
        %v3673 = vrot.slane %v3671, 5
        %v3674 = vsel %vm295, %v3669, %v3673
        %v3675 = vshrl.u32 %v3534, 16
        %v3677 = vrot.slane %v3675, 4
        %v3678 = vor.u32 %v3677, %v3673
        %v3679 = vrot.slane %v3678, 4
        %v3681 = vshll.u32 %v3535, 16
        %v3683 = vrot.slane %v3681, 5
        %v3684 = vsel %vm295, %v3679, %v3683
        %v3685 = vshrl.u32 %v3535, 16
        %v3687 = vrot.slane %v3685, 4
        %v3688 = vor.u32 %v3687, %v3683
        %v3689 = vrot.slane %v3688, 4
        %v3691 = vshll.u32 %v3536, 16
        %v3693 = vrot.slane %v3691, 5
        %v3694 = vsel %vm295, %v3689, %v3693
        %v3696 = vshrl.u32 %v3537, 16
        %v3698 = vrot.slane %v3696, 4
        %v3699 = vshll.u32 %v3537, 16
        %v3701 = vrot.slane %v3699, 5
        %v3702 = vor.u32 %v3698, %v3701
        %v3703 = vrot.slane %v3702, 4
        %v3705 = vshll.u32 %v3538, 16
        %v3707 = vrot.slane %v3705, 5
        %v3708 = vsel %vm295, %v3703, %v3707
        %v3709 = vshrl.u32 %v3538, 16
        %v3711 = vrot.slane %v3709, 4
        %v3712 = vor.u32 %v3711, %v3707
        %v3713 = vrot.slane %v3712, 4
        %v3715 = vshll.u32 %v3539, 16
        %v3717 = vrot.slane %v3715, 5
        %v3718 = vsel %vm295, %v3713, %v3717
        %v3719 = vshrl.u32 %v3539, 16
        %v3721 = vrot.slane %v3719, 4
        %v3722 = vor.u32 %v3721, %v3717
        %v3723 = vrot.slane %v3722, 4
        %v3725 = vshll.u32 %v3540, 16
        %v3727 = vrot.slane %v3725, 5
        %v3728 = vsel %vm295, %v3723, %v3727
        %v3729 = vshrl.u32 %v3540, 16
        %v3731 = vrot.slane %v3729, 4
        %v3732 = vor.u32 %v3731, %v3727
        %v3733 = vrot.slane %v3732, 4
        %v3735 = vshll.u32 %v3541, 16
        %v3737 = vrot.slane %v3735, 5
        %v3738 = vsel %vm295, %v3733, %v3737
        %v3740 = vshrl.u32 %v3542, 16
        %v3742 = vrot.slane %v3740, 4
        %v3743 = vshll.u32 %v3542, 16
        %v3745 = vrot.slane %v3743, 5
        %v3746 = vor.u32 %v3742, %v3745
        %v3747 = vrot.slane %v3746, 4
        %v3749 = vshll.u32 %v3543, 16
        %v3751 = vrot.slane %v3749, 5
        %v3752 = vsel %vm295, %v3747, %v3751
        %v3753 = vshrl.u32 %v3543, 16
        %v3755 = vrot.slane %v3753, 4
        %v3756 = vor.u32 %v3755, %v3751
        %v3757 = vrot.slane %v3756, 4
        %v3759 = vshll.u32 %v3544, 16
        %v3761 = vrot.slane %v3759, 5
        %v3762 = vsel %vm295, %v3757, %v3761
        %v3763 = vshrl.u32 %v3544, 16
        %v3765 = vrot.slane %v3763, 4
        %v3766 = vor.u32 %v3765, %v3761
        %v3767 = vrot.slane %v3766, 4
        %v3769 = vshll.u32 %v3545, 16
        %v3771 = vrot.slane %v3769, 5
        %v3772 = vsel %vm295, %v3767, %v3771
        %v3773 = vshrl.u32 %v3545, 16
        %v3775 = vrot.slane %v3773, 4
        %v3776 = vor.u32 %v3775, %v3771
        %v3777 = vrot.slane %v3776, 4
        %v3779 = vshll.u32 %v3546, 16
        %v3781 = vrot.slane %v3779, 5
        %v3782 = vsel %vm295, %v3777, %v3781
        %v3784 = vshrl.u32 %v3547, 16
        %v3786 = vrot.slane %v3784, 4
        %v3787 = vshll.u32 %v3547, 16
        %v3789 = vrot.slane %v3787, 5
        %v3790 = vor.u32 %v3786, %v3789
        %v3791 = vrot.slane %v3790, 4
        %v3793 = vshll.u32 %v3548, 16
        %v3795 = vrot.slane %v3793, 5
        %v3796 = vsel %vm295, %v3791, %v3795
        %v3797 = vshrl.u32 %v3548, 16
        %v3799 = vrot.slane %v3797, 4
        %v3800 = vor.u32 %v3799, %v3795
        %v3801 = vrot.slane %v3800, 4
        %v3803 = vshll.u32 %v3549, 16
        %v3805 = vrot.slane %v3803, 5
        %v3806 = vsel %vm295, %v3801, %v3805
        %v3807 = vshrl.u32 %v3549, 16
        %v3809 = vrot.slane %v3807, 4
        %v3810 = vor.u32 %v3809, %v3805
        %v3811 = vrot.slane %v3810, 4
        %v3813 = vshll.u32 %v3550, 16
        %v3815 = vrot.slane %v3813, 5
        %v3816 = vsel %vm295, %v3811, %v3815
        %v3817 = vshrl.u32 %v3550, 16
        %v3819 = vrot.slane %v3817, 4
        %v3820 = vor.u32 %v3819, %v3815
        %v3821 = vrot.slane %v3820, 4
        %v3823 = vshll.u32 %v3551, 16
        %v3825 = vrot.slane %v3823, 5
        %v3826 = vsel %vm295, %v3821, %v3825
        %v3828 = vshrl.u32 %v3552, 16
        %v3830 = vrot.slane %v3828, 4
        %v3831 = vshll.u32 %v3552, 16
        %v3833 = vrot.slane %v3831, 5
        %v3834 = vor.u32 %v3830, %v3833
        %v3835 = vrot.slane %v3834, 4
        %v3837 = vshll.u32 %v3553, 16
        %v3839 = vrot.slane %v3837, 5
        %v3840 = vsel %vm295, %v3835, %v3839
        %v3841 = vshrl.u32 %v3553, 16
        %v3843 = vrot.slane %v3841, 4
        %v3844 = vor.u32 %v3843, %v3839
        %v3845 = vrot.slane %v3844, 4
        %v3847 = vshll.u32 %v3554, 16
        %v3849 = vrot.slane %v3847, 5
        %v3850 = vsel %vm295, %v3845, %v3849
        %v3851 = vshrl.u32 %v3554, 16
        %v3853 = vrot.slane %v3851, 4
        %v3854 = vor.u32 %v3853, %v3849
        %v3855 = vrot.slane %v3854, 4
        %v3857 = vshll.u32 %v3555, 16
        %v3859 = vrot.slane %v3857, 5
        %v3860 = vsel %vm295, %v3855, %v3859
        %v3861 = vshrl.u32 %v3555, 16
        %v3863 = vrot.slane %v3861, 4
        %v3864 = vor.u32 %v3863, %v3859
        %v3865 = vrot.slane %v3864, 4
        %v3867 = vshll.u32 %v3556, 16
        %v3869 = vrot.slane %v3867, 5
        %v3870 = vsel %vm295, %v3865, %v3869
        %v3872 = vshrl.u32 %v3557, 16
        %v3874 = vrot.slane %v3872, 4
        %v3875 = vshll.u32 %v3557, 16
        %v3877 = vrot.slane %v3875, 5
        %v3878 = vor.u32 %v3874, %v3877
        %v3879 = vrot.slane %v3878, 4
        %v3881 = vshll.u32 %v3558, 16
        %v3883 = vrot.slane %v3881, 5
        %v3884 = vsel %vm295, %v3879, %v3883
        %v3885 = vshrl.u32 %v3558, 16
        %v3887 = vrot.slane %v3885, 4
        %v3888 = vor.u32 %v3887, %v3883
        %v3889 = vrot.slane %v3888, 4
        %v3891 = vshll.u32 %v3559, 16
        %v3893 = vrot.slane %v3891, 5
        %v3894 = vsel %vm295, %v3889, %v3893
        %v3895 = vshrl.u32 %v3559, 16
        %v3897 = vrot.slane %v3895, 4
        %v3898 = vor.u32 %v3897, %v3893
        %v3899 = vrot.slane %v3898, 4
        %v3901 = vshll.u32 %v3560, 16
        %v3903 = vrot.slane %v3901, 5
        %v3904 = vsel %vm295, %v3899, %v3903
        %v3905 = vshrl.u32 %v3560, 16
        %v3907 = vrot.slane %v3905, 4
        %v3908 = vor.u32 %v3907, %v3903
        %v3909 = vrot.slane %v3908, 4
        %v3911 = vshll.u32 %v3561, 16
        %v3913 = vrot.slane %v3911, 5
        %v3914 = vsel %vm295, %v3909, %v3913
        %v3916 = vshrl.u32 %v3562, 16
        %v3918 = vrot.slane %v3916, 4
        %v3919 = vshll.u32 %v3562, 16
        %v3921 = vrot.slane %v3919, 5
        %v3922 = vor.u32 %v3918, %v3921
        %v3923 = vrot.slane %v3922, 4
        %v3925 = vshll.u32 %v3563, 16
        %v3927 = vrot.slane %v3925, 5
        %v3928 = vsel %vm295, %v3923, %v3927
        %v3929 = vshrl.u32 %v3563, 16
        %v3931 = vrot.slane %v3929, 4
        %v3932 = vor.u32 %v3931, %v3927
        %v3933 = vrot.slane %v3932, 4
        %v3935 = vshll.u32 %v3564, 16
        %v3937 = vrot.slane %v3935, 5
        %v3938 = vsel %vm295, %v3933, %v3937
        %v3939 = vshrl.u32 %v3564, 16
        %v3941 = vrot.slane %v3939, 4
        %v3942 = vor.u32 %v3941, %v3937
        %v3943 = vrot.slane %v3942, 4
        %v3945 = vshll.u32 %v3565, 16
        %v3947 = vrot.slane %v3945, 5
        %v3948 = vsel %vm295, %v3943, %v3947
        %v3949 = vshrl.u32 %v3565, 16
        %v3951 = vrot.slane %v3949, 4
        %v3952 = vor.u32 %v3951, %v3947
        %v3953 = vrot.slane %v3952, 4
        %v3955 = vshll.u32 %v3566, 16
        %v3957 = vrot.slane %v3955, 5
        %v3958 = vsel %vm295, %v3953, %v3957
        %v3960 = vshrl.u32 %v3567, 16
        %v3962 = vrot.slane %v3960, 4
        %v3963 = vshll.u32 %v3567, 16
        %v3965 = vrot.slane %v3963, 5
        %v3966 = vor.u32 %v3962, %v3965
        %v3967 = vrot.slane %v3966, 4
        %v3969 = vshll.u32 %v3568, 16
        %v3971 = vrot.slane %v3969, 5
        %v3972 = vsel %vm295, %v3967, %v3971
        %v3973 = vshrl.u32 %v3568, 16
        %v3975 = vrot.slane %v3973, 4
        %v3976 = vor.u32 %v3975, %v3971
        %v3977 = vrot.slane %v3976, 4
        %v3979 = vshll.u32 %v3569, 16
        %v3981 = vrot.slane %v3979, 5
        %v3982 = vsel %vm295, %v3977, %v3981
        %v3983 = vshrl.u32 %v3569, 16
        %v3985 = vrot.slane %v3983, 4
        %v3986 = vor.u32 %v3985, %v3981
        %v3987 = vrot.slane %v3986, 4
        %v3989 = vshll.u32 %v3570, 16
        %v3991 = vrot.slane %v3989, 5
        %v3992 = vsel %vm295, %v3987, %v3991
        %v3993 = vshrl.u32 %v3570, 16
        %v3995 = vrot.slane %v3993, 4
        %v3996 = vor.u32 %v3995, %v3991
        %v3997 = vrot.slane %v3996, 4
        %v3999 = vshll.u32 %v3571, 16
        %v4001 = vrot.slane %v3999, 5
        %v4002 = vsel %vm295, %v3997, %v4001
        %v4004 = vshrl.u32 %v3572, 16
        %v4006 = vrot.slane %v4004, 4
        %v4007 = vshll.u32 %v3572, 16
        %v4009 = vrot.slane %v4007, 5
        %v4010 = vor.u32 %v4006, %v4009
        %v4011 = vrot.slane %v4010, 4
        %v4013 = vshll.u32 %v3573, 16
        %v4015 = vrot.slane %v4013, 5
        %v4016 = vsel %vm295, %v4011, %v4015
        %v4017 = vshrl.u32 %v3573, 16
        %v4019 = vrot.slane %v4017, 4
        %v4020 = vor.u32 %v4019, %v4015
        %v4021 = vrot.slane %v4020, 4
        %v4023 = vshll.u32 %v3574, 16
        %v4025 = vrot.slane %v4023, 5
        %v4026 = vsel %vm295, %v4021, %v4025
        %v4027 = vshrl.u32 %v3574, 16
        %v4029 = vrot.slane %v4027, 4
        %v4030 = vor.u32 %v4029, %v4025
        %v4031 = vrot.slane %v4030, 4
        %v4033 = vshll.u32 %v3575, 16
        %v4035 = vrot.slane %v4033, 5
        %v4036 = vsel %vm295, %v4031, %v4035
        %v4037 = vshrl.u32 %v3575, 16
        %v4039 = vrot.slane %v4037, 4
        %v4040 = vor.u32 %v4039, %v4035
        %v4041 = vrot.slane %v4040, 4
        %v4043 = vshll.u32 %v3576, 16
        %v4045 = vrot.slane %v4043, 5
        %v4046 = vsel %vm295, %v4041, %v4045
        %v4048 = vshrl.u32 %v3577, 16
        %v4050 = vrot.slane %v4048, 4
        %v4051 = vshll.u32 %v3577, 16
        %v4053 = vrot.slane %v4051, 5
        %v4054 = vor.u32 %v4050, %v4053
        %v4055 = vrot.slane %v4054, 4
        %v4057 = vshll.u32 %v3578, 16
        %v4059 = vrot.slane %v4057, 5
        %v4060 = vsel %vm295, %v4055, %v4059
        %v4061 = vshrl.u32 %v3578, 16
        %v4063 = vrot.slane %v4061, 4
        %v4064 = vor.u32 %v4063, %v4059
        %v4065 = vrot.slane %v4064, 4
        %v4067 = vshll.u32 %v3579, 16
        %v4069 = vrot.slane %v4067, 5
        %v4070 = vsel %vm295, %v4065, %v4069
        %v4071 = vshrl.u32 %v3579, 16
        %v4073 = vrot.slane %v4071, 4
        %v4074 = vor.u32 %v4073, %v4069
        %v4075 = vrot.slane %v4074, 4
        %v4077 = vshll.u32 %v3580, 16
        %v4079 = vrot.slane %v4077, 5
        %v4080 = vsel %vm295, %v4075, %v4079
        %v4081 = vshrl.u32 %v3580, 16
        %v4083 = vrot.slane %v4081, 4
        %v4084 = vor.u32 %v4083, %v4079
        %v4085 = vrot.slane %v4084, 4
        %v4087 = vshll.u32 %v3581, 16
        %v4089 = vrot.slane %v4087, 5
        %v4090 = vsel %vm295, %v4085, %v4089
        %v4092 = vshrl.u32 %v3582, 16
        %v4094 = vrot.slane %v4092, 4
        %v4095 = vshll.u32 %v3582, 16
        %v4097 = vrot.slane %v4095, 5
        %v4098 = vor.u32 %v4094, %v4097
        %v4099 = vrot.slane %v4098, 4
        %v4101 = vshll.u32 %v3583, 16
        %v4103 = vrot.slane %v4101, 5
        %v4104 = vsel %vm295, %v4099, %v4103
        %v4105 = vshrl.u32 %v3583, 16
        %v4107 = vrot.slane %v4105, 4
        %v4108 = vor.u32 %v4107, %v4103
        %v4109 = vrot.slane %v4108, 4
        %v4111 = vshll.u32 %v3584, 16
        %v4113 = vrot.slane %v4111, 5
        %v4114 = vsel %vm295, %v4109, %v4113
        %v4115 = vshrl.u32 %v3584, 16
        %v4117 = vrot.slane %v4115, 4
        %v4118 = vor.u32 %v4117, %v4113
        %v4119 = vrot.slane %v4118, 4
        %v4121 = vshll.u32 %v3585, 16
        %v4123 = vrot.slane %v4121, 5
        %v4124 = vsel %vm295, %v4119, %v4123
        %v4125 = vshrl.u32 %v3585, 16
        %v4127 = vrot.slane %v4125, 4
        %v4128 = vor.u32 %v4127, %v4123
        %v4129 = vrot.slane %v4128, 4
        %v4131 = vshll.u32 %v3586, 16
        %v4133 = vrot.slane %v4131, 5
        %v4134 = vsel %vm295, %v4129, %v4133
        %v4136 = vshrl.u32 %v3587, 16
        %v4138 = vrot.slane %v4136, 4
        %v4139 = vshll.u32 %v3587, 16
        %v4141 = vrot.slane %v4139, 5
        %v4142 = vor.u32 %v4138, %v4141
        %v4143 = vrot.slane %v4142, 4
        %v4145 = vshll.u32 %v3588, 16
        %v4147 = vrot.slane %v4145, 5
        %v4148 = vsel %vm295, %v4143, %v4147
        %v4149 = vshrl.u32 %v3588, 16
        %v4151 = vrot.slane %v4149, 4
        %v4152 = vor.u32 %v4151, %v4147
        %v4153 = vrot.slane %v4152, 4
        %v4155 = vshll.u32 %v3589, 16
        %v4157 = vrot.slane %v4155, 5
        %v4158 = vsel %vm295, %v4153, %v4157
        %v4159 = vshrl.u32 %v3589, 16
        %v4161 = vrot.slane %v4159, 4
        %v4162 = vor.u32 %v4161, %v4157
        %v4163 = vrot.slane %v4162, 4
        %v4165 = vshll.u32 %v3590, 16
        %v4167 = vrot.slane %v4165, 5
        %v4168 = vsel %vm295, %v4163, %v4167
        %v4169 = vshrl.u32 %v3590, 16
        %v4171 = vrot.slane %v4169, 4
        %v4172 = vor.u32 %v4171, %v4167
        %v4173 = vrot.slane %v4172, 4
        %v4175 = vshll.u32 %v3591, 16
        %v4177 = vrot.slane %v4175, 5
        %v4178 = vsel %vm295, %v4173, %v4177
        %v4180 = vshrl.u32 %v3592, 16
        %v4182 = vrot.slane %v4180, 4
        %v4183 = vshll.u32 %v3592, 16
        %v4185 = vrot.slane %v4183, 5
        %v4186 = vor.u32 %v4182, %v4185
        %v4187 = vrot.slane %v4186, 4
        %v4189 = vshll.u32 %v3593, 16
        %v4191 = vrot.slane %v4189, 5
        %v4192 = vsel %vm295, %v4187, %v4191
        %v4193 = vshrl.u32 %v3593, 16
        %v4195 = vrot.slane %v4193, 4
        %v4196 = vor.u32 %v4195, %v4191
        %v4197 = vrot.slane %v4196, 4
        %v4199 = vshll.u32 %v3594, 16
        %v4201 = vrot.slane %v4199, 5
        %v4202 = vsel %vm295, %v4197, %v4201
        %v4203 = vshrl.u32 %v3594, 16
        %v4205 = vrot.slane %v4203, 4
        %v4206 = vor.u32 %v4205, %v4201
        %v4207 = vrot.slane %v4206, 4
        %v4209 = vshll.u32 %v3595, 16
        %v4211 = vrot.slane %v4209, 5
        %v4212 = vsel %vm295, %v4207, %v4211
        %v4213 = vshrl.u32 %v3595, 16
        %v4215 = vrot.slane %v4213, 4
        %v4216 = vor.u32 %v4215, %v4211
        %v4217 = vrot.slane %v4216, 4
        %v4219 = vshll.u32 %v3596, 16
        %v4221 = vrot.slane %v4219, 5
        %v4222 = vsel %vm295, %v4217, %v4221
        %v4224 = vshrl.u32 %v3597, 16
        %v4226 = vrot.slane %v4224, 4
        %v4227 = vshll.u32 %v3597, 16
        %v4229 = vrot.slane %v4227, 5
        %v4230 = vor.u32 %v4226, %v4229
        %v4231 = vrot.slane %v4230, 4
        %v4233 = vshll.u32 %v3598, 16
        %v4235 = vrot.slane %v4233, 5
        %v4236 = vsel %vm295, %v4231, %v4235
        %v4237 = vshrl.u32 %v3598, 16
        %v4239 = vrot.slane %v4237, 4
        %v4240 = vor.u32 %v4239, %v4235
        %v4241 = vrot.slane %v4240, 4
        %v4243 = vshll.u32 %v3599, 16
        %v4245 = vrot.slane %v4243, 5
        %v4246 = vsel %vm295, %v4241, %v4245
        %v4247 = vshrl.u32 %v3599, 16
        %v4249 = vrot.slane %v4247, 4
        %v4250 = vor.u32 %v4249, %v4245
        %v4251 = vrot.slane %v4250, 4
        %v4253 = vshll.u32 %v3600, 16
        %v4255 = vrot.slane %v4253, 5
        %v4256 = vsel %vm295, %v4251, %v4255
        %v4257 = vshrl.u32 %v3600, 16
        %v4259 = vrot.slane %v4257, 4
        %v4260 = vor.u32 %v4259, %v4255
        %v4261 = vrot.slane %v4260, 4
        %v4263 = vshll.u32 %v3601, 16
        %v4265 = vrot.slane %v4263, 5
        %v4266 = vsel %vm295, %v4261, %v4265
        %v4268 = vshrl.u32 %v3602, 16
        %v4270 = vrot.slane %v4268, 4
        %v4271 = vshll.u32 %v3602, 16
        %v4273 = vrot.slane %v4271, 5
        %v4274 = vor.u32 %v4270, %v4273
        %v4275 = vrot.slane %v4274, 4
        %v4277 = vshll.u32 %v3603, 16
        %v4279 = vrot.slane %v4277, 5
        %v4280 = vsel %vm295, %v4275, %v4279
        %v4281 = vshrl.u32 %v3603, 16
        %v4283 = vrot.slane %v4281, 4
        %v4284 = vor.u32 %v4283, %v4279
        %v4285 = vrot.slane %v4284, 4
        %v4287 = vshll.u32 %v3604, 16
        %v4289 = vrot.slane %v4287, 5
        %v4290 = vsel %vm295, %v4285, %v4289
        %v4291 = vshrl.u32 %v3604, 16
        %v4293 = vrot.slane %v4291, 4
        %v4294 = vor.u32 %v4293, %v4289
        %v4295 = vrot.slane %v4294, 4
        %v4297 = vshll.u32 %v3605, 16
        %v4299 = vrot.slane %v4297, 5
        %v4300 = vsel %vm295, %v4295, %v4299
        %v4301 = vshrl.u32 %v3605, 16
        %v4303 = vrot.slane %v4301, 4
        %v4304 = vor.u32 %v4303, %v4299
        %v4305 = vrot.slane %v4304, 4
        %v4307 = vshll.u32 %v3606, 16
        %v4309 = vrot.slane %v4307, 5
        %v4310 = vsel %vm295, %v4305, %v4309
        %s4311 = scalar_lea.vmem %s1, 8
        %v4312 = vld [vmem:[%s4311] sm:$0x3]
        %v4313 = vunpack.c.l.b16 %v3620
        %v4314 = vunpack.c.l.b16 %v3630
        %v4315 = vunpack.c.l.b16 %v3640
        %v4316 = vunpack.c.l.b16 %v3650
        %v4317 = vunpack.c.l.b16 %v3664
        %v4318 = vunpack.c.l.b16 %v3674
        %v4319 = vunpack.c.l.b16 %v3684
        %v4320 = vunpack.c.l.b16 %v3694
        %v4321 = vunpack.c.l.b16 %v3708
        %v4322 = vunpack.c.l.b16 %v3718
        %v4323 = vunpack.c.l.b16 %v3728
        %v4324 = vunpack.c.l.b16 %v3738
        %v4325 = vunpack.c.l.b16 %v3752
        %v4326 = vunpack.c.l.b16 %v3762
        %v4327 = vunpack.c.l.b16 %v3772
        %v4328 = vunpack.c.l.b16 %v3782
        %v4329 = vunpack.c.l.b16 %v3796
        %v4330 = vunpack.c.l.b16 %v3806
        %v4331 = vunpack.c.l.b16 %v3816
        %v4332 = vunpack.c.l.b16 %v3826
        %v4333 = vunpack.c.l.b16 %v3840
        %v4334 = vunpack.c.l.b16 %v3850
        %v4335 = vunpack.c.l.b16 %v3860
        %v4336 = vunpack.c.l.b16 %v3870
        %v4337 = vunpack.c.l.b16 %v3884
        %v4338 = vunpack.c.l.b16 %v3894
        %v4339 = vunpack.c.l.b16 %v3904
        %v4340 = vunpack.c.l.b16 %v3914
        %v4341 = vunpack.c.l.b16 %v3928
        %v4342 = vunpack.c.l.b16 %v3938
        %v4343 = vunpack.c.l.b16 %v3948
        %v4344 = vunpack.c.l.b16 %v3958
        %v4345 = vunpack.c.l.b16 %v3972
        %v4346 = vunpack.c.l.b16 %v3982
        %v4347 = vunpack.c.l.b16 %v3992
        %v4348 = vunpack.c.l.b16 %v4002
        %v4349 = vunpack.c.l.b16 %v4016
        %v4350 = vunpack.c.l.b16 %v4026
        %v4351 = vunpack.c.l.b16 %v4036
        %v4352 = vunpack.c.l.b16 %v4046
        %v4353 = vunpack.c.l.b16 %v4060
        %v4354 = vunpack.c.l.b16 %v4070
        %v4355 = vunpack.c.l.b16 %v4080
        %v4356 = vunpack.c.l.b16 %v4090
        %v4357 = vunpack.c.l.b16 %v4104
        %v4358 = vunpack.c.l.b16 %v4114
        %v4359 = vunpack.c.l.b16 %v4124
        %v4360 = vunpack.c.l.b16 %v4134
        %v4361 = vunpack.c.l.b16 %v4148
        %v4362 = vunpack.c.l.b16 %v4158
        %v4363 = vunpack.c.l.b16 %v4168
        %v4364 = vunpack.c.l.b16 %v4178
        %v4365 = vunpack.c.l.b16 %v4192
        %v4366 = vunpack.c.l.b16 %v4202
        %v4367 = vunpack.c.l.b16 %v4212
        %v4368 = vunpack.c.l.b16 %v4222
        %v4369 = vunpack.c.l.b16 %v4236
        %v4370 = vunpack.c.l.b16 %v4246
        %v4371 = vunpack.c.l.b16 %v4256
        %v4372 = vunpack.c.l.b16 %v4266
        %v4373 = vunpack.c.l.b16 %v4280
        %v4374 = vunpack.c.l.b16 %v4290
        %v4375 = vunpack.c.l.b16 %v4300
        %v4376 = vunpack.c.l.b16 %v4310
        %v4377 = vpack.c.b16 %v4314, %v4313
        %v4378 = vpack.c.b16 %v4316, %v4315
        %v4379 = vpack.c.b16 %v4318, %v4317
        %v4380 = vpack.c.b16 %v4320, %v4319
        %v4381 = vpack.c.b16 %v4322, %v4321
        %v4382 = vpack.c.b16 %v4324, %v4323
        %v4383 = vpack.c.b16 %v4326, %v4325
        %v4384 = vpack.c.b16 %v4328, %v4327
        %v4385 = vpack.c.b16 %v4330, %v4329
        %v4386 = vpack.c.b16 %v4332, %v4331
        %v4387 = vpack.c.b16 %v4334, %v4333
        %v4388 = vpack.c.b16 %v4336, %v4335
        %v4389 = vpack.c.b16 %v4338, %v4337
        %v4390 = vpack.c.b16 %v4340, %v4339
        %v4391 = vpack.c.b16 %v4342, %v4341
        %v4392 = vpack.c.b16 %v4344, %v4343
        %v4393 = vpack.c.b16 %v4346, %v4345
        %v4394 = vpack.c.b16 %v4348, %v4347
        %v4395 = vpack.c.b16 %v4350, %v4349
        %v4396 = vpack.c.b16 %v4352, %v4351
        %v4397 = vpack.c.b16 %v4354, %v4353
        %v4398 = vpack.c.b16 %v4356, %v4355
        %v4399 = vpack.c.b16 %v4358, %v4357
        %v4400 = vpack.c.b16 %v4360, %v4359
        %v4401 = vpack.c.b16 %v4362, %v4361
        %v4402 = vpack.c.b16 %v4364, %v4363
        %v4403 = vpack.c.b16 %v4366, %v4365
        %v4404 = vpack.c.b16 %v4368, %v4367
        %v4405 = vpack.c.b16 %v4370, %v4369
        %v4406 = vpack.c.b16 %v4372, %v4371
        %v4407 = vpack.c.b16 %v4374, %v4373
        %v4408 = vpack.c.b16 %v4376, %v4375
        %v4410 = vsel %vm1098, %v4377, 0
        %v4413 = vsel %vm1098, %v4378, 0
        %v4416 = vsel %vm1098, %v4379, 0
        %v4419 = vsel %vm1098, %v4380, 0
        %v4422 = vsel %vm1098, %v4381, 0
        %v4425 = vsel %vm1098, %v4382, 0
        %v4428 = vsel %vm1098, %v4383, 0
        %v4431 = vsel %vm1098, %v4384, 0
        %v4434 = vsel %vm1098, %v4385, 0
        %v4437 = vsel %vm1098, %v4386, 0
        %v4440 = vsel %vm1098, %v4387, 0
        %v4443 = vsel %vm1098, %v4388, 0
        %v4446 = vsel %vm1098, %v4389, 0
        %v4449 = vsel %vm1098, %v4390, 0
        %v4452 = vsel %vm1098, %v4391, 0
        %v4455 = vsel %vm1098, %v4392, 0
        %v4458 = vsel %vm1098, %v4393, 0
        %v4461 = vsel %vm1098, %v4394, 0
        %v4464 = vsel %vm1098, %v4395, 0
        %v4467 = vsel %vm1098, %v4396, 0
        %v4470 = vsel %vm1098, %v4397, 0
        %v4473 = vsel %vm1098, %v4398, 0
        %v4476 = vsel %vm1098, %v4399, 0
        %v4479 = vsel %vm1098, %v4400, 0
        %v4482 = vsel %vm1098, %v4401, 0
        %v4485 = vsel %vm1098, %v4402, 0
        %v4488 = vsel %vm1098, %v4403, 0
        %v4491 = vsel %vm1098, %v4404, 0
        %v4494 = vsel %vm1098, %v4405, 0
        %v4497 = vsel %vm1098, %v4406, 0
        %v4500 = vsel %vm1098, %v4407, 0
        %v4503 = vsel %vm1098, %v4408, 0
        %v4506 = vsel %vm1195, %v4312, 0
        %4508 = vmatprep.subr.bf16.mxu0 0
        %4509 = vmatpush1.bf16.msra.mxu0 %v4506
        %4510 = vmatprep.subr.bf16.mxu0 0
        %4511 = vmatpush1.bf16.msra.mxu0 0
        %4512 = vmatprep.subr.bf16.mxu0 0
        %4513 = vmatpush1.bf16.msra.mxu0 0
        %4514 = vmatprep.subr.bf16.mxu0 0
        %4515 = vmatpush1.bf16.msra.mxu0 0
        %4516 = vmatprep.subr.bf16.mxu0 0
        %4517 = vmatpush1.bf16.msra.mxu0 0
        %4518 = vmatprep.subr.bf16.mxu0 0
        %4519 = vmatpush1.bf16.msra.mxu0 0
        %4520 = vmatprep.subr.bf16.mxu0 0
        %4521 = vmatpush1.bf16.msra.mxu0 0
        %4522 = vmatprep.subr.bf16.mxu0 0
        %4523 = vmatpush1.bf16.msra.mxu0 0
        %4524 = vmatprep.subr.bf16.mxu0 0
        %4525 = vmatpush1.bf16.msra.mxu0 0
        %4526 = vmatprep.subr.bf16.mxu0 0
        %4527 = vmatpush1.bf16.msra.mxu0 0
        %4528 = vmatprep.subr.bf16.mxu0 0
        %4529 = vmatpush1.bf16.msra.mxu0 0
        %4530 = vmatprep.subr.bf16.mxu0 0
        %4531 = vmatpush1.bf16.msra.mxu0 0
        %4532 = vmatprep.subr.bf16.mxu0 0
        %4533 = vmatpush1.bf16.msra.mxu0 0
        %4534 = vmatprep.subr.bf16.mxu0 0
        %4535 = vmatpush1.bf16.msra.mxu0 0
        %4536 = vmatprep.subr.bf16.mxu0 0
        %4537 = vmatpush1.bf16.msra.mxu0 0
        %4538 = vmatprep.subr.bf16.mxu0 0
        %4539 = vmatpush1.bf16.msra.mxu0 0
        %4540 = vmatprep.mubr.bf16.mxu0 0
        %4541 = vmatmul.mubr.bf16.gmra.mrb[0].mxu0 %v4410
        %v4542 = vpop.f32.mrb[0].mxu0
        %v4543 = vadd.f32 0.0, %v4542
        %v4544 = vpop.f32.mrb[0].mxu0
        %v4545 = vpop.f32.mrb[0].mxu0
        %v4546 = vadd.f32 0.0, %v4545
        %v4547 = vpop.f32.mrb[0].mxu0
        %4548 = vmatprep.mubr.bf16.mxu0 0
        %4549 = vmatmul.mubr.bf16.gmra.mrb[0].mxu0 %v4413
        %v4550 = vpop.f32.mrb[0].mxu0
        %v4551 = vadd.f32 0.0, %v4550
        %v4552 = vpop.f32.mrb[0].mxu0
        %v4553 = vpop.f32.mrb[0].mxu0
        %v4554 = vadd.f32 0.0, %v4553
        %v4555 = vpop.f32.mrb[0].mxu0
        %4556 = vmatprep.mubr.bf16.mxu0 0
        %4557 = vmatmul.mubr.bf16.gmra.mrb[0].mxu0 %v4416
        %v4558 = vpop.f32.mrb[0].mxu0
        %v4559 = vadd.f32 0.0, %v4558
        %v4560 = vpop.f32.mrb[0].mxu0
        %v4561 = vpop.f32.mrb[0].mxu0
        %v4562 = vadd.f32 0.0, %v4561
        %v4563 = vpop.f32.mrb[0].mxu0
        %4564 = vmatprep.mubr.bf16.mxu0 0
        %4565 = vmatmul.mubr.bf16.gmra.mrb[0].mxu0 %v4419
        %v4566 = vpop.f32.mrb[0].mxu0
        %v4567 = vadd.f32 0.0, %v4566
        %v4568 = vpop.f32.mrb[0].mxu0
        %v4569 = vpop.f32.mrb[0].mxu0
        %v4570 = vadd.f32 0.0, %v4569
        %v4571 = vpop.f32.mrb[0].mxu0
        %4572 = vmatprep.mubr.bf16.mxu0 0
        %4573 = vmatmul.mubr.bf16.gmra.mrb[0].mxu0 %v4422
        %v4574 = vpop.f32.mrb[0].mxu0
        %v4575 = vadd.f32 0.0, %v4574
        %v4576 = vpop.f32.mrb[0].mxu0
        %v4577 = vpop.f32.mrb[0].mxu0
        %v4578 = vadd.f32 0.0, %v4577
        %v4579 = vpop.f32.mrb[0].mxu0
        %4580 = vmatprep.mubr.bf16.mxu0 0
        %4581 = vmatmul.mubr.bf16.gmra.mrb[0].mxu0 %v4425
        %v4582 = vpop.f32.mrb[0].mxu0
        %v4583 = vadd.f32 0.0, %v4582
        %v4584 = vpop.f32.mrb[0].mxu0
        %v4585 = vpop.f32.mrb[0].mxu0
        %v4586 = vadd.f32 0.0, %v4585
        %v4587 = vpop.f32.mrb[0].mxu0
        %4588 = vmatprep.mubr.bf16.mxu0 0
        %4589 = vmatmul.mubr.bf16.gmra.mrb[0].mxu0 %v4428
        %v4590 = vpop.f32.mrb[0].mxu0
        %v4591 = vadd.f32 0.0, %v4590
        %v4592 = vpop.f32.mrb[0].mxu0
        %v4593 = vpop.f32.mrb[0].mxu0
        %v4594 = vadd.f32 0.0, %v4593
        %v4595 = vpop.f32.mrb[0].mxu0
        %4596 = vmatprep.mubr.bf16.mxu0 0
        %4597 = vmatmul.mubr.bf16.gmra.mrb[0].mxu0 %v4431
        %v4598 = vpop.f32.mrb[0].mxu0
        %v4599 = vadd.f32 0.0, %v4598
        %v4600 = vpop.f32.mrb[0].mxu0
        %v4601 = vpop.f32.mrb[0].mxu0
        %v4602 = vadd.f32 0.0, %v4601
        %v4603 = vpop.f32.mrb[0].mxu0
        %4604 = vmatprep.mubr.bf16.mxu0 0
        %4605 = vmatmul.mubr.bf16.gmra.mrb[0].mxu0 %v4434
        %v4606 = vpop.f32.mrb[0].mxu0
        %v4607 = vadd.f32 0.0, %v4606
        %v4608 = vpop.f32.mrb[0].mxu0
        %v4609 = vpop.f32.mrb[0].mxu0
        %v4610 = vadd.f32 0.0, %v4609
        %v4611 = vpop.f32.mrb[0].mxu0
        %4612 = vmatprep.mubr.bf16.mxu0 0
        %4613 = vmatmul.mubr.bf16.gmra.mrb[0].mxu0 %v4437
        %v4614 = vpop.f32.mrb[0].mxu0
        %v4615 = vadd.f32 0.0, %v4614
        %v4616 = vpop.f32.mrb[0].mxu0
        %v4617 = vpop.f32.mrb[0].mxu0
        %v4618 = vadd.f32 0.0, %v4617
        %v4619 = vpop.f32.mrb[0].mxu0
        %4620 = vmatprep.mubr.bf16.mxu0 0
        %4621 = vmatmul.mubr.bf16.gmra.mrb[0].mxu0 %v4440
        %v4622 = vpop.f32.mrb[0].mxu0
        %v4623 = vadd.f32 0.0, %v4622
        %v4624 = vpop.f32.mrb[0].mxu0
        %v4625 = vpop.f32.mrb[0].mxu0
        %v4626 = vadd.f32 0.0, %v4625
        %v4627 = vpop.f32.mrb[0].mxu0
        %4628 = vmatprep.mubr.bf16.mxu0 0
        %4629 = vmatmul.mubr.bf16.gmra.mrb[0].mxu0 %v4443
        %v4630 = vpop.f32.mrb[0].mxu0
        %v4631 = vadd.f32 0.0, %v4630
        %v4632 = vpop.f32.mrb[0].mxu0
        %v4633 = vpop.f32.mrb[0].mxu0
        %v4634 = vadd.f32 0.0, %v4633
        %v4635 = vpop.f32.mrb[0].mxu0
        %4636 = vmatprep.mubr.bf16.mxu0 0
        %4637 = vmatmul.mubr.bf16.gmra.mrb[0].mxu0 %v4446
        %v4638 = vpop.f32.mrb[0].mxu0
        %v4639 = vadd.f32 0.0, %v4638
        %v4640 = vpop.f32.mrb[0].mxu0
        %v4641 = vpop.f32.mrb[0].mxu0
        %v4642 = vadd.f32 0.0, %v4641
        %v4643 = vpop.f32.mrb[0].mxu0
        %4644 = vmatprep.mubr.bf16.mxu0 0
        %4645 = vmatmul.mubr.bf16.gmra.mrb[0].mxu0 %v4449
        %v4646 = vpop.f32.mrb[0].mxu0
        %v4647 = vadd.f32 0.0, %v4646
        %v4648 = vpop.f32.mrb[0].mxu0
        %v4649 = vpop.f32.mrb[0].mxu0
        %v4650 = vadd.f32 0.0, %v4649
        %v4651 = vpop.f32.mrb[0].mxu0
        %4652 = vmatprep.mubr.bf16.mxu0 0
        %4653 = vmatmul.mubr.bf16.gmra.mrb[0].mxu0 %v4452
        %v4654 = vpop.f32.mrb[0].mxu0
        %v4655 = vadd.f32 0.0, %v4654
        %v4656 = vpop.f32.mrb[0].mxu0
        %v4657 = vpop.f32.mrb[0].mxu0
        %v4658 = vadd.f32 0.0, %v4657
        %v4659 = vpop.f32.mrb[0].mxu0
        %4660 = vmatprep.mubr.bf16.mxu0 0
        %4661 = vmatmul.mubr.bf16.gmra.mrb[0].mxu0 %v4455
        %v4662 = vpop.f32.mrb[0].mxu0
        %v4663 = vadd.f32 0.0, %v4662
        %v4664 = vpop.f32.mrb[0].mxu0
        %v4665 = vpop.f32.mrb[0].mxu0
        %v4666 = vadd.f32 0.0, %v4665
        %v4667 = vpop.f32.mrb[0].mxu0
        %4668 = vmatprep.mubr.bf16.mxu0 0
        %4669 = vmatmul.mubr.bf16.gmra.mrb[0].mxu0 %v4458
        %v4670 = vpop.f32.mrb[0].mxu0
        %v4671 = vadd.f32 0.0, %v4670
        %v4672 = vpop.f32.mrb[0].mxu0
        %v4673 = vpop.f32.mrb[0].mxu0
        %v4674 = vadd.f32 0.0, %v4673
        %v4675 = vpop.f32.mrb[0].mxu0
        %4676 = vmatprep.mubr.bf16.mxu0 0
        %4677 = vmatmul.mubr.bf16.gmra.mrb[0].mxu0 %v4461
        %v4678 = vpop.f32.mrb[0].mxu0
        %v4679 = vadd.f32 0.0, %v4678
        %v4680 = vpop.f32.mrb[0].mxu0
        %v4681 = vpop.f32.mrb[0].mxu0
        %v4682 = vadd.f32 0.0, %v4681
        %v4683 = vpop.f32.mrb[0].mxu0
        %4684 = vmatprep.mubr.bf16.mxu0 0
        %4685 = vmatmul.mubr.bf16.gmra.mrb[0].mxu0 %v4464
        %v4686 = vpop.f32.mrb[0].mxu0
        %v4687 = vadd.f32 0.0, %v4686
        %v4688 = vpop.f32.mrb[0].mxu0
        %v4689 = vpop.f32.mrb[0].mxu0
        %v4690 = vadd.f32 0.0, %v4689
        %v4691 = vpop.f32.mrb[0].mxu0
        %4692 = vmatprep.mubr.bf16.mxu0 0
        %4693 = vmatmul.mubr.bf16.gmra.mrb[0].mxu0 %v4467
        %v4694 = vpop.f32.mrb[0].mxu0
        %v4695 = vadd.f32 0.0, %v4694
        %v4696 = vpop.f32.mrb[0].mxu0
        %v4697 = vpop.f32.mrb[0].mxu0
        %v4698 = vadd.f32 0.0, %v4697
        %v4699 = vpop.f32.mrb[0].mxu0
        %4700 = vmatprep.mubr.bf16.mxu0 0
        %4701 = vmatmul.mubr.bf16.gmra.mrb[0].mxu0 %v4470
        %v4702 = vpop.f32.mrb[0].mxu0
        %v4703 = vadd.f32 0.0, %v4702
        %v4704 = vpop.f32.mrb[0].mxu0
        %v4705 = vpop.f32.mrb[0].mxu0
        %v4706 = vadd.f32 0.0, %v4705
        %v4707 = vpop.f32.mrb[0].mxu0
        %4708 = vmatprep.mubr.bf16.mxu0 0
        %4709 = vmatmul.mubr.bf16.gmra.mrb[0].mxu0 %v4473
        %v4710 = vpop.f32.mrb[0].mxu0
        %v4711 = vadd.f32 0.0, %v4710
        %v4712 = vpop.f32.mrb[0].mxu0
        %v4713 = vpop.f32.mrb[0].mxu0
        %v4714 = vadd.f32 0.0, %v4713
        %v4715 = vpop.f32.mrb[0].mxu0
        %4716 = vmatprep.mubr.bf16.mxu0 0
        %4717 = vmatmul.mubr.bf16.gmra.mrb[0].mxu0 %v4476
        %v4718 = vpop.f32.mrb[0].mxu0
        %v4719 = vadd.f32 0.0, %v4718
        %v4720 = vpop.f32.mrb[0].mxu0
        %v4721 = vpop.f32.mrb[0].mxu0
        %v4722 = vadd.f32 0.0, %v4721
        %v4723 = vpop.f32.mrb[0].mxu0
        %4724 = vmatprep.mubr.bf16.mxu0 0
        %4725 = vmatmul.mubr.bf16.gmra.mrb[0].mxu0 %v4479
        %v4726 = vpop.f32.mrb[0].mxu0
        %v4727 = vadd.f32 0.0, %v4726
        %v4728 = vpop.f32.mrb[0].mxu0
        %v4729 = vpop.f32.mrb[0].mxu0
        %v4730 = vadd.f32 0.0, %v4729
        %v4731 = vpop.f32.mrb[0].mxu0
        %4732 = vmatprep.mubr.bf16.mxu0 0
        %4733 = vmatmul.mubr.bf16.gmra.mrb[0].mxu0 %v4482
        %v4734 = vpop.f32.mrb[0].mxu0
        %v4735 = vadd.f32 0.0, %v4734
        %v4736 = vpop.f32.mrb[0].mxu0
        %v4737 = vpop.f32.mrb[0].mxu0
        %v4738 = vadd.f32 0.0, %v4737
        %v4739 = vpop.f32.mrb[0].mxu0
        %4740 = vmatprep.mubr.bf16.mxu0 0
        %4741 = vmatmul.mubr.bf16.gmra.mrb[0].mxu0 %v4485
        %v4742 = vpop.f32.mrb[0].mxu0
        %v4743 = vadd.f32 0.0, %v4742
        %v4744 = vpop.f32.mrb[0].mxu0
        %v4745 = vpop.f32.mrb[0].mxu0
        %v4746 = vadd.f32 0.0, %v4745
        %v4747 = vpop.f32.mrb[0].mxu0
        %4748 = vmatprep.mubr.bf16.mxu0 0
        %4749 = vmatmul.mubr.bf16.gmra.mrb[0].mxu0 %v4488
        %v4750 = vpop.f32.mrb[0].mxu0
        %v4751 = vadd.f32 0.0, %v4750
        %v4752 = vpop.f32.mrb[0].mxu0
        %v4753 = vpop.f32.mrb[0].mxu0
        %v4754 = vadd.f32 0.0, %v4753
        %v4755 = vpop.f32.mrb[0].mxu0
        %4756 = vmatprep.mubr.bf16.mxu0 0
        %4757 = vmatmul.mubr.bf16.gmra.mrb[0].mxu0 %v4491
        %v4758 = vpop.f32.mrb[0].mxu0
        %v4759 = vadd.f32 0.0, %v4758
        %v4760 = vpop.f32.mrb[0].mxu0
        %v4761 = vpop.f32.mrb[0].mxu0
        %v4762 = vadd.f32 0.0, %v4761
        %v4763 = vpop.f32.mrb[0].mxu0
        %4764 = vmatprep.mubr.bf16.mxu0 0
        %4765 = vmatmul.mubr.bf16.gmra.mrb[0].mxu0 %v4494
        %v4766 = vpop.f32.mrb[0].mxu0
        %v4767 = vadd.f32 0.0, %v4766
        %v4768 = vpop.f32.mrb[0].mxu0
        %v4769 = vpop.f32.mrb[0].mxu0
        %v4770 = vadd.f32 0.0, %v4769
        %v4771 = vpop.f32.mrb[0].mxu0
        %4772 = vmatprep.mubr.bf16.mxu0 0
        %4773 = vmatmul.mubr.bf16.gmra.mrb[0].mxu0 %v4497
        %v4774 = vpop.f32.mrb[0].mxu0
        %v4775 = vadd.f32 0.0, %v4774
        %v4776 = vpop.f32.mrb[0].mxu0
        %v4777 = vpop.f32.mrb[0].mxu0
        %v4778 = vadd.f32 0.0, %v4777
        %v4779 = vpop.f32.mrb[0].mxu0
        %4780 = vmatprep.mubr.bf16.mxu0 0
        %4781 = vmatmul.mubr.bf16.gmra.mrb[0].mxu0 %v4500
        %v4782 = vpop.f32.mrb[0].mxu0
        %v4783 = vadd.f32 0.0, %v4782
        %v4784 = vpop.f32.mrb[0].mxu0
        %v4785 = vpop.f32.mrb[0].mxu0
        %v4786 = vadd.f32 0.0, %v4785
        %v4787 = vpop.f32.mrb[0].mxu0
        %4788 = vmatprep.mubr.bf16.mxu0 0
        %4789 = vmatmul.mubr.bf16.gmra.mrb[0].mxu0 %v4503
        %v4790 = vpop.f32.mrb[0].mxu0
        %v4791 = vadd.f32 0.0, %v4790
        %v4792 = vpop.f32.mrb[0].mxu0
        %v4793 = vpop.f32.mrb[0].mxu0
        %v4794 = vadd.f32 0.0, %v4793
        %v4795 = vpop.f32.mrb[0].mxu0
        %4796 = vdwg.mxu0
        %v4797 = vadd.f32 %v3463, %v4543
        %v4798 = vadd.f32 %v3464, %v4546
        %v4799 = vadd.f32 %v3465, %v4551
        %v4800 = vadd.f32 %v3466, %v4554
        %v4801 = vadd.f32 %v3467, %v4559
        %v4802 = vadd.f32 %v3468, %v4562
        %v4803 = vadd.f32 %v3469, %v4567
        %v4804 = vadd.f32 %v3470, %v4570
        %v4805 = vadd.f32 %v3471, %v4575
        %v4806 = vadd.f32 %v3472, %v4578
        %v4807 = vadd.f32 %v3473, %v4583
        %v4808 = vadd.f32 %v3474, %v4586
        %v4809 = vadd.f32 %v3475, %v4591
        %v4810 = vadd.f32 %v3476, %v4594
        %v4811 = vadd.f32 %v3477, %v4599
        %v4812 = vadd.f32 %v3478, %v4602
        %v4813 = vadd.f32 %v3479, %v4607
        %v4814 = vadd.f32 %v3480, %v4610
        %v4815 = vadd.f32 %v3481, %v4615
        %v4816 = vadd.f32 %v3482, %v4618
        %v4817 = vadd.f32 %v3483, %v4623
        %v4818 = vadd.f32 %v3484, %v4626
        %v4819 = vadd.f32 %v3485, %v4631
        %v4820 = vadd.f32 %v3486, %v4634
        %v4821 = vadd.f32 %v3487, %v4639
        %v4822 = vadd.f32 %v3488, %v4642
        %v4823 = vadd.f32 %v3489, %v4647
        %v4824 = vadd.f32 %v3490, %v4650
        %v4825 = vadd.f32 %v3491, %v4655
        %v4826 = vadd.f32 %v3492, %v4658
        %v4827 = vadd.f32 %v3493, %v4663
        %v4828 = vadd.f32 %v3494, %v4666
        %v4829 = vadd.f32 %v3495, %v4671
        %v4830 = vadd.f32 %v3496, %v4674
        %v4831 = vadd.f32 %v3497, %v4679
        %v4832 = vadd.f32 %v3498, %v4682
        %v4833 = vadd.f32 %v3499, %v4687
        %v4834 = vadd.f32 %v3500, %v4690
        %v4835 = vadd.f32 %v3501, %v4695
        %v4836 = vadd.f32 %v3502, %v4698
        %v4837 = vadd.f32 %v3503, %v4703
        %v4838 = vadd.f32 %v3504, %v4706
        %v4839 = vadd.f32 %v3505, %v4711
        %v4840 = vadd.f32 %v3506, %v4714
        %v4841 = vadd.f32 %v3507, %v4719
        %v4842 = vadd.f32 %v3508, %v4722
        %v4843 = vadd.f32 %v3509, %v4727
        %v4844 = vadd.f32 %v3510, %v4730
        %v4845 = vadd.f32 %v3511, %v4735
        %v4846 = vadd.f32 %v3512, %v4738
        %v4847 = vadd.f32 %v3513, %v4743
        %v4848 = vadd.f32 %v3514, %v4746
        %v4849 = vadd.f32 %v3515, %v4751
        %v4850 = vadd.f32 %v3516, %v4754
        %v4851 = vadd.f32 %v3517, %v4759
        %v4852 = vadd.f32 %v3518, %v4762
        %v4853 = vadd.f32 %v3519, %v4767
        %v4854 = vadd.f32 %v3520, %v4770
        %v4855 = vadd.f32 %v3521, %v4775
        %v4856 = vadd.f32 %v3522, %v4778
        %v4857 = vadd.f32 %v3523, %v4783
        %v4858 = vadd.f32 %v3524, %v4786
        %v4859 = vadd.f32 %v3525, %v4791
        %v4860 = vadd.f32 %v3526, %v4794
        %v4861 = vld [vmem:[%s2848] sm:$0xe]
        %v4862 = vld [vmem:[%s2848 + $0x14] sm:$0xe]
        %v4863 = vld [vmem:[%s2848 + $0x28] sm:$0xe]
        %v4864 = vld [vmem:[%s2848 + $0x3c] sm:$0xe]
        %v4865 = vld [vmem:[%s2848 + $0x50] sm:$0xe]
        %v4866 = vld [vmem:[%s2848 + $0x64] sm:$0xe]
        %v4867 = vld [vmem:[%s2848 + $0x78] sm:$0xe]
        %v4868 = vld [vmem:[%s2848 + $0x8c] sm:$0xe]
        %v4869 = vld [vmem:[%s2848 + $0xa0] sm:$0xe]
        %v4870 = vld [vmem:[%s2848 + $0xb4] sm:$0xe]
        %v4871 = vld [vmem:[%s2848 + $0xc8] sm:$0xe]
        %v4872 = vld [vmem:[%s2848 + $0xdc] sm:$0xe]
        %v4873 = vld [vmem:[%s2848 + $0xf0] sm:$0xe]
        %v4874 = vld [vmem:[%s2848 + $0x104] sm:$0xe]
        %v4875 = vld [vmem:[%s2848 + $0x118] sm:$0xe]
        %v4876 = vld [vmem:[%s2848 + $0x12c] sm:$0xe]
        %v4957 = vrot.slane %v4861, 5
        %v4958 = vrot.slane %v4957, 4
        %v4959 = vrot.slane %v3528, 5
        %v4960 = vsel %vm2086, %v4958, %v4959
        %v4961 = vrot.slane %v4959, 4
        %v4962 = vrot.slane %v3529, 5
        %v4963 = vsel %vm2086, %v4961, %v4962
        %v4964 = vrot.slane %v4962, 4
        %v4965 = vrot.slane %v3530, 5
        %v4966 = vsel %vm2086, %v4964, %v4965
        %v4967 = vrot.slane %v4965, 4
        %v4968 = vrot.slane %v3531, 5
        %v4969 = vsel %vm2086, %v4967, %v4968
        %v4970 = vrot.slane %v4862, 5
        %v4971 = vrot.slane %v4970, 4
        %v4972 = vrot.slane %v3533, 5
        %v4973 = vsel %vm2086, %v4971, %v4972
        %v4974 = vrot.slane %v4972, 4
        %v4975 = vrot.slane %v3534, 5
        %v4976 = vsel %vm2086, %v4974, %v4975
        %v4977 = vrot.slane %v4975, 4
        %v4978 = vrot.slane %v3535, 5
        %v4979 = vsel %vm2086, %v4977, %v4978
        %v4980 = vrot.slane %v4978, 4
        %v4981 = vrot.slane %v3536, 5
        %v4982 = vsel %vm2086, %v4980, %v4981
        %v4983 = vrot.slane %v4863, 5
        %v4984 = vrot.slane %v4983, 4
        %v4985 = vrot.slane %v3538, 5
        %v4986 = vsel %vm2086, %v4984, %v4985
        %v4987 = vrot.slane %v4985, 4
        %v4988 = vrot.slane %v3539, 5
        %v4989 = vsel %vm2086, %v4987, %v4988
        %v4990 = vrot.slane %v4988, 4
        %v4991 = vrot.slane %v3540, 5
        %v4992 = vsel %vm2086, %v4990, %v4991
        %v4993 = vrot.slane %v4991, 4
        %v4994 = vrot.slane %v3541, 5
        %v4995 = vsel %vm2086, %v4993, %v4994
        %v4996 = vrot.slane %v4864, 5
        %v4997 = vrot.slane %v4996, 4
        %v4998 = vrot.slane %v3543, 5
        %v4999 = vsel %vm2086, %v4997, %v4998
        %v5000 = vrot.slane %v4998, 4
        %v5001 = vrot.slane %v3544, 5
        %v5002 = vsel %vm2086, %v5000, %v5001
        %v5003 = vrot.slane %v5001, 4
        %v5004 = vrot.slane %v3545, 5
        %v5005 = vsel %vm2086, %v5003, %v5004
        %v5006 = vrot.slane %v5004, 4
        %v5007 = vrot.slane %v3546, 5
        %v5008 = vsel %vm2086, %v5006, %v5007
        %v5009 = vrot.slane %v4865, 5
        %v5010 = vrot.slane %v5009, 4
        %v5011 = vrot.slane %v3548, 5
        %v5012 = vsel %vm2086, %v5010, %v5011
        %v5013 = vrot.slane %v5011, 4
        %v5014 = vrot.slane %v3549, 5
        %v5015 = vsel %vm2086, %v5013, %v5014
        %v5016 = vrot.slane %v5014, 4
        %v5017 = vrot.slane %v3550, 5
        %v5018 = vsel %vm2086, %v5016, %v5017
        %v5019 = vrot.slane %v5017, 4
        %v5020 = vrot.slane %v3551, 5
        %v5021 = vsel %vm2086, %v5019, %v5020
        %v5022 = vrot.slane %v4866, 5
        %v5023 = vrot.slane %v5022, 4
        %v5024 = vrot.slane %v3553, 5
        %v5025 = vsel %vm2086, %v5023, %v5024
        %v5026 = vrot.slane %v5024, 4
        %v5027 = vrot.slane %v3554, 5
        %v5028 = vsel %vm2086, %v5026, %v5027
        %v5029 = vrot.slane %v5027, 4
        %v5030 = vrot.slane %v3555, 5
        %v5031 = vsel %vm2086, %v5029, %v5030
        %v5032 = vrot.slane %v5030, 4
        %v5033 = vrot.slane %v3556, 5
        %v5034 = vsel %vm2086, %v5032, %v5033
        %v5035 = vrot.slane %v4867, 5
        %v5036 = vrot.slane %v5035, 4
        %v5037 = vrot.slane %v3558, 5
        %v5038 = vsel %vm2086, %v5036, %v5037
        %v5039 = vrot.slane %v5037, 4
        %v5040 = vrot.slane %v3559, 5
        %v5041 = vsel %vm2086, %v5039, %v5040
        %v5042 = vrot.slane %v5040, 4
        %v5043 = vrot.slane %v3560, 5
        %v5044 = vsel %vm2086, %v5042, %v5043
        %v5045 = vrot.slane %v5043, 4
        %v5046 = vrot.slane %v3561, 5
        %v5047 = vsel %vm2086, %v5045, %v5046
        %v5048 = vrot.slane %v4868, 5
        %v5049 = vrot.slane %v5048, 4
        %v5050 = vrot.slane %v3563, 5
        %v5051 = vsel %vm2086, %v5049, %v5050
        %v5052 = vrot.slane %v5050, 4
        %v5053 = vrot.slane %v3564, 5
        %v5054 = vsel %vm2086, %v5052, %v5053
        %v5055 = vrot.slane %v5053, 4
        %v5056 = vrot.slane %v3565, 5
        %v5057 = vsel %vm2086, %v5055, %v5056
        %v5058 = vrot.slane %v5056, 4
        %v5059 = vrot.slane %v3566, 5
        %v5060 = vsel %vm2086, %v5058, %v5059
        %v5061 = vrot.slane %v4869, 5
        %v5062 = vrot.slane %v5061, 4
        %v5063 = vrot.slane %v3568, 5
        %v5064 = vsel %vm2086, %v5062, %v5063
        %v5065 = vrot.slane %v5063, 4
        %v5066 = vrot.slane %v3569, 5
        %v5067 = vsel %vm2086, %v5065, %v5066
        %v5068 = vrot.slane %v5066, 4
        %v5069 = vrot.slane %v3570, 5
        %v5070 = vsel %vm2086, %v5068, %v5069
        %v5071 = vrot.slane %v5069, 4
        %v5072 = vrot.slane %v3571, 5
        %v5073 = vsel %vm2086, %v5071, %v5072
        %v5074 = vrot.slane %v4870, 5
        %v5075 = vrot.slane %v5074, 4
        %v5076 = vrot.slane %v3573, 5
        %v5077 = vsel %vm2086, %v5075, %v5076
        %v5078 = vrot.slane %v5076, 4
        %v5079 = vrot.slane %v3574, 5
        %v5080 = vsel %vm2086, %v5078, %v5079
        %v5081 = vrot.slane %v5079, 4
        %v5082 = vrot.slane %v3575, 5
        %v5083 = vsel %vm2086, %v5081, %v5082
        %v5084 = vrot.slane %v5082, 4
        %v5085 = vrot.slane %v3576, 5
        %v5086 = vsel %vm2086, %v5084, %v5085
        %v5087 = vrot.slane %v4871, 5
        %v5088 = vrot.slane %v5087, 4
        %v5089 = vrot.slane %v3578, 5
        %v5090 = vsel %vm2086, %v5088, %v5089
        %v5091 = vrot.slane %v5089, 4
        %v5092 = vrot.slane %v3579, 5
        %v5093 = vsel %vm2086, %v5091, %v5092
        %v5094 = vrot.slane %v5092, 4
        %v5095 = vrot.slane %v3580, 5
        %v5096 = vsel %vm2086, %v5094, %v5095
        %v5097 = vrot.slane %v5095, 4
        %v5098 = vrot.slane %v3581, 5
        %v5099 = vsel %vm2086, %v5097, %v5098
        %v5100 = vrot.slane %v4872, 5
        %v5101 = vrot.slane %v5100, 4
        %v5102 = vrot.slane %v3583, 5
        %v5103 = vsel %vm2086, %v5101, %v5102
        %v5104 = vrot.slane %v5102, 4
        %v5105 = vrot.slane %v3584, 5
        %v5106 = vsel %vm2086, %v5104, %v5105
        %v5107 = vrot.slane %v5105, 4
        %v5108 = vrot.slane %v3585, 5
        %v5109 = vsel %vm2086, %v5107, %v5108
        %v5110 = vrot.slane %v5108, 4
        %v5111 = vrot.slane %v3586, 5
        %v5112 = vsel %vm2086, %v5110, %v5111
        %v5113 = vrot.slane %v4873, 5
        %v5114 = vrot.slane %v5113, 4
        %v5115 = vrot.slane %v3588, 5
        %v5116 = vsel %vm2086, %v5114, %v5115
        %v5117 = vrot.slane %v5115, 4
        %v5118 = vrot.slane %v3589, 5
        %v5119 = vsel %vm2086, %v5117, %v5118
        %v5120 = vrot.slane %v5118, 4
        %v5121 = vrot.slane %v3590, 5
        %v5122 = vsel %vm2086, %v5120, %v5121
        %v5123 = vrot.slane %v5121, 4
        %v5124 = vrot.slane %v3591, 5
        %v5125 = vsel %vm2086, %v5123, %v5124
        %v5126 = vrot.slane %v4874, 5
        %v5127 = vrot.slane %v5126, 4
        %v5128 = vrot.slane %v3593, 5
        %v5129 = vsel %vm2086, %v5127, %v5128
        %v5130 = vrot.slane %v5128, 4
        %v5131 = vrot.slane %v3594, 5
        %v5132 = vsel %vm2086, %v5130, %v5131
        %v5133 = vrot.slane %v5131, 4
        %v5134 = vrot.slane %v3595, 5
        %v5135 = vsel %vm2086, %v5133, %v5134
        %v5136 = vrot.slane %v5134, 4
        %v5137 = vrot.slane %v3596, 5
        %v5138 = vsel %vm2086, %v5136, %v5137
        %v5139 = vrot.slane %v4875, 5
        %v5140 = vrot.slane %v5139, 4
        %v5141 = vrot.slane %v3598, 5
        %v5142 = vsel %vm2086, %v5140, %v5141
        %v5143 = vrot.slane %v5141, 4
        %v5144 = vrot.slane %v3599, 5
        %v5145 = vsel %vm2086, %v5143, %v5144
        %v5146 = vrot.slane %v5144, 4
        %v5147 = vrot.slane %v3600, 5
        %v5148 = vsel %vm2086, %v5146, %v5147
        %v5149 = vrot.slane %v5147, 4
        %v5150 = vrot.slane %v3601, 5
        %v5151 = vsel %vm2086, %v5149, %v5150
        %v5152 = vrot.slane %v4876, 5
        %v5153 = vrot.slane %v5152, 4
        %v5154 = vrot.slane %v3603, 5
        %v5155 = vsel %vm2086, %v5153, %v5154
        %v5156 = vrot.slane %v5154, 4
        %v5157 = vrot.slane %v3604, 5
        %v5158 = vsel %vm2086, %v5156, %v5157
        %v5159 = vrot.slane %v5157, 4
        %v5160 = vrot.slane %v3605, 5
        %v5161 = vsel %vm2086, %v5159, %v5160
        %v5162 = vrot.slane %v5160, 4
        %v5163 = vrot.slane %v3606, 5
        %v5164 = vsel %vm2086, %v5162, %v5163
        %s5165 = scalar_lea.vmem %s1, 10
        %v5166 = vld [vmem:[%s5165] sm:$0x3]
        %v5167 = vunpack.c.l.b16 %v4960
        %v5168 = vunpack.c.l.b16 %v4963
        %v5169 = vunpack.c.l.b16 %v4966
        %v5170 = vunpack.c.l.b16 %v4969
        %v5171 = vunpack.c.l.b16 %v4973
        %v5172 = vunpack.c.l.b16 %v4976
        %v5173 = vunpack.c.l.b16 %v4979
        %v5174 = vunpack.c.l.b16 %v4982
        %v5175 = vunpack.c.l.b16 %v4986
        %v5176 = vunpack.c.l.b16 %v4989
        %v5177 = vunpack.c.l.b16 %v4992
        %v5178 = vunpack.c.l.b16 %v4995
        %v5179 = vunpack.c.l.b16 %v4999
        %v5180 = vunpack.c.l.b16 %v5002
        %v5181 = vunpack.c.l.b16 %v5005
        %v5182 = vunpack.c.l.b16 %v5008
        %v5183 = vunpack.c.l.b16 %v5012
        %v5184 = vunpack.c.l.b16 %v5015
        %v5185 = vunpack.c.l.b16 %v5018
        %v5186 = vunpack.c.l.b16 %v5021
        %v5187 = vunpack.c.l.b16 %v5025
        %v5188 = vunpack.c.l.b16 %v5028
        %v5189 = vunpack.c.l.b16 %v5031
        %v5190 = vunpack.c.l.b16 %v5034
        %v5191 = vunpack.c.l.b16 %v5038
        %v5192 = vunpack.c.l.b16 %v5041
        %v5193 = vunpack.c.l.b16 %v5044
        %v5194 = vunpack.c.l.b16 %v5047
        %v5195 = vunpack.c.l.b16 %v5051
        %v5196 = vunpack.c.l.b16 %v5054
        %v5197 = vunpack.c.l.b16 %v5057
        %v5198 = vunpack.c.l.b16 %v5060
        %v5199 = vunpack.c.l.b16 %v5064
        %v5200 = vunpack.c.l.b16 %v5067
        %v5201 = vunpack.c.l.b16 %v5070
        %v5202 = vunpack.c.l.b16 %v5073
        %v5203 = vunpack.c.l.b16 %v5077
        %v5204 = vunpack.c.l.b16 %v5080
        %v5205 = vunpack.c.l.b16 %v5083
        %v5206 = vunpack.c.l.b16 %v5086
        %v5207 = vunpack.c.l.b16 %v5090
        %v5208 = vunpack.c.l.b16 %v5093
        %v5209 = vunpack.c.l.b16 %v5096
        %v5210 = vunpack.c.l.b16 %v5099
        %v5211 = vunpack.c.l.b16 %v5103
        %v5212 = vunpack.c.l.b16 %v5106
        %v5213 = vunpack.c.l.b16 %v5109
        %v5214 = vunpack.c.l.b16 %v5112
        %v5215 = vunpack.c.l.b16 %v5116
        %v5216 = vunpack.c.l.b16 %v5119
        %v5217 = vunpack.c.l.b16 %v5122
        %v5218 = vunpack.c.l.b16 %v5125
        %v5219 = vunpack.c.l.b16 %v5129
        %v5220 = vunpack.c.l.b16 %v5132
        %v5221 = vunpack.c.l.b16 %v5135
        %v5222 = vunpack.c.l.b16 %v5138
        %v5223 = vunpack.c.l.b16 %v5142
        %v5224 = vunpack.c.l.b16 %v5145
        %v5225 = vunpack.c.l.b16 %v5148
        %v5226 = vunpack.c.l.b16 %v5151
        %v5227 = vunpack.c.l.b16 %v5155
        %v5228 = vunpack.c.l.b16 %v5158
        %v5229 = vunpack.c.l.b16 %v5161
        %v5230 = vunpack.c.l.b16 %v5164
        %v5231 = vpack.c.b16 %v5168, %v5167
        %v5232 = vpack.c.b16 %v5170, %v5169
        %v5233 = vpack.c.b16 %v5172, %v5171
        %v5234 = vpack.c.b16 %v5174, %v5173
        %v5235 = vpack.c.b16 %v5176, %v5175
        %v5236 = vpack.c.b16 %v5178, %v5177
        %v5237 = vpack.c.b16 %v5180, %v5179
        %v5238 = vpack.c.b16 %v5182, %v5181
        %v5239 = vpack.c.b16 %v5184, %v5183
        %v5240 = vpack.c.b16 %v5186, %v5185
        %v5241 = vpack.c.b16 %v5188, %v5187
        %v5242 = vpack.c.b16 %v5190, %v5189
        %v5243 = vpack.c.b16 %v5192, %v5191
        %v5244 = vpack.c.b16 %v5194, %v5193
        %v5245 = vpack.c.b16 %v5196, %v5195
        %v5246 = vpack.c.b16 %v5198, %v5197
        %v5247 = vpack.c.b16 %v5200, %v5199
        %v5248 = vpack.c.b16 %v5202, %v5201
        %v5249 = vpack.c.b16 %v5204, %v5203
        %v5250 = vpack.c.b16 %v5206, %v5205
        %v5251 = vpack.c.b16 %v5208, %v5207
        %v5252 = vpack.c.b16 %v5210, %v5209
        %v5253 = vpack.c.b16 %v5212, %v5211
        %v5254 = vpack.c.b16 %v5214, %v5213
        %v5255 = vpack.c.b16 %v5216, %v5215
        %v5256 = vpack.c.b16 %v5218, %v5217
        %v5257 = vpack.c.b16 %v5220, %v5219
        %v5258 = vpack.c.b16 %v5222, %v5221
        %v5259 = vpack.c.b16 %v5224, %v5223
        %v5260 = vpack.c.b16 %v5226, %v5225
        %v5261 = vpack.c.b16 %v5228, %v5227
        %v5262 = vpack.c.b16 %v5230, %v5229
        %v5264 = vsel %vm1098, %v5231, 0
        %v5267 = vsel %vm1098, %v5232, 0
        %v5270 = vsel %vm1098, %v5233, 0
        %v5273 = vsel %vm1098, %v5234, 0
        %v5276 = vsel %vm1098, %v5235, 0
        %v5279 = vsel %vm1098, %v5236, 0
        %v5282 = vsel %vm1098, %v5237, 0
        %v5285 = vsel %vm1098, %v5238, 0
        %v5288 = vsel %vm1098, %v5239, 0
        %v5291 = vsel %vm1098, %v5240, 0
        %v5294 = vsel %vm1098, %v5241, 0
        %v5297 = vsel %vm1098, %v5242, 0
        %v5300 = vsel %vm1098, %v5243, 0
        %v5303 = vsel %vm1098, %v5244, 0
        %v5306 = vsel %vm1098, %v5245, 0
        %v5309 = vsel %vm1098, %v5246, 0
        %v5312 = vsel %vm1098, %v5247, 0
        %v5315 = vsel %vm1098, %v5248, 0
        %v5318 = vsel %vm1098, %v5249, 0
        %v5321 = vsel %vm1098, %v5250, 0
        %v5324 = vsel %vm1098, %v5251, 0
        %v5327 = vsel %vm1098, %v5252, 0
        %v5330 = vsel %vm1098, %v5253, 0
        %v5333 = vsel %vm1098, %v5254, 0
        %v5336 = vsel %vm1098, %v5255, 0
        %v5339 = vsel %vm1098, %v5256, 0
        %v5342 = vsel %vm1098, %v5257, 0
        %v5345 = vsel %vm1098, %v5258, 0
        %v5348 = vsel %vm1098, %v5259, 0
        %v5351 = vsel %vm1098, %v5260, 0
        %v5354 = vsel %vm1098, %v5261, 0
        %v5357 = vsel %vm1098, %v5262, 0
        %v5360 = vsel %vm1195, %v5166, 0
        %5362 = vmatprep.subr.bf16.mxu0 0
        %5363 = vmatpush1.bf16.msra.mxu0 %v5360
        %5364 = vmatprep.subr.bf16.mxu0 0
        %5365 = vmatpush1.bf16.msra.mxu0 0
        %5366 = vmatprep.subr.bf16.mxu0 0
        %5367 = vmatpush1.bf16.msra.mxu0 0
        %5368 = vmatprep.subr.bf16.mxu0 0
        %5369 = vmatpush1.bf16.msra.mxu0 0
        %5370 = vmatprep.subr.bf16.mxu0 0
        %5371 = vmatpush1.bf16.msra.mxu0 0
        %5372 = vmatprep.subr.bf16.mxu0 0
        %5373 = vmatpush1.bf16.msra.mxu0 0
        %5374 = vmatprep.subr.bf16.mxu0 0
        %5375 = vmatpush1.bf16.msra.mxu0 0
        %5376 = vmatprep.subr.bf16.mxu0 0
        %5377 = vmatpush1.bf16.msra.mxu0 0
        %5378 = vmatprep.subr.bf16.mxu0 0
        %5379 = vmatpush1.bf16.msra.mxu0 0
        %5380 = vmatprep.subr.bf16.mxu0 0
        %5381 = vmatpush1.bf16.msra.mxu0 0
        %5382 = vmatprep.subr.bf16.mxu0 0
        %5383 = vmatpush1.bf16.msra.mxu0 0
        %5384 = vmatprep.subr.bf16.mxu0 0
        %5385 = vmatpush1.bf16.msra.mxu0 0
        %5386 = vmatprep.subr.bf16.mxu0 0
        %5387 = vmatpush1.bf16.msra.mxu0 0
        %5388 = vmatprep.subr.bf16.mxu0 0
        %5389 = vmatpush1.bf16.msra.mxu0 0
        %5390 = vmatprep.subr.bf16.mxu0 0
        %5391 = vmatpush1.bf16.msra.mxu0 0
        %5392 = vmatprep.subr.bf16.mxu0 0
        %5393 = vmatpush1.bf16.msra.mxu0 0
        %5394 = vmatprep.mubr.bf16.mxu0 0
        %5395 = vmatmul.mubr.bf16.gmra.mrb[0].mxu0 %v5264
        %v5396 = vpop.f32.mrb[0].mxu0
        %v5397 = vadd.f32 0.0, %v5396
        %v5398 = vpop.f32.mrb[0].mxu0
        %v5399 = vpop.f32.mrb[0].mxu0
        %v5400 = vadd.f32 0.0, %v5399
        %v5401 = vpop.f32.mrb[0].mxu0
        %5402 = vmatprep.mubr.bf16.mxu0 0
        %5403 = vmatmul.mubr.bf16.gmra.mrb[0].mxu0 %v5267
        %v5404 = vpop.f32.mrb[0].mxu0
        %v5405 = vadd.f32 0.0, %v5404
        %v5406 = vpop.f32.mrb[0].mxu0
        %v5407 = vpop.f32.mrb[0].mxu0
        %v5408 = vadd.f32 0.0, %v5407
        %v5409 = vpop.f32.mrb[0].mxu0
        %5410 = vmatprep.mubr.bf16.mxu0 0
        %5411 = vmatmul.mubr.bf16.gmra.mrb[0].mxu0 %v5270
        %v5412 = vpop.f32.mrb[0].mxu0
        %v5413 = vadd.f32 0.0, %v5412
        %v5414 = vpop.f32.mrb[0].mxu0
        %v5415 = vpop.f32.mrb[0].mxu0
        %v5416 = vadd.f32 0.0, %v5415
        %v5417 = vpop.f32.mrb[0].mxu0
        %5418 = vmatprep.mubr.bf16.mxu0 0
        %5419 = vmatmul.mubr.bf16.gmra.mrb[0].mxu0 %v5273
        %v5420 = vpop.f32.mrb[0].mxu0
        %v5421 = vadd.f32 0.0, %v5420
        %v5422 = vpop.f32.mrb[0].mxu0
        %v5423 = vpop.f32.mrb[0].mxu0
        %v5424 = vadd.f32 0.0, %v5423
        %v5425 = vpop.f32.mrb[0].mxu0
        %5426 = vmatprep.mubr.bf16.mxu0 0
        %5427 = vmatmul.mubr.bf16.gmra.mrb[0].mxu0 %v5276
        %v5428 = vpop.f32.mrb[0].mxu0
        %v5429 = vadd.f32 0.0, %v5428
        %v5430 = vpop.f32.mrb[0].mxu0
        %v5431 = vpop.f32.mrb[0].mxu0
        %v5432 = vadd.f32 0.0, %v5431
        %v5433 = vpop.f32.mrb[0].mxu0
        %5434 = vmatprep.mubr.bf16.mxu0 0
        %5435 = vmatmul.mubr.bf16.gmra.mrb[0].mxu0 %v5279
        %v5436 = vpop.f32.mrb[0].mxu0
        %v5437 = vadd.f32 0.0, %v5436
        %v5438 = vpop.f32.mrb[0].mxu0
        %v5439 = vpop.f32.mrb[0].mxu0
        %v5440 = vadd.f32 0.0, %v5439
        %v5441 = vpop.f32.mrb[0].mxu0
        %5442 = vmatprep.mubr.bf16.mxu0 0
        %5443 = vmatmul.mubr.bf16.gmra.mrb[0].mxu0 %v5282
        %v5444 = vpop.f32.mrb[0].mxu0
        %v5445 = vadd.f32 0.0, %v5444
        %v5446 = vpop.f32.mrb[0].mxu0
        %v5447 = vpop.f32.mrb[0].mxu0
        %v5448 = vadd.f32 0.0, %v5447
        %v5449 = vpop.f32.mrb[0].mxu0
        %5450 = vmatprep.mubr.bf16.mxu0 0
        %5451 = vmatmul.mubr.bf16.gmra.mrb[0].mxu0 %v5285
        %v5452 = vpop.f32.mrb[0].mxu0
        %v5453 = vadd.f32 0.0, %v5452
        %v5454 = vpop.f32.mrb[0].mxu0
        %v5455 = vpop.f32.mrb[0].mxu0
        %v5456 = vadd.f32 0.0, %v5455
        %v5457 = vpop.f32.mrb[0].mxu0
        %5458 = vmatprep.mubr.bf16.mxu0 0
        %5459 = vmatmul.mubr.bf16.gmra.mrb[0].mxu0 %v5288
        %v5460 = vpop.f32.mrb[0].mxu0
        %v5461 = vadd.f32 0.0, %v5460
        %v5462 = vpop.f32.mrb[0].mxu0
        %v5463 = vpop.f32.mrb[0].mxu0
        %v5464 = vadd.f32 0.0, %v5463
        %v5465 = vpop.f32.mrb[0].mxu0
        %5466 = vmatprep.mubr.bf16.mxu0 0
        %5467 = vmatmul.mubr.bf16.gmra.mrb[0].mxu0 %v5291
        %v5468 = vpop.f32.mrb[0].mxu0
        %v5469 = vadd.f32 0.0, %v5468
        %v5470 = vpop.f32.mrb[0].mxu0
        %v5471 = vpop.f32.mrb[0].mxu0
        %v5472 = vadd.f32 0.0, %v5471
        %v5473 = vpop.f32.mrb[0].mxu0
        %5474 = vmatprep.mubr.bf16.mxu0 0
        %5475 = vmatmul.mubr.bf16.gmra.mrb[0].mxu0 %v5294
        %v5476 = vpop.f32.mrb[0].mxu0
        %v5477 = vadd.f32 0.0, %v5476
        %v5478 = vpop.f32.mrb[0].mxu0
        %v5479 = vpop.f32.mrb[0].mxu0
        %v5480 = vadd.f32 0.0, %v5479
        %v5481 = vpop.f32.mrb[0].mxu0
        %5482 = vmatprep.mubr.bf16.mxu0 0
        %5483 = vmatmul.mubr.bf16.gmra.mrb[0].mxu0 %v5297
        %v5484 = vpop.f32.mrb[0].mxu0
        %v5485 = vadd.f32 0.0, %v5484
        %v5486 = vpop.f32.mrb[0].mxu0
        %v5487 = vpop.f32.mrb[0].mxu0
        %v5488 = vadd.f32 0.0, %v5487
        %v5489 = vpop.f32.mrb[0].mxu0
        %5490 = vmatprep.mubr.bf16.mxu0 0
        %5491 = vmatmul.mubr.bf16.gmra.mrb[0].mxu0 %v5300
        %v5492 = vpop.f32.mrb[0].mxu0
        %v5493 = vadd.f32 0.0, %v5492
        %v5494 = vpop.f32.mrb[0].mxu0
        %v5495 = vpop.f32.mrb[0].mxu0
        %v5496 = vadd.f32 0.0, %v5495
        %v5497 = vpop.f32.mrb[0].mxu0
        %5498 = vmatprep.mubr.bf16.mxu0 0
        %5499 = vmatmul.mubr.bf16.gmra.mrb[0].mxu0 %v5303
        %v5500 = vpop.f32.mrb[0].mxu0
        %v5501 = vadd.f32 0.0, %v5500
        %v5502 = vpop.f32.mrb[0].mxu0
        %v5503 = vpop.f32.mrb[0].mxu0
        %v5504 = vadd.f32 0.0, %v5503
        %v5505 = vpop.f32.mrb[0].mxu0
        %5506 = vmatprep.mubr.bf16.mxu0 0
        %5507 = vmatmul.mubr.bf16.gmra.mrb[0].mxu0 %v5306
        %v5508 = vpop.f32.mrb[0].mxu0
        %v5509 = vadd.f32 0.0, %v5508
        %v5510 = vpop.f32.mrb[0].mxu0
        %v5511 = vpop.f32.mrb[0].mxu0
        %v5512 = vadd.f32 0.0, %v5511
        %v5513 = vpop.f32.mrb[0].mxu0
        %5514 = vmatprep.mubr.bf16.mxu0 0
        %5515 = vmatmul.mubr.bf16.gmra.mrb[0].mxu0 %v5309
        %v5516 = vpop.f32.mrb[0].mxu0
        %v5517 = vadd.f32 0.0, %v5516
        %v5518 = vpop.f32.mrb[0].mxu0
        %v5519 = vpop.f32.mrb[0].mxu0
        %v5520 = vadd.f32 0.0, %v5519
        %v5521 = vpop.f32.mrb[0].mxu0
        %5522 = vmatprep.mubr.bf16.mxu0 0
        %5523 = vmatmul.mubr.bf16.gmra.mrb[0].mxu0 %v5312
        %v5524 = vpop.f32.mrb[0].mxu0
        %v5525 = vadd.f32 0.0, %v5524
        %v5526 = vpop.f32.mrb[0].mxu0
        %v5527 = vpop.f32.mrb[0].mxu0
        %v5528 = vadd.f32 0.0, %v5527
        %v5529 = vpop.f32.mrb[0].mxu0
        %5530 = vmatprep.mubr.bf16.mxu0 0
        %5531 = vmatmul.mubr.bf16.gmra.mrb[0].mxu0 %v5315
        %v5532 = vpop.f32.mrb[0].mxu0
        %v5533 = vadd.f32 0.0, %v5532
        %v5534 = vpop.f32.mrb[0].mxu0
        %v5535 = vpop.f32.mrb[0].mxu0
        %v5536 = vadd.f32 0.0, %v5535
        %v5537 = vpop.f32.mrb[0].mxu0
        %5538 = vmatprep.mubr.bf16.mxu0 0
        %5539 = vmatmul.mubr.bf16.gmra.mrb[0].mxu0 %v5318
        %v5540 = vpop.f32.mrb[0].mxu0
        %v5541 = vadd.f32 0.0, %v5540
        %v5542 = vpop.f32.mrb[0].mxu0
        %v5543 = vpop.f32.mrb[0].mxu0
        %v5544 = vadd.f32 0.0, %v5543
        %v5545 = vpop.f32.mrb[0].mxu0
        %5546 = vmatprep.mubr.bf16.mxu0 0
        %5547 = vmatmul.mubr.bf16.gmra.mrb[0].mxu0 %v5321
        %v5548 = vpop.f32.mrb[0].mxu0
        %v5549 = vadd.f32 0.0, %v5548
        %v5550 = vpop.f32.mrb[0].mxu0
        %v5551 = vpop.f32.mrb[0].mxu0
        %v5552 = vadd.f32 0.0, %v5551
        %v5553 = vpop.f32.mrb[0].mxu0
        %5554 = vmatprep.mubr.bf16.mxu0 0
        %5555 = vmatmul.mubr.bf16.gmra.mrb[0].mxu0 %v5324
        %v5556 = vpop.f32.mrb[0].mxu0
        %v5557 = vadd.f32 0.0, %v5556
        %v5558 = vpop.f32.mrb[0].mxu0
        %v5559 = vpop.f32.mrb[0].mxu0
        %v5560 = vadd.f32 0.0, %v5559
        %v5561 = vpop.f32.mrb[0].mxu0
        %5562 = vmatprep.mubr.bf16.mxu0 0
        %5563 = vmatmul.mubr.bf16.gmra.mrb[0].mxu0 %v5327
        %v5564 = vpop.f32.mrb[0].mxu0
        %v5565 = vadd.f32 0.0, %v5564
        %v5566 = vpop.f32.mrb[0].mxu0
        %v5567 = vpop.f32.mrb[0].mxu0
        %v5568 = vadd.f32 0.0, %v5567
        %v5569 = vpop.f32.mrb[0].mxu0
        %5570 = vmatprep.mubr.bf16.mxu0 0
        %5571 = vmatmul.mubr.bf16.gmra.mrb[0].mxu0 %v5330
        %v5572 = vpop.f32.mrb[0].mxu0
        %v5573 = vadd.f32 0.0, %v5572
        %v5574 = vpop.f32.mrb[0].mxu0
        %v5575 = vpop.f32.mrb[0].mxu0
        %v5576 = vadd.f32 0.0, %v5575
        %v5577 = vpop.f32.mrb[0].mxu0
        %5578 = vmatprep.mubr.bf16.mxu0 0
        %5579 = vmatmul.mubr.bf16.gmra.mrb[0].mxu0 %v5333
        %v5580 = vpop.f32.mrb[0].mxu0
        %v5581 = vadd.f32 0.0, %v5580
        %v5582 = vpop.f32.mrb[0].mxu0
        %v5583 = vpop.f32.mrb[0].mxu0
        %v5584 = vadd.f32 0.0, %v5583
        %v5585 = vpop.f32.mrb[0].mxu0
        %5586 = vmatprep.mubr.bf16.mxu0 0
        %5587 = vmatmul.mubr.bf16.gmra.mrb[0].mxu0 %v5336
        %v5588 = vpop.f32.mrb[0].mxu0
        %v5589 = vadd.f32 0.0, %v5588
        %v5590 = vpop.f32.mrb[0].mxu0
        %v5591 = vpop.f32.mrb[0].mxu0
        %v5592 = vadd.f32 0.0, %v5591
        %v5593 = vpop.f32.mrb[0].mxu0
        %5594 = vmatprep.mubr.bf16.mxu0 0
        %5595 = vmatmul.mubr.bf16.gmra.mrb[0].mxu0 %v5339
        %v5596 = vpop.f32.mrb[0].mxu0
        %v5597 = vadd.f32 0.0, %v5596
        %v5598 = vpop.f32.mrb[0].mxu0
        %v5599 = vpop.f32.mrb[0].mxu0
        %v5600 = vadd.f32 0.0, %v5599
        %v5601 = vpop.f32.mrb[0].mxu0
        %5602 = vmatprep.mubr.bf16.mxu0 0
        %5603 = vmatmul.mubr.bf16.gmra.mrb[0].mxu0 %v5342
        %v5604 = vpop.f32.mrb[0].mxu0
        %v5605 = vadd.f32 0.0, %v5604
        %v5606 = vpop.f32.mrb[0].mxu0
        %v5607 = vpop.f32.mrb[0].mxu0
        %v5608 = vadd.f32 0.0, %v5607
        %v5609 = vpop.f32.mrb[0].mxu0
        %5610 = vmatprep.mubr.bf16.mxu0 0
        %5611 = vmatmul.mubr.bf16.gmra.mrb[0].mxu0 %v5345
        %v5612 = vpop.f32.mrb[0].mxu0
        %v5613 = vadd.f32 0.0, %v5612
        %v5614 = vpop.f32.mrb[0].mxu0
        %v5615 = vpop.f32.mrb[0].mxu0
        %v5616 = vadd.f32 0.0, %v5615
        %v5617 = vpop.f32.mrb[0].mxu0
        %5618 = vmatprep.mubr.bf16.mxu0 0
        %5619 = vmatmul.mubr.bf16.gmra.mrb[0].mxu0 %v5348
        %v5620 = vpop.f32.mrb[0].mxu0
        %v5621 = vadd.f32 0.0, %v5620
        %v5622 = vpop.f32.mrb[0].mxu0
        %v5623 = vpop.f32.mrb[0].mxu0
        %v5624 = vadd.f32 0.0, %v5623
        %v5625 = vpop.f32.mrb[0].mxu0
        %5626 = vmatprep.mubr.bf16.mxu0 0
        %5627 = vmatmul.mubr.bf16.gmra.mrb[0].mxu0 %v5351
        %v5628 = vpop.f32.mrb[0].mxu0
        %v5629 = vadd.f32 0.0, %v5628
        %v5630 = vpop.f32.mrb[0].mxu0
        %v5631 = vpop.f32.mrb[0].mxu0
        %v5632 = vadd.f32 0.0, %v5631
        %v5633 = vpop.f32.mrb[0].mxu0
        %5634 = vmatprep.mubr.bf16.mxu0 0
        %5635 = vmatmul.mubr.bf16.gmra.mrb[0].mxu0 %v5354
        %v5636 = vpop.f32.mrb[0].mxu0
        %v5637 = vadd.f32 0.0, %v5636
        %v5638 = vpop.f32.mrb[0].mxu0
        %v5639 = vpop.f32.mrb[0].mxu0
        %v5640 = vadd.f32 0.0, %v5639
        %v5641 = vpop.f32.mrb[0].mxu0
        %5642 = vmatprep.mubr.bf16.mxu0 0
        %5643 = vmatmul.mubr.bf16.gmra.mrb[0].mxu0 %v5357
        %v5644 = vpop.f32.mrb[0].mxu0
        %v5645 = vadd.f32 0.0, %v5644
        %v5646 = vpop.f32.mrb[0].mxu0
        %v5647 = vpop.f32.mrb[0].mxu0
        %v5648 = vadd.f32 0.0, %v5647
        %v5649 = vpop.f32.mrb[0].mxu0
        %5650 = vdwg.mxu0
        %v5651 = vadd.f32 %v4797, %v5397
        %v5652 = vadd.f32 %v4798, %v5400
        %v5653 = vadd.f32 %v4799, %v5405
        %v5654 = vadd.f32 %v4800, %v5408
        %v5655 = vadd.f32 %v4801, %v5413
        %v5656 = vadd.f32 %v4802, %v5416
        %v5657 = vadd.f32 %v4803, %v5421
        %v5658 = vadd.f32 %v4804, %v5424
        %v5659 = vadd.f32 %v4805, %v5429
        %v5660 = vadd.f32 %v4806, %v5432
        %v5661 = vadd.f32 %v4807, %v5437
        %v5662 = vadd.f32 %v4808, %v5440
        %v5663 = vadd.f32 %v4809, %v5445
        %v5664 = vadd.f32 %v4810, %v5448
        %v5665 = vadd.f32 %v4811, %v5453
        %v5666 = vadd.f32 %v4812, %v5456
        %v5667 = vadd.f32 %v4813, %v5461
        %v5668 = vadd.f32 %v4814, %v5464
        %v5669 = vadd.f32 %v4815, %v5469
        %v5670 = vadd.f32 %v4816, %v5472
        %v5671 = vadd.f32 %v4817, %v5477
        %v5672 = vadd.f32 %v4818, %v5480
        %v5673 = vadd.f32 %v4819, %v5485
        %v5674 = vadd.f32 %v4820, %v5488
        %v5675 = vadd.f32 %v4821, %v5493
        %v5676 = vadd.f32 %v4822, %v5496
        %v5677 = vadd.f32 %v4823, %v5501
        %v5678 = vadd.f32 %v4824, %v5504
        %v5679 = vadd.f32 %v4825, %v5509
        %v5680 = vadd.f32 %v4826, %v5512
        %v5681 = vadd.f32 %v4827, %v5517
        %v5682 = vadd.f32 %v4828, %v5520
        %v5683 = vadd.f32 %v4829, %v5525
        %v5684 = vadd.f32 %v4830, %v5528
        %v5685 = vadd.f32 %v4831, %v5533
        %v5686 = vadd.f32 %v4832, %v5536
        %v5687 = vadd.f32 %v4833, %v5541
        %v5688 = vadd.f32 %v4834, %v5544
        %v5689 = vadd.f32 %v4835, %v5549
        %v5690 = vadd.f32 %v4836, %v5552
        %v5691 = vadd.f32 %v4837, %v5557
        %v5692 = vadd.f32 %v4838, %v5560
        %v5693 = vadd.f32 %v4839, %v5565
        %v5694 = vadd.f32 %v4840, %v5568
        %v5695 = vadd.f32 %v4841, %v5573
        %v5696 = vadd.f32 %v4842, %v5576
        %v5697 = vadd.f32 %v4843, %v5581
        %v5698 = vadd.f32 %v4844, %v5584
        %v5699 = vadd.f32 %v4845, %v5589
        %v5700 = vadd.f32 %v4846, %v5592
        %v5701 = vadd.f32 %v4847, %v5597
        %v5702 = vadd.f32 %v4848, %v5600
        %v5703 = vadd.f32 %v4849, %v5605
        %v5704 = vadd.f32 %v4850, %v5608
        %v5705 = vadd.f32 %v4851, %v5613
        %v5706 = vadd.f32 %v4852, %v5616
        %v5707 = vadd.f32 %v4853, %v5621
        %v5708 = vadd.f32 %v4854, %v5624
        %v5709 = vadd.f32 %v4855, %v5629
        %v5710 = vadd.f32 %v4856, %v5632
        %v5711 = vadd.f32 %v4857, %v5637
        %v5712 = vadd.f32 %v4858, %v5640
        %v5713 = vadd.f32 %v4859, %v5645
        %v5714 = vadd.f32 %v4860, %v5648
        %s5715 = sadd.s32 %s208, 2
        %s5716 = smul.u32 %s5715, 5
        %s5717 = smul.addr %s5716, 4
        %s5718 = scalar_lea.vmem %s205, %s5717
        %v5719 = vld [vmem:[%s5718] sm:$0xf]
        %v5720 = vld [vmem:[%s5718 + $0x4] sm:$0xf]
        %v5721 = vld [vmem:[%s5718 + $0x8] sm:$0xf]
        %v5722 = vld [vmem:[%s5718 + $0xc] sm:$0xf]
        %v5723 = vld [vmem:[%s5718 + $0x14] sm:$0xf]
        %v5724 = vld [vmem:[%s5718 + $0x18] sm:$0xf]
        %v5725 = vld [vmem:[%s5718 + $0x1c] sm:$0xf]
        %v5726 = vld [vmem:[%s5718 + $0x20] sm:$0xf]
        %v5727 = vld [vmem:[%s5718 + $0x28] sm:$0xf]
        %v5728 = vld [vmem:[%s5718 + $0x2c] sm:$0xf]
        %v5729 = vld [vmem:[%s5718 + $0x30] sm:$0xf]
        %v5730 = vld [vmem:[%s5718 + $0x34] sm:$0xf]
        %v5731 = vld [vmem:[%s5718 + $0x3c] sm:$0xf]
        %v5732 = vld [vmem:[%s5718 + $0x40] sm:$0xf]
        %v5733 = vld [vmem:[%s5718 + $0x44] sm:$0xf]
        %v5734 = vld [vmem:[%s5718 + $0x48] sm:$0xf]
        %v5735 = vld [vmem:[%s5718 + $0x50] sm:$0xf]
        %v5736 = vld [vmem:[%s5718 + $0x54] sm:$0xf]
        %v5737 = vld [vmem:[%s5718 + $0x58] sm:$0xf]
        %v5738 = vld [vmem:[%s5718 + $0x5c] sm:$0xf]
        %v5739 = vld [vmem:[%s5718 + $0x64] sm:$0xf]
        %v5740 = vld [vmem:[%s5718 + $0x68] sm:$0xf]
        %v5741 = vld [vmem:[%s5718 + $0x6c] sm:$0xf]
        %v5742 = vld [vmem:[%s5718 + $0x70] sm:$0xf]
        %v5743 = vld [vmem:[%s5718 + $0x78] sm:$0xf]
        %v5744 = vld [vmem:[%s5718 + $0x7c] sm:$0xf]
        %v5745 = vld [vmem:[%s5718 + $0x80] sm:$0xf]
        %v5746 = vld [vmem:[%s5718 + $0x84] sm:$0xf]
        %v5747 = vld [vmem:[%s5718 + $0x8c] sm:$0xf]
        %v5748 = vld [vmem:[%s5718 + $0x90] sm:$0xf]
        %v5749 = vld [vmem:[%s5718 + $0x94] sm:$0xf]
        %v5750 = vld [vmem:[%s5718 + $0x98] sm:$0xf]
        %v5751 = vld [vmem:[%s5718 + $0xa0] sm:$0xf]
        %v5752 = vld [vmem:[%s5718 + $0xa4] sm:$0xf]
        %v5753 = vld [vmem:[%s5718 + $0xa8] sm:$0xf]
        %v5754 = vld [vmem:[%s5718 + $0xac] sm:$0xf]
        %v5755 = vld [vmem:[%s5718 + $0xb4] sm:$0xf]
        %v5756 = vld [vmem:[%s5718 + $0xb8] sm:$0xf]
        %v5757 = vld [vmem:[%s5718 + $0xbc] sm:$0xf]
        %v5758 = vld [vmem:[%s5718 + $0xc0] sm:$0xf]
        %v5759 = vld [vmem:[%s5718 + $0xc8] sm:$0xf]
        %v5760 = vld [vmem:[%s5718 + $0xcc] sm:$0xf]
        %v5761 = vld [vmem:[%s5718 + $0xd0] sm:$0xf]
        %v5762 = vld [vmem:[%s5718 + $0xd4] sm:$0xf]
        %v5763 = vld [vmem:[%s5718 + $0xdc] sm:$0xf]
        %v5764 = vld [vmem:[%s5718 + $0xe0] sm:$0xf]
        %v5765 = vld [vmem:[%s5718 + $0xe4] sm:$0xf]
        %v5766 = vld [vmem:[%s5718 + $0xe8] sm:$0xf]
        %v5767 = vld [vmem:[%s5718 + $0xf0] sm:$0xf]
        %v5768 = vld [vmem:[%s5718 + $0xf4] sm:$0xf]
        %v5769 = vld [vmem:[%s5718 + $0xf8] sm:$0xf]
        %v5770 = vld [vmem:[%s5718 + $0xfc] sm:$0xf]
        %v5771 = vld [vmem:[%s5718 + $0x104] sm:$0xf]
        %v5772 = vld [vmem:[%s5718 + $0x108] sm:$0xf]
        %v5773 = vld [vmem:[%s5718 + $0x10c] sm:$0xf]
        %v5774 = vld [vmem:[%s5718 + $0x110] sm:$0xf]
        %v5775 = vld [vmem:[%s5718 + $0x118] sm:$0xf]
        %v5776 = vld [vmem:[%s5718 + $0x11c] sm:$0xf]
        %v5777 = vld [vmem:[%s5718 + $0x120] sm:$0xf]
        %v5778 = vld [vmem:[%s5718 + $0x124] sm:$0xf]
        %v5779 = vld [vmem:[%s5718 + $0x12c] sm:$0xf]
        %v5780 = vld [vmem:[%s5718 + $0x130] sm:$0xf]
        %v5781 = vld [vmem:[%s5718 + $0x134] sm:$0xf]
        %v5782 = vld [vmem:[%s5718 + $0x138] sm:$0xf]
        %s5783 = scalar_lea.vmem %s1, 12
        %v5784 = vld [vmem:[%s5783] sm:$0x3]
        %v5849 = vunpack.c.l.b16 %v5719
        %v5850 = vunpack.c.l.b16 %v5720
        %v5851 = vunpack.c.l.b16 %v5721
        %v5852 = vunpack.c.l.b16 %v5722
        %v5853 = vunpack.c.l.b16 %v5723
        %v5854 = vunpack.c.l.b16 %v5724
        %v5855 = vunpack.c.l.b16 %v5725
        %v5856 = vunpack.c.l.b16 %v5726
        %v5857 = vunpack.c.l.b16 %v5727
        %v5858 = vunpack.c.l.b16 %v5728
        %v5859 = vunpack.c.l.b16 %v5729
        %v5860 = vunpack.c.l.b16 %v5730
        %v5861 = vunpack.c.l.b16 %v5731
        %v5862 = vunpack.c.l.b16 %v5732
        %v5863 = vunpack.c.l.b16 %v5733
        %v5864 = vunpack.c.l.b16 %v5734
        %v5865 = vunpack.c.l.b16 %v5735
        %v5866 = vunpack.c.l.b16 %v5736
        %v5867 = vunpack.c.l.b16 %v5737
        %v5868 = vunpack.c.l.b16 %v5738
        %v5869 = vunpack.c.l.b16 %v5739
        %v5870 = vunpack.c.l.b16 %v5740
        %v5871 = vunpack.c.l.b16 %v5741
        %v5872 = vunpack.c.l.b16 %v5742
        %v5873 = vunpack.c.l.b16 %v5743
        %v5874 = vunpack.c.l.b16 %v5744
        %v5875 = vunpack.c.l.b16 %v5745
        %v5876 = vunpack.c.l.b16 %v5746
        %v5877 = vunpack.c.l.b16 %v5747
        %v5878 = vunpack.c.l.b16 %v5748
        %v5879 = vunpack.c.l.b16 %v5749
        %v5880 = vunpack.c.l.b16 %v5750
        %v5881 = vunpack.c.l.b16 %v5751
        %v5882 = vunpack.c.l.b16 %v5752
        %v5883 = vunpack.c.l.b16 %v5753
        %v5884 = vunpack.c.l.b16 %v5754
        %v5885 = vunpack.c.l.b16 %v5755
        %v5886 = vunpack.c.l.b16 %v5756
        %v5887 = vunpack.c.l.b16 %v5757
        %v5888 = vunpack.c.l.b16 %v5758
        %v5889 = vunpack.c.l.b16 %v5759
        %v5890 = vunpack.c.l.b16 %v5760
        %v5891 = vunpack.c.l.b16 %v5761
        %v5892 = vunpack.c.l.b16 %v5762
        %v5893 = vunpack.c.l.b16 %v5763
        %v5894 = vunpack.c.l.b16 %v5764
        %v5895 = vunpack.c.l.b16 %v5765
        %v5896 = vunpack.c.l.b16 %v5766
        %v5897 = vunpack.c.l.b16 %v5767
        %v5898 = vunpack.c.l.b16 %v5768
        %v5899 = vunpack.c.l.b16 %v5769
        %v5900 = vunpack.c.l.b16 %v5770
        %v5901 = vunpack.c.l.b16 %v5771
        %v5902 = vunpack.c.l.b16 %v5772
        %v5903 = vunpack.c.l.b16 %v5773
        %v5904 = vunpack.c.l.b16 %v5774
        %v5905 = vunpack.c.l.b16 %v5775
        %v5906 = vunpack.c.l.b16 %v5776
        %v5907 = vunpack.c.l.b16 %v5777
        %v5908 = vunpack.c.l.b16 %v5778
        %v5909 = vunpack.c.l.b16 %v5779
        %v5910 = vunpack.c.l.b16 %v5780
        %v5911 = vunpack.c.l.b16 %v5781
        %v5912 = vunpack.c.l.b16 %v5782
        %v5913 = vpack.c.b16 %v5850, %v5849
        %v5914 = vpack.c.b16 %v5852, %v5851
        %v5915 = vpack.c.b16 %v5854, %v5853
        %v5916 = vpack.c.b16 %v5856, %v5855
        %v5917 = vpack.c.b16 %v5858, %v5857
        %v5918 = vpack.c.b16 %v5860, %v5859
        %v5919 = vpack.c.b16 %v5862, %v5861
        %v5920 = vpack.c.b16 %v5864, %v5863
        %v5921 = vpack.c.b16 %v5866, %v5865
        %v5922 = vpack.c.b16 %v5868, %v5867
        %v5923 = vpack.c.b16 %v5870, %v5869
        %v5924 = vpack.c.b16 %v5872, %v5871
        %v5925 = vpack.c.b16 %v5874, %v5873
        %v5926 = vpack.c.b16 %v5876, %v5875
        %v5927 = vpack.c.b16 %v5878, %v5877
        %v5928 = vpack.c.b16 %v5880, %v5879
        %v5929 = vpack.c.b16 %v5882, %v5881
        %v5930 = vpack.c.b16 %v5884, %v5883
        %v5931 = vpack.c.b16 %v5886, %v5885
        %v5932 = vpack.c.b16 %v5888, %v5887
        %v5933 = vpack.c.b16 %v5890, %v5889
        %v5934 = vpack.c.b16 %v5892, %v5891
        %v5935 = vpack.c.b16 %v5894, %v5893
        %v5936 = vpack.c.b16 %v5896, %v5895
        %v5937 = vpack.c.b16 %v5898, %v5897
        %v5938 = vpack.c.b16 %v5900, %v5899
        %v5939 = vpack.c.b16 %v5902, %v5901
        %v5940 = vpack.c.b16 %v5904, %v5903
        %v5941 = vpack.c.b16 %v5906, %v5905
        %v5942 = vpack.c.b16 %v5908, %v5907
        %v5943 = vpack.c.b16 %v5910, %v5909
        %v5944 = vpack.c.b16 %v5912, %v5911
        %v5946 = vsel %vm1098, %v5913, 0
        %v5949 = vsel %vm1098, %v5914, 0
        %v5952 = vsel %vm1098, %v5915, 0
        %v5955 = vsel %vm1098, %v5916, 0
        %v5958 = vsel %vm1098, %v5917, 0
        %v5961 = vsel %vm1098, %v5918, 0
        %v5964 = vsel %vm1098, %v5919, 0
        %v5967 = vsel %vm1098, %v5920, 0
        %v5970 = vsel %vm1098, %v5921, 0
        %v5973 = vsel %vm1098, %v5922, 0
        %v5976 = vsel %vm1098, %v5923, 0
        %v5979 = vsel %vm1098, %v5924, 0
        %v5982 = vsel %vm1098, %v5925, 0
        %v5985 = vsel %vm1098, %v5926, 0
        %v5988 = vsel %vm1098, %v5927, 0
        %v5991 = vsel %vm1098, %v5928, 0
        %v5994 = vsel %vm1098, %v5929, 0
        %v5997 = vsel %vm1098, %v5930, 0
        %v6000 = vsel %vm1098, %v5931, 0
        %v6003 = vsel %vm1098, %v5932, 0
        %v6006 = vsel %vm1098, %v5933, 0
        %v6009 = vsel %vm1098, %v5934, 0
        %v6012 = vsel %vm1098, %v5935, 0
        %v6015 = vsel %vm1098, %v5936, 0
        %v6018 = vsel %vm1098, %v5937, 0
        %v6021 = vsel %vm1098, %v5938, 0
        %v6024 = vsel %vm1098, %v5939, 0
        %v6027 = vsel %vm1098, %v5940, 0
        %v6030 = vsel %vm1098, %v5941, 0
        %v6033 = vsel %vm1098, %v5942, 0
        %v6036 = vsel %vm1098, %v5943, 0
        %v6039 = vsel %vm1098, %v5944, 0
        %v6042 = vsel %vm1195, %v5784, 0
        %6044 = vmatprep.subr.bf16.mxu0 0
        %6045 = vmatpush1.bf16.msra.mxu0 %v6042
        %6046 = vmatprep.subr.bf16.mxu0 0
        %6047 = vmatpush1.bf16.msra.mxu0 0
        %6048 = vmatprep.subr.bf16.mxu0 0
        %6049 = vmatpush1.bf16.msra.mxu0 0
        %6050 = vmatprep.subr.bf16.mxu0 0
        %6051 = vmatpush1.bf16.msra.mxu0 0
        %6052 = vmatprep.subr.bf16.mxu0 0
        %6053 = vmatpush1.bf16.msra.mxu0 0
        %6054 = vmatprep.subr.bf16.mxu0 0
        %6055 = vmatpush1.bf16.msra.mxu0 0
        %6056 = vmatprep.subr.bf16.mxu0 0
        %6057 = vmatpush1.bf16.msra.mxu0 0
        %6058 = vmatprep.subr.bf16.mxu0 0
        %6059 = vmatpush1.bf16.msra.mxu0 0
        %6060 = vmatprep.subr.bf16.mxu0 0
        %6061 = vmatpush1.bf16.msra.mxu0 0
        %6062 = vmatprep.subr.bf16.mxu0 0
        %6063 = vmatpush1.bf16.msra.mxu0 0
        %6064 = vmatprep.subr.bf16.mxu0 0
        %6065 = vmatpush1.bf16.msra.mxu0 0
        %6066 = vmatprep.subr.bf16.mxu0 0
        %6067 = vmatpush1.bf16.msra.mxu0 0
        %6068 = vmatprep.subr.bf16.mxu0 0
        %6069 = vmatpush1.bf16.msra.mxu0 0
        %6070 = vmatprep.subr.bf16.mxu0 0
        %6071 = vmatpush1.bf16.msra.mxu0 0
        %6072 = vmatprep.subr.bf16.mxu0 0
        %6073 = vmatpush1.bf16.msra.mxu0 0
        %6074 = vmatprep.subr.bf16.mxu0 0
        %6075 = vmatpush1.bf16.msra.mxu0 0
        %6076 = vmatprep.mubr.bf16.mxu0 0
        %6077 = vmatmul.mubr.bf16.gmra.mrb[0].mxu0 %v5946
        %v6078 = vpop.f32.mrb[0].mxu0
        %v6079 = vadd.f32 0.0, %v6078
        %v6080 = vpop.f32.mrb[0].mxu0
        %v6081 = vpop.f32.mrb[0].mxu0
        %v6082 = vadd.f32 0.0, %v6081
        %v6083 = vpop.f32.mrb[0].mxu0
        %6084 = vmatprep.mubr.bf16.mxu0 0
        %6085 = vmatmul.mubr.bf16.gmra.mrb[0].mxu0 %v5949
        %v6086 = vpop.f32.mrb[0].mxu0
        %v6087 = vadd.f32 0.0, %v6086
        %v6088 = vpop.f32.mrb[0].mxu0
        %v6089 = vpop.f32.mrb[0].mxu0
        %v6090 = vadd.f32 0.0, %v6089
        %v6091 = vpop.f32.mrb[0].mxu0
        %6092 = vmatprep.mubr.bf16.mxu0 0
        %6093 = vmatmul.mubr.bf16.gmra.mrb[0].mxu0 %v5952
        %v6094 = vpop.f32.mrb[0].mxu0
        %v6095 = vadd.f32 0.0, %v6094
        %v6096 = vpop.f32.mrb[0].mxu0
        %v6097 = vpop.f32.mrb[0].mxu0
        %v6098 = vadd.f32 0.0, %v6097
        %v6099 = vpop.f32.mrb[0].mxu0
        %6100 = vmatprep.mubr.bf16.mxu0 0
        %6101 = vmatmul.mubr.bf16.gmra.mrb[0].mxu0 %v5955
        %v6102 = vpop.f32.mrb[0].mxu0
        %v6103 = vadd.f32 0.0, %v6102
        %v6104 = vpop.f32.mrb[0].mxu0
        %v6105 = vpop.f32.mrb[0].mxu0
        %v6106 = vadd.f32 0.0, %v6105
        %v6107 = vpop.f32.mrb[0].mxu0
        %6108 = vmatprep.mubr.bf16.mxu0 0
        %6109 = vmatmul.mubr.bf16.gmra.mrb[0].mxu0 %v5958
        %v6110 = vpop.f32.mrb[0].mxu0
        %v6111 = vadd.f32 0.0, %v6110
        %v6112 = vpop.f32.mrb[0].mxu0
        %v6113 = vpop.f32.mrb[0].mxu0
        %v6114 = vadd.f32 0.0, %v6113
        %v6115 = vpop.f32.mrb[0].mxu0
        %6116 = vmatprep.mubr.bf16.mxu0 0
        %6117 = vmatmul.mubr.bf16.gmra.mrb[0].mxu0 %v5961
        %v6118 = vpop.f32.mrb[0].mxu0
        %v6119 = vadd.f32 0.0, %v6118
        %v6120 = vpop.f32.mrb[0].mxu0
        %v6121 = vpop.f32.mrb[0].mxu0
        %v6122 = vadd.f32 0.0, %v6121
        %v6123 = vpop.f32.mrb[0].mxu0
        %6124 = vmatprep.mubr.bf16.mxu0 0
        %6125 = vmatmul.mubr.bf16.gmra.mrb[0].mxu0 %v5964
        %v6126 = vpop.f32.mrb[0].mxu0
        %v6127 = vadd.f32 0.0, %v6126
        %v6128 = vpop.f32.mrb[0].mxu0
        %v6129 = vpop.f32.mrb[0].mxu0
        %v6130 = vadd.f32 0.0, %v6129
        %v6131 = vpop.f32.mrb[0].mxu0
        %6132 = vmatprep.mubr.bf16.mxu0 0
        %6133 = vmatmul.mubr.bf16.gmra.mrb[0].mxu0 %v5967
        %v6134 = vpop.f32.mrb[0].mxu0
        %v6135 = vadd.f32 0.0, %v6134
        %v6136 = vpop.f32.mrb[0].mxu0
        %v6137 = vpop.f32.mrb[0].mxu0
        %v6138 = vadd.f32 0.0, %v6137
        %v6139 = vpop.f32.mrb[0].mxu0
        %6140 = vmatprep.mubr.bf16.mxu0 0
        %6141 = vmatmul.mubr.bf16.gmra.mrb[0].mxu0 %v5970
        %v6142 = vpop.f32.mrb[0].mxu0
        %v6143 = vadd.f32 0.0, %v6142
        %v6144 = vpop.f32.mrb[0].mxu0
        %v6145 = vpop.f32.mrb[0].mxu0
        %v6146 = vadd.f32 0.0, %v6145
        %v6147 = vpop.f32.mrb[0].mxu0
        %6148 = vmatprep.mubr.bf16.mxu0 0
        %6149 = vmatmul.mubr.bf16.gmra.mrb[0].mxu0 %v5973
        %v6150 = vpop.f32.mrb[0].mxu0
        %v6151 = vadd.f32 0.0, %v6150
        %v6152 = vpop.f32.mrb[0].mxu0
        %v6153 = vpop.f32.mrb[0].mxu0
        %v6154 = vadd.f32 0.0, %v6153
        %v6155 = vpop.f32.mrb[0].mxu0
        %6156 = vmatprep.mubr.bf16.mxu0 0
        %6157 = vmatmul.mubr.bf16.gmra.mrb[0].mxu0 %v5976
        %v6158 = vpop.f32.mrb[0].mxu0
        %v6159 = vadd.f32 0.0, %v6158
        %v6160 = vpop.f32.mrb[0].mxu0
        %v6161 = vpop.f32.mrb[0].mxu0
        %v6162 = vadd.f32 0.0, %v6161
        %v6163 = vpop.f32.mrb[0].mxu0
        %6164 = vmatprep.mubr.bf16.mxu0 0
        %6165 = vmatmul.mubr.bf16.gmra.mrb[0].mxu0 %v5979
        %v6166 = vpop.f32.mrb[0].mxu0
        %v6167 = vadd.f32 0.0, %v6166
        %v6168 = vpop.f32.mrb[0].mxu0
        %v6169 = vpop.f32.mrb[0].mxu0
        %v6170 = vadd.f32 0.0, %v6169
        %v6171 = vpop.f32.mrb[0].mxu0
        %6172 = vmatprep.mubr.bf16.mxu0 0
        %6173 = vmatmul.mubr.bf16.gmra.mrb[0].mxu0 %v5982
        %v6174 = vpop.f32.mrb[0].mxu0
        %v6175 = vadd.f32 0.0, %v6174
        %v6176 = vpop.f32.mrb[0].mxu0
        %v6177 = vpop.f32.mrb[0].mxu0
        %v6178 = vadd.f32 0.0, %v6177
        %v6179 = vpop.f32.mrb[0].mxu0
        %6180 = vmatprep.mubr.bf16.mxu0 0
        %6181 = vmatmul.mubr.bf16.gmra.mrb[0].mxu0 %v5985
        %v6182 = vpop.f32.mrb[0].mxu0
        %v6183 = vadd.f32 0.0, %v6182
        %v6184 = vpop.f32.mrb[0].mxu0
        %v6185 = vpop.f32.mrb[0].mxu0
        %v6186 = vadd.f32 0.0, %v6185
        %v6187 = vpop.f32.mrb[0].mxu0
        %6188 = vmatprep.mubr.bf16.mxu0 0
        %6189 = vmatmul.mubr.bf16.gmra.mrb[0].mxu0 %v5988
        %v6190 = vpop.f32.mrb[0].mxu0
        %v6191 = vadd.f32 0.0, %v6190
        %v6192 = vpop.f32.mrb[0].mxu0
        %v6193 = vpop.f32.mrb[0].mxu0
        %v6194 = vadd.f32 0.0, %v6193
        %v6195 = vpop.f32.mrb[0].mxu0
        %6196 = vmatprep.mubr.bf16.mxu0 0
        %6197 = vmatmul.mubr.bf16.gmra.mrb[0].mxu0 %v5991
        %v6198 = vpop.f32.mrb[0].mxu0
        %v6199 = vadd.f32 0.0, %v6198
        %v6200 = vpop.f32.mrb[0].mxu0
        %v6201 = vpop.f32.mrb[0].mxu0
        %v6202 = vadd.f32 0.0, %v6201
        %v6203 = vpop.f32.mrb[0].mxu0
        %6204 = vmatprep.mubr.bf16.mxu0 0
        %6205 = vmatmul.mubr.bf16.gmra.mrb[0].mxu0 %v5994
        %v6206 = vpop.f32.mrb[0].mxu0
        %v6207 = vadd.f32 0.0, %v6206
        %v6208 = vpop.f32.mrb[0].mxu0
        %v6209 = vpop.f32.mrb[0].mxu0
        %v6210 = vadd.f32 0.0, %v6209
        %v6211 = vpop.f32.mrb[0].mxu0
        %6212 = vmatprep.mubr.bf16.mxu0 0
        %6213 = vmatmul.mubr.bf16.gmra.mrb[0].mxu0 %v5997
        %v6214 = vpop.f32.mrb[0].mxu0
        %v6215 = vadd.f32 0.0, %v6214
        %v6216 = vpop.f32.mrb[0].mxu0
        %v6217 = vpop.f32.mrb[0].mxu0
        %v6218 = vadd.f32 0.0, %v6217
        %v6219 = vpop.f32.mrb[0].mxu0
        %6220 = vmatprep.mubr.bf16.mxu0 0
        %6221 = vmatmul.mubr.bf16.gmra.mrb[0].mxu0 %v6000
        %v6222 = vpop.f32.mrb[0].mxu0
        %v6223 = vadd.f32 0.0, %v6222
        %v6224 = vpop.f32.mrb[0].mxu0
        %v6225 = vpop.f32.mrb[0].mxu0
        %v6226 = vadd.f32 0.0, %v6225
        %v6227 = vpop.f32.mrb[0].mxu0
        %6228 = vmatprep.mubr.bf16.mxu0 0
        %6229 = vmatmul.mubr.bf16.gmra.mrb[0].mxu0 %v6003
        %v6230 = vpop.f32.mrb[0].mxu0
        %v6231 = vadd.f32 0.0, %v6230
        %v6232 = vpop.f32.mrb[0].mxu0
        %v6233 = vpop.f32.mrb[0].mxu0
        %v6234 = vadd.f32 0.0, %v6233
        %v6235 = vpop.f32.mrb[0].mxu0
        %6236 = vmatprep.mubr.bf16.mxu0 0
        %6237 = vmatmul.mubr.bf16.gmra.mrb[0].mxu0 %v6006
        %v6238 = vpop.f32.mrb[0].mxu0
        %v6239 = vadd.f32 0.0, %v6238
        %v6240 = vpop.f32.mrb[0].mxu0
        %v6241 = vpop.f32.mrb[0].mxu0
        %v6242 = vadd.f32 0.0, %v6241
        %v6243 = vpop.f32.mrb[0].mxu0
        %6244 = vmatprep.mubr.bf16.mxu0 0
        %6245 = vmatmul.mubr.bf16.gmra.mrb[0].mxu0 %v6009
        %v6246 = vpop.f32.mrb[0].mxu0
        %v6247 = vadd.f32 0.0, %v6246
        %v6248 = vpop.f32.mrb[0].mxu0
        %v6249 = vpop.f32.mrb[0].mxu0
        %v6250 = vadd.f32 0.0, %v6249
        %v6251 = vpop.f32.mrb[0].mxu0
        %6252 = vmatprep.mubr.bf16.mxu0 0
        %6253 = vmatmul.mubr.bf16.gmra.mrb[0].mxu0 %v6012
        %v6254 = vpop.f32.mrb[0].mxu0
        %v6255 = vadd.f32 0.0, %v6254
        %v6256 = vpop.f32.mrb[0].mxu0
        %v6257 = vpop.f32.mrb[0].mxu0
        %v6258 = vadd.f32 0.0, %v6257
        %v6259 = vpop.f32.mrb[0].mxu0
        %6260 = vmatprep.mubr.bf16.mxu0 0
        %6261 = vmatmul.mubr.bf16.gmra.mrb[0].mxu0 %v6015
        %v6262 = vpop.f32.mrb[0].mxu0
        %v6263 = vadd.f32 0.0, %v6262
        %v6264 = vpop.f32.mrb[0].mxu0
        %v6265 = vpop.f32.mrb[0].mxu0
        %v6266 = vadd.f32 0.0, %v6265
        %v6267 = vpop.f32.mrb[0].mxu0
        %6268 = vmatprep.mubr.bf16.mxu0 0
        %6269 = vmatmul.mubr.bf16.gmra.mrb[0].mxu0 %v6018
        %v6270 = vpop.f32.mrb[0].mxu0
        %v6271 = vadd.f32 0.0, %v6270
        %v6272 = vpop.f32.mrb[0].mxu0
        %v6273 = vpop.f32.mrb[0].mxu0
        %v6274 = vadd.f32 0.0, %v6273
        %v6275 = vpop.f32.mrb[0].mxu0
        %6276 = vmatprep.mubr.bf16.mxu0 0
        %6277 = vmatmul.mubr.bf16.gmra.mrb[0].mxu0 %v6021
        %v6278 = vpop.f32.mrb[0].mxu0
        %v6279 = vadd.f32 0.0, %v6278
        %v6280 = vpop.f32.mrb[0].mxu0
        %v6281 = vpop.f32.mrb[0].mxu0
        %v6282 = vadd.f32 0.0, %v6281
        %v6283 = vpop.f32.mrb[0].mxu0
        %6284 = vmatprep.mubr.bf16.mxu0 0
        %6285 = vmatmul.mubr.bf16.gmra.mrb[0].mxu0 %v6024
        %v6286 = vpop.f32.mrb[0].mxu0
        %v6287 = vadd.f32 0.0, %v6286
        %v6288 = vpop.f32.mrb[0].mxu0
        %v6289 = vpop.f32.mrb[0].mxu0
        %v6290 = vadd.f32 0.0, %v6289
        %v6291 = vpop.f32.mrb[0].mxu0
        %6292 = vmatprep.mubr.bf16.mxu0 0
        %6293 = vmatmul.mubr.bf16.gmra.mrb[0].mxu0 %v6027
        %v6294 = vpop.f32.mrb[0].mxu0
        %v6295 = vadd.f32 0.0, %v6294
        %v6296 = vpop.f32.mrb[0].mxu0
        %v6297 = vpop.f32.mrb[0].mxu0
        %v6298 = vadd.f32 0.0, %v6297
        %v6299 = vpop.f32.mrb[0].mxu0
        %6300 = vmatprep.mubr.bf16.mxu0 0
        %6301 = vmatmul.mubr.bf16.gmra.mrb[0].mxu0 %v6030
        %v6302 = vpop.f32.mrb[0].mxu0
        %v6303 = vadd.f32 0.0, %v6302
        %v6304 = vpop.f32.mrb[0].mxu0
        %v6305 = vpop.f32.mrb[0].mxu0
        %v6306 = vadd.f32 0.0, %v6305
        %v6307 = vpop.f32.mrb[0].mxu0
        %6308 = vmatprep.mubr.bf16.mxu0 0
        %6309 = vmatmul.mubr.bf16.gmra.mrb[0].mxu0 %v6033
        %v6310 = vpop.f32.mrb[0].mxu0
        %v6311 = vadd.f32 0.0, %v6310
        %v6312 = vpop.f32.mrb[0].mxu0
        %v6313 = vpop.f32.mrb[0].mxu0
        %v6314 = vadd.f32 0.0, %v6313
        %v6315 = vpop.f32.mrb[0].mxu0
        %6316 = vmatprep.mubr.bf16.mxu0 0
        %6317 = vmatmul.mubr.bf16.gmra.mrb[0].mxu0 %v6036
        %v6318 = vpop.f32.mrb[0].mxu0
        %v6319 = vadd.f32 0.0, %v6318
        %v6320 = vpop.f32.mrb[0].mxu0
        %v6321 = vpop.f32.mrb[0].mxu0
        %v6322 = vadd.f32 0.0, %v6321
        %v6323 = vpop.f32.mrb[0].mxu0
        %6324 = vmatprep.mubr.bf16.mxu0 0
        %6325 = vmatmul.mubr.bf16.gmra.mrb[0].mxu0 %v6039
        %v6326 = vpop.f32.mrb[0].mxu0
        %v6327 = vadd.f32 0.0, %v6326
        %v6328 = vpop.f32.mrb[0].mxu0
        %v6329 = vpop.f32.mrb[0].mxu0
        %v6330 = vadd.f32 0.0, %v6329
        %v6331 = vpop.f32.mrb[0].mxu0
        %6332 = vdwg.mxu0
        %v6333 = vadd.f32 %v5651, %v6079
        %v6334 = vadd.f32 %v5652, %v6082
        %v6335 = vadd.f32 %v5653, %v6087
        %v6336 = vadd.f32 %v5654, %v6090
        %v6337 = vadd.f32 %v5655, %v6095
        %v6338 = vadd.f32 %v5656, %v6098
        %v6339 = vadd.f32 %v5657, %v6103
        %v6340 = vadd.f32 %v5658, %v6106
        %v6341 = vadd.f32 %v5659, %v6111
        %v6342 = vadd.f32 %v5660, %v6114
        %v6343 = vadd.f32 %v5661, %v6119
        %v6344 = vadd.f32 %v5662, %v6122
        %v6345 = vadd.f32 %v5663, %v6127
        %v6346 = vadd.f32 %v5664, %v6130
        %v6347 = vadd.f32 %v5665, %v6135
        %v6348 = vadd.f32 %v5666, %v6138
        %v6349 = vadd.f32 %v5667, %v6143
        %v6350 = vadd.f32 %v5668, %v6146
        %v6351 = vadd.f32 %v5669, %v6151
        %v6352 = vadd.f32 %v5670, %v6154
        %v6353 = vadd.f32 %v5671, %v6159
        %v6354 = vadd.f32 %v5672, %v6162
        %v6355 = vadd.f32 %v5673, %v6167
        %v6356 = vadd.f32 %v5674, %v6170
        %v6357 = vadd.f32 %v5675, %v6175
        %v6358 = vadd.f32 %v5676, %v6178
        %v6359 = vadd.f32 %v5677, %v6183
        %v6360 = vadd.f32 %v5678, %v6186
        %v6361 = vadd.f32 %v5679, %v6191
        %v6362 = vadd.f32 %v5680, %v6194
        %v6363 = vadd.f32 %v5681, %v6199
        %v6364 = vadd.f32 %v5682, %v6202
        %v6365 = vadd.f32 %v5683, %v6207
        %v6366 = vadd.f32 %v5684, %v6210
        %v6367 = vadd.f32 %v5685, %v6215
        %v6368 = vadd.f32 %v5686, %v6218
        %v6369 = vadd.f32 %v5687, %v6223
        %v6370 = vadd.f32 %v5688, %v6226
        %v6371 = vadd.f32 %v5689, %v6231
        %v6372 = vadd.f32 %v5690, %v6234
        %v6373 = vadd.f32 %v5691, %v6239
        %v6374 = vadd.f32 %v5692, %v6242
        %v6375 = vadd.f32 %v5693, %v6247
        %v6376 = vadd.f32 %v5694, %v6250
        %v6377 = vadd.f32 %v5695, %v6255
        %v6378 = vadd.f32 %v5696, %v6258
        %v6379 = vadd.f32 %v5697, %v6263
        %v6380 = vadd.f32 %v5698, %v6266
        %v6381 = vadd.f32 %v5699, %v6271
        %v6382 = vadd.f32 %v5700, %v6274
        %v6383 = vadd.f32 %v5701, %v6279
        %v6384 = vadd.f32 %v5702, %v6282
        %v6385 = vadd.f32 %v5703, %v6287
        %v6386 = vadd.f32 %v5704, %v6290
        %v6387 = vadd.f32 %v5705, %v6295
        %v6388 = vadd.f32 %v5706, %v6298
        %v6389 = vadd.f32 %v5707, %v6303
        %v6390 = vadd.f32 %v5708, %v6306
        %v6391 = vadd.f32 %v5709, %v6311
        %v6392 = vadd.f32 %v5710, %v6314
        %v6393 = vadd.f32 %v5711, %v6319
        %v6394 = vadd.f32 %v5712, %v6322
        %v6395 = vadd.f32 %v5713, %v6327
        %v6396 = vadd.f32 %v5714, %v6330
        %v6397 = vld [vmem:[%s5718] sm:$0xf]
        %v6398 = vld [vmem:[%s5718 + $0x4] sm:$0xf]
        %v6399 = vld [vmem:[%s5718 + $0x8] sm:$0xf]
        %v6400 = vld [vmem:[%s5718 + $0xc] sm:$0xf]
        %v6401 = vld [vmem:[%s5718 + $0x10] sm:$0x1]
        %v6402 = vld [vmem:[%s5718 + $0x14] sm:$0xf]
        %v6403 = vld [vmem:[%s5718 + $0x18] sm:$0xf]
        %v6404 = vld [vmem:[%s5718 + $0x1c] sm:$0xf]
        %v6405 = vld [vmem:[%s5718 + $0x20] sm:$0xf]
        %v6406 = vld [vmem:[%s5718 + $0x24] sm:$0x1]
        %v6407 = vld [vmem:[%s5718 + $0x28] sm:$0xf]
        %v6408 = vld [vmem:[%s5718 + $0x2c] sm:$0xf]
        %v6409 = vld [vmem:[%s5718 + $0x30] sm:$0xf]
        %v6410 = vld [vmem:[%s5718 + $0x34] sm:$0xf]
        %v6411 = vld [vmem:[%s5718 + $0x38] sm:$0x1]
        %v6412 = vld [vmem:[%s5718 + $0x3c] sm:$0xf]
        %v6413 = vld [vmem:[%s5718 + $0x40] sm:$0xf]
        %v6414 = vld [vmem:[%s5718 + $0x44] sm:$0xf]
        %v6415 = vld [vmem:[%s5718 + $0x48] sm:$0xf]
        %v6416 = vld [vmem:[%s5718 + $0x4c] sm:$0x1]
        %v6417 = vld [vmem:[%s5718 + $0x50] sm:$0xf]
        %v6418 = vld [vmem:[%s5718 + $0x54] sm:$0xf]
        %v6419 = vld [vmem:[%s5718 + $0x58] sm:$0xf]
        %v6420 = vld [vmem:[%s5718 + $0x5c] sm:$0xf]
        %v6421 = vld [vmem:[%s5718 + $0x60] sm:$0x1]
        %v6422 = vld [vmem:[%s5718 + $0x64] sm:$0xf]
        %v6423 = vld [vmem:[%s5718 + $0x68] sm:$0xf]
        %v6424 = vld [vmem:[%s5718 + $0x6c] sm:$0xf]
        %v6425 = vld [vmem:[%s5718 + $0x70] sm:$0xf]
        %v6426 = vld [vmem:[%s5718 + $0x74] sm:$0x1]
        %v6427 = vld [vmem:[%s5718 + $0x78] sm:$0xf]
        %v6428 = vld [vmem:[%s5718 + $0x7c] sm:$0xf]
        %v6429 = vld [vmem:[%s5718 + $0x80] sm:$0xf]
        %v6430 = vld [vmem:[%s5718 + $0x84] sm:$0xf]
        %v6431 = vld [vmem:[%s5718 + $0x88] sm:$0x1]
        %v6432 = vld [vmem:[%s5718 + $0x8c] sm:$0xf]
        %v6433 = vld [vmem:[%s5718 + $0x90] sm:$0xf]
        %v6434 = vld [vmem:[%s5718 + $0x94] sm:$0xf]
        %v6435 = vld [vmem:[%s5718 + $0x98] sm:$0xf]
        %v6436 = vld [vmem:[%s5718 + $0x9c] sm:$0x1]
        %v6437 = vld [vmem:[%s5718 + $0xa0] sm:$0xf]
        %v6438 = vld [vmem:[%s5718 + $0xa4] sm:$0xf]
        %v6439 = vld [vmem:[%s5718 + $0xa8] sm:$0xf]
        %v6440 = vld [vmem:[%s5718 + $0xac] sm:$0xf]
        %v6441 = vld [vmem:[%s5718 + $0xb0] sm:$0x1]
        %v6442 = vld [vmem:[%s5718 + $0xb4] sm:$0xf]
        %v6443 = vld [vmem:[%s5718 + $0xb8] sm:$0xf]
        %v6444 = vld [vmem:[%s5718 + $0xbc] sm:$0xf]
        %v6445 = vld [vmem:[%s5718 + $0xc0] sm:$0xf]
        %v6446 = vld [vmem:[%s5718 + $0xc4] sm:$0x1]
        %v6447 = vld [vmem:[%s5718 + $0xc8] sm:$0xf]
        %v6448 = vld [vmem:[%s5718 + $0xcc] sm:$0xf]
        %v6449 = vld [vmem:[%s5718 + $0xd0] sm:$0xf]
        %v6450 = vld [vmem:[%s5718 + $0xd4] sm:$0xf]
        %v6451 = vld [vmem:[%s5718 + $0xd8] sm:$0x1]
        %v6452 = vld [vmem:[%s5718 + $0xdc] sm:$0xf]
        %v6453 = vld [vmem:[%s5718 + $0xe0] sm:$0xf]
        %v6454 = vld [vmem:[%s5718 + $0xe4] sm:$0xf]
        %v6455 = vld [vmem:[%s5718 + $0xe8] sm:$0xf]
        %v6456 = vld [vmem:[%s5718 + $0xec] sm:$0x1]
        %v6457 = vld [vmem:[%s5718 + $0xf0] sm:$0xf]
        %v6458 = vld [vmem:[%s5718 + $0xf4] sm:$0xf]
        %v6459 = vld [vmem:[%s5718 + $0xf8] sm:$0xf]
        %v6460 = vld [vmem:[%s5718 + $0xfc] sm:$0xf]
        %v6461 = vld [vmem:[%s5718 + $0x100] sm:$0x1]
        %v6462 = vld [vmem:[%s5718 + $0x104] sm:$0xf]
        %v6463 = vld [vmem:[%s5718 + $0x108] sm:$0xf]
        %v6464 = vld [vmem:[%s5718 + $0x10c] sm:$0xf]
        %v6465 = vld [vmem:[%s5718 + $0x110] sm:$0xf]
        %v6466 = vld [vmem:[%s5718 + $0x114] sm:$0x1]
        %v6467 = vld [vmem:[%s5718 + $0x118] sm:$0xf]
        %v6468 = vld [vmem:[%s5718 + $0x11c] sm:$0xf]
        %v6469 = vld [vmem:[%s5718 + $0x120] sm:$0xf]
        %v6470 = vld [vmem:[%s5718 + $0x124] sm:$0xf]
        %v6471 = vld [vmem:[%s5718 + $0x128] sm:$0x1]
        %v6472 = vld [vmem:[%s5718 + $0x12c] sm:$0xf]
        %v6473 = vld [vmem:[%s5718 + $0x130] sm:$0xf]
        %v6474 = vld [vmem:[%s5718 + $0x134] sm:$0xf]
        %v6475 = vld [vmem:[%s5718 + $0x138] sm:$0xf]
        %v6476 = vld [vmem:[%s5718 + $0x13c] sm:$0x1]
        %v6478 = vshrl.u32 %v6397, 16
        %v6480 = vrot.slane %v6478, 4
        %v6481 = vshll.u32 %v6397, 16
        %v6483 = vrot.slane %v6481, 5
        %v6484 = vor.u32 %v6480, %v6483
        %v6485 = vrot.slane %v6484, 4
        %v6487 = vshll.u32 %v6398, 16
        %v6489 = vrot.slane %v6487, 5
        %v6490 = vsel %vm295, %v6485, %v6489
        %v6491 = vshrl.u32 %v6398, 16
        %v6493 = vrot.slane %v6491, 4
        %v6494 = vor.u32 %v6493, %v6489
        %v6495 = vrot.slane %v6494, 4
        %v6497 = vshll.u32 %v6399, 16
        %v6499 = vrot.slane %v6497, 5
        %v6500 = vsel %vm295, %v6495, %v6499
        %v6501 = vshrl.u32 %v6399, 16
        %v6503 = vrot.slane %v6501, 4
        %v6504 = vor.u32 %v6503, %v6499
        %v6505 = vrot.slane %v6504, 4
        %v6507 = vshll.u32 %v6400, 16
        %v6509 = vrot.slane %v6507, 5
        %v6510 = vsel %vm295, %v6505, %v6509
        %v6511 = vshrl.u32 %v6400, 16
        %v6513 = vrot.slane %v6511, 4
        %v6514 = vor.u32 %v6513, %v6509
        %v6515 = vrot.slane %v6514, 4
        %v6517 = vshll.u32 %v6401, 16
        %v6519 = vrot.slane %v6517, 5
        %v6520 = vsel %vm295, %v6515, %v6519
        %v6522 = vshrl.u32 %v6402, 16
        %v6524 = vrot.slane %v6522, 4
        %v6525 = vshll.u32 %v6402, 16
        %v6527 = vrot.slane %v6525, 5
        %v6528 = vor.u32 %v6524, %v6527
        %v6529 = vrot.slane %v6528, 4
        %v6531 = vshll.u32 %v6403, 16
        %v6533 = vrot.slane %v6531, 5
        %v6534 = vsel %vm295, %v6529, %v6533
        %v6535 = vshrl.u32 %v6403, 16
        %v6537 = vrot.slane %v6535, 4
        %v6538 = vor.u32 %v6537, %v6533
        %v6539 = vrot.slane %v6538, 4
        %v6541 = vshll.u32 %v6404, 16
        %v6543 = vrot.slane %v6541, 5
        %v6544 = vsel %vm295, %v6539, %v6543
        %v6545 = vshrl.u32 %v6404, 16
        %v6547 = vrot.slane %v6545, 4
        %v6548 = vor.u32 %v6547, %v6543
        %v6549 = vrot.slane %v6548, 4
        %v6551 = vshll.u32 %v6405, 16
        %v6553 = vrot.slane %v6551, 5
        %v6554 = vsel %vm295, %v6549, %v6553
        %v6555 = vshrl.u32 %v6405, 16
        %v6557 = vrot.slane %v6555, 4
        %v6558 = vor.u32 %v6557, %v6553
        %v6559 = vrot.slane %v6558, 4
        %v6561 = vshll.u32 %v6406, 16
        %v6563 = vrot.slane %v6561, 5
        %v6564 = vsel %vm295, %v6559, %v6563
        %v6566 = vshrl.u32 %v6407, 16
        %v6568 = vrot.slane %v6566, 4
        %v6569 = vshll.u32 %v6407, 16
        %v6571 = vrot.slane %v6569, 5
        %v6572 = vor.u32 %v6568, %v6571
        %v6573 = vrot.slane %v6572, 4
        %v6575 = vshll.u32 %v6408, 16
        %v6577 = vrot.slane %v6575, 5
        %v6578 = vsel %vm295, %v6573, %v6577
        %v6579 = vshrl.u32 %v6408, 16
        %v6581 = vrot.slane %v6579, 4
        %v6582 = vor.u32 %v6581, %v6577
        %v6583 = vrot.slane %v6582, 4
        %v6585 = vshll.u32 %v6409, 16
        %v6587 = vrot.slane %v6585, 5
        %v6588 = vsel %vm295, %v6583, %v6587
        %v6589 = vshrl.u32 %v6409, 16
        %v6591 = vrot.slane %v6589, 4
        %v6592 = vor.u32 %v6591, %v6587
        %v6593 = vrot.slane %v6592, 4
        %v6595 = vshll.u32 %v6410, 16
        %v6597 = vrot.slane %v6595, 5
        %v6598 = vsel %vm295, %v6593, %v6597
        %v6599 = vshrl.u32 %v6410, 16
        %v6601 = vrot.slane %v6599, 4
        %v6602 = vor.u32 %v6601, %v6597
        %v6603 = vrot.slane %v6602, 4
        %v6605 = vshll.u32 %v6411, 16
        %v6607 = vrot.slane %v6605, 5
        %v6608 = vsel %vm295, %v6603, %v6607
        %v6610 = vshrl.u32 %v6412, 16
        %v6612 = vrot.slane %v6610, 4
        %v6613 = vshll.u32 %v6412, 16
        %v6615 = vrot.slane %v6613, 5
        %v6616 = vor.u32 %v6612, %v6615
        %v6617 = vrot.slane %v6616, 4
        %v6619 = vshll.u32 %v6413, 16
        %v6621 = vrot.slane %v6619, 5
        %v6622 = vsel %vm295, %v6617, %v6621
        %v6623 = vshrl.u32 %v6413, 16
        %v6625 = vrot.slane %v6623, 4
        %v6626 = vor.u32 %v6625, %v6621
        %v6627 = vrot.slane %v6626, 4
        %v6629 = vshll.u32 %v6414, 16
        %v6631 = vrot.slane %v6629, 5
        %v6632 = vsel %vm295, %v6627, %v6631
        %v6633 = vshrl.u32 %v6414, 16
        %v6635 = vrot.slane %v6633, 4
        %v6636 = vor.u32 %v6635, %v6631
        %v6637 = vrot.slane %v6636, 4
        %v6639 = vshll.u32 %v6415, 16
        %v6641 = vrot.slane %v6639, 5
        %v6642 = vsel %vm295, %v6637, %v6641
        %v6643 = vshrl.u32 %v6415, 16
        %v6645 = vrot.slane %v6643, 4
        %v6646 = vor.u32 %v6645, %v6641
        %v6647 = vrot.slane %v6646, 4
        %v6649 = vshll.u32 %v6416, 16
        %v6651 = vrot.slane %v6649, 5
        %v6652 = vsel %vm295, %v6647, %v6651
        %v6654 = vshrl.u32 %v6417, 16
        %v6656 = vrot.slane %v6654, 4
        %v6657 = vshll.u32 %v6417, 16
        %v6659 = vrot.slane %v6657, 5
        %v6660 = vor.u32 %v6656, %v6659
        %v6661 = vrot.slane %v6660, 4
        %v6663 = vshll.u32 %v6418, 16
        %v6665 = vrot.slane %v6663, 5
        %v6666 = vsel %vm295, %v6661, %v6665
        %v6667 = vshrl.u32 %v6418, 16
        %v6669 = vrot.slane %v6667, 4
        %v6670 = vor.u32 %v6669, %v6665
        %v6671 = vrot.slane %v6670, 4
        %v6673 = vshll.u32 %v6419, 16
        %v6675 = vrot.slane %v6673, 5
        %v6676 = vsel %vm295, %v6671, %v6675
        %v6677 = vshrl.u32 %v6419, 16
        %v6679 = vrot.slane %v6677, 4
        %v6680 = vor.u32 %v6679, %v6675
        %v6681 = vrot.slane %v6680, 4
        %v6683 = vshll.u32 %v6420, 16
        %v6685 = vrot.slane %v6683, 5
        %v6686 = vsel %vm295, %v6681, %v6685
        %v6687 = vshrl.u32 %v6420, 16
        %v6689 = vrot.slane %v6687, 4
        %v6690 = vor.u32 %v6689, %v6685
        %v6691 = vrot.slane %v6690, 4
        %v6693 = vshll.u32 %v6421, 16
        %v6695 = vrot.slane %v6693, 5
        %v6696 = vsel %vm295, %v6691, %v6695
        %v6698 = vshrl.u32 %v6422, 16
        %v6700 = vrot.slane %v6698, 4
        %v6701 = vshll.u32 %v6422, 16
        %v6703 = vrot.slane %v6701, 5
        %v6704 = vor.u32 %v6700, %v6703
        %v6705 = vrot.slane %v6704, 4
        %v6707 = vshll.u32 %v6423, 16
        %v6709 = vrot.slane %v6707, 5
        %v6710 = vsel %vm295, %v6705, %v6709
        %v6711 = vshrl.u32 %v6423, 16
        %v6713 = vrot.slane %v6711, 4
        %v6714 = vor.u32 %v6713, %v6709
        %v6715 = vrot.slane %v6714, 4
        %v6717 = vshll.u32 %v6424, 16
        %v6719 = vrot.slane %v6717, 5
        %v6720 = vsel %vm295, %v6715, %v6719
        %v6721 = vshrl.u32 %v6424, 16
        %v6723 = vrot.slane %v6721, 4
        %v6724 = vor.u32 %v6723, %v6719
        %v6725 = vrot.slane %v6724, 4
        %v6727 = vshll.u32 %v6425, 16
        %v6729 = vrot.slane %v6727, 5
        %v6730 = vsel %vm295, %v6725, %v6729
        %v6731 = vshrl.u32 %v6425, 16
        %v6733 = vrot.slane %v6731, 4
        %v6734 = vor.u32 %v6733, %v6729
        %v6735 = vrot.slane %v6734, 4
        %v6737 = vshll.u32 %v6426, 16
        %v6739 = vrot.slane %v6737, 5
        %v6740 = vsel %vm295, %v6735, %v6739
        %v6742 = vshrl.u32 %v6427, 16
        %v6744 = vrot.slane %v6742, 4
        %v6745 = vshll.u32 %v6427, 16
        %v6747 = vrot.slane %v6745, 5
        %v6748 = vor.u32 %v6744, %v6747
        %v6749 = vrot.slane %v6748, 4
        %v6751 = vshll.u32 %v6428, 16
        %v6753 = vrot.slane %v6751, 5
        %v6754 = vsel %vm295, %v6749, %v6753
        %v6755 = vshrl.u32 %v6428, 16
        %v6757 = vrot.slane %v6755, 4
        %v6758 = vor.u32 %v6757, %v6753
        %v6759 = vrot.slane %v6758, 4
        %v6761 = vshll.u32 %v6429, 16
        %v6763 = vrot.slane %v6761, 5
        %v6764 = vsel %vm295, %v6759, %v6763
        %v6765 = vshrl.u32 %v6429, 16
        %v6767 = vrot.slane %v6765, 4
        %v6768 = vor.u32 %v6767, %v6763
        %v6769 = vrot.slane %v6768, 4
        %v6771 = vshll.u32 %v6430, 16
        %v6773 = vrot.slane %v6771, 5
        %v6774 = vsel %vm295, %v6769, %v6773
        %v6775 = vshrl.u32 %v6430, 16
        %v6777 = vrot.slane %v6775, 4
        %v6778 = vor.u32 %v6777, %v6773
        %v6779 = vrot.slane %v6778, 4
        %v6781 = vshll.u32 %v6431, 16
        %v6783 = vrot.slane %v6781, 5
        %v6784 = vsel %vm295, %v6779, %v6783
        %v6786 = vshrl.u32 %v6432, 16
        %v6788 = vrot.slane %v6786, 4
        %v6789 = vshll.u32 %v6432, 16
        %v6791 = vrot.slane %v6789, 5
        %v6792 = vor.u32 %v6788, %v6791
        %v6793 = vrot.slane %v6792, 4
        %v6795 = vshll.u32 %v6433, 16
        %v6797 = vrot.slane %v6795, 5
        %v6798 = vsel %vm295, %v6793, %v6797
        %v6799 = vshrl.u32 %v6433, 16
        %v6801 = vrot.slane %v6799, 4
        %v6802 = vor.u32 %v6801, %v6797
        %v6803 = vrot.slane %v6802, 4
        %v6805 = vshll.u32 %v6434, 16
        %v6807 = vrot.slane %v6805, 5
        %v6808 = vsel %vm295, %v6803, %v6807
        %v6809 = vshrl.u32 %v6434, 16
        %v6811 = vrot.slane %v6809, 4
        %v6812 = vor.u32 %v6811, %v6807
        %v6813 = vrot.slane %v6812, 4
        %v6815 = vshll.u32 %v6435, 16
        %v6817 = vrot.slane %v6815, 5
        %v6818 = vsel %vm295, %v6813, %v6817
        %v6819 = vshrl.u32 %v6435, 16
        %v6821 = vrot.slane %v6819, 4
        %v6822 = vor.u32 %v6821, %v6817
        %v6823 = vrot.slane %v6822, 4
        %v6825 = vshll.u32 %v6436, 16
        %v6827 = vrot.slane %v6825, 5
        %v6828 = vsel %vm295, %v6823, %v6827
        %v6830 = vshrl.u32 %v6437, 16
        %v6832 = vrot.slane %v6830, 4
        %v6833 = vshll.u32 %v6437, 16
        %v6835 = vrot.slane %v6833, 5
        %v6836 = vor.u32 %v6832, %v6835
        %v6837 = vrot.slane %v6836, 4
        %v6839 = vshll.u32 %v6438, 16
        %v6841 = vrot.slane %v6839, 5
        %v6842 = vsel %vm295, %v6837, %v6841
        %v6843 = vshrl.u32 %v6438, 16
        %v6845 = vrot.slane %v6843, 4
        %v6846 = vor.u32 %v6845, %v6841
        %v6847 = vrot.slane %v6846, 4
        %v6849 = vshll.u32 %v6439, 16
        %v6851 = vrot.slane %v6849, 5
        %v6852 = vsel %vm295, %v6847, %v6851
        %v6853 = vshrl.u32 %v6439, 16
        %v6855 = vrot.slane %v6853, 4
        %v6856 = vor.u32 %v6855, %v6851
        %v6857 = vrot.slane %v6856, 4
        %v6859 = vshll.u32 %v6440, 16
        %v6861 = vrot.slane %v6859, 5
        %v6862 = vsel %vm295, %v6857, %v6861
        %v6863 = vshrl.u32 %v6440, 16
        %v6865 = vrot.slane %v6863, 4
        %v6866 = vor.u32 %v6865, %v6861
        %v6867 = vrot.slane %v6866, 4
        %v6869 = vshll.u32 %v6441, 16
        %v6871 = vrot.slane %v6869, 5
        %v6872 = vsel %vm295, %v6867, %v6871
        %v6874 = vshrl.u32 %v6442, 16
        %v6876 = vrot.slane %v6874, 4
        %v6877 = vshll.u32 %v6442, 16
        %v6879 = vrot.slane %v6877, 5
        %v6880 = vor.u32 %v6876, %v6879
        %v6881 = vrot.slane %v6880, 4
        %v6883 = vshll.u32 %v6443, 16
        %v6885 = vrot.slane %v6883, 5
        %v6886 = vsel %vm295, %v6881, %v6885
        %v6887 = vshrl.u32 %v6443, 16
        %v6889 = vrot.slane %v6887, 4
        %v6890 = vor.u32 %v6889, %v6885
        %v6891 = vrot.slane %v6890, 4
        %v6893 = vshll.u32 %v6444, 16
        %v6895 = vrot.slane %v6893, 5
        %v6896 = vsel %vm295, %v6891, %v6895
        %v6897 = vshrl.u32 %v6444, 16
        %v6899 = vrot.slane %v6897, 4
        %v6900 = vor.u32 %v6899, %v6895
        %v6901 = vrot.slane %v6900, 4
        %v6903 = vshll.u32 %v6445, 16
        %v6905 = vrot.slane %v6903, 5
        %v6906 = vsel %vm295, %v6901, %v6905
        %v6907 = vshrl.u32 %v6445, 16
        %v6909 = vrot.slane %v6907, 4
        %v6910 = vor.u32 %v6909, %v6905
        %v6911 = vrot.slane %v6910, 4
        %v6913 = vshll.u32 %v6446, 16
        %v6915 = vrot.slane %v6913, 5
        %v6916 = vsel %vm295, %v6911, %v6915
        %v6918 = vshrl.u32 %v6447, 16
        %v6920 = vrot.slane %v6918, 4
        %v6921 = vshll.u32 %v6447, 16
        %v6923 = vrot.slane %v6921, 5
        %v6924 = vor.u32 %v6920, %v6923
        %v6925 = vrot.slane %v6924, 4
        %v6927 = vshll.u32 %v6448, 16
        %v6929 = vrot.slane %v6927, 5
        %v6930 = vsel %vm295, %v6925, %v6929
        %v6931 = vshrl.u32 %v6448, 16
        %v6933 = vrot.slane %v6931, 4
        %v6934 = vor.u32 %v6933, %v6929
        %v6935 = vrot.slane %v6934, 4
        %v6937 = vshll.u32 %v6449, 16
        %v6939 = vrot.slane %v6937, 5
        %v6940 = vsel %vm295, %v6935, %v6939
        %v6941 = vshrl.u32 %v6449, 16
        %v6943 = vrot.slane %v6941, 4
        %v6944 = vor.u32 %v6943, %v6939
        %v6945 = vrot.slane %v6944, 4
        %v6947 = vshll.u32 %v6450, 16
        %v6949 = vrot.slane %v6947, 5
        %v6950 = vsel %vm295, %v6945, %v6949
        %v6951 = vshrl.u32 %v6450, 16
        %v6953 = vrot.slane %v6951, 4
        %v6954 = vor.u32 %v6953, %v6949
        %v6955 = vrot.slane %v6954, 4
        %v6957 = vshll.u32 %v6451, 16
        %v6959 = vrot.slane %v6957, 5
        %v6960 = vsel %vm295, %v6955, %v6959
        %v6962 = vshrl.u32 %v6452, 16
        %v6964 = vrot.slane %v6962, 4
        %v6965 = vshll.u32 %v6452, 16
        %v6967 = vrot.slane %v6965, 5
        %v6968 = vor.u32 %v6964, %v6967
        %v6969 = vrot.slane %v6968, 4
        %v6971 = vshll.u32 %v6453, 16
        %v6973 = vrot.slane %v6971, 5
        %v6974 = vsel %vm295, %v6969, %v6973
        %v6975 = vshrl.u32 %v6453, 16
        %v6977 = vrot.slane %v6975, 4
        %v6978 = vor.u32 %v6977, %v6973
        %v6979 = vrot.slane %v6978, 4
        %v6981 = vshll.u32 %v6454, 16
        %v6983 = vrot.slane %v6981, 5
        %v6984 = vsel %vm295, %v6979, %v6983
        %v6985 = vshrl.u32 %v6454, 16
        %v6987 = vrot.slane %v6985, 4
        %v6988 = vor.u32 %v6987, %v6983
        %v6989 = vrot.slane %v6988, 4
        %v6991 = vshll.u32 %v6455, 16
        %v6993 = vrot.slane %v6991, 5
        %v6994 = vsel %vm295, %v6989, %v6993
        %v6995 = vshrl.u32 %v6455, 16
        %v6997 = vrot.slane %v6995, 4
        %v6998 = vor.u32 %v6997, %v6993
        %v6999 = vrot.slane %v6998, 4
        %v7001 = vshll.u32 %v6456, 16
        %v7003 = vrot.slane %v7001, 5
        %v7004 = vsel %vm295, %v6999, %v7003
        %v7006 = vshrl.u32 %v6457, 16
        %v7008 = vrot.slane %v7006, 4
        %v7009 = vshll.u32 %v6457, 16
        %v7011 = vrot.slane %v7009, 5
        %v7012 = vor.u32 %v7008, %v7011
        %v7013 = vrot.slane %v7012, 4
        %v7015 = vshll.u32 %v6458, 16
        %v7017 = vrot.slane %v7015, 5
        %v7018 = vsel %vm295, %v7013, %v7017
        %v7019 = vshrl.u32 %v6458, 16
        %v7021 = vrot.slane %v7019, 4
        %v7022 = vor.u32 %v7021, %v7017
        %v7023 = vrot.slane %v7022, 4
        %v7025 = vshll.u32 %v6459, 16
        %v7027 = vrot.slane %v7025, 5
        %v7028 = vsel %vm295, %v7023, %v7027
        %v7029 = vshrl.u32 %v6459, 16
        %v7031 = vrot.slane %v7029, 4
        %v7032 = vor.u32 %v7031, %v7027
        %v7033 = vrot.slane %v7032, 4
        %v7035 = vshll.u32 %v6460, 16
        %v7037 = vrot.slane %v7035, 5
        %v7038 = vsel %vm295, %v7033, %v7037
        %v7039 = vshrl.u32 %v6460, 16
        %v7041 = vrot.slane %v7039, 4
        %v7042 = vor.u32 %v7041, %v7037
        %v7043 = vrot.slane %v7042, 4
        %v7045 = vshll.u32 %v6461, 16
        %v7047 = vrot.slane %v7045, 5
        %v7048 = vsel %vm295, %v7043, %v7047
        %v7050 = vshrl.u32 %v6462, 16
        %v7052 = vrot.slane %v7050, 4
        %v7053 = vshll.u32 %v6462, 16
        %v7055 = vrot.slane %v7053, 5
        %v7056 = vor.u32 %v7052, %v7055
        %v7057 = vrot.slane %v7056, 4
        %v7059 = vshll.u32 %v6463, 16
        %v7061 = vrot.slane %v7059, 5
        %v7062 = vsel %vm295, %v7057, %v7061
        %v7063 = vshrl.u32 %v6463, 16
        %v7065 = vrot.slane %v7063, 4
        %v7066 = vor.u32 %v7065, %v7061
        %v7067 = vrot.slane %v7066, 4
        %v7069 = vshll.u32 %v6464, 16
        %v7071 = vrot.slane %v7069, 5
        %v7072 = vsel %vm295, %v7067, %v7071
        %v7073 = vshrl.u32 %v6464, 16
        %v7075 = vrot.slane %v7073, 4
        %v7076 = vor.u32 %v7075, %v7071
        %v7077 = vrot.slane %v7076, 4
        %v7079 = vshll.u32 %v6465, 16
        %v7081 = vrot.slane %v7079, 5
        %v7082 = vsel %vm295, %v7077, %v7081
        %v7083 = vshrl.u32 %v6465, 16
        %v7085 = vrot.slane %v7083, 4
        %v7086 = vor.u32 %v7085, %v7081
        %v7087 = vrot.slane %v7086, 4
        %v7089 = vshll.u32 %v6466, 16
        %v7091 = vrot.slane %v7089, 5
        %v7092 = vsel %vm295, %v7087, %v7091
        %v7094 = vshrl.u32 %v6467, 16
        %v7096 = vrot.slane %v7094, 4
        %v7097 = vshll.u32 %v6467, 16
        %v7099 = vrot.slane %v7097, 5
        %v7100 = vor.u32 %v7096, %v7099
        %v7101 = vrot.slane %v7100, 4
        %v7103 = vshll.u32 %v6468, 16
        %v7105 = vrot.slane %v7103, 5
        %v7106 = vsel %vm295, %v7101, %v7105
        %v7107 = vshrl.u32 %v6468, 16
        %v7109 = vrot.slane %v7107, 4
        %v7110 = vor.u32 %v7109, %v7105
        %v7111 = vrot.slane %v7110, 4
        %v7113 = vshll.u32 %v6469, 16
        %v7115 = vrot.slane %v7113, 5
        %v7116 = vsel %vm295, %v7111, %v7115
        %v7117 = vshrl.u32 %v6469, 16
        %v7119 = vrot.slane %v7117, 4
        %v7120 = vor.u32 %v7119, %v7115
        %v7121 = vrot.slane %v7120, 4
        %v7123 = vshll.u32 %v6470, 16
        %v7125 = vrot.slane %v7123, 5
        %v7126 = vsel %vm295, %v7121, %v7125
        %v7127 = vshrl.u32 %v6470, 16
        %v7129 = vrot.slane %v7127, 4
        %v7130 = vor.u32 %v7129, %v7125
        %v7131 = vrot.slane %v7130, 4
        %v7133 = vshll.u32 %v6471, 16
        %v7135 = vrot.slane %v7133, 5
        %v7136 = vsel %vm295, %v7131, %v7135
        %v7138 = vshrl.u32 %v6472, 16
        %v7140 = vrot.slane %v7138, 4
        %v7141 = vshll.u32 %v6472, 16
        %v7143 = vrot.slane %v7141, 5
        %v7144 = vor.u32 %v7140, %v7143
        %v7145 = vrot.slane %v7144, 4
        %v7147 = vshll.u32 %v6473, 16
        %v7149 = vrot.slane %v7147, 5
        %v7150 = vsel %vm295, %v7145, %v7149
        %v7151 = vshrl.u32 %v6473, 16
        %v7153 = vrot.slane %v7151, 4
        %v7154 = vor.u32 %v7153, %v7149
        %v7155 = vrot.slane %v7154, 4
        %v7157 = vshll.u32 %v6474, 16
        %v7159 = vrot.slane %v7157, 5
        %v7160 = vsel %vm295, %v7155, %v7159
        %v7161 = vshrl.u32 %v6474, 16
        %v7163 = vrot.slane %v7161, 4
        %v7164 = vor.u32 %v7163, %v7159
        %v7165 = vrot.slane %v7164, 4
        %v7167 = vshll.u32 %v6475, 16
        %v7169 = vrot.slane %v7167, 5
        %v7170 = vsel %vm295, %v7165, %v7169
        %v7171 = vshrl.u32 %v6475, 16
        %v7173 = vrot.slane %v7171, 4
        %v7174 = vor.u32 %v7173, %v7169
        %v7175 = vrot.slane %v7174, 4
        %v7177 = vshll.u32 %v6476, 16
        %v7179 = vrot.slane %v7177, 5
        %v7180 = vsel %vm295, %v7175, %v7179
        %s7181 = scalar_lea.vmem %s1, 14
        %v7182 = vld [vmem:[%s7181] sm:$0x3]
        %v7183 = vunpack.c.l.b16 %v6490
        %v7184 = vunpack.c.l.b16 %v6500
        %v7185 = vunpack.c.l.b16 %v6510
        %v7186 = vunpack.c.l.b16 %v6520
        %v7187 = vunpack.c.l.b16 %v6534
        %v7188 = vunpack.c.l.b16 %v6544
        %v7189 = vunpack.c.l.b16 %v6554
        %v7190 = vunpack.c.l.b16 %v6564
        %v7191 = vunpack.c.l.b16 %v6578
        %v7192 = vunpack.c.l.b16 %v6588
        %v7193 = vunpack.c.l.b16 %v6598
        %v7194 = vunpack.c.l.b16 %v6608
        %v7195 = vunpack.c.l.b16 %v6622
        %v7196 = vunpack.c.l.b16 %v6632
        %v7197 = vunpack.c.l.b16 %v6642
        %v7198 = vunpack.c.l.b16 %v6652
        %v7199 = vunpack.c.l.b16 %v6666
        %v7200 = vunpack.c.l.b16 %v6676
        %v7201 = vunpack.c.l.b16 %v6686
        %v7202 = vunpack.c.l.b16 %v6696
        %v7203 = vunpack.c.l.b16 %v6710
        %v7204 = vunpack.c.l.b16 %v6720
        %v7205 = vunpack.c.l.b16 %v6730
        %v7206 = vunpack.c.l.b16 %v6740
        %v7207 = vunpack.c.l.b16 %v6754
        %v7208 = vunpack.c.l.b16 %v6764
        %v7209 = vunpack.c.l.b16 %v6774
        %v7210 = vunpack.c.l.b16 %v6784
        %v7211 = vunpack.c.l.b16 %v6798
        %v7212 = vunpack.c.l.b16 %v6808
        %v7213 = vunpack.c.l.b16 %v6818
        %v7214 = vunpack.c.l.b16 %v6828
        %v7215 = vunpack.c.l.b16 %v6842
        %v7216 = vunpack.c.l.b16 %v6852
        %v7217 = vunpack.c.l.b16 %v6862
        %v7218 = vunpack.c.l.b16 %v6872
        %v7219 = vunpack.c.l.b16 %v6886
        %v7220 = vunpack.c.l.b16 %v6896
        %v7221 = vunpack.c.l.b16 %v6906
        %v7222 = vunpack.c.l.b16 %v6916
        %v7223 = vunpack.c.l.b16 %v6930
        %v7224 = vunpack.c.l.b16 %v6940
        %v7225 = vunpack.c.l.b16 %v6950
        %v7226 = vunpack.c.l.b16 %v6960
        %v7227 = vunpack.c.l.b16 %v6974
        %v7228 = vunpack.c.l.b16 %v6984
        %v7229 = vunpack.c.l.b16 %v6994
        %v7230 = vunpack.c.l.b16 %v7004
        %v7231 = vunpack.c.l.b16 %v7018
        %v7232 = vunpack.c.l.b16 %v7028
        %v7233 = vunpack.c.l.b16 %v7038
        %v7234 = vunpack.c.l.b16 %v7048
        %v7235 = vunpack.c.l.b16 %v7062
        %v7236 = vunpack.c.l.b16 %v7072
        %v7237 = vunpack.c.l.b16 %v7082
        %v7238 = vunpack.c.l.b16 %v7092
        %v7239 = vunpack.c.l.b16 %v7106
        %v7240 = vunpack.c.l.b16 %v7116
        %v7241 = vunpack.c.l.b16 %v7126
        %v7242 = vunpack.c.l.b16 %v7136
        %v7243 = vunpack.c.l.b16 %v7150
        %v7244 = vunpack.c.l.b16 %v7160
        %v7245 = vunpack.c.l.b16 %v7170
        %v7246 = vunpack.c.l.b16 %v7180
        %v7247 = vpack.c.b16 %v7184, %v7183
        %v7248 = vpack.c.b16 %v7186, %v7185
        %v7249 = vpack.c.b16 %v7188, %v7187
        %v7250 = vpack.c.b16 %v7190, %v7189
        %v7251 = vpack.c.b16 %v7192, %v7191
        %v7252 = vpack.c.b16 %v7194, %v7193
        %v7253 = vpack.c.b16 %v7196, %v7195
        %v7254 = vpack.c.b16 %v7198, %v7197
        %v7255 = vpack.c.b16 %v7200, %v7199
        %v7256 = vpack.c.b16 %v7202, %v7201
        %v7257 = vpack.c.b16 %v7204, %v7203
        %v7258 = vpack.c.b16 %v7206, %v7205
        %v7259 = vpack.c.b16 %v7208, %v7207
        %v7260 = vpack.c.b16 %v7210, %v7209
        %v7261 = vpack.c.b16 %v7212, %v7211
        %v7262 = vpack.c.b16 %v7214, %v7213
        %v7263 = vpack.c.b16 %v7216, %v7215
        %v7264 = vpack.c.b16 %v7218, %v7217
        %v7265 = vpack.c.b16 %v7220, %v7219
        %v7266 = vpack.c.b16 %v7222, %v7221
        %v7267 = vpack.c.b16 %v7224, %v7223
        %v7268 = vpack.c.b16 %v7226, %v7225
        %v7269 = vpack.c.b16 %v7228, %v7227
        %v7270 = vpack.c.b16 %v7230, %v7229
        %v7271 = vpack.c.b16 %v7232, %v7231
        %v7272 = vpack.c.b16 %v7234, %v7233
        %v7273 = vpack.c.b16 %v7236, %v7235
        %v7274 = vpack.c.b16 %v7238, %v7237
        %v7275 = vpack.c.b16 %v7240, %v7239
        %v7276 = vpack.c.b16 %v7242, %v7241
        %v7277 = vpack.c.b16 %v7244, %v7243
        %v7278 = vpack.c.b16 %v7246, %v7245
        %v7280 = vsel %vm1098, %v7247, 0
        %v7283 = vsel %vm1098, %v7248, 0
        %v7286 = vsel %vm1098, %v7249, 0
        %v7289 = vsel %vm1098, %v7250, 0
        %v7292 = vsel %vm1098, %v7251, 0
        %v7295 = vsel %vm1098, %v7252, 0
        %v7298 = vsel %vm1098, %v7253, 0
        %v7301 = vsel %vm1098, %v7254, 0
        %v7304 = vsel %vm1098, %v7255, 0
        %v7307 = vsel %vm1098, %v7256, 0
        %v7310 = vsel %vm1098, %v7257, 0
        %v7313 = vsel %vm1098, %v7258, 0
        %v7316 = vsel %vm1098, %v7259, 0
        %v7319 = vsel %vm1098, %v7260, 0
        %v7322 = vsel %vm1098, %v7261, 0
        %v7325 = vsel %vm1098, %v7262, 0
        %v7328 = vsel %vm1098, %v7263, 0
        %v7331 = vsel %vm1098, %v7264, 0
        %v7334 = vsel %vm1098, %v7265, 0
        %v7337 = vsel %vm1098, %v7266, 0
        %v7340 = vsel %vm1098, %v7267, 0
        %v7343 = vsel %vm1098, %v7268, 0
        %v7346 = vsel %vm1098, %v7269, 0
        %v7349 = vsel %vm1098, %v7270, 0
        %v7352 = vsel %vm1098, %v7271, 0
        %v7355 = vsel %vm1098, %v7272, 0
        %v7358 = vsel %vm1098, %v7273, 0
        %v7361 = vsel %vm1098, %v7274, 0
        %v7364 = vsel %vm1098, %v7275, 0
        %v7367 = vsel %vm1098, %v7276, 0
        %v7370 = vsel %vm1098, %v7277, 0
        %v7373 = vsel %vm1098, %v7278, 0
        %v7376 = vsel %vm1195, %v7182, 0
        %7378 = vmatprep.subr.bf16.mxu0 0
        %7379 = vmatpush1.bf16.msra.mxu0 %v7376
        %7380 = vmatprep.subr.bf16.mxu0 0
        %7381 = vmatpush1.bf16.msra.mxu0 0
        %7382 = vmatprep.subr.bf16.mxu0 0
        %7383 = vmatpush1.bf16.msra.mxu0 0
        %7384 = vmatprep.subr.bf16.mxu0 0
        %7385 = vmatpush1.bf16.msra.mxu0 0
        %7386 = vmatprep.subr.bf16.mxu0 0
        %7387 = vmatpush1.bf16.msra.mxu0 0
        %7388 = vmatprep.subr.bf16.mxu0 0
        %7389 = vmatpush1.bf16.msra.mxu0 0
        %7390 = vmatprep.subr.bf16.mxu0 0
        %7391 = vmatpush1.bf16.msra.mxu0 0
        %7392 = vmatprep.subr.bf16.mxu0 0
        %7393 = vmatpush1.bf16.msra.mxu0 0
        %7394 = vmatprep.subr.bf16.mxu0 0
        %7395 = vmatpush1.bf16.msra.mxu0 0
        %7396 = vmatprep.subr.bf16.mxu0 0
        %7397 = vmatpush1.bf16.msra.mxu0 0
        %7398 = vmatprep.subr.bf16.mxu0 0
        %7399 = vmatpush1.bf16.msra.mxu0 0
        %7400 = vmatprep.subr.bf16.mxu0 0
        %7401 = vmatpush1.bf16.msra.mxu0 0
        %7402 = vmatprep.subr.bf16.mxu0 0
        %7403 = vmatpush1.bf16.msra.mxu0 0
        %7404 = vmatprep.subr.bf16.mxu0 0
        %7405 = vmatpush1.bf16.msra.mxu0 0
        %7406 = vmatprep.subr.bf16.mxu0 0
        %7407 = vmatpush1.bf16.msra.mxu0 0
        %7408 = vmatprep.subr.bf16.mxu0 0
        %7409 = vmatpush1.bf16.msra.mxu0 0
        %7410 = vmatprep.mubr.bf16.mxu0 0
        %7411 = vmatmul.mubr.bf16.gmra.mrb[0].mxu0 %v7280
        %v7412 = vpop.f32.mrb[0].mxu0
        %v7413 = vadd.f32 0.0, %v7412
        %v7414 = vpop.f32.mrb[0].mxu0
        %v7415 = vpop.f32.mrb[0].mxu0
        %v7416 = vadd.f32 0.0, %v7415
        %v7417 = vpop.f32.mrb[0].mxu0
        %7418 = vmatprep.mubr.bf16.mxu0 0
        %7419 = vmatmul.mubr.bf16.gmra.mrb[0].mxu0 %v7283
        %v7420 = vpop.f32.mrb[0].mxu0
        %v7421 = vadd.f32 0.0, %v7420
        %v7422 = vpop.f32.mrb[0].mxu0
        %v7423 = vpop.f32.mrb[0].mxu0
        %v7424 = vadd.f32 0.0, %v7423
        %v7425 = vpop.f32.mrb[0].mxu0
        %7426 = vmatprep.mubr.bf16.mxu0 0
        %7427 = vmatmul.mubr.bf16.gmra.mrb[0].mxu0 %v7286
        %v7428 = vpop.f32.mrb[0].mxu0
        %v7429 = vadd.f32 0.0, %v7428
        %v7430 = vpop.f32.mrb[0].mxu0
        %v7431 = vpop.f32.mrb[0].mxu0
        %v7432 = vadd.f32 0.0, %v7431
        %v7433 = vpop.f32.mrb[0].mxu0
        %7434 = vmatprep.mubr.bf16.mxu0 0
        %7435 = vmatmul.mubr.bf16.gmra.mrb[0].mxu0 %v7289
        %v7436 = vpop.f32.mrb[0].mxu0
        %v7437 = vadd.f32 0.0, %v7436
        %v7438 = vpop.f32.mrb[0].mxu0
        %v7439 = vpop.f32.mrb[0].mxu0
        %v7440 = vadd.f32 0.0, %v7439
        %v7441 = vpop.f32.mrb[0].mxu0
        %7442 = vmatprep.mubr.bf16.mxu0 0
        %7443 = vmatmul.mubr.bf16.gmra.mrb[0].mxu0 %v7292
        %v7444 = vpop.f32.mrb[0].mxu0
        %v7445 = vadd.f32 0.0, %v7444
        %v7446 = vpop.f32.mrb[0].mxu0
        %v7447 = vpop.f32.mrb[0].mxu0
        %v7448 = vadd.f32 0.0, %v7447
        %v7449 = vpop.f32.mrb[0].mxu0
        %7450 = vmatprep.mubr.bf16.mxu0 0
        %7451 = vmatmul.mubr.bf16.gmra.mrb[0].mxu0 %v7295
        %v7452 = vpop.f32.mrb[0].mxu0
        %v7453 = vadd.f32 0.0, %v7452
        %v7454 = vpop.f32.mrb[0].mxu0
        %v7455 = vpop.f32.mrb[0].mxu0
        %v7456 = vadd.f32 0.0, %v7455
        %v7457 = vpop.f32.mrb[0].mxu0
        %7458 = vmatprep.mubr.bf16.mxu0 0
        %7459 = vmatmul.mubr.bf16.gmra.mrb[0].mxu0 %v7298
        %v7460 = vpop.f32.mrb[0].mxu0
        %v7461 = vadd.f32 0.0, %v7460
        %v7462 = vpop.f32.mrb[0].mxu0
        %v7463 = vpop.f32.mrb[0].mxu0
        %v7464 = vadd.f32 0.0, %v7463
        %v7465 = vpop.f32.mrb[0].mxu0
        %7466 = vmatprep.mubr.bf16.mxu0 0
        %7467 = vmatmul.mubr.bf16.gmra.mrb[0].mxu0 %v7301
        %v7468 = vpop.f32.mrb[0].mxu0
        %v7469 = vadd.f32 0.0, %v7468
        %v7470 = vpop.f32.mrb[0].mxu0
        %v7471 = vpop.f32.mrb[0].mxu0
        %v7472 = vadd.f32 0.0, %v7471
        %v7473 = vpop.f32.mrb[0].mxu0
        %7474 = vmatprep.mubr.bf16.mxu0 0
        %7475 = vmatmul.mubr.bf16.gmra.mrb[0].mxu0 %v7304
        %v7476 = vpop.f32.mrb[0].mxu0
        %v7477 = vadd.f32 0.0, %v7476
        %v7478 = vpop.f32.mrb[0].mxu0
        %v7479 = vpop.f32.mrb[0].mxu0
        %v7480 = vadd.f32 0.0, %v7479
        %v7481 = vpop.f32.mrb[0].mxu0
        %7482 = vmatprep.mubr.bf16.mxu0 0
        %7483 = vmatmul.mubr.bf16.gmra.mrb[0].mxu0 %v7307
        %v7484 = vpop.f32.mrb[0].mxu0
        %v7485 = vadd.f32 0.0, %v7484
        %v7486 = vpop.f32.mrb[0].mxu0
        %v7487 = vpop.f32.mrb[0].mxu0
        %v7488 = vadd.f32 0.0, %v7487
        %v7489 = vpop.f32.mrb[0].mxu0
        %7490 = vmatprep.mubr.bf16.mxu0 0
        %7491 = vmatmul.mubr.bf16.gmra.mrb[0].mxu0 %v7310
        %v7492 = vpop.f32.mrb[0].mxu0
        %v7493 = vadd.f32 0.0, %v7492
        %v7494 = vpop.f32.mrb[0].mxu0
        %v7495 = vpop.f32.mrb[0].mxu0
        %v7496 = vadd.f32 0.0, %v7495
        %v7497 = vpop.f32.mrb[0].mxu0
        %7498 = vmatprep.mubr.bf16.mxu0 0
        %7499 = vmatmul.mubr.bf16.gmra.mrb[0].mxu0 %v7313
        %v7500 = vpop.f32.mrb[0].mxu0
        %v7501 = vadd.f32 0.0, %v7500
        %v7502 = vpop.f32.mrb[0].mxu0
        %v7503 = vpop.f32.mrb[0].mxu0
        %v7504 = vadd.f32 0.0, %v7503
        %v7505 = vpop.f32.mrb[0].mxu0
        %7506 = vmatprep.mubr.bf16.mxu0 0
        %7507 = vmatmul.mubr.bf16.gmra.mrb[0].mxu0 %v7316
        %v7508 = vpop.f32.mrb[0].mxu0
        %v7509 = vadd.f32 0.0, %v7508
        %v7510 = vpop.f32.mrb[0].mxu0
        %v7511 = vpop.f32.mrb[0].mxu0
        %v7512 = vadd.f32 0.0, %v7511
        %v7513 = vpop.f32.mrb[0].mxu0
        %7514 = vmatprep.mubr.bf16.mxu0 0
        %7515 = vmatmul.mubr.bf16.gmra.mrb[0].mxu0 %v7319
        %v7516 = vpop.f32.mrb[0].mxu0
        %v7517 = vadd.f32 0.0, %v7516
        %v7518 = vpop.f32.mrb[0].mxu0
        %v7519 = vpop.f32.mrb[0].mxu0
        %v7520 = vadd.f32 0.0, %v7519
        %v7521 = vpop.f32.mrb[0].mxu0
        %7522 = vmatprep.mubr.bf16.mxu0 0
        %7523 = vmatmul.mubr.bf16.gmra.mrb[0].mxu0 %v7322
        %v7524 = vpop.f32.mrb[0].mxu0
        %v7525 = vadd.f32 0.0, %v7524
        %v7526 = vpop.f32.mrb[0].mxu0
        %v7527 = vpop.f32.mrb[0].mxu0
        %v7528 = vadd.f32 0.0, %v7527
        %v7529 = vpop.f32.mrb[0].mxu0
        %7530 = vmatprep.mubr.bf16.mxu0 0
        %7531 = vmatmul.mubr.bf16.gmra.mrb[0].mxu0 %v7325
        %v7532 = vpop.f32.mrb[0].mxu0
        %v7533 = vadd.f32 0.0, %v7532
        %v7534 = vpop.f32.mrb[0].mxu0
        %v7535 = vpop.f32.mrb[0].mxu0
        %v7536 = vadd.f32 0.0, %v7535
        %v7537 = vpop.f32.mrb[0].mxu0
        %7538 = vmatprep.mubr.bf16.mxu0 0
        %7539 = vmatmul.mubr.bf16.gmra.mrb[0].mxu0 %v7328
        %v7540 = vpop.f32.mrb[0].mxu0
        %v7541 = vadd.f32 0.0, %v7540
        %v7542 = vpop.f32.mrb[0].mxu0
        %v7543 = vpop.f32.mrb[0].mxu0
        %v7544 = vadd.f32 0.0, %v7543
        %v7545 = vpop.f32.mrb[0].mxu0
        %7546 = vmatprep.mubr.bf16.mxu0 0
        %7547 = vmatmul.mubr.bf16.gmra.mrb[0].mxu0 %v7331
        %v7548 = vpop.f32.mrb[0].mxu0
        %v7549 = vadd.f32 0.0, %v7548
        %v7550 = vpop.f32.mrb[0].mxu0
        %v7551 = vpop.f32.mrb[0].mxu0
        %v7552 = vadd.f32 0.0, %v7551
        %v7553 = vpop.f32.mrb[0].mxu0
        %7554 = vmatprep.mubr.bf16.mxu0 0
        %7555 = vmatmul.mubr.bf16.gmra.mrb[0].mxu0 %v7334
        %v7556 = vpop.f32.mrb[0].mxu0
        %v7557 = vadd.f32 0.0, %v7556
        %v7558 = vpop.f32.mrb[0].mxu0
        %v7559 = vpop.f32.mrb[0].mxu0
        %v7560 = vadd.f32 0.0, %v7559
        %v7561 = vpop.f32.mrb[0].mxu0
        %7562 = vmatprep.mubr.bf16.mxu0 0
        %7563 = vmatmul.mubr.bf16.gmra.mrb[0].mxu0 %v7337
        %v7564 = vpop.f32.mrb[0].mxu0
        %v7565 = vadd.f32 0.0, %v7564
        %v7566 = vpop.f32.mrb[0].mxu0
        %v7567 = vpop.f32.mrb[0].mxu0
        %v7568 = vadd.f32 0.0, %v7567
        %v7569 = vpop.f32.mrb[0].mxu0
        %7570 = vmatprep.mubr.bf16.mxu0 0
        %7571 = vmatmul.mubr.bf16.gmra.mrb[0].mxu0 %v7340
        %v7572 = vpop.f32.mrb[0].mxu0
        %v7573 = vadd.f32 0.0, %v7572
        %v7574 = vpop.f32.mrb[0].mxu0
        %v7575 = vpop.f32.mrb[0].mxu0
        %v7576 = vadd.f32 0.0, %v7575
        %v7577 = vpop.f32.mrb[0].mxu0
        %7578 = vmatprep.mubr.bf16.mxu0 0
        %7579 = vmatmul.mubr.bf16.gmra.mrb[0].mxu0 %v7343
        %v7580 = vpop.f32.mrb[0].mxu0
        %v7581 = vadd.f32 0.0, %v7580
        %v7582 = vpop.f32.mrb[0].mxu0
        %v7583 = vpop.f32.mrb[0].mxu0
        %v7584 = vadd.f32 0.0, %v7583
        %v7585 = vpop.f32.mrb[0].mxu0
        %7586 = vmatprep.mubr.bf16.mxu0 0
        %7587 = vmatmul.mubr.bf16.gmra.mrb[0].mxu0 %v7346
        %v7588 = vpop.f32.mrb[0].mxu0
        %v7589 = vadd.f32 0.0, %v7588
        %v7590 = vpop.f32.mrb[0].mxu0
        %v7591 = vpop.f32.mrb[0].mxu0
        %v7592 = vadd.f32 0.0, %v7591
        %v7593 = vpop.f32.mrb[0].mxu0
        %7594 = vmatprep.mubr.bf16.mxu0 0
        %7595 = vmatmul.mubr.bf16.gmra.mrb[0].mxu0 %v7349
        %v7596 = vpop.f32.mrb[0].mxu0
        %v7597 = vadd.f32 0.0, %v7596
        %v7598 = vpop.f32.mrb[0].mxu0
        %v7599 = vpop.f32.mrb[0].mxu0
        %v7600 = vadd.f32 0.0, %v7599
        %v7601 = vpop.f32.mrb[0].mxu0
        %7602 = vmatprep.mubr.bf16.mxu0 0
        %7603 = vmatmul.mubr.bf16.gmra.mrb[0].mxu0 %v7352
        %v7604 = vpop.f32.mrb[0].mxu0
        %v7605 = vadd.f32 0.0, %v7604
        %v7606 = vpop.f32.mrb[0].mxu0
        %v7607 = vpop.f32.mrb[0].mxu0
        %v7608 = vadd.f32 0.0, %v7607
        %v7609 = vpop.f32.mrb[0].mxu0
        %7610 = vmatprep.mubr.bf16.mxu0 0
        %7611 = vmatmul.mubr.bf16.gmra.mrb[0].mxu0 %v7355
        %v7612 = vpop.f32.mrb[0].mxu0
        %v7613 = vadd.f32 0.0, %v7612
        %v7614 = vpop.f32.mrb[0].mxu0
        %v7615 = vpop.f32.mrb[0].mxu0
        %v7616 = vadd.f32 0.0, %v7615
        %v7617 = vpop.f32.mrb[0].mxu0
        %7618 = vmatprep.mubr.bf16.mxu0 0
        %7619 = vmatmul.mubr.bf16.gmra.mrb[0].mxu0 %v7358
        %v7620 = vpop.f32.mrb[0].mxu0
        %v7621 = vadd.f32 0.0, %v7620
        %v7622 = vpop.f32.mrb[0].mxu0
        %v7623 = vpop.f32.mrb[0].mxu0
        %v7624 = vadd.f32 0.0, %v7623
        %v7625 = vpop.f32.mrb[0].mxu0
        %7626 = vmatprep.mubr.bf16.mxu0 0
        %7627 = vmatmul.mubr.bf16.gmra.mrb[0].mxu0 %v7361
        %v7628 = vpop.f32.mrb[0].mxu0
        %v7629 = vadd.f32 0.0, %v7628
        %v7630 = vpop.f32.mrb[0].mxu0
        %v7631 = vpop.f32.mrb[0].mxu0
        %v7632 = vadd.f32 0.0, %v7631
        %v7633 = vpop.f32.mrb[0].mxu0
        %7634 = vmatprep.mubr.bf16.mxu0 0
        %7635 = vmatmul.mubr.bf16.gmra.mrb[0].mxu0 %v7364
        %v7636 = vpop.f32.mrb[0].mxu0
        %v7637 = vadd.f32 0.0, %v7636
        %v7638 = vpop.f32.mrb[0].mxu0
        %v7639 = vpop.f32.mrb[0].mxu0
        %v7640 = vadd.f32 0.0, %v7639
        %v7641 = vpop.f32.mrb[0].mxu0
        %7642 = vmatprep.mubr.bf16.mxu0 0
        %7643 = vmatmul.mubr.bf16.gmra.mrb[0].mxu0 %v7367
        %v7644 = vpop.f32.mrb[0].mxu0
        %v7645 = vadd.f32 0.0, %v7644
        %v7646 = vpop.f32.mrb[0].mxu0
        %v7647 = vpop.f32.mrb[0].mxu0
        %v7648 = vadd.f32 0.0, %v7647
        %v7649 = vpop.f32.mrb[0].mxu0
        %7650 = vmatprep.mubr.bf16.mxu0 0
        %7651 = vmatmul.mubr.bf16.gmra.mrb[0].mxu0 %v7370
        %v7652 = vpop.f32.mrb[0].mxu0
        %v7653 = vadd.f32 0.0, %v7652
        %v7654 = vpop.f32.mrb[0].mxu0
        %v7655 = vpop.f32.mrb[0].mxu0
        %v7656 = vadd.f32 0.0, %v7655
        %v7657 = vpop.f32.mrb[0].mxu0
        %7658 = vmatprep.mubr.bf16.mxu0 0
        %7659 = vmatmul.mubr.bf16.gmra.mrb[0].mxu0 %v7373
        %v7660 = vpop.f32.mrb[0].mxu0
        %v7661 = vadd.f32 0.0, %v7660
        %v7662 = vpop.f32.mrb[0].mxu0
        %v7663 = vpop.f32.mrb[0].mxu0
        %v7664 = vadd.f32 0.0, %v7663
        %v7665 = vpop.f32.mrb[0].mxu0
        %7666 = vdwg.mxu0
        %v7667 = vadd.f32 %v6333, %v7413
        %v7668 = vadd.f32 %v6334, %v7416
        %v7669 = vadd.f32 %v6335, %v7421
        %v7670 = vadd.f32 %v6336, %v7424
        %v7671 = vadd.f32 %v6337, %v7429
        %v7672 = vadd.f32 %v6338, %v7432
        %v7673 = vadd.f32 %v6339, %v7437
        %v7674 = vadd.f32 %v6340, %v7440
        %v7675 = vadd.f32 %v6341, %v7445
        %v7676 = vadd.f32 %v6342, %v7448
        %v7677 = vadd.f32 %v6343, %v7453
        %v7678 = vadd.f32 %v6344, %v7456
        %v7679 = vadd.f32 %v6345, %v7461
        %v7680 = vadd.f32 %v6346, %v7464
        %v7681 = vadd.f32 %v6347, %v7469
        %v7682 = vadd.f32 %v6348, %v7472
        %v7683 = vadd.f32 %v6349, %v7477
        %v7684 = vadd.f32 %v6350, %v7480
        %v7685 = vadd.f32 %v6351, %v7485
        %v7686 = vadd.f32 %v6352, %v7488
        %v7687 = vadd.f32 %v6353, %v7493
        %v7688 = vadd.f32 %v6354, %v7496
        %v7689 = vadd.f32 %v6355, %v7501
        %v7690 = vadd.f32 %v6356, %v7504
        %v7691 = vadd.f32 %v6357, %v7509
        %v7692 = vadd.f32 %v6358, %v7512
        %v7693 = vadd.f32 %v6359, %v7517
        %v7694 = vadd.f32 %v6360, %v7520
        %v7695 = vadd.f32 %v6361, %v7525
        %v7696 = vadd.f32 %v6362, %v7528
        %v7697 = vadd.f32 %v6363, %v7533
        %v7698 = vadd.f32 %v6364, %v7536
        %v7699 = vadd.f32 %v6365, %v7541
        %v7700 = vadd.f32 %v6366, %v7544
        %v7701 = vadd.f32 %v6367, %v7549
        %v7702 = vadd.f32 %v6368, %v7552
        %v7703 = vadd.f32 %v6369, %v7557
        %v7704 = vadd.f32 %v6370, %v7560
        %v7705 = vadd.f32 %v6371, %v7565
        %v7706 = vadd.f32 %v6372, %v7568
        %v7707 = vadd.f32 %v6373, %v7573
        %v7708 = vadd.f32 %v6374, %v7576
        %v7709 = vadd.f32 %v6375, %v7581
        %v7710 = vadd.f32 %v6376, %v7584
        %v7711 = vadd.f32 %v6377, %v7589
        %v7712 = vadd.f32 %v6378, %v7592
        %v7713 = vadd.f32 %v6379, %v7597
        %v7714 = vadd.f32 %v6380, %v7600
        %v7715 = vadd.f32 %v6381, %v7605
        %v7716 = vadd.f32 %v6382, %v7608
        %v7717 = vadd.f32 %v6383, %v7613
        %v7718 = vadd.f32 %v6384, %v7616
        %v7719 = vadd.f32 %v6385, %v7621
        %v7720 = vadd.f32 %v6386, %v7624
        %v7721 = vadd.f32 %v6387, %v7629
        %v7722 = vadd.f32 %v6388, %v7632
        %v7723 = vadd.f32 %v6389, %v7637
        %v7724 = vadd.f32 %v6390, %v7640
        %v7725 = vadd.f32 %v6391, %v7645
        %v7726 = vadd.f32 %v6392, %v7648
        %v7727 = vadd.f32 %v6393, %v7653
        %v7728 = vadd.f32 %v6394, %v7656
        %v7729 = vadd.f32 %v6395, %v7661
        %v7730 = vadd.f32 %v6396, %v7664
        %v7731 = vld [vmem:[%s5718] sm:$0xe]
        %v7732 = vld [vmem:[%s5718 + $0x14] sm:$0xe]
        %v7733 = vld [vmem:[%s5718 + $0x28] sm:$0xe]
        %v7734 = vld [vmem:[%s5718 + $0x3c] sm:$0xe]
        %v7735 = vld [vmem:[%s5718 + $0x50] sm:$0xe]
        %v7736 = vld [vmem:[%s5718 + $0x64] sm:$0xe]
        %v7737 = vld [vmem:[%s5718 + $0x78] sm:$0xe]
        %v7738 = vld [vmem:[%s5718 + $0x8c] sm:$0xe]
        %v7739 = vld [vmem:[%s5718 + $0xa0] sm:$0xe]
        %v7740 = vld [vmem:[%s5718 + $0xb4] sm:$0xe]
        %v7741 = vld [vmem:[%s5718 + $0xc8] sm:$0xe]
        %v7742 = vld [vmem:[%s5718 + $0xdc] sm:$0xe]
        %v7743 = vld [vmem:[%s5718 + $0xf0] sm:$0xe]
        %v7744 = vld [vmem:[%s5718 + $0x104] sm:$0xe]
        %v7745 = vld [vmem:[%s5718 + $0x118] sm:$0xe]
        %v7746 = vld [vmem:[%s5718 + $0x12c] sm:$0xe]
        %v7827 = vrot.slane %v7731, 5
        %v7828 = vrot.slane %v7827, 4
        %v7829 = vrot.slane %v6398, 5
        %v7830 = vsel %vm2086, %v7828, %v7829
        %v7831 = vrot.slane %v7829, 4
        %v7832 = vrot.slane %v6399, 5
        %v7833 = vsel %vm2086, %v7831, %v7832
        %v7834 = vrot.slane %v7832, 4
        %v7835 = vrot.slane %v6400, 5
        %v7836 = vsel %vm2086, %v7834, %v7835
        %v7837 = vrot.slane %v7835, 4
        %v7838 = vrot.slane %v6401, 5
        %v7839 = vsel %vm2086, %v7837, %v7838
        %v7840 = vrot.slane %v7732, 5
        %v7841 = vrot.slane %v7840, 4
        %v7842 = vrot.slane %v6403, 5
        %v7843 = vsel %vm2086, %v7841, %v7842
        %v7844 = vrot.slane %v7842, 4
        %v7845 = vrot.slane %v6404, 5
        %v7846 = vsel %vm2086, %v7844, %v7845
        %v7847 = vrot.slane %v7845, 4
        %v7848 = vrot.slane %v6405, 5
        %v7849 = vsel %vm2086, %v7847, %v7848
        %v7850 = vrot.slane %v7848, 4
        %v7851 = vrot.slane %v6406, 5
        %v7852 = vsel %vm2086, %v7850, %v7851
        %v7853 = vrot.slane %v7733, 5
        %v7854 = vrot.slane %v7853, 4
        %v7855 = vrot.slane %v6408, 5
        %v7856 = vsel %vm2086, %v7854, %v7855
        %v7857 = vrot.slane %v7855, 4
        %v7858 = vrot.slane %v6409, 5
        %v7859 = vsel %vm2086, %v7857, %v7858
        %v7860 = vrot.slane %v7858, 4
        %v7861 = vrot.slane %v6410, 5
        %v7862 = vsel %vm2086, %v7860, %v7861
        %v7863 = vrot.slane %v7861, 4
        %v7864 = vrot.slane %v6411, 5
        %v7865 = vsel %vm2086, %v7863, %v7864
        %v7866 = vrot.slane %v7734, 5
        %v7867 = vrot.slane %v7866, 4
        %v7868 = vrot.slane %v6413, 5
        %v7869 = vsel %vm2086, %v7867, %v7868
        %v7870 = vrot.slane %v7868, 4
        %v7871 = vrot.slane %v6414, 5
        %v7872 = vsel %vm2086, %v7870, %v7871
        %v7873 = vrot.slane %v7871, 4
        %v7874 = vrot.slane %v6415, 5
        %v7875 = vsel %vm2086, %v7873, %v7874
        %v7876 = vrot.slane %v7874, 4
        %v7877 = vrot.slane %v6416, 5
        %v7878 = vsel %vm2086, %v7876, %v7877
        %v7879 = vrot.slane %v7735, 5
        %v7880 = vrot.slane %v7879, 4
        %v7881 = vrot.slane %v6418, 5
        %v7882 = vsel %vm2086, %v7880, %v7881
        %v7883 = vrot.slane %v7881, 4
        %v7884 = vrot.slane %v6419, 5
        %v7885 = vsel %vm2086, %v7883, %v7884
        %v7886 = vrot.slane %v7884, 4
        %v7887 = vrot.slane %v6420, 5
        %v7888 = vsel %vm2086, %v7886, %v7887
        %v7889 = vrot.slane %v7887, 4
        %v7890 = vrot.slane %v6421, 5
        %v7891 = vsel %vm2086, %v7889, %v7890
        %v7892 = vrot.slane %v7736, 5
        %v7893 = vrot.slane %v7892, 4
        %v7894 = vrot.slane %v6423, 5
        %v7895 = vsel %vm2086, %v7893, %v7894
        %v7896 = vrot.slane %v7894, 4
        %v7897 = vrot.slane %v6424, 5
        %v7898 = vsel %vm2086, %v7896, %v7897
        %v7899 = vrot.slane %v7897, 4
        %v7900 = vrot.slane %v6425, 5
        %v7901 = vsel %vm2086, %v7899, %v7900
        %v7902 = vrot.slane %v7900, 4
        %v7903 = vrot.slane %v6426, 5
        %v7904 = vsel %vm2086, %v7902, %v7903
        %v7905 = vrot.slane %v7737, 5
        %v7906 = vrot.slane %v7905, 4
        %v7907 = vrot.slane %v6428, 5
        %v7908 = vsel %vm2086, %v7906, %v7907
        %v7909 = vrot.slane %v7907, 4
        %v7910 = vrot.slane %v6429, 5
        %v7911 = vsel %vm2086, %v7909, %v7910
        %v7912 = vrot.slane %v7910, 4
        %v7913 = vrot.slane %v6430, 5
        %v7914 = vsel %vm2086, %v7912, %v7913
        %v7915 = vrot.slane %v7913, 4
        %v7916 = vrot.slane %v6431, 5
        %v7917 = vsel %vm2086, %v7915, %v7916
        %v7918 = vrot.slane %v7738, 5
        %v7919 = vrot.slane %v7918, 4
        %v7920 = vrot.slane %v6433, 5
        %v7921 = vsel %vm2086, %v7919, %v7920
        %v7922 = vrot.slane %v7920, 4
        %v7923 = vrot.slane %v6434, 5
        %v7924 = vsel %vm2086, %v7922, %v7923
        %v7925 = vrot.slane %v7923, 4
        %v7926 = vrot.slane %v6435, 5
        %v7927 = vsel %vm2086, %v7925, %v7926
        %v7928 = vrot.slane %v7926, 4
        %v7929 = vrot.slane %v6436, 5
        %v7930 = vsel %vm2086, %v7928, %v7929
        %v7931 = vrot.slane %v7739, 5
        %v7932 = vrot.slane %v7931, 4
        %v7933 = vrot.slane %v6438, 5
        %v7934 = vsel %vm2086, %v7932, %v7933
        %v7935 = vrot.slane %v7933, 4
        %v7936 = vrot.slane %v6439, 5
        %v7937 = vsel %vm2086, %v7935, %v7936
        %v7938 = vrot.slane %v7936, 4
        %v7939 = vrot.slane %v6440, 5
        %v7940 = vsel %vm2086, %v7938, %v7939
        %v7941 = vrot.slane %v7939, 4
        %v7942 = vrot.slane %v6441, 5
        %v7943 = vsel %vm2086, %v7941, %v7942
        %v7944 = vrot.slane %v7740, 5
        %v7945 = vrot.slane %v7944, 4
        %v7946 = vrot.slane %v6443, 5
        %v7947 = vsel %vm2086, %v7945, %v7946
        %v7948 = vrot.slane %v7946, 4
        %v7949 = vrot.slane %v6444, 5
        %v7950 = vsel %vm2086, %v7948, %v7949
        %v7951 = vrot.slane %v7949, 4
        %v7952 = vrot.slane %v6445, 5
        %v7953 = vsel %vm2086, %v7951, %v7952
        %v7954 = vrot.slane %v7952, 4
        %v7955 = vrot.slane %v6446, 5
        %v7956 = vsel %vm2086, %v7954, %v7955
        %v7957 = vrot.slane %v7741, 5
        %v7958 = vrot.slane %v7957, 4
        %v7959 = vrot.slane %v6448, 5
        %v7960 = vsel %vm2086, %v7958, %v7959
        %v7961 = vrot.slane %v7959, 4
        %v7962 = vrot.slane %v6449, 5
        %v7963 = vsel %vm2086, %v7961, %v7962
        %v7964 = vrot.slane %v7962, 4
        %v7965 = vrot.slane %v6450, 5
        %v7966 = vsel %vm2086, %v7964, %v7965
        %v7967 = vrot.slane %v7965, 4
        %v7968 = vrot.slane %v6451, 5
        %v7969 = vsel %vm2086, %v7967, %v7968
        %v7970 = vrot.slane %v7742, 5
        %v7971 = vrot.slane %v7970, 4
        %v7972 = vrot.slane %v6453, 5
        %v7973 = vsel %vm2086, %v7971, %v7972
        %v7974 = vrot.slane %v7972, 4
        %v7975 = vrot.slane %v6454, 5
        %v7976 = vsel %vm2086, %v7974, %v7975
        %v7977 = vrot.slane %v7975, 4
        %v7978 = vrot.slane %v6455, 5
        %v7979 = vsel %vm2086, %v7977, %v7978
        %v7980 = vrot.slane %v7978, 4
        %v7981 = vrot.slane %v6456, 5
        %v7982 = vsel %vm2086, %v7980, %v7981
        %v7983 = vrot.slane %v7743, 5
        %v7984 = vrot.slane %v7983, 4
        %v7985 = vrot.slane %v6458, 5
        %v7986 = vsel %vm2086, %v7984, %v7985
        %v7987 = vrot.slane %v7985, 4
        %v7988 = vrot.slane %v6459, 5
        %v7989 = vsel %vm2086, %v7987, %v7988
        %v7990 = vrot.slane %v7988, 4
        %v7991 = vrot.slane %v6460, 5
        %v7992 = vsel %vm2086, %v7990, %v7991
        %v7993 = vrot.slane %v7991, 4
        %v7994 = vrot.slane %v6461, 5
        %v7995 = vsel %vm2086, %v7993, %v7994
        %v7996 = vrot.slane %v7744, 5
        %v7997 = vrot.slane %v7996, 4
        %v7998 = vrot.slane %v6463, 5
        %v7999 = vsel %vm2086, %v7997, %v7998
        %v8000 = vrot.slane %v7998, 4
        %v8001 = vrot.slane %v6464, 5
        %v8002 = vsel %vm2086, %v8000, %v8001
        %v8003 = vrot.slane %v8001, 4
        %v8004 = vrot.slane %v6465, 5
        %v8005 = vsel %vm2086, %v8003, %v8004
        %v8006 = vrot.slane %v8004, 4
        %v8007 = vrot.slane %v6466, 5
        %v8008 = vsel %vm2086, %v8006, %v8007
        %v8009 = vrot.slane %v7745, 5
        %v8010 = vrot.slane %v8009, 4
        %v8011 = vrot.slane %v6468, 5
        %v8012 = vsel %vm2086, %v8010, %v8011
        %v8013 = vrot.slane %v8011, 4
        %v8014 = vrot.slane %v6469, 5
        %v8015 = vsel %vm2086, %v8013, %v8014
        %v8016 = vrot.slane %v8014, 4
        %v8017 = vrot.slane %v6470, 5
        %v8018 = vsel %vm2086, %v8016, %v8017
        %v8019 = vrot.slane %v8017, 4
        %v8020 = vrot.slane %v6471, 5
        %v8021 = vsel %vm2086, %v8019, %v8020
        %v8022 = vrot.slane %v7746, 5
        %v8023 = vrot.slane %v8022, 4
        %v8024 = vrot.slane %v6473, 5
        %v8025 = vsel %vm2086, %v8023, %v8024
        %v8026 = vrot.slane %v8024, 4
        %v8027 = vrot.slane %v6474, 5
        %v8028 = vsel %vm2086, %v8026, %v8027
        %v8029 = vrot.slane %v8027, 4
        %v8030 = vrot.slane %v6475, 5
        %v8031 = vsel %vm2086, %v8029, %v8030
        %v8032 = vrot.slane %v8030, 4
        %v8033 = vrot.slane %v6476, 5
        %v8034 = vsel %vm2086, %v8032, %v8033
        %s8035 = scalar_lea.vmem %s1, 16
        %v8036 = vld [vmem:[%s8035] sm:$0x3]
        %v8037 = vunpack.c.l.b16 %v7830
        %v8038 = vunpack.c.l.b16 %v7833
        %v8039 = vunpack.c.l.b16 %v7836
        %v8040 = vunpack.c.l.b16 %v7839
        %v8041 = vunpack.c.l.b16 %v7843
        %v8042 = vunpack.c.l.b16 %v7846
        %v8043 = vunpack.c.l.b16 %v7849
        %v8044 = vunpack.c.l.b16 %v7852
        %v8045 = vunpack.c.l.b16 %v7856
        %v8046 = vunpack.c.l.b16 %v7859
        %v8047 = vunpack.c.l.b16 %v7862
        %v8048 = vunpack.c.l.b16 %v7865
        %v8049 = vunpack.c.l.b16 %v7869
        %v8050 = vunpack.c.l.b16 %v7872
        %v8051 = vunpack.c.l.b16 %v7875
        %v8052 = vunpack.c.l.b16 %v7878
        %v8053 = vunpack.c.l.b16 %v7882
        %v8054 = vunpack.c.l.b16 %v7885
        %v8055 = vunpack.c.l.b16 %v7888
        %v8056 = vunpack.c.l.b16 %v7891
        %v8057 = vunpack.c.l.b16 %v7895
        %v8058 = vunpack.c.l.b16 %v7898
        %v8059 = vunpack.c.l.b16 %v7901
        %v8060 = vunpack.c.l.b16 %v7904
        %v8061 = vunpack.c.l.b16 %v7908
        %v8062 = vunpack.c.l.b16 %v7911
        %v8063 = vunpack.c.l.b16 %v7914
        %v8064 = vunpack.c.l.b16 %v7917
        %v8065 = vunpack.c.l.b16 %v7921
        %v8066 = vunpack.c.l.b16 %v7924
        %v8067 = vunpack.c.l.b16 %v7927
        %v8068 = vunpack.c.l.b16 %v7930
        %v8069 = vunpack.c.l.b16 %v7934
        %v8070 = vunpack.c.l.b16 %v7937
        %v8071 = vunpack.c.l.b16 %v7940
        %v8072 = vunpack.c.l.b16 %v7943
        %v8073 = vunpack.c.l.b16 %v7947
        %v8074 = vunpack.c.l.b16 %v7950
        %v8075 = vunpack.c.l.b16 %v7953
        %v8076 = vunpack.c.l.b16 %v7956
        %v8077 = vunpack.c.l.b16 %v7960
        %v8078 = vunpack.c.l.b16 %v7963
        %v8079 = vunpack.c.l.b16 %v7966
        %v8080 = vunpack.c.l.b16 %v7969
        %v8081 = vunpack.c.l.b16 %v7973
        %v8082 = vunpack.c.l.b16 %v7976
        %v8083 = vunpack.c.l.b16 %v7979
        %v8084 = vunpack.c.l.b16 %v7982
        %v8085 = vunpack.c.l.b16 %v7986
        %v8086 = vunpack.c.l.b16 %v7989
        %v8087 = vunpack.c.l.b16 %v7992
        %v8088 = vunpack.c.l.b16 %v7995
        %v8089 = vunpack.c.l.b16 %v7999
        %v8090 = vunpack.c.l.b16 %v8002
        %v8091 = vunpack.c.l.b16 %v8005
        %v8092 = vunpack.c.l.b16 %v8008
        %v8093 = vunpack.c.l.b16 %v8012
        %v8094 = vunpack.c.l.b16 %v8015
        %v8095 = vunpack.c.l.b16 %v8018
        %v8096 = vunpack.c.l.b16 %v8021
        %v8097 = vunpack.c.l.b16 %v8025
        %v8098 = vunpack.c.l.b16 %v8028
        %v8099 = vunpack.c.l.b16 %v8031
        %v8100 = vunpack.c.l.b16 %v8034
        %v8101 = vpack.c.b16 %v8038, %v8037
        %v8102 = vpack.c.b16 %v8040, %v8039
        %v8103 = vpack.c.b16 %v8042, %v8041
        %v8104 = vpack.c.b16 %v8044, %v8043
        %v8105 = vpack.c.b16 %v8046, %v8045
        %v8106 = vpack.c.b16 %v8048, %v8047
        %v8107 = vpack.c.b16 %v8050, %v8049
        %v8108 = vpack.c.b16 %v8052, %v8051
        %v8109 = vpack.c.b16 %v8054, %v8053
        %v8110 = vpack.c.b16 %v8056, %v8055
        %v8111 = vpack.c.b16 %v8058, %v8057
        %v8112 = vpack.c.b16 %v8060, %v8059
        %v8113 = vpack.c.b16 %v8062, %v8061
        %v8114 = vpack.c.b16 %v8064, %v8063
        %v8115 = vpack.c.b16 %v8066, %v8065
        %v8116 = vpack.c.b16 %v8068, %v8067
        %v8117 = vpack.c.b16 %v8070, %v8069
        %v8118 = vpack.c.b16 %v8072, %v8071
        %v8119 = vpack.c.b16 %v8074, %v8073
        %v8120 = vpack.c.b16 %v8076, %v8075
        %v8121 = vpack.c.b16 %v8078, %v8077
        %v8122 = vpack.c.b16 %v8080, %v8079
        %v8123 = vpack.c.b16 %v8082, %v8081
        %v8124 = vpack.c.b16 %v8084, %v8083
        %v8125 = vpack.c.b16 %v8086, %v8085
        %v8126 = vpack.c.b16 %v8088, %v8087
        %v8127 = vpack.c.b16 %v8090, %v8089
        %v8128 = vpack.c.b16 %v8092, %v8091
        %v8129 = vpack.c.b16 %v8094, %v8093
        %v8130 = vpack.c.b16 %v8096, %v8095
        %v8131 = vpack.c.b16 %v8098, %v8097
        %v8132 = vpack.c.b16 %v8100, %v8099
        %v8134 = vsel %vm1098, %v8101, 0
        %v8137 = vsel %vm1098, %v8102, 0
        %v8140 = vsel %vm1098, %v8103, 0
        %v8143 = vsel %vm1098, %v8104, 0
        %v8146 = vsel %vm1098, %v8105, 0
        %v8149 = vsel %vm1098, %v8106, 0
        %v8152 = vsel %vm1098, %v8107, 0
        %v8155 = vsel %vm1098, %v8108, 0
        %v8158 = vsel %vm1098, %v8109, 0
        %v8161 = vsel %vm1098, %v8110, 0
        %v8164 = vsel %vm1098, %v8111, 0
        %v8167 = vsel %vm1098, %v8112, 0
        %v8170 = vsel %vm1098, %v8113, 0
        %v8173 = vsel %vm1098, %v8114, 0
        %v8176 = vsel %vm1098, %v8115, 0
        %v8179 = vsel %vm1098, %v8116, 0
        %v8182 = vsel %vm1098, %v8117, 0
        %v8185 = vsel %vm1098, %v8118, 0
        %v8188 = vsel %vm1098, %v8119, 0
        %v8191 = vsel %vm1098, %v8120, 0
        %v8194 = vsel %vm1098, %v8121, 0
        %v8197 = vsel %vm1098, %v8122, 0
        %v8200 = vsel %vm1098, %v8123, 0
        %v8203 = vsel %vm1098, %v8124, 0
        %v8206 = vsel %vm1098, %v8125, 0
        %v8209 = vsel %vm1098, %v8126, 0
        %v8212 = vsel %vm1098, %v8127, 0
        %v8215 = vsel %vm1098, %v8128, 0
        %v8218 = vsel %vm1098, %v8129, 0
        %v8221 = vsel %vm1098, %v8130, 0
        %v8224 = vsel %vm1098, %v8131, 0
        %v8227 = vsel %vm1098, %v8132, 0
        %v8230 = vsel %vm1195, %v8036, 0
        %8232 = vmatprep.subr.bf16.mxu0 0
        %8233 = vmatpush1.bf16.msra.mxu0 %v8230
        %8234 = vmatprep.subr.bf16.mxu0 0
        %8235 = vmatpush1.bf16.msra.mxu0 0
        %8236 = vmatprep.subr.bf16.mxu0 0
        %8237 = vmatpush1.bf16.msra.mxu0 0
        %8238 = vmatprep.subr.bf16.mxu0 0
        %8239 = vmatpush1.bf16.msra.mxu0 0
        %8240 = vmatprep.subr.bf16.mxu0 0
        %8241 = vmatpush1.bf16.msra.mxu0 0
        %8242 = vmatprep.subr.bf16.mxu0 0
        %8243 = vmatpush1.bf16.msra.mxu0 0
        %8244 = vmatprep.subr.bf16.mxu0 0
        %8245 = vmatpush1.bf16.msra.mxu0 0
        %8246 = vmatprep.subr.bf16.mxu0 0
        %8247 = vmatpush1.bf16.msra.mxu0 0
        %8248 = vmatprep.subr.bf16.mxu0 0
        %8249 = vmatpush1.bf16.msra.mxu0 0
        %8250 = vmatprep.subr.bf16.mxu0 0
        %8251 = vmatpush1.bf16.msra.mxu0 0
        %8252 = vmatprep.subr.bf16.mxu0 0
        %8253 = vmatpush1.bf16.msra.mxu0 0
        %8254 = vmatprep.subr.bf16.mxu0 0
        %8255 = vmatpush1.bf16.msra.mxu0 0
        %8256 = vmatprep.subr.bf16.mxu0 0
        %8257 = vmatpush1.bf16.msra.mxu0 0
        %8258 = vmatprep.subr.bf16.mxu0 0
        %8259 = vmatpush1.bf16.msra.mxu0 0
        %8260 = vmatprep.subr.bf16.mxu0 0
        %8261 = vmatpush1.bf16.msra.mxu0 0
        %8262 = vmatprep.subr.bf16.mxu0 0
        %8263 = vmatpush1.bf16.msra.mxu0 0
        %8264 = vmatprep.mubr.bf16.mxu0 0
        %8265 = vmatmul.mubr.bf16.gmra.mrb[0].mxu0 %v8134
        %v8266 = vpop.f32.mrb[0].mxu0
        %v8267 = vadd.f32 0.0, %v8266
        %v8268 = vpop.f32.mrb[0].mxu0
        %v8269 = vpop.f32.mrb[0].mxu0
        %v8270 = vadd.f32 0.0, %v8269
        %v8271 = vpop.f32.mrb[0].mxu0
        %8272 = vmatprep.mubr.bf16.mxu0 0
        %8273 = vmatmul.mubr.bf16.gmra.mrb[0].mxu0 %v8137
        %v8274 = vpop.f32.mrb[0].mxu0
        %v8275 = vadd.f32 0.0, %v8274
        %v8276 = vpop.f32.mrb[0].mxu0
        %v8277 = vpop.f32.mrb[0].mxu0
        %v8278 = vadd.f32 0.0, %v8277
        %v8279 = vpop.f32.mrb[0].mxu0
        %8280 = vmatprep.mubr.bf16.mxu0 0
        %8281 = vmatmul.mubr.bf16.gmra.mrb[0].mxu0 %v8140
        %v8282 = vpop.f32.mrb[0].mxu0
        %v8283 = vadd.f32 0.0, %v8282
        %v8284 = vpop.f32.mrb[0].mxu0
        %v8285 = vpop.f32.mrb[0].mxu0
        %v8286 = vadd.f32 0.0, %v8285
        %v8287 = vpop.f32.mrb[0].mxu0
        %8288 = vmatprep.mubr.bf16.mxu0 0
        %8289 = vmatmul.mubr.bf16.gmra.mrb[0].mxu0 %v8143
        %v8290 = vpop.f32.mrb[0].mxu0
        %v8291 = vadd.f32 0.0, %v8290
        %v8292 = vpop.f32.mrb[0].mxu0
        %v8293 = vpop.f32.mrb[0].mxu0
        %v8294 = vadd.f32 0.0, %v8293
        %v8295 = vpop.f32.mrb[0].mxu0
        %8296 = vmatprep.mubr.bf16.mxu0 0
        %8297 = vmatmul.mubr.bf16.gmra.mrb[0].mxu0 %v8146
        %v8298 = vpop.f32.mrb[0].mxu0
        %v8299 = vadd.f32 0.0, %v8298
        %v8300 = vpop.f32.mrb[0].mxu0
        %v8301 = vpop.f32.mrb[0].mxu0
        %v8302 = vadd.f32 0.0, %v8301
        %v8303 = vpop.f32.mrb[0].mxu0
        %8304 = vmatprep.mubr.bf16.mxu0 0
        %8305 = vmatmul.mubr.bf16.gmra.mrb[0].mxu0 %v8149
        %v8306 = vpop.f32.mrb[0].mxu0
        %v8307 = vadd.f32 0.0, %v8306
        %v8308 = vpop.f32.mrb[0].mxu0
        %v8309 = vpop.f32.mrb[0].mxu0
        %v8310 = vadd.f32 0.0, %v8309
        %v8311 = vpop.f32.mrb[0].mxu0
        %8312 = vmatprep.mubr.bf16.mxu0 0
        %8313 = vmatmul.mubr.bf16.gmra.mrb[0].mxu0 %v8152
        %v8314 = vpop.f32.mrb[0].mxu0
        %v8315 = vadd.f32 0.0, %v8314
        %v8316 = vpop.f32.mrb[0].mxu0
        %v8317 = vpop.f32.mrb[0].mxu0
        %v8318 = vadd.f32 0.0, %v8317
        %v8319 = vpop.f32.mrb[0].mxu0
        %8320 = vmatprep.mubr.bf16.mxu0 0
        %8321 = vmatmul.mubr.bf16.gmra.mrb[0].mxu0 %v8155
        %v8322 = vpop.f32.mrb[0].mxu0
        %v8323 = vadd.f32 0.0, %v8322
        %v8324 = vpop.f32.mrb[0].mxu0
        %v8325 = vpop.f32.mrb[0].mxu0
        %v8326 = vadd.f32 0.0, %v8325
        %v8327 = vpop.f32.mrb[0].mxu0
        %8328 = vmatprep.mubr.bf16.mxu0 0
        %8329 = vmatmul.mubr.bf16.gmra.mrb[0].mxu0 %v8158
        %v8330 = vpop.f32.mrb[0].mxu0
        %v8331 = vadd.f32 0.0, %v8330
        %v8332 = vpop.f32.mrb[0].mxu0
        %v8333 = vpop.f32.mrb[0].mxu0
        %v8334 = vadd.f32 0.0, %v8333
        %v8335 = vpop.f32.mrb[0].mxu0
        %8336 = vmatprep.mubr.bf16.mxu0 0
        %8337 = vmatmul.mubr.bf16.gmra.mrb[0].mxu0 %v8161
        %v8338 = vpop.f32.mrb[0].mxu0
        %v8339 = vadd.f32 0.0, %v8338
        %v8340 = vpop.f32.mrb[0].mxu0
        %v8341 = vpop.f32.mrb[0].mxu0
        %v8342 = vadd.f32 0.0, %v8341
        %v8343 = vpop.f32.mrb[0].mxu0
        %8344 = vmatprep.mubr.bf16.mxu0 0
        %8345 = vmatmul.mubr.bf16.gmra.mrb[0].mxu0 %v8164
        %v8346 = vpop.f32.mrb[0].mxu0
        %v8347 = vadd.f32 0.0, %v8346
        %v8348 = vpop.f32.mrb[0].mxu0
        %v8349 = vpop.f32.mrb[0].mxu0
        %v8350 = vadd.f32 0.0, %v8349
        %v8351 = vpop.f32.mrb[0].mxu0
        %8352 = vmatprep.mubr.bf16.mxu0 0
        %8353 = vmatmul.mubr.bf16.gmra.mrb[0].mxu0 %v8167
        %v8354 = vpop.f32.mrb[0].mxu0
        %v8355 = vadd.f32 0.0, %v8354
        %v8356 = vpop.f32.mrb[0].mxu0
        %v8357 = vpop.f32.mrb[0].mxu0
        %v8358 = vadd.f32 0.0, %v8357
        %v8359 = vpop.f32.mrb[0].mxu0
        %8360 = vmatprep.mubr.bf16.mxu0 0
        %8361 = vmatmul.mubr.bf16.gmra.mrb[0].mxu0 %v8170
        %v8362 = vpop.f32.mrb[0].mxu0
        %v8363 = vadd.f32 0.0, %v8362
        %v8364 = vpop.f32.mrb[0].mxu0
        %v8365 = vpop.f32.mrb[0].mxu0
        %v8366 = vadd.f32 0.0, %v8365
        %v8367 = vpop.f32.mrb[0].mxu0
        %8368 = vmatprep.mubr.bf16.mxu0 0
        %8369 = vmatmul.mubr.bf16.gmra.mrb[0].mxu0 %v8173
        %v8370 = vpop.f32.mrb[0].mxu0
        %v8371 = vadd.f32 0.0, %v8370
        %v8372 = vpop.f32.mrb[0].mxu0
        %v8373 = vpop.f32.mrb[0].mxu0
        %v8374 = vadd.f32 0.0, %v8373
        %v8375 = vpop.f32.mrb[0].mxu0
        %8376 = vmatprep.mubr.bf16.mxu0 0
        %8377 = vmatmul.mubr.bf16.gmra.mrb[0].mxu0 %v8176
        %v8378 = vpop.f32.mrb[0].mxu0
        %v8379 = vadd.f32 0.0, %v8378
        %v8380 = vpop.f32.mrb[0].mxu0
        %v8381 = vpop.f32.mrb[0].mxu0
        %v8382 = vadd.f32 0.0, %v8381
        %v8383 = vpop.f32.mrb[0].mxu0
        %8384 = vmatprep.mubr.bf16.mxu0 0
        %8385 = vmatmul.mubr.bf16.gmra.mrb[0].mxu0 %v8179
        %v8386 = vpop.f32.mrb[0].mxu0
        %v8387 = vadd.f32 0.0, %v8386
        %v8388 = vpop.f32.mrb[0].mxu0
        %v8389 = vpop.f32.mrb[0].mxu0
        %v8390 = vadd.f32 0.0, %v8389
        %v8391 = vpop.f32.mrb[0].mxu0
        %8392 = vmatprep.mubr.bf16.mxu0 0
        %8393 = vmatmul.mubr.bf16.gmra.mrb[0].mxu0 %v8182
        %v8394 = vpop.f32.mrb[0].mxu0
        %v8395 = vadd.f32 0.0, %v8394
        %v8396 = vpop.f32.mrb[0].mxu0
        %v8397 = vpop.f32.mrb[0].mxu0
        %v8398 = vadd.f32 0.0, %v8397
        %v8399 = vpop.f32.mrb[0].mxu0
        %8400 = vmatprep.mubr.bf16.mxu0 0
        %8401 = vmatmul.mubr.bf16.gmra.mrb[0].mxu0 %v8185
        %v8402 = vpop.f32.mrb[0].mxu0
        %v8403 = vadd.f32 0.0, %v8402
        %v8404 = vpop.f32.mrb[0].mxu0
        %v8405 = vpop.f32.mrb[0].mxu0
        %v8406 = vadd.f32 0.0, %v8405
        %v8407 = vpop.f32.mrb[0].mxu0
        %8408 = vmatprep.mubr.bf16.mxu0 0
        %8409 = vmatmul.mubr.bf16.gmra.mrb[0].mxu0 %v8188
        %v8410 = vpop.f32.mrb[0].mxu0
        %v8411 = vadd.f32 0.0, %v8410
        %v8412 = vpop.f32.mrb[0].mxu0
        %v8413 = vpop.f32.mrb[0].mxu0
        %v8414 = vadd.f32 0.0, %v8413
        %v8415 = vpop.f32.mrb[0].mxu0
        %8416 = vmatprep.mubr.bf16.mxu0 0
        %8417 = vmatmul.mubr.bf16.gmra.mrb[0].mxu0 %v8191
        %v8418 = vpop.f32.mrb[0].mxu0
        %v8419 = vadd.f32 0.0, %v8418
        %v8420 = vpop.f32.mrb[0].mxu0
        %v8421 = vpop.f32.mrb[0].mxu0
        %v8422 = vadd.f32 0.0, %v8421
        %v8423 = vpop.f32.mrb[0].mxu0
        %8424 = vmatprep.mubr.bf16.mxu0 0
        %8425 = vmatmul.mubr.bf16.gmra.mrb[0].mxu0 %v8194
        %v8426 = vpop.f32.mrb[0].mxu0
        %v8427 = vadd.f32 0.0, %v8426
        %v8428 = vpop.f32.mrb[0].mxu0
        %v8429 = vpop.f32.mrb[0].mxu0
        %v8430 = vadd.f32 0.0, %v8429
        %v8431 = vpop.f32.mrb[0].mxu0
        %8432 = vmatprep.mubr.bf16.mxu0 0
        %8433 = vmatmul.mubr.bf16.gmra.mrb[0].mxu0 %v8197
        %v8434 = vpop.f32.mrb[0].mxu0
        %v8435 = vadd.f32 0.0, %v8434
        %v8436 = vpop.f32.mrb[0].mxu0
        %v8437 = vpop.f32.mrb[0].mxu0
        %v8438 = vadd.f32 0.0, %v8437
        %v8439 = vpop.f32.mrb[0].mxu0
        %8440 = vmatprep.mubr.bf16.mxu0 0
        %8441 = vmatmul.mubr.bf16.gmra.mrb[0].mxu0 %v8200
        %v8442 = vpop.f32.mrb[0].mxu0
        %v8443 = vadd.f32 0.0, %v8442
        %v8444 = vpop.f32.mrb[0].mxu0
        %v8445 = vpop.f32.mrb[0].mxu0
        %v8446 = vadd.f32 0.0, %v8445
        %v8447 = vpop.f32.mrb[0].mxu0
        %8448 = vmatprep.mubr.bf16.mxu0 0
        %8449 = vmatmul.mubr.bf16.gmra.mrb[0].mxu0 %v8203
        %v8450 = vpop.f32.mrb[0].mxu0
        %v8451 = vadd.f32 0.0, %v8450
        %v8452 = vpop.f32.mrb[0].mxu0
        %v8453 = vpop.f32.mrb[0].mxu0
        %v8454 = vadd.f32 0.0, %v8453
        %v8455 = vpop.f32.mrb[0].mxu0
        %8456 = vmatprep.mubr.bf16.mxu0 0
        %8457 = vmatmul.mubr.bf16.gmra.mrb[0].mxu0 %v8206
        %v8458 = vpop.f32.mrb[0].mxu0
        %v8459 = vadd.f32 0.0, %v8458
        %v8460 = vpop.f32.mrb[0].mxu0
        %v8461 = vpop.f32.mrb[0].mxu0
        %v8462 = vadd.f32 0.0, %v8461
        %v8463 = vpop.f32.mrb[0].mxu0
        %8464 = vmatprep.mubr.bf16.mxu0 0
        %8465 = vmatmul.mubr.bf16.gmra.mrb[0].mxu0 %v8209
        %v8466 = vpop.f32.mrb[0].mxu0
        %v8467 = vadd.f32 0.0, %v8466
        %v8468 = vpop.f32.mrb[0].mxu0
        %v8469 = vpop.f32.mrb[0].mxu0
        %v8470 = vadd.f32 0.0, %v8469
        %v8471 = vpop.f32.mrb[0].mxu0
        %8472 = vmatprep.mubr.bf16.mxu0 0
        %8473 = vmatmul.mubr.bf16.gmra.mrb[0].mxu0 %v8212
        %v8474 = vpop.f32.mrb[0].mxu0
        %v8475 = vadd.f32 0.0, %v8474
        %v8476 = vpop.f32.mrb[0].mxu0
        %v8477 = vpop.f32.mrb[0].mxu0
        %v8478 = vadd.f32 0.0, %v8477
        %v8479 = vpop.f32.mrb[0].mxu0
        %8480 = vmatprep.mubr.bf16.mxu0 0
        %8481 = vmatmul.mubr.bf16.gmra.mrb[0].mxu0 %v8215
        %v8482 = vpop.f32.mrb[0].mxu0
        %v8483 = vadd.f32 0.0, %v8482
        %v8484 = vpop.f32.mrb[0].mxu0
        %v8485 = vpop.f32.mrb[0].mxu0
        %v8486 = vadd.f32 0.0, %v8485
        %v8487 = vpop.f32.mrb[0].mxu0
        %8488 = vmatprep.mubr.bf16.mxu0 0
        %8489 = vmatmul.mubr.bf16.gmra.mrb[0].mxu0 %v8218
        %v8490 = vpop.f32.mrb[0].mxu0
        %v8491 = vadd.f32 0.0, %v8490
        %v8492 = vpop.f32.mrb[0].mxu0
        %v8493 = vpop.f32.mrb[0].mxu0
        %v8494 = vadd.f32 0.0, %v8493
        %v8495 = vpop.f32.mrb[0].mxu0
        %8496 = vmatprep.mubr.bf16.mxu0 0
        %8497 = vmatmul.mubr.bf16.gmra.mrb[0].mxu0 %v8221
        %v8498 = vpop.f32.mrb[0].mxu0
        %v8499 = vadd.f32 0.0, %v8498
        %v8500 = vpop.f32.mrb[0].mxu0
        %v8501 = vpop.f32.mrb[0].mxu0
        %v8502 = vadd.f32 0.0, %v8501
        %v8503 = vpop.f32.mrb[0].mxu0
        %8504 = vmatprep.mubr.bf16.mxu0 0
        %8505 = vmatmul.mubr.bf16.gmra.mrb[0].mxu0 %v8224
        %v8506 = vpop.f32.mrb[0].mxu0
        %v8507 = vadd.f32 0.0, %v8506
        %v8508 = vpop.f32.mrb[0].mxu0
        %v8509 = vpop.f32.mrb[0].mxu0
        %v8510 = vadd.f32 0.0, %v8509
        %v8511 = vpop.f32.mrb[0].mxu0
        %8512 = vmatprep.mubr.bf16.mxu0 0
        %8513 = vmatmul.mubr.bf16.gmra.mrb[0].mxu0 %v8227
        %v8514 = vpop.f32.mrb[0].mxu0
        %v8515 = vadd.f32 0.0, %v8514
        %v8516 = vpop.f32.mrb[0].mxu0
        %v8517 = vpop.f32.mrb[0].mxu0
        %v8518 = vadd.f32 0.0, %v8517
        %v8519 = vpop.f32.mrb[0].mxu0
        %8520 = vdwg.mxu0
        %v8521 = vadd.f32 %v7667, %v8267
        %v8522 = vadd.f32 %v7668, %v8270
        %v8523 = vadd.f32 %v7669, %v8275
        %v8524 = vadd.f32 %v7670, %v8278
        %v8525 = vadd.f32 %v7671, %v8283
        %v8526 = vadd.f32 %v7672, %v8286
        %v8527 = vadd.f32 %v7673, %v8291
        %v8528 = vadd.f32 %v7674, %v8294
        %v8529 = vadd.f32 %v7675, %v8299
        %v8530 = vadd.f32 %v7676, %v8302
        %v8531 = vadd.f32 %v7677, %v8307
        %v8532 = vadd.f32 %v7678, %v8310
        %v8533 = vadd.f32 %v7679, %v8315
        %v8534 = vadd.f32 %v7680, %v8318
        %v8535 = vadd.f32 %v7681, %v8323
        %v8536 = vadd.f32 %v7682, %v8326
        %v8537 = vadd.f32 %v7683, %v8331
        %v8538 = vadd.f32 %v7684, %v8334
        %v8539 = vadd.f32 %v7685, %v8339
        %v8540 = vadd.f32 %v7686, %v8342
        %v8541 = vadd.f32 %v7687, %v8347
        %v8542 = vadd.f32 %v7688, %v8350
        %v8543 = vadd.f32 %v7689, %v8355
        %v8544 = vadd.f32 %v7690, %v8358
        %v8545 = vadd.f32 %v7691, %v8363
        %v8546 = vadd.f32 %v7692, %v8366
        %v8547 = vadd.f32 %v7693, %v8371
        %v8548 = vadd.f32 %v7694, %v8374
        %v8549 = vadd.f32 %v7695, %v8379
        %v8550 = vadd.f32 %v7696, %v8382
        %v8551 = vadd.f32 %v7697, %v8387
        %v8552 = vadd.f32 %v7698, %v8390
        %v8553 = vadd.f32 %v7699, %v8395
        %v8554 = vadd.f32 %v7700, %v8398
        %v8555 = vadd.f32 %v7701, %v8403
        %v8556 = vadd.f32 %v7702, %v8406
        %v8557 = vadd.f32 %v7703, %v8411
        %v8558 = vadd.f32 %v7704, %v8414
        %v8559 = vadd.f32 %v7705, %v8419
        %v8560 = vadd.f32 %v7706, %v8422
        %v8561 = vadd.f32 %v7707, %v8427
        %v8562 = vadd.f32 %v7708, %v8430
        %v8563 = vadd.f32 %v7709, %v8435
        %v8564 = vadd.f32 %v7710, %v8438
        %v8565 = vadd.f32 %v7711, %v8443
        %v8566 = vadd.f32 %v7712, %v8446
        %v8567 = vadd.f32 %v7713, %v8451
        %v8568 = vadd.f32 %v7714, %v8454
        %v8569 = vadd.f32 %v7715, %v8459
        %v8570 = vadd.f32 %v7716, %v8462
        %v8571 = vadd.f32 %v7717, %v8467
        %v8572 = vadd.f32 %v7718, %v8470
        %v8573 = vadd.f32 %v7719, %v8475
        %v8574 = vadd.f32 %v7720, %v8478
        %v8575 = vadd.f32 %v7721, %v8483
        %v8576 = vadd.f32 %v7722, %v8486
        %v8577 = vadd.f32 %v7723, %v8491
        %v8578 = vadd.f32 %v7724, %v8494
        %v8579 = vadd.f32 %v7725, %v8499
        %v8580 = vadd.f32 %v7726, %v8502
        %v8581 = vadd.f32 %v7727, %v8507
        %v8582 = vadd.f32 %v7728, %v8510
        %v8583 = vadd.f32 %v7729, %v8515
        %v8584 = vadd.f32 %v7730, %v8518
        %v8585 = vld [vmem:[%s2] sm:$0x1]
        %v8587 = vlaneseq
        %v8588 = vshrl.u32 %v8587, 7
        %v8589 = vsub.s32 0, %v8588
        %v8590 = vrot.slane %v8585, %v8589
        %v8592 = vadd.f32 %v8521, %v8590
        %v8593 = vadd.f32 %v8522, %v8590
        %v8594 = vadd.f32 %v8523, %v8590
        %v8595 = vadd.f32 %v8524, %v8590
        %v8596 = vadd.f32 %v8525, %v8590
        %v8597 = vadd.f32 %v8526, %v8590
        %v8598 = vadd.f32 %v8527, %v8590
        %v8599 = vadd.f32 %v8528, %v8590
        %v8600 = vadd.f32 %v8529, %v8590
        %v8601 = vadd.f32 %v8530, %v8590
        %v8602 = vadd.f32 %v8531, %v8590
        %v8603 = vadd.f32 %v8532, %v8590
        %v8604 = vadd.f32 %v8533, %v8590
        %v8605 = vadd.f32 %v8534, %v8590
        %v8606 = vadd.f32 %v8535, %v8590
        %v8607 = vadd.f32 %v8536, %v8590
        %v8608 = vadd.f32 %v8537, %v8590
        %v8609 = vadd.f32 %v8538, %v8590
        %v8610 = vadd.f32 %v8539, %v8590
        %v8611 = vadd.f32 %v8540, %v8590
        %v8612 = vadd.f32 %v8541, %v8590
        %v8613 = vadd.f32 %v8542, %v8590
        %v8614 = vadd.f32 %v8543, %v8590
        %v8615 = vadd.f32 %v8544, %v8590
        %v8616 = vadd.f32 %v8545, %v8590
        %v8617 = vadd.f32 %v8546, %v8590
        %v8618 = vadd.f32 %v8547, %v8590
        %v8619 = vadd.f32 %v8548, %v8590
        %v8620 = vadd.f32 %v8549, %v8590
        %v8621 = vadd.f32 %v8550, %v8590
        %v8622 = vadd.f32 %v8551, %v8590
        %v8623 = vadd.f32 %v8552, %v8590
        %v8624 = vadd.f32 %v8553, %v8590
        %v8625 = vadd.f32 %v8554, %v8590
        %v8626 = vadd.f32 %v8555, %v8590
        %v8627 = vadd.f32 %v8556, %v8590
        %v8628 = vadd.f32 %v8557, %v8590
        %v8629 = vadd.f32 %v8558, %v8590
        %v8630 = vadd.f32 %v8559, %v8590
        %v8631 = vadd.f32 %v8560, %v8590
        %v8632 = vadd.f32 %v8561, %v8590
        %v8633 = vadd.f32 %v8562, %v8590
        %v8634 = vadd.f32 %v8563, %v8590
        %v8635 = vadd.f32 %v8564, %v8590
        %v8636 = vadd.f32 %v8565, %v8590
        %v8637 = vadd.f32 %v8566, %v8590
        %v8638 = vadd.f32 %v8567, %v8590
        %v8639 = vadd.f32 %v8568, %v8590
        %v8640 = vadd.f32 %v8569, %v8590
        %v8641 = vadd.f32 %v8570, %v8590
        %v8642 = vadd.f32 %v8571, %v8590
        %v8643 = vadd.f32 %v8572, %v8590
        %v8644 = vadd.f32 %v8573, %v8590
        %v8645 = vadd.f32 %v8574, %v8590
        %v8646 = vadd.f32 %v8575, %v8590
        %v8647 = vadd.f32 %v8576, %v8590
        %v8648 = vadd.f32 %v8577, %v8590
        %v8649 = vadd.f32 %v8578, %v8590
        %v8650 = vadd.f32 %v8579, %v8590
        %v8651 = vadd.f32 %v8580, %v8590
        %v8652 = vadd.f32 %v8581, %v8590
        %v8653 = vadd.f32 %v8582, %v8590
        %v8654 = vadd.f32 %v8583, %v8590
        %v8655 = vadd.f32 %v8584, %v8590
        %v8656 = vpack.c.bf16 %v8593, %v8592
        %v8657 = vpack.c.bf16 %v8595, %v8594
        %v8658 = vpack.c.bf16 %v8597, %v8596
        %v8659 = vpack.c.bf16 %v8599, %v8598
        %v8660 = vpack.c.bf16 %v8601, %v8600
        %v8661 = vpack.c.bf16 %v8603, %v8602
        %v8662 = vpack.c.bf16 %v8605, %v8604
        %v8663 = vpack.c.bf16 %v8607, %v8606
        %v8664 = vpack.c.bf16 %v8609, %v8608
        %v8665 = vpack.c.bf16 %v8611, %v8610
        %v8666 = vpack.c.bf16 %v8613, %v8612
        %v8667 = vpack.c.bf16 %v8615, %v8614
        %v8668 = vpack.c.bf16 %v8617, %v8616
        %v8669 = vpack.c.bf16 %v8619, %v8618
        %v8670 = vpack.c.bf16 %v8621, %v8620
        %v8671 = vpack.c.bf16 %v8623, %v8622
        %v8672 = vpack.c.bf16 %v8625, %v8624
        %v8673 = vpack.c.bf16 %v8627, %v8626
        %v8674 = vpack.c.bf16 %v8629, %v8628
        %v8675 = vpack.c.bf16 %v8631, %v8630
        %v8676 = vpack.c.bf16 %v8633, %v8632
        %v8677 = vpack.c.bf16 %v8635, %v8634
        %v8678 = vpack.c.bf16 %v8637, %v8636
        %v8679 = vpack.c.bf16 %v8639, %v8638
        %v8680 = vpack.c.bf16 %v8641, %v8640
        %v8681 = vpack.c.bf16 %v8643, %v8642
        %v8682 = vpack.c.bf16 %v8645, %v8644
        %v8683 = vpack.c.bf16 %v8647, %v8646
        %v8684 = vpack.c.bf16 %v8649, %v8648
        %v8685 = vpack.c.bf16 %v8651, %v8650
        %v8686 = vpack.c.bf16 %v8653, %v8652
        %v8687 = vpack.c.bf16 %v8655, %v8654
        %v8720 = vunpack.c.l.b16 %v8656
        %v8721 = vunpack.c.h.b16 %v8656
        %v8722 = vunpack.c.l.b16 %v8657
        %v8723 = vunpack.c.h.b16 %v8657
        %v8724 = vunpack.c.l.b16 %v8658
        %v8725 = vunpack.c.h.b16 %v8658
        %v8726 = vunpack.c.l.b16 %v8659
        %v8727 = vunpack.c.h.b16 %v8659
        %v8728 = vunpack.c.l.b16 %v8660
        %v8729 = vunpack.c.h.b16 %v8660
        %v8730 = vunpack.c.l.b16 %v8661
        %v8731 = vunpack.c.h.b16 %v8661
        %v8732 = vunpack.c.l.b16 %v8662
        %v8733 = vunpack.c.h.b16 %v8662
        %v8734 = vunpack.c.l.b16 %v8663
        %v8735 = vunpack.c.h.b16 %v8663
        %v8736 = vunpack.c.l.b16 %v8664
        %v8737 = vunpack.c.h.b16 %v8664
        %v8738 = vunpack.c.l.b16 %v8665
        %v8739 = vunpack.c.h.b16 %v8665
        %v8740 = vunpack.c.l.b16 %v8666
        %v8741 = vunpack.c.h.b16 %v8666
        %v8742 = vunpack.c.l.b16 %v8667
        %v8743 = vunpack.c.h.b16 %v8667
        %v8744 = vunpack.c.l.b16 %v8668
        %v8745 = vunpack.c.h.b16 %v8668
        %v8746 = vunpack.c.l.b16 %v8669
        %v8747 = vunpack.c.h.b16 %v8669
        %v8748 = vunpack.c.l.b16 %v8670
        %v8749 = vunpack.c.h.b16 %v8670
        %v8750 = vunpack.c.l.b16 %v8671
        %v8751 = vunpack.c.h.b16 %v8671
        %v8752 = vunpack.c.l.b16 %v8672
        %v8753 = vunpack.c.h.b16 %v8672
        %v8754 = vunpack.c.l.b16 %v8673
        %v8755 = vunpack.c.h.b16 %v8673
        %v8756 = vunpack.c.l.b16 %v8674
        %v8757 = vunpack.c.h.b16 %v8674
        %v8758 = vunpack.c.l.b16 %v8675
        %v8759 = vunpack.c.h.b16 %v8675
        %v8760 = vunpack.c.l.b16 %v8676
        %v8761 = vunpack.c.h.b16 %v8676
        %v8762 = vunpack.c.l.b16 %v8677
        %v8763 = vunpack.c.h.b16 %v8677
        %v8764 = vunpack.c.l.b16 %v8678
        %v8765 = vunpack.c.h.b16 %v8678
        %v8766 = vunpack.c.l.b16 %v8679
        %v8767 = vunpack.c.h.b16 %v8679
        %v8768 = vunpack.c.l.b16 %v8680
        %v8769 = vunpack.c.h.b16 %v8680
        %v8770 = vunpack.c.l.b16 %v8681
        %v8771 = vunpack.c.h.b16 %v8681
        %v8772 = vunpack.c.l.b16 %v8682
        %v8773 = vunpack.c.h.b16 %v8682
        %v8774 = vunpack.c.l.b16 %v8683
        %v8775 = vunpack.c.h.b16 %v8683
        %v8776 = vunpack.c.l.b16 %v8684
        %v8777 = vunpack.c.h.b16 %v8684
        %v8778 = vunpack.c.l.b16 %v8685
        %v8779 = vunpack.c.h.b16 %v8685
        %v8780 = vunpack.c.l.b16 %v8686
        %v8781 = vunpack.c.h.b16 %v8686
        %v8782 = vunpack.c.l.b16 %v8687
        %v8783 = vunpack.c.h.b16 %v8687
        %v8784 = vpack.c.b16 %v8720, %v8720
        %v8785 = vpack.c.b16 %v8721, %v8721
        %v8786 = vpack.c.b16 %v8722, %v8722
        %v8787 = vpack.c.b16 %v8723, %v8723
        %v8788 = vpack.c.b16 %v8724, %v8724
        %v8789 = vpack.c.b16 %v8725, %v8725
        %v8790 = vpack.c.b16 %v8726, %v8726
        %v8791 = vpack.c.b16 %v8727, %v8727
        %v8792 = vpack.c.b16 %v8728, %v8728
        %v8793 = vpack.c.b16 %v8729, %v8729
        %v8794 = vpack.c.b16 %v8730, %v8730
        %v8795 = vpack.c.b16 %v8731, %v8731
        %v8796 = vpack.c.b16 %v8732, %v8732
        %v8797 = vpack.c.b16 %v8733, %v8733
        %v8798 = vpack.c.b16 %v8734, %v8734
        %v8799 = vpack.c.b16 %v8735, %v8735
        %v8800 = vpack.c.b16 %v8736, %v8736
        %v8801 = vpack.c.b16 %v8737, %v8737
        %v8802 = vpack.c.b16 %v8738, %v8738
        %v8803 = vpack.c.b16 %v8739, %v8739
        %v8804 = vpack.c.b16 %v8740, %v8740
        %v8805 = vpack.c.b16 %v8741, %v8741
        %v8806 = vpack.c.b16 %v8742, %v8742
        %v8807 = vpack.c.b16 %v8743, %v8743
        %v8808 = vpack.c.b16 %v8744, %v8744
        %v8809 = vpack.c.b16 %v8745, %v8745
        %v8810 = vpack.c.b16 %v8746, %v8746
        %v8811 = vpack.c.b16 %v8747, %v8747
        %v8812 = vpack.c.b16 %v8748, %v8748
        %v8813 = vpack.c.b16 %v8749, %v8749
        %v8814 = vpack.c.b16 %v8750, %v8750
        %v8815 = vpack.c.b16 %v8751, %v8751
        %v8816 = vpack.c.b16 %v8752, %v8752
        %v8817 = vpack.c.b16 %v8753, %v8753
        %v8818 = vpack.c.b16 %v8754, %v8754
        %v8819 = vpack.c.b16 %v8755, %v8755
        %v8820 = vpack.c.b16 %v8756, %v8756
        %v8821 = vpack.c.b16 %v8757, %v8757
        %v8822 = vpack.c.b16 %v8758, %v8758
        %v8823 = vpack.c.b16 %v8759, %v8759
        %v8824 = vpack.c.b16 %v8760, %v8760
        %v8825 = vpack.c.b16 %v8761, %v8761
        %v8826 = vpack.c.b16 %v8762, %v8762
        %v8827 = vpack.c.b16 %v8763, %v8763
        %v8828 = vpack.c.b16 %v8764, %v8764
        %v8829 = vpack.c.b16 %v8765, %v8765
        %v8830 = vpack.c.b16 %v8766, %v8766
        %v8831 = vpack.c.b16 %v8767, %v8767
        %v8832 = vpack.c.b16 %v8768, %v8768
        %v8833 = vpack.c.b16 %v8769, %v8769
        %v8834 = vpack.c.b16 %v8770, %v8770
        %v8835 = vpack.c.b16 %v8771, %v8771
        %v8836 = vpack.c.b16 %v8772, %v8772
        %v8837 = vpack.c.b16 %v8773, %v8773
        %v8838 = vpack.c.b16 %v8774, %v8774
        %v8839 = vpack.c.b16 %v8775, %v8775
        %v8840 = vpack.c.b16 %v8776, %v8776
        %v8841 = vpack.c.b16 %v8777, %v8777
        %v8842 = vpack.c.b16 %v8778, %v8778
        %v8843 = vpack.c.b16 %v8779, %v8779
        %v8844 = vpack.c.b16 %v8780, %v8780
        %v8845 = vpack.c.b16 %v8781, %v8781
        %v8846 = vpack.c.b16 %v8782, %v8782
        %v8847 = vpack.c.b16 %v8783, %v8783
        %8912 = vst [vmem:[%s196] sm:$0xf] %v8784
        %8913 = vst [vmem:[%s196 + $0x4] sm:$0xf] %v8785
        %8914 = vst [vmem:[%s196 + $0x8] sm:$0xf] %v8786
        %8915 = vst [vmem:[%s196 + $0xc] sm:$0xf] %v8787
        %8916 = vst [vmem:[%s196 + $0x10] sm:$0xf] %v8788
        %8917 = vst [vmem:[%s196 + $0x14] sm:$0xf] %v8789
        %8918 = vst [vmem:[%s196 + $0x18] sm:$0xf] %v8790
        %8919 = vst [vmem:[%s196 + $0x1c] sm:$0xf] %v8791
        %8920 = vst [vmem:[%s196 + $0x20] sm:$0xf] %v8792
        %8921 = vst [vmem:[%s196 + $0x24] sm:$0xf] %v8793
        %8922 = vst [vmem:[%s196 + $0x28] sm:$0xf] %v8794
        %8923 = vst [vmem:[%s196 + $0x2c] sm:$0xf] %v8795
        %8924 = vst [vmem:[%s196 + $0x30] sm:$0xf] %v8796
        %8925 = vst [vmem:[%s196 + $0x34] sm:$0xf] %v8797
        %8926 = vst [vmem:[%s196 + $0x38] sm:$0xf] %v8798
        %8927 = vst [vmem:[%s196 + $0x3c] sm:$0xf] %v8799
        %8928 = vst [vmem:[%s196 + $0x40] sm:$0xf] %v8800
        %8929 = vst [vmem:[%s196 + $0x44] sm:$0xf] %v8801
        %8930 = vst [vmem:[%s196 + $0x48] sm:$0xf] %v8802
        %8931 = vst [vmem:[%s196 + $0x4c] sm:$0xf] %v8803
        %8932 = vst [vmem:[%s196 + $0x50] sm:$0xf] %v8804
        %8933 = vst [vmem:[%s196 + $0x54] sm:$0xf] %v8805
        %8934 = vst [vmem:[%s196 + $0x58] sm:$0xf] %v8806
        %8935 = vst [vmem:[%s196 + $0x5c] sm:$0xf] %v8807
        %8936 = vst [vmem:[%s196 + $0x60] sm:$0xf] %v8808
        %8937 = vst [vmem:[%s196 + $0x64] sm:$0xf] %v8809
        %8938 = vst [vmem:[%s196 + $0x68] sm:$0xf] %v8810
        %8939 = vst [vmem:[%s196 + $0x6c] sm:$0xf] %v8811
        %8940 = vst [vmem:[%s196 + $0x70] sm:$0xf] %v8812
        %8941 = vst [vmem:[%s196 + $0x74] sm:$0xf] %v8813
        %8942 = vst [vmem:[%s196 + $0x78] sm:$0xf] %v8814
        %8943 = vst [vmem:[%s196 + $0x7c] sm:$0xf] %v8815
        %8944 = vst [vmem:[%s196 + $0x80] sm:$0xf] %v8816
        %8945 = vst [vmem:[%s196 + $0x84] sm:$0xf] %v8817
        %8946 = vst [vmem:[%s196 + $0x88] sm:$0xf] %v8818
        %8947 = vst [vmem:[%s196 + $0x8c] sm:$0xf] %v8819
        %8948 = vst [vmem:[%s196 + $0x90] sm:$0xf] %v8820
        %8949 = vst [vmem:[%s196 + $0x94] sm:$0xf] %v8821
        %8950 = vst [vmem:[%s196 + $0x98] sm:$0xf] %v8822
        %8951 = vst [vmem:[%s196 + $0x9c] sm:$0xf] %v8823
        %8952 = vst [vmem:[%s196 + $0xa0] sm:$0xf] %v8824
        %8953 = vst [vmem:[%s196 + $0xa4] sm:$0xf] %v8825
        %8954 = vst [vmem:[%s196 + $0xa8] sm:$0xf] %v8826
        %8955 = vst [vmem:[%s196 + $0xac] sm:$0xf] %v8827
        %8956 = vst [vmem:[%s196 + $0xb0] sm:$0xf] %v8828
        %8957 = vst [vmem:[%s196 + $0xb4] sm:$0xf] %v8829
        %8958 = vst [vmem:[%s196 + $0xb8] sm:$0xf] %v8830
        %8959 = vst [vmem:[%s196 + $0xbc] sm:$0xf] %v8831
        %8960 = vst [vmem:[%s196 + $0xc0] sm:$0xf] %v8832
        %8961 = vst [vmem:[%s196 + $0xc4] sm:$0xf] %v8833
        %8962 = vst [vmem:[%s196 + $0xc8] sm:$0xf] %v8834
        %8963 = vst [vmem:[%s196 + $0xcc] sm:$0xf] %v8835
        %8964 = vst [vmem:[%s196 + $0xd0] sm:$0xf] %v8836
        %8965 = vst [vmem:[%s196 + $0xd4] sm:$0xf] %v8837
        %8966 = vst [vmem:[%s196 + $0xd8] sm:$0xf] %v8838
        %8967 = vst [vmem:[%s196 + $0xdc] sm:$0xf] %v8839
        %8968 = vst [vmem:[%s196 + $0xe0] sm:$0xf] %v8840
        %8969 = vst [vmem:[%s196 + $0xe4] sm:$0xf] %v8841
        %8970 = vst [vmem:[%s196 + $0xe8] sm:$0xf] %v8842
        %8971 = vst [vmem:[%s196 + $0xec] sm:$0xf] %v8843
        %8972 = vst [vmem:[%s196 + $0xf0] sm:$0xf] %v8844
        %8973 = vst [vmem:[%s196 + $0xf4] sm:$0xf] %v8845
        %8974 = vst [vmem:[%s196 + $0xf8] sm:$0xf] %v8846
        %8975 = vst [vmem:[%s196 + $0xfc] sm:$0xf] %v8847
        %s8976 = sand.u32 %s118, 1
        %s8977 = scalar_lea.sflag [#allocation3], %s8976
        %s8978 = sand.u32 %s118, 1
        %s8979 = smul.addr %s8978, 256
        %s8980 = scalar_lea.vmem [#allocation2], %s8979
        // Predicated region
        $region33: #{tpu_custom_call.1} parent=31 // pred_check
          %p8981 = pneg %p128
        $region34: #{tpu_custom_call.1} parent=31 // pred_check_branch
          %8983 = sbr.rel (%p8981) target = $region36
        $region35: #{tpu_custom_call.1} parent=31 // pred_region
          %s8984 = smul.u32 64, %s24
          %s8986 = ssub.s32 4096, 4096
          %8987 = vsyncadd %s8977, %s8986
          %s8988 = smul.addr %s23, 128
          %s8989 = sadd.s32 %s8984, %s8988
          %s8990 = smul.addr %s22, 256
          %s8991 = sadd.s32 %s8989, %s8990
          %s8992 = smul.addr %s8991, 64
          %s8993 = scalar_lea.hbm %s3, %s8992
          %s8994 = sshll.u32 %s8980, 4
          %s8995 = int_to_ptr.vmem [resolvable:$true] %s8994
          %9000 = dma.vmem_to_hbm [thread:$0]  %s8995, 4096, %s8993, %s8977, 64, 64, 4
        $region36: #{tpu_custom_call.1} parent=31 // pred_fallthru
          _
      $region32: #{tpu_custom_call.1} parent=5 // pred_fallthru
        _
      %p9001 = scmp.le.s32.totalorder 2, %s12
      // Predicated region
      $region37: #{tpu_custom_call.1} parent=5 // pred_check
        %p9002 = pneg %p9001
      $region38: #{tpu_custom_call.1} parent=5 // pred_check_branch
        %9004 = sbr.rel (%p9002) target = $region40
      $region39: #{tpu_custom_call.1} parent=5 // pred_region
        %s9005 = ssub.s32 %s12, 2
        // Predicated region
        $region41: #{tpu_custom_call.1} parent=39 // pred_check
          %p9006 = pneg %p134
        $region42: #{tpu_custom_call.1} parent=39 // pred_check_branch
          %9008 = sbr.rel (%p9006) target = $region44
        $region43: #{tpu_custom_call.1} parent=39 // pred_region
          %s9009 = sand.u32 %s119, 1
          %s9010 = scalar_lea.sflag [#allocation3], %s9009
          %s9011 = sand.u32 %s119, 1
          %s9012 = smul.addr %s9011, 256
          %s9013 = scalar_lea.vmem [#allocation2], %s9012
          %9014 = dma.done %s9010, 4096
        $region44: #{tpu_custom_call.1} parent=39 // pred_fallthru
          _
      $region40: #{tpu_custom_call.1} parent=5 // pred_fallthru
        _
    $region6: #{tpu_custom_call.1} parent=1 // loop_footer
      %s16 = sadd.s32 1, %s12
    $region7: #{tpu_custom_call.1} parent=1 // loop_footer_branch
      %11 = sbr.rel target = $region3
    $region8: #{tpu_custom_call.1} parent=1 // loop_exit
      _
    %9015 = vsyncpa [#allocation3], 1
    %s9016 = scalar_lea.sflag [#allocation3], 1
    %9017 = vsyncpa %s9016, 1

</llo_original>
